<compile_context>
chip_gen: v5e
topology: v5e:2x2
jax: 0.10.0
libtpu: 0.0.40
codegen_flags: <defaults>
</compile_context>

<pallas_src>
import functools

import jax
import jax.numpy as jnp
from jax.experimental import pallas as pl
from jax.experimental.pallas import tpu as pltpu


# ---------------------------------------------------------------------------
# VMEM budgeting (review: v7x has 64 MiB physical / 32 MiB default scoped)
# ---------------------------------------------------------------------------

def _vmem_limit_bytes(working_set_bytes):
    try:
        cap = int(pltpu.get_tpu_info().vmem_capacity_bytes)
    except Exception:
        cap = 64 << 20                       # assume the smallest target (v7x)
    want = max(4 * int(working_set_bytes), 16 << 20)
    return int(min(want, cap // 2))


# ---------------------------------------------------------------------------
# Kernel 1: ConvTranspose2d(k=2, s=2) as a per-image matmul
#   out[n, 2h+di, 2w+dj, co] = b[co] + sum_ci x[n,h,w,ci] * wt[ci,co,di,dj]
# ---------------------------------------------------------------------------

def _convt_kernel(x_ref, w_ref, b_ref, o_ref):
    acc = jnp.dot(x_ref[...], w_ref[...], preferred_element_type=jnp.float32)
    o_ref[...] = (acc + b_ref[...]).astype(o_ref.dtype)


def conv_transpose2x2(x, wt, bt):
    """x: (N,H,W,Cin) NHWC -> (N,2H,2W,Cout) in bf16 (intermediate stays bf16)."""
    N, H, W, Cin = x.shape
    Cout = wt.shape[1]
    HW = H * W

    x2 = x.astype(jnp.bfloat16).reshape(N, HW, Cin)
    # Cout is the contiguous (lane) axis of the output columns, so the pixel
    # shuffle below is a lane-contiguous relayout (review).
    w2 = jnp.transpose(wt, (0, 2, 3, 1)).reshape(Cin, 4 * Cout).astype(jnp.bfloat16)
    b2 = jnp.tile(bt.astype(jnp.float32), 4).reshape(1, 4 * Cout)

    working = 2 * (HW * Cin * 2 + HW * 4 * Cout * 2) + 2 * Cin * 4 * Cout * 2
    cost = pl.CostEstimate(
        flops=int(2 * N * HW * Cin * 4 * Cout),
        transcendentals=0,
        bytes_accessed=int(x2.size * 2 + w2.size * 2 + b2.size * 4
                           + N * HW * 4 * Cout * 2))

    y = pl.pallas_call(
        _convt_kernel,
        out_shape=jax.ShapeDtypeStruct((N, HW, 4 * Cout), jnp.bfloat16),
        grid_spec=pltpu.PrefetchScalarGridSpec(
            num_scalar_prefetch=0,
            grid=(N,),
            in_specs=[
                pl.BlockSpec((None, HW, Cin), lambda n: (n, 0, 0)),
                pl.BlockSpec((Cin, 4 * Cout), lambda n: (0, 0)),
                pl.BlockSpec((1, 4 * Cout), lambda n: (0, 0)),
            ],
            out_specs=pl.BlockSpec((None, HW, 4 * Cout), lambda n: (n, 0, 0)),
        ),
        compiler_params=pltpu.CompilerParams(
            dimension_semantics=("parallel",),
            vmem_limit_bytes=_vmem_limit_bytes(working)),
        cost_estimate=cost,
    )(x2, w2, b2)

    # pixel shuffle (N,H,W,2,2,Cout) -> (N,2H,2W,Cout); Cout innermost.
    y = y.reshape(N, H, W, 2, 2, Cout).transpose(0, 1, 3, 2, 4, 5)
    return y.reshape(N, 2 * H, 2 * W, Cout)


# ---------------------------------------------------------------------------
# Kernel 2: fused conv_block = conv3x3(pad=1)+ReLU -> conv3x3(pad=1)+ReLU.
#
# Layout trick: the input is zero padded to (H+3, W+2) (1 top / 2 bottom rows,
# 1 left / 1 right column) and flattened row-major to (P, Cin) with row stride
# Wp = W+2.  The tap (di,dj) contribution to output pixel (r,c) is then
# input_flat[r*Wp + c + di*Wp + dj] -- a constant row shift per tap -- so the
# im2col is folded into the reduction loop.  Output rows keep the Wp stride;
# the 2 pad columns per row are don't-care and sliced off outside.  The
# conv1 -> conv2 intermediate never leaves VMEM.
# ---------------------------------------------------------------------------

def _conv_block_kernel(a1_ref, w1_ref, b1_ref, w2_ref, b2_ref, o_ref,
                       a1f_ref, acc_ref, a2_ref, *, h_out, wp, w_valid):
    m = h_out * wp                      # output rows (with pad-column stride)

    def conv3x3(src_ref, w_ref, b_ref, dst_ref):
        # src_ref: (P, Cin) f32, zero-padded & row-flattened with stride wp.
        dst_ref[...] = jnp.zeros_like(dst_ref)
        for di in range(3):
            for dj in range(3):
                lhs = src_ref[pl.ds(di * wp + dj, m), :].astype(jnp.bfloat16)
                dst_ref[...] += jnp.dot(lhs, w_ref[3 * di + dj],
                                        preferred_element_type=jnp.float32)
        dst_ref[...] = jnp.maximum(dst_ref[...] + b_ref[...], 0.0)

    # single upcast; every tap read below is a 32-bit sublane-shifted load
    a1f_ref[...] = a1_ref[...].astype(jnp.float32)

    # conv1 + ReLU
    conv3x3(a1f_ref, w1_ref, b1_ref, acc_ref)

    # Re-pad conv1's output as conv2's input (same flat layout, shifted by one
    # pad row + one pad column); per-row pad columns are masked to zero.
    col = jax.lax.broadcasted_iota(jnp.int32, (m, 1), 0) % wp
    h1 = jnp.where(col < w_valid, acc_ref[...], 0.0)
    a2_ref[...] = jnp.zeros_like(a2_ref)
    a2_ref[pl.ds(wp + 1, m), :] = h1

    # conv2 + ReLU, accumulated directly into the f32 output block (no scratch)
    conv3x3(a2_ref, w2_ref, b2_ref, o_ref)


def conv_block_fused(x, w1, b1, w2, b2):
    """[conv3x3(pad=1) + ReLU] x 2 on an NHWC input -- one pallas_call."""
    N, H, W, C1 = x.shape
    C2 = w1.shape[0]
    assert w1.shape == (C2, C1, 3, 3) and w2.shape == (C2, C2, 3, 3)
    wp = W + 2
    p_rows = (H + 3) * wp
    m = H * wp

    # zero pad (1 top, 2 bottom, 1 left, 1 right), flatten rows; bf16 in HBM.
    a1 = jnp.pad(x.astype(jnp.bfloat16),
                 ((0, 0), (1, 2), (1, 1), (0, 0))).reshape(N, p_rows, C1)
    # tap-major weights: w_t[3*di+dj, ci, co] = w_torch[co, ci, di, dj]
    w1t = jnp.transpose(w1, (2, 3, 1, 0)).reshape(9, C1, C2).astype(jnp.bfloat16)
    w2t = jnp.transpose(w2, (2, 3, 1, 0)).reshape(9, C2, C2).astype(jnp.bfloat16)
    b1r = b1.astype(jnp.float32).reshape(1, C2)
    b2r = b2.astype(jnp.float32).reshape(1, C2)

    # per-grid-step VMEM working set: double-buffered blocks + scratch
    working = (2 * (p_rows * C1 * 2 + m * C2 * 4)
               + 2 * 2 * (w1t.size + w2t.size)
               + p_rows * C1 * 4 + m * C2 * 4 + p_rows * C2 * 4)
    limit = _vmem_limit_bytes(working)
    # TODO(synk): add a spatially-tiled fallback for images too large to keep
    # resident in VMEM; decoder/test sizes here are far below the limit.
    assert working < limit, "conv_block_fused: image too large for VMEM-resident kernel"

    cost = pl.CostEstimate(
        flops=int(2 * 9 * N * m * (C1 * C2 + C2 * C2)),
        transcendentals=0,
        bytes_accessed=int(a1.size * 2 + (w1t.size + w2t.size) * 2
                           + N * m * C2 * 4))

    out = pl.pallas_call(
        functools.partial(_conv_block_kernel, h_out=H, wp=wp, w_valid=W),
        out_shape=jax.ShapeDtypeStruct((N, m, C2), jnp.float32),
        grid_spec=pltpu.PrefetchScalarGridSpec(
            num_scalar_prefetch=0,
            grid=(N,),
            in_specs=[
                pl.BlockSpec((None, p_rows, C1), lambda n: (n, 0, 0)),
                pl.BlockSpec((9, C1, C2), lambda n: (0, 0, 0)),
                pl.BlockSpec((1, C2), lambda n: (0, 0)),
                pl.BlockSpec((9, C2, C2), lambda n: (0, 0, 0)),
                pl.BlockSpec((1, C2), lambda n: (0, 0)),
            ],
            out_specs=pl.BlockSpec((None, m, C2), lambda n: (n, 0, 0)),
            scratch_shapes=[
                pltpu.VMEM((p_rows, C1), jnp.float32),   # upcast conv1 input
                pltpu.VMEM((m, C2), jnp.float32),        # conv1 accumulator
                pltpu.VMEM((p_rows, C2), jnp.float32),   # padded conv2 input
            ],
        ),
        compiler_params=pltpu.CompilerParams(
            dimension_semantics=("parallel",),
            vmem_limit_bytes=limit),
        cost_estimate=cost,
    )(a1, w1t, b1r, w2t, b2r)

    # drop the per-row pad columns and restore (N, H, W, C2)
    return out.reshape(N, H, wp, C2)[:, :, :W, :]


# ---------------- module blocks ----------------

def decoder_block(x, skip, params):
    up = conv_transpose2x2(x, params["wt"], params["bt"])          # bf16
    # torch.cat(axis=1) in NCHW == channel concat (last axis) in NHWC.
    cat = jnp.concatenate([up, skip.astype(jnp.bfloat16)], axis=-1)
    c = params["conv"]
    # NOTE: bn1/bn2 exist in the PyTorch module but are NOT applied in forward().
    return conv_block_fused(cat, c["w1"], c["b1"], c["w2"], c["b2"])


def decoder_block_forward(x_nchw, skip_nchw, params):
    x = jnp.transpose(x_nchw, (0, 2, 3, 1))        # NCHW -> NHWC
    skip = jnp.transpose(skip_nchw, (0, 2, 3, 1))
    y = decoder_block(x, skip, params)
    return jnp.transpose(y, (0, 3, 1, 2))          # NHWC -> NCHW


# ---------------- deterministic parameter init (PyTorch-default-like) ----------------

def _conv_init(key, out_c, in_c, kh, kw):
    kw_, kb = jax.random.split(key)
    fan_in = in_c * kh * kw
    bound = 1.0 / float(fan_in) ** 0.5
    w = jax.random.uniform(kw_, (out_c, in_c, kh, kw), jnp.float32, -bound, bound)
    b = jax.random.uniform(kb, (out_c,), jnp.float32, -bound, bound)
    return w, b


def _convT_init(key, in_c, out_c, kh, kw):
    kw_, kb = jax.random.split(key)
    fan_in = out_c * kh * kw
    bound = 1.0 / float(fan_in) ** 0.5
    w = jax.random.uniform(kw_, (in_c, out_c, kh, kw), jnp.float32, -bound, bound)
    b = jax.random.uniform(kb, (out_c,), jnp.float32, -bound, bound)
    return w, b


def _conv_block_init(key, in_c, out_c):
    k1, k2 = jax.random.split(key)
    w1, b1 = _conv_init(k1, out_c, in_c, 3, 3)
    w2, b2 = _conv_init(k2, out_c, out_c, 3, 3)
    return {"w1": w1, "b1": b1, "w2": w2, "b2": b2}


def init_params(key, in_c, out_c):
    k1, k2 = jax.random.split(key)
    wt, bt = _convT_init(k1, in_c, out_c, 2, 2)
    return {"wt": wt, "bt": bt,
            "conv": _conv_block_init(k2, out_c + out_c, out_c)}


if __name__ == "__main__":
    key = jax.random.PRNGKey(0)
    kx, ks, kp = jax.random.split(key, 3)
    in_c, out_c = 64, 32
    # decoder input: (2, in_c, 8, 8) upsamples to 16x16 and concats with skip.
    x = jax.random.normal(kx, (2, in_c, 8, 8), jnp.float32)
    skip = jax.random.normal(ks, (2, out_c, 16, 16), jnp.float32)
    params = init_params(kp, in_c, out_c)

    fwd = jax.jit(decoder_block_forward)
    y = fwd(x, skip, params)
    jax.block_until_ready(y)

    assert y.shape == (2, out_c, 16, 16), y.shape
    assert bool(jnp.all(jnp.isfinite(y)))
    print("KERNEL_OK")
</pallas_src>

<mosaic_0001>
module attributes {stable_mosaic.version = 11 : i64} {
  func.func @_convt_kernel(%arg0: i32, %arg1: memref<1x64x64xbf16, #tpu.memory_space<vmem>>, %arg2: memref<64x128xbf16, #tpu.memory_space<vmem>>, %arg3: memref<1x128xf32, #tpu.memory_space<vmem>>, %arg4: memref<1x64x128xbf16, #tpu.memory_space<vmem>>) attributes {dimension_semantics = [#tpu.dimension_semantics<parallel>], iteration_bounds = array<i64: 2>, scalar_prefetch = 0 : i64, scratch_operands = 0 : i64, tpu.core_type = #tpu.core_type<tc>, window_params = [{transform_indices = @transform_0, window_bounds = array<i64: 1, 64, 64>}, {pipeline_mode = #tpu.pipeline_mode<synchronous>, transform_indices = @transform_1, window_bounds = array<i64: 64, 128>}, {pipeline_mode = #tpu.pipeline_mode<synchronous>, transform_indices = @transform_2, window_bounds = array<i64: 1, 128>}, {transform_indices = @transform_3, window_bounds = array<i64: 1, 64, 128>}]} {
    %c0 = arith.constant 0 : index
    %c0_0 = arith.constant 0 : index
    %c0_1 = arith.constant 0 : index
    %0 = vector.load %arg1[%c0, %c0_0, %c0_1] : memref<1x64x64xbf16, #tpu.memory_space<vmem>>, vector<1x64x64xbf16>
    %1 = vector.shape_cast %0 : vector<1x64x64xbf16> to vector<64x64xbf16>
    %c0_2 = arith.constant 0 : index
    %c0_3 = arith.constant 0 : index
    %2 = vector.load %arg2[%c0_2, %c0_3] : memref<64x128xbf16, #tpu.memory_space<vmem>>, vector<64x128xbf16>
    %cst = arith.constant dense<0.000000e+00> : vector<64x128xf32>
    %3 = tpu.matmul %1, %2, %cst {dimension_numbers = #tpu.dot_dimension_numbers<[1], [0], [0], [1], [0, 0, 1, 1], [], []>} : vector<64x64xbf16>, vector<64x128xbf16>, vector<64x128xf32> -> vector<64x128xf32>
    %c0_4 = arith.constant 0 : index
    %c0_5 = arith.constant 0 : index
    %4 = vector.load %arg3[%c0_4, %c0_5] : memref<1x128xf32, #tpu.memory_space<vmem>>, vector<1x128xf32>
    %5 = vector.broadcast %4 : vector<1x128xf32> to vector<64x128xf32>
    %6 = arith.addf %3, %5 : vector<64x128xf32>
    %7 = arith.truncf %6 : vector<64x128xf32> to vector<64x128xbf16>
    %c0_6 = arith.constant 0 : index
    %c0_7 = arith.constant 0 : index
    %c0_8 = arith.constant 0 : index
    %8 = vector.load %arg4[%c0_6, %c0_7, %c0_8] : memref<1x64x128xbf16, #tpu.memory_space<vmem>>, vector<1x64x128xbf16>
    %9 = vector.shape_cast %8 : vector<1x64x128xbf16> to vector<64x128xbf16>
    %10 = vector.shape_cast %7 : vector<64x128xbf16> to vector<1x64x128xbf16>
    tpu.vector_store %arg4[%c0_6, %c0_7, %c0_8], %10 {strides = array<i32>} : memref<1x64x128xbf16, #tpu.memory_space<vmem>>, vector<1x64x128xbf16>,
    return
  }
  func.func @transform_0(%arg0: i32) -> (i32, i32, i32) {
    %c0_i32 = arith.constant 0 : i32
    %c0_i32_0 = arith.constant 0 : i32
    %c0_i32_1 = arith.constant 0 : i32
    return %arg0, %c0_i32, %c0_i32_0 : i32, i32, i32
  }
  func.func @transform_1(%arg0: i32) -> (i32, i32) {
    %c0_i32 = arith.constant 0 : i32
    %c0_i32_0 = arith.constant 0 : i32
    %c0_i32_1 = arith.constant 0 : i32
    return %c0_i32, %c0_i32_0 : i32, i32
  }
  func.func @transform_2(%arg0: i32) -> (i32, i32) {
    %c0_i32 = arith.constant 0 : i32
    %c0_i32_0 = arith.constant 0 : i32
    %c0_i32_1 = arith.constant 0 : i32
    return %c0_i32, %c0_i32_0 : i32, i32
  }
  func.func @transform_3(%arg0: i32) -> (i32, i32, i32) {
    %c0_i32 = arith.constant 0 : i32
    %c0_i32_0 = arith.constant 0 : i32
    %c0_i32_1 = arith.constant 0 : i32
    return %arg0, %c0_i32, %c0_i32_0 : i32, i32, i32
  }
}

module attributes {stable_mosaic.version = 11 : i64} {
  func.func @_conv_block_kernel(%arg0: i32, %arg1: memref<1x342x64xbf16, #tpu.memory_space<vmem>>, %arg2: memref<9x64x32xbf16, #tpu.memory_space<vmem>>, %arg3: memref<1x32xf32, #tpu.memory_space<vmem>>, %arg4: memref<9x32x32xbf16, #tpu.memory_space<vmem>>, %arg5: memref<1x32xf32, #tpu.memory_space<vmem>>, %arg6: memref<1x288x32xf32, #tpu.memory_space<vmem>>, %arg7: memref<342x64xf32, #tpu.memory_space<vmem>>, %arg8: memref<288x32xf32, #tpu.memory_space<vmem>>, %arg9: memref<342x32xf32, #tpu.memory_space<vmem>>) attributes {dimension_semantics = [#tpu.dimension_semantics<parallel>], iteration_bounds = array<i64: 2>, scalar_prefetch = 0 : i64, scratch_operands = 3 : i64, tpu.core_type = #tpu.core_type<tc>, window_params = [{transform_indices = @transform_0, window_bounds = array<i64: 1, 342, 64>}, {pipeline_mode = #tpu.pipeline_mode<synchronous>, transform_indices = @transform_1, window_bounds = array<i64: 9, 64, 32>}, {pipeline_mode = #tpu.pipeline_mode<synchronous>, transform_indices = @transform_2, window_bounds = array<i64: 1, 32>}, {pipeline_mode = #tpu.pipeline_mode<synchronous>, transform_indices = @transform_3, window_bounds = array<i64: 9, 32, 32>}, {pipeline_mode = #tpu.pipeline_mode<synchronous>, transform_indices = @transform_4, window_bounds = array<i64: 1, 32>}, {transform_indices = @transform_5, window_bounds = array<i64: 1, 288, 32>}]} {
    %c0 = arith.constant 0 : index
    %c0_0 = arith.constant 0 : index
    %c0_1 = arith.constant 0 : index
    %0 = vector.load %arg1[%c0, %c0_0, %c0_1] : memref<1x342x64xbf16, #tpu.memory_space<vmem>>, vector<1x342x64xbf16>
    %1 = vector.shape_cast %0 : vector<1x342x64xbf16> to vector<342x64xbf16>
    %2 = arith.extf %1 : vector<342x64xbf16> to vector<342x64xf32>
    %c0_2 = arith.constant 0 : index
    %c0_3 = arith.constant 0 : index
    %3 = vector.load %arg7[%c0_2, %c0_3] : memref<342x64xf32, #tpu.memory_space<vmem>>, vector<342x64xf32>
    tpu.vector_store %arg7[%c0_2, %c0_3], %2 {strides = array<i32>} : memref<342x64xf32, #tpu.memory_space<vmem>>, vector<342x64xf32>,
    %cst = arith.constant 0.000000e+00 : f32
    %4 = vector.broadcast %cst : f32 to vector<288x32xf32>
    %c0_4 = arith.constant 0 : index
    %c0_5 = arith.constant 0 : index
    %5 = vector.load %arg8[%c0_4, %c0_5] : memref<288x32xf32, #tpu.memory_space<vmem>>, vector<288x32xf32>
    tpu.vector_store %arg8[%c0_4, %c0_5], %4 {strides = array<i32>} : memref<288x32xf32, #tpu.memory_space<vmem>>, vector<288x32xf32>,
    %c0_6 = arith.constant 0 : index
    %c0_7 = arith.constant 0 : index
    %6 = vector.load %arg7[%c0_6, %c0_7] : memref<342x64xf32, #tpu.memory_space<vmem>>, vector<288x64xf32>
    %7 = arith.truncf %6 : vector<288x64xf32> to vector<288x64xbf16>
    %c0_8 = arith.constant 0 : index
    %c0_9 = arith.constant 0 : index
    %8 = vector.load %arg8[%c0_8, %c0_9] : memref<288x32xf32, #tpu.memory_space<vmem>>, vector<288x32xf32>
    %c0_10 = arith.constant 0 : index
    %c0_11 = arith.constant 0 : index
    %c0_12 = arith.constant 0 : index
    %9 = vector.load %arg2[%c0_10, %c0_11, %c0_12] : memref<9x64x32xbf16, #tpu.memory_space<vmem>>, vector<1x64x32xbf16>
    %10 = vector.shape_cast %9 : vector<1x64x32xbf16> to vector<64x32xbf16>
    %cst_13 = arith.constant dense<0.000000e+00> : vector<288x32xf32>
    %11 = tpu.matmul %7, %10, %cst_13 {dimension_numbers = #tpu.dot_dimension_numbers<[1], [0], [0], [1], [0, 0, 1, 1], [], []>} : vector<288x64xbf16>, vector<64x32xbf16>, vector<288x32xf32> -> vector<288x32xf32>
    %12 = arith.addf %8, %11 : vector<288x32xf32>
    %c0_14 = arith.constant 0 : index
    %c0_15 = arith.constant 0 : index
    %13 = vector.load %arg8[%c0_14, %c0_15] : memref<288x32xf32, #tpu.memory_space<vmem>>, vector<288x32xf32>
    tpu.vector_store %arg8[%c0_14, %c0_15], %12 {strides = array<i32>} : memref<288x32xf32, #tpu.memory_space<vmem>>, vector<288x32xf32>,
    %c1 = arith.constant 1 : index
    %c0_16 = arith.constant 0 : index
    %14 = vector.load %arg7[%c1, %c0_16] : memref<342x64xf32, #tpu.memory_space<vmem>>, vector<288x64xf32>
    %15 = arith.truncf %14 : vector<288x64xf32> to vector<288x64xbf16>
    %c0_17 = arith.constant 0 : index
    %c0_18 = arith.constant 0 : index
    %16 = vector.load %arg8[%c0_17, %c0_18] : memref<288x32xf32, #tpu.memory_space<vmem>>, vector<288x32xf32>
    %c1_19 = arith.constant 1 : index
    %c0_20 = arith.constant 0 : index
    %c0_21 = arith.constant 0 : index
    %17 = vector.load %arg2[%c1_19, %c0_20, %c0_21] : memref<9x64x32xbf16, #tpu.memory_space<vmem>>, vector<1x64x32xbf16>
    %18 = vector.shape_cast %17 : vector<1x64x32xbf16> to vector<64x32xbf16>
    %cst_22 = arith.constant dense<0.000000e+00> : vector<288x32xf32>
    %19 = tpu.matmul %15, %18, %cst_22 {dimension_numbers = #tpu.dot_dimension_numbers<[1], [0], [0], [1], [0, 0, 1, 1], [], []>} : vector<288x64xbf16>, vector<64x32xbf16>, vector<288x32xf32> -> vector<288x32xf32>
    %20 = arith.addf %16, %19 : vector<288x32xf32>
    %c0_23 = arith.constant 0 : index
    %c0_24 = arith.constant 0 : index
    %21 = vector.load %arg8[%c0_23, %c0_24] : memref<288x32xf32, #tpu.memory_space<vmem>>, vector<288x32xf32>
    tpu.vector_store %arg8[%c0_23, %c0_24], %20 {strides = array<i32>} : memref<288x32xf32, #tpu.memory_space<vmem>>, vector<288x32xf32>,
    %c2 = arith.constant 2 : index
    %c0_25 = arith.constant 0 : index
    %22 = vector.load %arg7[%c2, %c0_25] : memref<342x64xf32, #tpu.memory_space<vmem>>, vector<288x64xf32>
    %23 = arith.truncf %22 : vector<288x64xf32> to vector<288x64xbf16>
    %c0_26 = arith.constant 0 : index
    %c0_27 = arith.constant 0 : index
    %24 = vector.load %arg8[%c0_26, %c0_27] : memref<288x32xf32, #tpu.memory_space<vmem>>, vector<288x32xf32>
    %c2_28 = arith.constant 2 : index
    %c0_29 = arith.constant 0 : index
    %c0_30 = arith.constant 0 : index
    %25 = vector.load %arg2[%c2_28, %c0_29, %c0_30] : memref<9x64x32xbf16, #tpu.memory_space<vmem>>, vector<1x64x32xbf16>
    %26 = vector.shape_cast %25 : vector<1x64x32xbf16> to vector<64x32xbf16>
    %cst_31 = arith.constant dense<0.000000e+00> : vector<288x32xf32>
    %27 = tpu.matmul %23, %26, %cst_31 {dimension_numbers = #tpu.dot_dimension_numbers<[1], [0], [0], [1], [0, 0, 1, 1], [], []>} : vector<288x64xbf16>, vector<64x32xbf16>, vector<288x32xf32> -> vector<288x32xf32>
    %28 = arith.addf %24, %27 : vector<288x32xf32>
    %c0_32 = arith.constant 0 : index
    %c0_33 = arith.constant 0 : index
    %29 = vector.load %arg8[%c0_32, %c0_33] : memref<288x32xf32, #tpu.memory_space<vmem>>, vector<288x32xf32>
    tpu.vector_store %arg8[%c0_32, %c0_33], %28 {strides = array<i32>} : memref<288x32xf32, #tpu.memory_space<vmem>>, vector<288x32xf32>,
    %c18 = arith.constant 18 : index
    %c0_34 = arith.constant 0 : index
    %30 = vector.load %arg7[%c18, %c0_34] : memref<342x64xf32, #tpu.memory_space<vmem>>, vector<288x64xf32>
    %31 = arith.truncf %30 : vector<288x64xf32> to vector<288x64xbf16>
    %c0_35 = arith.constant 0 : index
    %c0_36 = arith.constant 0 : index
    %32 = vector.load %arg8[%c0_35, %c0_36] : memref<288x32xf32, #tpu.memory_space<vmem>>, vector<288x32xf32>
    %c3 = arith.constant 3 : index
    %c0_37 = arith.constant 0 : index
    %c0_38 = arith.constant 0 : index
    %33 = vector.load %arg2[%c3, %c0_37, %c0_38] : memref<9x64x32xbf16, #tpu.memory_space<vmem>>, vector<1x64x32xbf16>
    %34 = vector.shape_cast %33 : vector<1x64x32xbf16> to vector<64x32xbf16>
    %cst_39 = arith.constant dense<0.000000e+00> : vector<288x32xf32>
    %35 = tpu.matmul %31, %34, %cst_39 {dimension_numbers = #tpu.dot_dimension_numbers<[1], [0], [0], [1], [0, 0, 1, 1], [], []>} : vector<288x64xbf16>, vector<64x32xbf16>, vector<288x32xf32> -> vector<288x32xf32>
    %36 = arith.addf %32, %35 : vector<288x32xf32>
    %c0_40 = arith.constant 0 : index
    %c0_41 = arith.constant 0 : index
    %37 = vector.load %arg8[%c0_40, %c0_41] : memref<288x32xf32, #tpu.memory_space<vmem>>, vector<288x32xf32>
    tpu.vector_store %arg8[%c0_40, %c0_41], %36 {strides = array<i32>} : memref<288x32xf32, #tpu.memory_space<vmem>>, vector<288x32xf32>,
    %c19 = arith.constant 19 : index
    %c0_42 = arith.constant 0 : index
    %38 = vector.load %arg7[%c19, %c0_42] : memref<342x64xf32, #tpu.memory_space<vmem>>, vector<288x64xf32>
    %39 = arith.truncf %38 : vector<288x64xf32> to vector<288x64xbf16>
    %c0_43 = arith.constant 0 : index
    %c0_44 = arith.constant 0 : index
    %40 = vector.load %arg8[%c0_43, %c0_44] : memref<288x32xf32, #tpu.memory_space<vmem>>, vector<288x32xf32>
    %c4 = arith.constant 4 : index
    %c0_45 = arith.constant 0 : index
    %c0_46 = arith.constant 0 : index
    %41 = vector.load %arg2[%c4, %c0_45, %c0_46] : memref<9x64x32xbf16, #tpu.memory_space<vmem>>, vector<1x64x32xbf16>
    %42 = vector.shape_cast %41 : vector<1x64x32xbf16> to vector<64x32xbf16>
    %cst_47 = arith.constant dense<0.000000e+00> : vector<288x32xf32>
    %43 = tpu.matmul %39, %42, %cst_47 {dimension_numbers = #tpu.dot_dimension_numbers<[1], [0], [0], [1], [0, 0, 1, 1], [], []>} : vector<288x64xbf16>, vector<64x32xbf16>, vector<288x32xf32> -> vector<288x32xf32>
    %44 = arith.addf %40, %43 : vector<288x32xf32>
    %c0_48 = arith.constant 0 : index
    %c0_49 = arith.constant 0 : index
    %45 = vector.load %arg8[%c0_48, %c0_49] : memref<288x32xf32, #tpu.memory_space<vmem>>, vector<288x32xf32>
    tpu.vector_store %arg8[%c0_48, %c0_49], %44 {strides = array<i32>} : memref<288x32xf32, #tpu.memory_space<vmem>>, vector<288x32xf32>,
    %c20 = arith.constant 20 : index
    %c0_50 = arith.constant 0 : index
    %46 = vector.load %arg7[%c20, %c0_50] : memref<342x64xf32, #tpu.memory_space<vmem>>, vector<288x64xf32>
    %47 = arith.truncf %46 : vector<288x64xf32> to vector<288x64xbf16>
    %c0_51 = arith.constant 0 : index
    %c0_52 = arith.constant 0 : index
    %48 = vector.load %arg8[%c0_51, %c0_52] : memref<288x32xf32, #tpu.memory_space<vmem>>, vector<288x32xf32>
    %c5 = arith.constant 5 : index
    %c0_53 = arith.constant 0 : index
    %c0_54 = arith.constant 0 : index
    %49 = vector.load %arg2[%c5, %c0_53, %c0_54] : memref<9x64x32xbf16, #tpu.memory_space<vmem>>, vector<1x64x32xbf16>
    %50 = vector.shape_cast %49 : vector<1x64x32xbf16> to vector<64x32xbf16>
    %cst_55 = arith.constant dense<0.000000e+00> : vector<288x32xf32>
    %51 = tpu.matmul %47, %50, %cst_55 {dimension_numbers = #tpu.dot_dimension_numbers<[1], [0], [0], [1], [0, 0, 1, 1], [], []>} : vector<288x64xbf16>, vector<64x32xbf16>, vector<288x32xf32> -> vector<288x32xf32>
    %52 = arith.addf %48, %51 : vector<288x32xf32>
    %c0_56 = arith.constant 0 : index
    %c0_57 = arith.constant 0 : index
    %53 = vector.load %arg8[%c0_56, %c0_57] : memref<288x32xf32, #tpu.memory_space<vmem>>, vector<288x32xf32>
    tpu.vector_store %arg8[%c0_56, %c0_57], %52 {strides = array<i32>} : memref<288x32xf32, #tpu.memory_space<vmem>>, vector<288x32xf32>,
    %c36 = arith.constant 36 : index
    %c0_58 = arith.constant 0 : index
    %54 = vector.load %arg7[%c36, %c0_58] : memref<342x64xf32, #tpu.memory_space<vmem>>, vector<288x64xf32>
    %55 = arith.truncf %54 : vector<288x64xf32> to vector<288x64xbf16>
    %c0_59 = arith.constant 0 : index
    %c0_60 = arith.constant 0 : index
    %56 = vector.load %arg8[%c0_59, %c0_60] : memref<288x32xf32, #tpu.memory_space<vmem>>, vector<288x32xf32>
    %c6 = arith.constant 6 : index
    %c0_61 = arith.constant 0 : index
    %c0_62 = arith.constant 0 : index
    %57 = vector.load %arg2[%c6, %c0_61, %c0_62] : memref<9x64x32xbf16, #tpu.memory_space<vmem>>, vector<1x64x32xbf16>
    %58 = vector.shape_cast %57 : vector<1x64x32xbf16> to vector<64x32xbf16>
    %cst_63 = arith.constant dense<0.000000e+00> : vector<288x32xf32>
    %59 = tpu.matmul %55, %58, %cst_63 {dimension_numbers = #tpu.dot_dimension_numbers<[1], [0], [0], [1], [0, 0, 1, 1], [], []>} : vector<288x64xbf16>, vector<64x32xbf16>, vector<288x32xf32> -> vector<288x32xf32>
    %60 = arith.addf %56, %59 : vector<288x32xf32>
    %c0_64 = arith.constant 0 : index
    %c0_65 = arith.constant 0 : index
    %61 = vector.load %arg8[%c0_64, %c0_65] : memref<288x32xf32, #tpu.memory_space<vmem>>, vector<288x32xf32>
    tpu.vector_store %arg8[%c0_64, %c0_65], %60 {strides = array<i32>} : memref<288x32xf32, #tpu.memory_space<vmem>>, vector<288x32xf32>,
    %c37 = arith.constant 37 : index
    %c0_66 = arith.constant 0 : index
    %62 = vector.load %arg7[%c37, %c0_66] : memref<342x64xf32, #tpu.memory_space<vmem>>, vector<288x64xf32>
    %63 = arith.truncf %62 : vector<288x64xf32> to vector<288x64xbf16>
    %c0_67 = arith.constant 0 : index
    %c0_68 = arith.constant 0 : index
    %64 = vector.load %arg8[%c0_67, %c0_68] : memref<288x32xf32, #tpu.memory_space<vmem>>, vector<288x32xf32>
    %c7 = arith.constant 7 : index
    %c0_69 = arith.constant 0 : index
    %c0_70 = arith.constant 0 : index
    %65 = vector.load %arg2[%c7, %c0_69, %c0_70] : memref<9x64x32xbf16, #tpu.memory_space<vmem>>, vector<1x64x32xbf16>
    %66 = vector.shape_cast %65 : vector<1x64x32xbf16> to vector<64x32xbf16>
    %cst_71 = arith.constant dense<0.000000e+00> : vector<288x32xf32>
    %67 = tpu.matmul %63, %66, %cst_71 {dimension_numbers = #tpu.dot_dimension_numbers<[1], [0], [0], [1], [0, 0, 1, 1], [], []>} : vector<288x64xbf16>, vector<64x32xbf16>, vector<288x32xf32> -> vector<288x32xf32>
    %68 = arith.addf %64, %67 : vector<288x32xf32>
    %c0_72 = arith.constant 0 : index
    %c0_73 = arith.constant 0 : index
    %69 = vector.load %arg8[%c0_72, %c0_73] : memref<288x32xf32, #tpu.memory_space<vmem>>, vector<288x32xf32>
    tpu.vector_store %arg8[%c0_72, %c0_73], %68 {strides = array<i32>} : memref<288x32xf32, #tpu.memory_space<vmem>>, vector<288x32xf32>,
    %c38 = arith.constant 38 : index
    %c0_74 = arith.constant 0 : index
    %70 = vector.load %arg7[%c38, %c0_74] : memref<342x64xf32, #tpu.memory_space<vmem>>, vector<288x64xf32>
    %71 = arith.truncf %70 : vector<288x64xf32> to vector<288x64xbf16>
    %c0_75 = arith.constant 0 : index
    %c0_76 = arith.constant 0 : index
    %72 = vector.load %arg8[%c0_75, %c0_76] : memref<288x32xf32, #tpu.memory_space<vmem>>, vector<288x32xf32>
    %c8 = arith.constant 8 : index
    %c0_77 = arith.constant 0 : index
    %c0_78 = arith.constant 0 : index
    %73 = vector.load %arg2[%c8, %c0_77, %c0_78] : memref<9x64x32xbf16, #tpu.memory_space<vmem>>, vector<1x64x32xbf16>
    %74 = vector.shape_cast %73 : vector<1x64x32xbf16> to vector<64x32xbf16>
    %cst_79 = arith.constant dense<0.000000e+00> : vector<288x32xf32>
    %75 = tpu.matmul %71, %74, %cst_79 {dimension_numbers = #tpu.dot_dimension_numbers<[1], [0], [0], [1], [0, 0, 1, 1], [], []>} : vector<288x64xbf16>, vector<64x32xbf16>, vector<288x32xf32> -> vector<288x32xf32>
    %76 = arith.addf %72, %75 : vector<288x32xf32>
    %c0_80 = arith.constant 0 : index
    %c0_81 = arith.constant 0 : index
    %77 = vector.load %arg8[%c0_80, %c0_81] : memref<288x32xf32, #tpu.memory_space<vmem>>, vector<288x32xf32>
    tpu.vector_store %arg8[%c0_80, %c0_81], %76 {strides = array<i32>} : memref<288x32xf32, #tpu.memory_space<vmem>>, vector<288x32xf32>,
    %c0_82 = arith.constant 0 : index
    %c0_83 = arith.constant 0 : index
    %78 = vector.load %arg8[%c0_82, %c0_83] : memref<288x32xf32, #tpu.memory_space<vmem>>, vector<288x32xf32>
    %c0_84 = arith.constant 0 : index
    %c0_85 = arith.constant 0 : index
    %79 = vector.load %arg3[%c0_84, %c0_85] : memref<1x32xf32, #tpu.memory_space<vmem>>, vector<1x32xf32>
    %80 = vector.broadcast %79 : vector<1x32xf32> to vector<288x32xf32>
    %81 = arith.addf %78, %80 : vector<288x32xf32>
    %cst_86 = arith.constant 0.000000e+00 : f32
    %82 = vector.broadcast %cst_86 : f32 to vector<288x32xf32>
    %83 = arith.maximumf %81, %82 : vector<288x32xf32>
    %c0_87 = arith.constant 0 : index
    %c0_88 = arith.constant 0 : index
    %84 = vector.load %arg8[%c0_87, %c0_88] : memref<288x32xf32, #tpu.memory_space<vmem>>, vector<288x32xf32>
    tpu.vector_store %arg8[%c0_87, %c0_88], %83 {strides = array<i32>} : memref<288x32xf32, #tpu.memory_space<vmem>>, vector<288x32xf32>,
    %85 = tpu.iota {dimensions = array<i32: 0>} : vector<288x1xi32>
    %c18_i32 = arith.constant 18 : i32
    %c0_i32 = arith.constant 0 : i32
    %86 = arith.cmpi eq, %c18_i32, %c0_i32 : i32
    %c1_i32 = arith.constant 1 : i32
    %87 = arith.select %86, %c1_i32, %c18_i32 : i32
    %88 = vector.broadcast %87 : i32 to vector<288x1xi32>
    %89 = arith.remsi %85, %88 : vector<288x1xi32>
    %c0_i32_89 = arith.constant 0 : i32
    %90 = vector.broadcast %c0_i32_89 : i32 to vector<288x1xi32>
    %91 = arith.cmpi ne, %89, %90 : vector<288x1xi32>
    %c0_i32_90 = arith.constant 0 : i32
    %92 = vector.broadcast %c0_i32_90 : i32 to vector<288x1xi32>
    %93 = arith.cmpi slt, %89, %92 : vector<288x1xi32>
    %c0_i32_91 = arith.constant 0 : i32
    %94 = arith.cmpi slt, %87, %c0_i32_91 : i32
    %95 = vector.broadcast %94 : i1 to vector<288x1xi1>
    %96 = vector.broadcast %95 : vector<288x1xi1> to vector<288x1xi1>
    %97 = arith.xori %93, %96 : vector<288x1xi1>
    %98 = arith.andi %97, %91 : vector<288x1xi1>
    %99 = vector.broadcast %87 : i32 to vector<288x1xi32>
    %100 = arith.addi %89, %99 : vector<288x1xi32>
    %101 = arith.select %98, %100, %89 : vector<288x1xi1>, vector<288x1xi32>
    %c16_i32 = arith.constant 16 : i32
    %102 = vector.broadcast %c16_i32 : i32 to vector<288x1xi32>
    %103 = arith.cmpi slt, %101, %102 : vector<288x1xi32>
    %c0_92 = arith.constant 0 : index
    %c0_93 = arith.constant 0 : index
    %104 = vector.load %arg8[%c0_92, %c0_93] : memref<288x32xf32, #tpu.memory_space<vmem>>, vector<288x32xf32>
    %cst_94 = arith.constant 0.000000e+00 : f32
    %105 = vector.shape_cast %103 : vector<288x1xi1> to vector<288x1xi1>
    %106 = vector.broadcast %105 : vector<288x1xi1> to vector<288x32xi1>
    %107 = vector.broadcast %cst_94 : f32 to vector<288x32xf32>
    %108 = arith.select %106, %104, %107 : vector<288x32xi1>, vector<288x32xf32>
    %cst_95 = arith.constant 0.000000e+00 : f32
    %109 = vector.broadcast %cst_95 : f32 to vector<342x32xf32>
    %c0_96 = arith.constant 0 : index
    %c0_97 = arith.constant 0 : index
    %110 = vector.load %arg9[%c0_96, %c0_97] : memref<342x32xf32, #tpu.memory_space<vmem>>, vector<342x32xf32>
    tpu.vector_store %arg9[%c0_96, %c0_97], %109 {strides = array<i32>} : memref<342x32xf32, #tpu.memory_space<vmem>>, vector<342x32xf32>,
    %c19_98 = arith.constant 19 : index
    %c0_99 = arith.constant 0 : index
    %111 = vector.load %arg9[%c19_98, %c0_99] : memref<342x32xf32, #tpu.memory_space<vmem>>, vector<288x32xf32>
    tpu.vector_store %arg9[%c19_98, %c0_99], %108 {strides = array<i32>} : memref<342x32xf32, #tpu.memory_space<vmem>>, vector<288x32xf32>,
    %cst_100 = arith.constant 0.000000e+00 : f32
    %112 = vector.broadcast %cst_100 : f32 to vector<288x32xf32>
    %c0_101 = arith.constant 0 : index
    %c0_102 = arith.constant 0 : index
    %c0_103 = arith.constant 0 : index
    %113 = vector.load %arg6[%c0_101, %c0_102, %c0_103] : memref<1x288x32xf32, #tpu.memory_space<vmem>>, vector<1x288x32xf32>
    %114 = vector.shape_cast %113 : vector<1x288x32xf32> to vector<288x32xf32>
    %115 = vector.shape_cast %112 : vector<288x32xf32> to vector<1x288x32xf32>
    tpu.vector_store %arg6[%c0_101, %c0_102, %c0_103], %115 {strides = array<i32>} : memref<1x288x32xf32, #tpu.memory_space<vmem>>, vector<1x288x32xf32>,
    %c0_104 = arith.constant 0 : index
    %c0_105 = arith.constant 0 : index
    %116 = vector.load %arg9[%c0_104, %c0_105] : memref<342x32xf32, #tpu.memory_space<vmem>>, vector<288x32xf32>
    %117 = arith.truncf %116 : vector<288x32xf32> to vector<288x32xbf16>
    %c0_106 = arith.constant 0 : index
    %c0_107 = arith.constant 0 : index
    %c0_108 = arith.constant 0 : index
    %118 = vector.load %arg6[%c0_106, %c0_107, %c0_108] : memref<1x288x32xf32, #tpu.memory_space<vmem>>, vector<1x288x32xf32>
    %119 = vector.shape_cast %118 : vector<1x288x32xf32> to vector<288x32xf32>
    %c0_109 = arith.constant 0 : index
    %c0_110 = arith.constant 0 : index
    %c0_111 = arith.constant 0 : index
    %120 = vector.load %arg4[%c0_109, %c0_110, %c0_111] : memref<9x32x32xbf16, #tpu.memory_space<vmem>>, vector<1x32x32xbf16>
    %121 = vector.shape_cast %120 : vector<1x32x32xbf16> to vector<32x32xbf16>
    %cst_112 = arith.constant dense<0.000000e+00> : vector<288x32xf32>
    %122 = tpu.matmul %117, %121, %cst_112 {dimension_numbers = #tpu.dot_dimension_numbers<[1], [0], [0], [1], [0, 0, 1, 1], [], []>} : vector<288x32xbf16>, vector<32x32xbf16>, vector<288x32xf32> -> vector<288x32xf32>
    %123 = arith.addf %119, %122 : vector<288x32xf32>
    %c0_113 = arith.constant 0 : index
    %c0_114 = arith.constant 0 : index
    %c0_115 = arith.constant 0 : index
    %124 = vector.load %arg6[%c0_113, %c0_114, %c0_115] : memref<1x288x32xf32, #tpu.memory_space<vmem>>, vector<1x288x32xf32>
    %125 = vector.shape_cast %124 : vector<1x288x32xf32> to vector<288x32xf32>
    %126 = vector.shape_cast %123 : vector<288x32xf32> to vector<1x288x32xf32>
    tpu.vector_store %arg6[%c0_113, %c0_114, %c0_115], %126 {strides = array<i32>} : memref<1x288x32xf32, #tpu.memory_space<vmem>>, vector<1x288x32xf32>,
    %c1_116 = arith.constant 1 : index
    %c0_117 = arith.constant 0 : index
    %127 = vector.load %arg9[%c1_116, %c0_117] : memref<342x32xf32, #tpu.memory_space<vmem>>, vector<288x32xf32>
    %128 = arith.truncf %127 : vector<288x32xf32> to vector<288x32xbf16>
    %c0_118 = arith.constant 0 : index
    %c0_119 = arith.constant 0 : index
    %c0_120 = arith.constant 0 : index
    %129 = vector.load %arg6[%c0_118, %c0_119, %c0_120] : memref<1x288x32xf32, #tpu.memory_space<vmem>>, vector<1x288x32xf32>
    %130 = vector.shape_cast %129 : vector<1x288x32xf32> to vector<288x32xf32>
    %c1_121 = arith.constant 1 : index
    %c0_122 = arith.constant 0 : index
    %c0_123 = arith.constant 0 : index
    %131 = vector.load %arg4[%c1_121, %c0_122, %c0_123] : memref<9x32x32xbf16, #tpu.memory_space<vmem>>, vector<1x32x32xbf16>
    %132 = vector.shape_cast %131 : vector<1x32x32xbf16> to vector<32x32xbf16>
    %cst_124 = arith.constant dense<0.000000e+00> : vector<288x32xf32>
    %133 = tpu.matmul %128, %132, %cst_124 {dimension_numbers = #tpu.dot_dimension_numbers<[1], [0], [0], [1], [0, 0, 1, 1], [], []>} : vector<288x32xbf16>, vector<32x32xbf16>, vector<288x32xf32> -> vector<288x32xf32>
    %134 = arith.addf %130, %133 : vector<288x32xf32>
    %c0_125 = arith.constant 0 : index
    %c0_126 = arith.constant 0 : index
    %c0_127 = arith.constant 0 : index
    %135 = vector.load %arg6[%c0_125, %c0_126, %c0_127] : memref<1x288x32xf32, #tpu.memory_space<vmem>>, vector<1x288x32xf32>
    %136 = vector.shape_cast %135 : vector<1x288x32xf32> to vector<288x32xf32>
    %137 = vector.shape_cast %134 : vector<288x32xf32> to vector<1x288x32xf32>
    tpu.vector_store %arg6[%c0_125, %c0_126, %c0_127], %137 {strides = array<i32>} : memref<1x288x32xf32, #tpu.memory_space<vmem>>, vector<1x288x32xf32>,
    %c2_128 = arith.constant 2 : index
    %c0_129 = arith.constant 0 : index
    %138 = vector.load %arg9[%c2_128, %c0_129] : memref<342x32xf32, #tpu.memory_space<vmem>>, vector<288x32xf32>
    %139 = arith.truncf %138 : vector<288x32xf32> to vector<288x32xbf16>
    %c0_130 = arith.constant 0 : index
    %c0_131 = arith.constant 0 : index
    %c0_132 = arith.constant 0 : index
    %140 = vector.load %arg6[%c0_130, %c0_131, %c0_132] : memref<1x288x32xf32, #tpu.memory_space<vmem>>, vector<1x288x32xf32>
    %141 = vector.shape_cast %140 : vector<1x288x32xf32> to vector<288x32xf32>
    %c2_133 = arith.constant 2 : index
    %c0_134 = arith.constant 0 : index
    %c0_135 = arith.constant 0 : index
    %142 = vector.load %arg4[%c2_133, %c0_134, %c0_135] : memref<9x32x32xbf16, #tpu.memory_space<vmem>>, vector<1x32x32xbf16>
    %143 = vector.shape_cast %142 : vector<1x32x32xbf16> to vector<32x32xbf16>
    %cst_136 = arith.constant dense<0.000000e+00> : vector<288x32xf32>
    %144 = tpu.matmul %139, %143, %cst_136 {dimension_numbers = #tpu.dot_dimension_numbers<[1], [0], [0], [1], [0, 0, 1, 1], [], []>} : vector<288x32xbf16>, vector<32x32xbf16>, vector<288x32xf32> -> vector<288x32xf32>
    %145 = arith.addf %141, %144 : vector<288x32xf32>
    %c0_137 = arith.constant 0 : index
    %c0_138 = arith.constant 0 : index
    %c0_139 = arith.constant 0 : index
    %146 = vector.load %arg6[%c0_137, %c0_138, %c0_139] : memref<1x288x32xf32, #tpu.memory_space<vmem>>, vector<1x288x32xf32>
    %147 = vector.shape_cast %146 : vector<1x288x32xf32> to vector<288x32xf32>
    %148 = vector.shape_cast %145 : vector<288x32xf32> to vector<1x288x32xf32>
    tpu.vector_store %arg6[%c0_137, %c0_138, %c0_139], %148 {strides = array<i32>} : memref<1x288x32xf32, #tpu.memory_space<vmem>>, vector<1x288x32xf32>,
    %c18_140 = arith.constant 18 : index
    %c0_141 = arith.constant 0 : index
    %149 = vector.load %arg9[%c18_140, %c0_141] : memref<342x32xf32, #tpu.memory_space<vmem>>, vector<288x32xf32>
    %150 = arith.truncf %149 : vector<288x32xf32> to vector<288x32xbf16>
    %c0_142 = arith.constant 0 : index
    %c0_143 = arith.constant 0 : index
    %c0_144 = arith.constant 0 : index
    %151 = vector.load %arg6[%c0_142, %c0_143, %c0_144] : memref<1x288x32xf32, #tpu.memory_space<vmem>>, vector<1x288x32xf32>
    %152 = vector.shape_cast %151 : vector<1x288x32xf32> to vector<288x32xf32>
    %c3_145 = arith.constant 3 : index
    %c0_146 = arith.constant 0 : index
    %c0_147 = arith.constant 0 : index
    %153 = vector.load %arg4[%c3_145, %c0_146, %c0_147] : memref<9x32x32xbf16, #tpu.memory_space<vmem>>, vector<1x32x32xbf16>
    %154 = vector.shape_cast %153 : vector<1x32x32xbf16> to vector<32x32xbf16>
    %cst_148 = arith.constant dense<0.000000e+00> : vector<288x32xf32>
    %155 = tpu.matmul %150, %154, %cst_148 {dimension_numbers = #tpu.dot_dimension_numbers<[1], [0], [0], [1], [0, 0, 1, 1], [], []>} : vector<288x32xbf16>, vector<32x32xbf16>, vector<288x32xf32> -> vector<288x32xf32>
    %156 = arith.addf %152, %155 : vector<288x32xf32>
    %c0_149 = arith.constant 0 : index
    %c0_150 = arith.constant 0 : index
    %c0_151 = arith.constant 0 : index
    %157 = vector.load %arg6[%c0_149, %c0_150, %c0_151] : memref<1x288x32xf32, #tpu.memory_space<vmem>>, vector<1x288x32xf32>
    %158 = vector.shape_cast %157 : vector<1x288x32xf32> to vector<288x32xf32>
    %159 = vector.shape_cast %156 : vector<288x32xf32> to vector<1x288x32xf32>
    tpu.vector_store %arg6[%c0_149, %c0_150, %c0_151], %159 {strides = array<i32>} : memref<1x288x32xf32, #tpu.memory_space<vmem>>, vector<1x288x32xf32>,
    %c19_152 = arith.constant 19 : index
    %c0_153 = arith.constant 0 : index
    %160 = vector.load %arg9[%c19_152, %c0_153] : memref<342x32xf32, #tpu.memory_space<vmem>>, vector<288x32xf32>
    %161 = arith.truncf %160 : vector<288x32xf32> to vector<288x32xbf16>
    %c0_154 = arith.constant 0 : index
    %c0_155 = arith.constant 0 : index
    %c0_156 = arith.constant 0 : index
    %162 = vector.load %arg6[%c0_154, %c0_155, %c0_156] : memref<1x288x32xf32, #tpu.memory_space<vmem>>, vector<1x288x32xf32>
    %163 = vector.shape_cast %162 : vector<1x288x32xf32> to vector<288x32xf32>
    %c4_157 = arith.constant 4 : index
    %c0_158 = arith.constant 0 : index
    %c0_159 = arith.constant 0 : index
    %164 = vector.load %arg4[%c4_157, %c0_158, %c0_159] : memref<9x32x32xbf16, #tpu.memory_space<vmem>>, vector<1x32x32xbf16>
    %165 = vector.shape_cast %164 : vector<1x32x32xbf16> to vector<32x32xbf16>
    %cst_160 = arith.constant dense<0.000000e+00> : vector<288x32xf32>
    %166 = tpu.matmul %161, %165, %cst_160 {dimension_numbers = #tpu.dot_dimension_numbers<[1], [0], [0], [1], [0, 0, 1, 1], [], []>} : vector<288x32xbf16>, vector<32x32xbf16>, vector<288x32xf32> -> vector<288x32xf32>
    %167 = arith.addf %163, %166 : vector<288x32xf32>
    %c0_161 = arith.constant 0 : index
    %c0_162 = arith.constant 0 : index
    %c0_163 = arith.constant 0 : index
    %168 = vector.load %arg6[%c0_161, %c0_162, %c0_163] : memref<1x288x32xf32, #tpu.memory_space<vmem>>, vector<1x288x32xf32>
    %169 = vector.shape_cast %168 : vector<1x288x32xf32> to vector<288x32xf32>
    %170 = vector.shape_cast %167 : vector<288x32xf32> to vector<1x288x32xf32>
    tpu.vector_store %arg6[%c0_161, %c0_162, %c0_163], %170 {strides = array<i32>} : memref<1x288x32xf32, #tpu.memory_space<vmem>>, vector<1x288x32xf32>,
    %c20_164 = arith.constant 20 : index
    %c0_165 = arith.constant 0 : index
    %171 = vector.load %arg9[%c20_164, %c0_165] : memref<342x32xf32, #tpu.memory_space<vmem>>, vector<288x32xf32>
    %172 = arith.truncf %171 : vector<288x32xf32> to vector<288x32xbf16>
    %c0_166 = arith.constant 0 : index
    %c0_167 = arith.constant 0 : index
    %c0_168 = arith.constant 0 : index
    %173 = vector.load %arg6[%c0_166, %c0_167, %c0_168] : memref<1x288x32xf32, #tpu.memory_space<vmem>>, vector<1x288x32xf32>
    %174 = vector.shape_cast %173 : vector<1x288x32xf32> to vector<288x32xf32>
    %c5_169 = arith.constant 5 : index
    %c0_170 = arith.constant 0 : index
    %c0_171 = arith.constant 0 : index
    %175 = vector.load %arg4[%c5_169, %c0_170, %c0_171] : memref<9x32x32xbf16, #tpu.memory_space<vmem>>, vector<1x32x32xbf16>
    %176 = vector.shape_cast %175 : vector<1x32x32xbf16> to vector<32x32xbf16>
    %cst_172 = arith.constant dense<0.000000e+00> : vector<288x32xf32>
    %177 = tpu.matmul %172, %176, %cst_172 {dimension_numbers = #tpu.dot_dimension_numbers<[1], [0], [0], [1], [0, 0, 1, 1], [], []>} : vector<288x32xbf16>, vector<32x32xbf16>, vector<288x32xf32> -> vector<288x32xf32>
    %178 = arith.addf %174, %177 : vector<288x32xf32>
    %c0_173 = arith.constant 0 : index
    %c0_174 = arith.constant 0 : index
    %c0_175 = arith.constant 0 : index
    %179 = vector.load %arg6[%c0_173, %c0_174, %c0_175] : memref<1x288x32xf32, #tpu.memory_space<vmem>>, vector<1x288x32xf32>
    %180 = vector.shape_cast %179 : vector<1x288x32xf32> to vector<288x32xf32>
    %181 = vector.shape_cast %178 : vector<288x32xf32> to vector<1x288x32xf32>
    tpu.vector_store %arg6[%c0_173, %c0_174, %c0_175], %181 {strides = array<i32>} : memref<1x288x32xf32, #tpu.memory_space<vmem>>, vector<1x288x32xf32>,
    %c36_176 = arith.constant 36 : index
    %c0_177 = arith.constant 0 : index
    %182 = vector.load %arg9[%c36_176, %c0_177] : memref<342x32xf32, #tpu.memory_space<vmem>>, vector<288x32xf32>
    %183 = arith.truncf %182 : vector<288x32xf32> to vector<288x32xbf16>
    %c0_178 = arith.constant 0 : index
    %c0_179 = arith.constant 0 : index
    %c0_180 = arith.constant 0 : index
    %184 = vector.load %arg6[%c0_178, %c0_179, %c0_180] : memref<1x288x32xf32, #tpu.memory_space<vmem>>, vector<1x288x32xf32>
    %185 = vector.shape_cast %184 : vector<1x288x32xf32> to vector<288x32xf32>
    %c6_181 = arith.constant 6 : index
    %c0_182 = arith.constant 0 : index
    %c0_183 = arith.constant 0 : index
    %186 = vector.load %arg4[%c6_181, %c0_182, %c0_183] : memref<9x32x32xbf16, #tpu.memory_space<vmem>>, vector<1x32x32xbf16>
    %187 = vector.shape_cast %186 : vector<1x32x32xbf16> to vector<32x32xbf16>
    %cst_184 = arith.constant dense<0.000000e+00> : vector<288x32xf32>
    %188 = tpu.matmul %183, %187, %cst_184 {dimension_numbers = #tpu.dot_dimension_numbers<[1], [0], [0], [1], [0, 0, 1, 1], [], []>} : vector<288x32xbf16>, vector<32x32xbf16>, vector<288x32xf32> -> vector<288x32xf32>
    %189 = arith.addf %185, %188 : vector<288x32xf32>
    %c0_185 = arith.constant 0 : index
    %c0_186 = arith.constant 0 : index
    %c0_187 = arith.constant 0 : index
    %190 = vector.load %arg6[%c0_185, %c0_186, %c0_187] : memref<1x288x32xf32, #tpu.memory_space<vmem>>, vector<1x288x32xf32>
    %191 = vector.shape_cast %190 : vector<1x288x32xf32> to vector<288x32xf32>
    %192 = vector.shape_cast %189 : vector<288x32xf32> to vector<1x288x32xf32>
    tpu.vector_store %arg6[%c0_185, %c0_186, %c0_187], %192 {strides = array<i32>} : memref<1x288x32xf32, #tpu.memory_space<vmem>>, vector<1x288x32xf32>,
    %c37_188 = arith.constant 37 : index
    %c0_189 = arith.constant 0 : index
    %193 = vector.load %arg9[%c37_188, %c0_189] : memref<342x32xf32, #tpu.memory_space<vmem>>, vector<288x32xf32>
    %194 = arith.truncf %193 : vector<288x32xf32> to vector<288x32xbf16>
    %c0_190 = arith.constant 0 : index
    %c0_191 = arith.constant 0 : index
    %c0_192 = arith.constant 0 : index
    %195 = vector.load %arg6[%c0_190, %c0_191, %c0_192] : memref<1x288x32xf32, #tpu.memory_space<vmem>>, vector<1x288x32xf32>
    %196 = vector.shape_cast %195 : vector<1x288x32xf32> to vector<288x32xf32>
    %c7_193 = arith.constant 7 : index
    %c0_194 = arith.constant 0 : index
    %c0_195 = arith.constant 0 : index
    %197 = vector.load %arg4[%c7_193, %c0_194, %c0_195] : memref<9x32x32xbf16, #tpu.memory_space<vmem>>, vector<1x32x32xbf16>
    %198 = vector.shape_cast %197 : vector<1x32x32xbf16> to vector<32x32xbf16>
    %cst_196 = arith.constant dense<0.000000e+00> : vector<288x32xf32>
    %199 = tpu.matmul %194, %198, %cst_196 {dimension_numbers = #tpu.dot_dimension_numbers<[1], [0], [0], [1], [0, 0, 1, 1], [], []>} : vector<288x32xbf16>, vector<32x32xbf16>, vector<288x32xf32> -> vector<288x32xf32>
    %200 = arith.addf %196, %199 : vector<288x32xf32>
    %c0_197 = arith.constant 0 : index
    %c0_198 = arith.constant 0 : index
    %c0_199 = arith.constant 0 : index
    %201 = vector.load %arg6[%c0_197, %c0_198, %c0_199] : memref<1x288x32xf32, #tpu.memory_space<vmem>>, vector<1x288x32xf32>
    %202 = vector.shape_cast %201 : vector<1x288x32xf32> to vector<288x32xf32>
    %203 = vector.shape_cast %200 : vector<288x32xf32> to vector<1x288x32xf32>
    tpu.vector_store %arg6[%c0_197, %c0_198, %c0_199], %203 {strides = array<i32>} : memref<1x288x32xf32, #tpu.memory_space<vmem>>, vector<1x288x32xf32>,
    %c38_200 = arith.constant 38 : index
    %c0_201 = arith.constant 0 : index
    %204 = vector.load %arg9[%c38_200, %c0_201] : memref<342x32xf32, #tpu.memory_space<vmem>>, vector<288x32xf32>
    %205 = arith.truncf %204 : vector<288x32xf32> to vector<288x32xbf16>
    %c0_202 = arith.constant 0 : index
    %c0_203 = arith.constant 0 : index
    %c0_204 = arith.constant 0 : index
    %206 = vector.load %arg6[%c0_202, %c0_203, %c0_204] : memref<1x288x32xf32, #tpu.memory_space<vmem>>, vector<1x288x32xf32>
    %207 = vector.shape_cast %206 : vector<1x288x32xf32> to vector<288x32xf32>
    %c8_205 = arith.constant 8 : index
    %c0_206 = arith.constant 0 : index
    %c0_207 = arith.constant 0 : index
    %208 = vector.load %arg4[%c8_205, %c0_206, %c0_207] : memref<9x32x32xbf16, #tpu.memory_space<vmem>>, vector<1x32x32xbf16>
    %209 = vector.shape_cast %208 : vector<1x32x32xbf16> to vector<32x32xbf16>
    %cst_208 = arith.constant dense<0.000000e+00> : vector<288x32xf32>
    %210 = tpu.matmul %205, %209, %cst_208 {dimension_numbers = #tpu.dot_dimension_numbers<[1], [0], [0], [1], [0, 0, 1, 1], [], []>} : vector<288x32xbf16>, vector<32x32xbf16>, vector<288x32xf32> -> vector<288x32xf32>
    %211 = arith.addf %207, %210 : vector<288x32xf32>
    %c0_209 = arith.constant 0 : index
    %c0_210 = arith.constant 0 : index
    %c0_211 = arith.constant 0 : index
    %212 = vector.load %arg6[%c0_209, %c0_210, %c0_211] : memref<1x288x32xf32, #tpu.memory_space<vmem>>, vector<1x288x32xf32>
    %213 = vector.shape_cast %212 : vector<1x288x32xf32> to vector<288x32xf32>
    %214 = vector.shape_cast %211 : vector<288x32xf32> to vector<1x288x32xf32>
    tpu.vector_store %arg6[%c0_209, %c0_210, %c0_211], %214 {strides = array<i32>} : memref<1x288x32xf32, #tpu.memory_space<vmem>>, vector<1x288x32xf32>,
    %c0_212 = arith.constant 0 : index
    %c0_213 = arith.constant 0 : index
    %c0_214 = arith.constant 0 : index
    %215 = vector.load %arg6[%c0_212, %c0_213, %c0_214] : memref<1x288x32xf32, #tpu.memory_space<vmem>>, vector<1x288x32xf32>
    %216 = vector.shape_cast %215 : vector<1x288x32xf32> to vector<288x32xf32>
    %c0_215 = arith.constant 0 : index
    %c0_216 = arith.constant 0 : index
    %217 = vector.load %arg5[%c0_215, %c0_216] : memref<1x32xf32, #tpu.memory_space<vmem>>, vector<1x32xf32>
    %218 = vector.broadcast %217 : vector<1x32xf32> to vector<288x32xf32>
    %219 = arith.addf %216, %218 : vector<288x32xf32>
    %cst_217 = arith.constant 0.000000e+00 : f32
    %220 = vector.broadcast %cst_217 : f32 to vector<288x32xf32>
    %221 = arith.maximumf %219, %220 : vector<288x32xf32>
    %c0_218 = arith.constant 0 : index
    %c0_219 = arith.constant 0 : index
    %c0_220 = arith.constant 0 : index
    %222 = vector.load %arg6[%c0_218, %c0_219, %c0_220] : memref<1x288x32xf32, #tpu.memory_space<vmem>>, vector<1x288x32xf32>
    %223 = vector.shape_cast %222 : vector<1x288x32xf32> to vector<288x32xf32>
    %224 = vector.shape_cast %221 : vector<288x32xf32> to vector<1x288x32xf32>
    tpu.vector_store %arg6[%c0_218, %c0_219, %c0_220], %224 {strides = array<i32>} : memref<1x288x32xf32, #tpu.memory_space<vmem>>, vector<1x288x32xf32>,
    return
  }
  func.func @transform_0(%arg0: i32) -> (i32, i32, i32) {
    %c0_i32 = arith.constant 0 : i32
    %c0_i32_0 = arith.constant 0 : i32
    %c0_i32_1 = arith.constant 0 : i32
    return %arg0, %c0_i32, %c0_i32_0 : i32, i32, i32
  }
  func.func @transform_1(%arg0: i32) -> (i32, i32, i32) {
    %c0_i32 = arith.constant 0 : i32
    %c0_i32_0 = arith.constant 0 : i32
    %c0_i32_1 = arith.constant 0 : i32
    %c0_i32_2 = arith.constant 0 : i32
    return %c0_i32, %c0_i32_0, %c0_i32_1 : i32, i32, i32
  }
  func.func @transform_2(%arg0: i32) -> (i32, i32) {
    %c0_i32 = arith.constant 0 : i32
    %c0_i32_0 = arith.constant 0 : i32
    %c0_i32_1 = arith.constant 0 : i32
    return %c0_i32, %c0_i32_0 : i32, i32
  }
  func.func @transform_3(%arg0: i32) -> (i32, i32, i32) {
    %c0_i32 = arith.constant 0 : i32
    %c0_i32_0 = arith.constant 0 : i32
    %c0_i32_1 = arith.constant 0 : i32
    %c0_i32_2 = arith.constant 0 : i32
    return %c0_i32, %c0_i32_0, %c0_i32_1 : i32, i32, i32
  }
  func.func @transform_4(%arg0: i32) -> (i32, i32) {
    %c0_i32 = arith.constant 0 : i32
    %c0_i32_0 = arith.constant 0 : i32
    %c0_i32_1 = arith.constant 0 : i32
    return %c0_i32, %c0_i32_0 : i32, i32
  }
  func.func @transform_5(%arg0: i32) -> (i32, i32, i32) {
    %c0_i32 = arith.constant 0 : i32
    %c0_i32_0 = arith.constant 0 : i32
    %c0_i32_1 = arith.constant 0 : i32
    return %arg0, %c0_i32, %c0_i32_0 : i32, i32, i32
  }
}

</mosaic_0001>

<llo_original>
// kernel: tile.9
$region0: #{tile.9}
  %s0 = inlined_call_operand.vmem [shape: f32[4,32], index: 0, kind: input, shape index: {}]
  %s1 = inlined_call_operand.vmem [shape: f32[1,128], index: 1, kind: output, shape index: {}]
  $region1: #{tile.9} parent=0
    #allocation0 [shape = 'u8[4096]{0}', space=vmem, size = 0x1000, scoped, tag = 'scoped mem for output reshape']
    #allocation1 [shape = 'u8[4096]{0}', space=vmem, size = 0x1000, scoped, tag = 'scoped mem for input reshape']
    %s3 = ssub.s32 16, 1
    %v4 = vld [vmem:[%s0] sm:%s3]
    %5 = vst [vmem:[#allocation1] sm:%s3] %v4
    %v6 = vld [vmem:[#allocation1] sm:$0x1]
    %vm7 = vcmask 261120
    %8 = vst.msk [vmem:[#allocation0] sm:$0x1] %vm7, %v6
    %s9 = scalar_lea.vmem [#allocation1], 3
    %v10 = vld [vmem:[%s9] sm:$0x1]
    %11 = vrot.lane.b32.xlu0 %v10, 96
    %v12 = vpop.permute.xlu0 %11
    %vm13 = vcmask 1048320
    %14 = vst.msk [vmem:[#allocation0] sm:$0x1] %vm13, %v12
    %s15 = scalar_lea.vmem [#allocation1], 2
    %v16 = vld [vmem:[%s15] sm:$0x1]
    %17 = vrot.lane.b32.xlu0 %v16, 64
    %v18 = vpop.permute.xlu0 %17
    %vm19 = vcmask 785920
    %20 = vst.msk [vmem:[#allocation0] sm:$0x1] %vm19, %v18
    %s21 = scalar_lea.vmem [#allocation1], 1
    %v22 = vld [vmem:[%s21] sm:$0x1]
    %23 = vrot.lane.b32.xlu0 %v22, 32
    %v24 = vpop.permute.xlu0 %23
    %vm25 = vcmask 523520
    %26 = vst.msk [vmem:[#allocation0] sm:$0x1] %vm25, %v24
    %s28 = ssub.s32 2, 1
    %v29 = vld [vmem:[#allocation0] sm:%s28]
    %s31 = ssub.s32 2, 1
    %32 = vst [vmem:[%s1] sm:%s31] %v29

// kernel: tile.8
$region0: #{tile.8}
  #allocation2 [shape = 's32[1]{0}', space=sflag, size = 0x4, scoped, tag = 'scoped memory for tile.8']
  %s0 = inlined_call_operand.hbm [shape: f32[32], index: 0, kind: input, shape index: {}]
  %s1 = inlined_call_operand.vmem [shape: f32[4,32], index: 1, kind: output, shape index: {}]
  $region1: #{tile.8} parent=0
    #allocation0 [shape = 'u8[512]{0}', space=vmem, size = 0x400, scoped, tag = 'operand span for operand 0']
    #allocation1 [shape = 's32[1]{0}', space=sflag, size = 0x4, scoped, tag = 'scoped memory for tile.8']
    %2 = vsyncpa [#allocation1], 0
    // Predicated region
    $region2: #{tile.8} parent=1 // pred_check
      _
    $region3: #{tile.8} parent=1 // pred_check_branch
      %4 = sbr.rel (0) target = $region5
    $region4: #{tile.8} parent=1 // pred_region
      %6 = vsyncadd [#allocation1], 0
      %s8 = sshll.u32 %s0, 4
      %s9 = int_to_ptr.hbm [resolvable:$true] %s8
      %s10 = sshll.u32 [#allocation0], 4
      %s11 = int_to_ptr.vmem [resolvable:$true] %s10
      %13 = dma.hbm_to_vmem [thread:$0]  %s9, 16, %s11, [#allocation1]
    $region5: #{tile.8} parent=1 // pred_fallthru
      _
    // Predicated region
    $region6: #{tile.8} parent=1 // pred_check
      _
    $region7: #{tile.8} parent=1 // pred_check_branch
      %15 = sbr.rel (0) target = $region9
    $region8: #{tile.8} parent=1 // pred_region
      %17 = dma.done [#allocation1], 16
    $region9: #{tile.8} parent=1 // pred_fallthru
      _
    %v18 = vld [vmem:[#allocation0] ss:$0 sm:$0xff]
    %19 = vst [vmem:[%s1] sm:$0xf] %v18
    %20 = vsyncpa [#allocation1], 1

// kernel: decoder_block_forward.2
$region0: #{decoder_block_forward.2}
  #allocation0 [shape = 'u32[]', space=smem, size = 0x4, offset = 0x4, fixed_abs, tag = 'smem constant byte address 0x4 - core index']
  #allocation1 [shape = 'u32[72,128]{1,0:T(1,128)}', space=vmem, size = 0x9000, scoped, tag = 'internal scratch']
  %s0 = inlined_call_operand.vmem [shape: bf16[2,64,64], index: 0, kind: input, shape index: {}]
  %s1 = inlined_call_operand.vmem [shape: bf16[64,128], index: 1, kind: input, shape index: {}]
  %s2 = inlined_call_operand.vmem [shape: f32[1,128], index: 2, kind: input, shape index: {}]
  %s3 = inlined_call_operand.vmem [shape: bf16[2,64,128], index: 3, kind: output, shape index: {}]
  %s4 = sld [smem:[#allocation0]]
  $region45: #{decoder_block_forward.2} parent=0
    _
  %s6 = ssub.s32 1, %s4
  %s7 = scalar_select 0, %s6, %s4
  loop: start=0, step=1, limit=4
  $region2: #{decoder_block_forward.2} parent=0 // loop_pre_header
    _
  $region3: #{decoder_block_forward.2} parent=0 // loop_header
    %s9 = sphi 0, %s13
    %p10 = scmp.ge.s32.totalorder %s9, 4
    %s19 = sphi 0, %s21
    %s22 = sphi 0, %s19
    %s23 = sphi 0, %s22
    %s39 = sphi 0, %s23
    %s43 = sphi 0, %s43
    %s45 = sphi 0, %s43
    %s46 = sphi 0, %s45
    %s60 = sphi 0, %s46
    %s64 = sphi 0, %s64
    %s66 = sphi 0, %s64
    %s67 = sphi 0, %s66
    %s81 = sphi 0, %s67
    %s87 = sphi 0, %s89
    %s90 = sphi 0, %s87
    %s91 = sphi 0, %s90
    %s107 = sphi 0, %s91
  $region4: #{decoder_block_forward.2} parent=0 // loop_header_branch
    %12 = sbr.rel (%p10) target = $region8
  $region5: #{decoder_block_forward.2} parent=0 // loop_body
    %s14 = ssub.s32 %s9, 1
    %s15 = ssub.s32 %s9, 2
    %s16 = sadd.s32 %s9, 1
    %s17 = ssub.s32 %s9, %s16
    %p18 = scmp.eq.s32.totalorder %s17, 0
    %s20 = sadd.s32 %s19, 1
    %s21 = scalar_select %p18, %s19, %s20
    %p24 = pneg %p18
    %p25 = scmp.eq.s32.totalorder %s9, 1
    %p26 = por %p24, %p25
    %p27 = scmp.ne.s32.totalorder %s19, %s22
    %p28 = scmp.eq.s32.totalorder %s9, 0
    %p29 = por %p27, %p28
    %p30 = scmp.ne.s32.totalorder %s19, %s22
    %p31 = scmp.eq.s32.totalorder %s14, 1
    %p32 = por %p30, %p31
    %p33 = scmp.ne.s32.totalorder %s22, %s23
    %p34 = scmp.eq.s32.totalorder %s14, 0
    %p35 = por %p33, %p34
    %p36 = scmp.ne.s32.totalorder %s22, %s23
    %p37 = scmp.eq.s32.totalorder %s15, 1
    %p38 = por %p36, %p37
    %p40 = scmp.ne.s32.totalorder %s23, %s39
    %p41 = scmp.eq.s32.totalorder %s15, 0
    %p42 = por %p40, %p41
    %s44 = sadd.s32 %s43, 1
    %p47 = scmp.eq.s32.totalorder %s9, 1
    %p48 = scmp.ne.s32.totalorder %s43, %s45
    %p49 = scmp.eq.s32.totalorder %s9, 0
    %p50 = por %p48, %p49
    %p51 = scmp.ne.s32.totalorder %s43, %s45
    %p52 = scmp.eq.s32.totalorder %s14, 1
    %p53 = por %p51, %p52
    %p54 = scmp.ne.s32.totalorder %s45, %s46
    %p55 = scmp.eq.s32.totalorder %s14, 0
    %p56 = por %p54, %p55
    %p57 = scmp.ne.s32.totalorder %s45, %s46
    %p58 = scmp.eq.s32.totalorder %s15, 1
    %p59 = por %p57, %p58
    %p61 = scmp.ne.s32.totalorder %s46, %s60
    %p62 = scmp.eq.s32.totalorder %s15, 0
    %p63 = por %p61, %p62
    %s65 = sadd.s32 %s64, 1
    %p68 = scmp.eq.s32.totalorder %s9, 1
    %p69 = scmp.ne.s32.totalorder %s64, %s66
    %p70 = scmp.eq.s32.totalorder %s9, 0
    %p71 = por %p69, %p70
    %p72 = scmp.ne.s32.totalorder %s64, %s66
    %p73 = scmp.eq.s32.totalorder %s14, 1
    %p74 = por %p72, %p73
    %p75 = scmp.ne.s32.totalorder %s66, %s67
    %p76 = scmp.eq.s32.totalorder %s14, 0
    %p77 = por %p75, %p76
    %p78 = scmp.ne.s32.totalorder %s66, %s67
    %p79 = scmp.eq.s32.totalorder %s15, 1
    %p80 = por %p78, %p79
    %p82 = scmp.ne.s32.totalorder %s67, %s81
    %p83 = scmp.eq.s32.totalorder %s15, 0
    %p84 = por %p82, %p83
    %s85 = ssub.s32 %s9, %s16
    %p86 = scmp.eq.s32.totalorder %s85, 0
    %s88 = sadd.s32 %s87, 1
    %s89 = scalar_select %p86, %s87, %s88
    %p92 = pneg %p86
    %p93 = scmp.eq.s32.totalorder %s9, 1
    %p94 = por %p92, %p93
    %p95 = scmp.ne.s32.totalorder %s87, %s90
    %p96 = scmp.eq.s32.totalorder %s9, 0
    %p97 = por %p95, %p96
    %p98 = scmp.ne.s32.totalorder %s87, %s90
    %p99 = scmp.eq.s32.totalorder %s14, 1
    %p100 = por %p98, %p99
    %p101 = scmp.ne.s32.totalorder %s90, %s91
    %p102 = scmp.eq.s32.totalorder %s14, 0
    %p103 = por %p101, %p102
    %p104 = scmp.ne.s32.totalorder %s90, %s91
    %p105 = scmp.eq.s32.totalorder %s15, 1
    %p106 = por %p104, %p105
    %p108 = scmp.ne.s32.totalorder %s91, %s107
    %p109 = scmp.eq.s32.totalorder %s15, 0
    %p110 = por %p108, %p109
    %p111 = scmp.le.s32.totalorder 1, %s9
    %p112 = scmp.lt.s32.totalorder %s9, 3
    %p113 = pnand %p111, %p112
    %p114 = pneg %p113
    // Predicated region
    $region9: #{decoder_block_forward.2} parent=5 // pred_check
      _
    $region10: #{decoder_block_forward.2} parent=5 // pred_check_branch
      %116 = sbr.rel (%p113) target = $region12
    $region11: #{decoder_block_forward.2} parent=5 // pred_region
      %s117 = ssub.s32 %s9, 1
      // Predicated region
      $region13: #{decoder_block_forward.2} parent=11 // pred_check
        %p118 = pneg %p56
      $region14: #{decoder_block_forward.2} parent=11 // pred_check_branch
        %120 = sbr.rel (%p118) target = $region16
      $region15: #{decoder_block_forward.2} parent=11 // pred_region
        _
      $region16: #{decoder_block_forward.2} parent=11 // pred_fallthru
        _
      // Predicated region
      $region17: #{decoder_block_forward.2} parent=11 // pred_check
        %p121 = pneg %p77
      $region18: #{decoder_block_forward.2} parent=11 // pred_check_branch
        %123 = sbr.rel (%p121) target = $region20
      $region19: #{decoder_block_forward.2} parent=11 // pred_region
        _
      $region20: #{decoder_block_forward.2} parent=11 // pred_fallthru
        _
    $region12: #{decoder_block_forward.2} parent=5 // pred_fallthru
      _
    %p124 = scmp.lt.s32.totalorder %s9, 2
    // Predicated region
    $region21: #{decoder_block_forward.2} parent=5 // pred_check
      %p125 = pneg %p124
    $region22: #{decoder_block_forward.2} parent=5 // pred_check_branch
      %127 = sbr.rel (%p125) target = $region24
    $region23: #{decoder_block_forward.2} parent=5 // pred_region
      // Predicated region
      $region25: #{decoder_block_forward.2} parent=23 // pred_check
        %p128 = pneg %p29
      $region26: #{decoder_block_forward.2} parent=23 // pred_check_branch
        %130 = sbr.rel (%p128) target = $region28
      $region27: #{decoder_block_forward.2} parent=23 // pred_region
        %p131 = scmp.lt.s32.totalorder %s9, 1
        %s132 = scalar_select %p131, %s9, 1
        %s133 = smul.addr %s132, 8
        %s134 = smul.addr %s133, 4
        %s135 = scalar_lea.vmem %s0, %s134
      $region28: #{decoder_block_forward.2} parent=23 // pred_fallthru
        _
    $region24: #{decoder_block_forward.2} parent=5 // pred_fallthru
      _
    %p136 = scmp.le.s32.totalorder 1, %s9
    %p137 = scmp.lt.s32.totalorder %s9, 3
    %p138 = pnand %p136, %p137
    %p139 = pneg %p138
    // Predicated region
    $region29: #{decoder_block_forward.2} parent=5 // pred_check
      _
    $region30: #{decoder_block_forward.2} parent=5 // pred_check_branch
      %141 = sbr.rel (%p138) target = $region32
    $region31: #{decoder_block_forward.2} parent=5 // pred_region
      %s142 = ssub.s32 %s9, 1
      %p143 = scmp.lt.s32.totalorder %s14, 1
      %s144 = scalar_select %p143, %s14, 1
      %s145 = smul.addr %s144, 8
      %s146 = smul.addr %s145, 4
      %s147 = scalar_lea.vmem %s0, %s146
      %p148 = pneg %p35
      %p149 = pneg %p32
      %p150 = pneg %p56
      %p151 = pneg %p53
      %p152 = pneg %p77
      %p153 = pneg %p74
      %p154 = pneg %p103
      %p155 = pneg %p100
      %p156 = scmp.lt.s32.totalorder %s14, 1
      %s157 = scalar_select %p156, %s14, 1
      %s158 = smul.addr %s157, 8
      %s159 = smul.addr %s158, 4
      %s160 = scalar_lea.vmem %s3, %s159
      %p161 = scmp.lt.s32.totalorder %s14, 1
      %s162 = scalar_select %p161, %s14, 1
      %s163 = smul.addr %s162, 8
      %s164 = smul.addr %s163, 4
      %s165 = scalar_lea.vmem %s0, %s164
      %p166 = scmp.lt.s32.totalorder %s14, 1
      %s167 = scalar_select %p166, %s14, 1
      %s168 = smul.addr %s167, 8
      %s169 = smul.addr %s168, 4
      %s170 = scalar_lea.vmem %s3, %s169
      %v172 = vld [vmem:[%s165] sm:$0xf]
      %v173 = vld [vmem:[%s165 + $0x4] sm:$0xf]
      %v174 = vld [vmem:[%s165 + $0x8] sm:$0xf]
      %v175 = vld [vmem:[%s165 + $0xc] sm:$0xf]
      %v176 = vld [vmem:[%s165 + $0x10] sm:$0xf]
      %v177 = vld [vmem:[%s165 + $0x14] sm:$0xf]
      %v178 = vld [vmem:[%s165 + $0x18] sm:$0xf]
      %v179 = vld [vmem:[%s165 + $0x1c] sm:$0xf]
      %v180 = vld [vmem:[%s1] sm:$0xf]
      %v181 = vld [vmem:[%s1 + $0x4] sm:$0xf]
      %v182 = vld [vmem:[%s1 + $0x8] sm:$0xf]
      %v183 = vld [vmem:[%s1 + $0xc] sm:$0xf]
      %v184 = vld [vmem:[%s1 + $0x10] sm:$0xf]
      %v185 = vld [vmem:[%s1 + $0x14] sm:$0xf]
      %v186 = vld [vmem:[%s1 + $0x18] sm:$0xf]
      %v187 = vld [vmem:[%s1 + $0x1c] sm:$0xf]
      %v188 = vld [vmem:[%s2] sm:$0x1]
      %v190 = vperm.slane %v188, 0
      %v200 = vunpack.c.l.b16 %v172
      %v201 = vunpack.c.l.b16 %v173
      %v202 = vunpack.c.l.b16 %v174
      %v203 = vunpack.c.l.b16 %v175
      %v204 = vunpack.c.l.b16 %v176
      %v205 = vunpack.c.l.b16 %v177
      %v206 = vunpack.c.l.b16 %v178
      %v207 = vunpack.c.l.b16 %v179
      %v208 = vpack.c.b16 %v201, %v200
      %v209 = vpack.c.b16 %v203, %v202
      %v210 = vpack.c.b16 %v205, %v204
      %v211 = vpack.c.b16 %v207, %v206
      %v220 = vunpack.c.l.b16 %v180
      %v221 = vunpack.c.l.b16 %v181
      %v222 = vunpack.c.l.b16 %v182
      %v223 = vunpack.c.l.b16 %v183
      %v224 = vunpack.c.l.b16 %v184
      %v225 = vunpack.c.l.b16 %v185
      %v226 = vunpack.c.l.b16 %v186
      %v227 = vunpack.c.l.b16 %v187
      %v228 = vpack.c.b16 %v221, %v220
      %v229 = vpack.c.b16 %v223, %v222
      %v230 = vpack.c.b16 %v225, %v224
      %v231 = vpack.c.b16 %v227, %v226
      %vm236 = vcmask 523264
      %v238 = vsel %vm236, %v208, 0
      %v241 = vsel %vm236, %v209, 0
      %v244 = vsel %vm236, %v210, 0
      %v247 = vsel %vm236, %v211, 0
      %249 = vmatpush.bf16.msra.mxu0 0
      %250 = vmatpush.bf16.msra.mxu0 0
      %251 = vmatpush.bf16.msra.mxu0 0
      %252 = vmatpush.bf16.msra.mxu0 0
      %253 = vmatpush.bf16.msra.mxu0 %v231
      %254 = vmatpush.bf16.msra.mxu0 %v230
      %255 = vmatpush.bf16.msra.mxu0 %v229
      %256 = vmatpush.bf16.msra.mxu0 %v228
      %257 = vmatmul.bf16.gmra.mxu0 %v238
      %v258 = vpop.f32.mrf.mxu0
      %v259 = vadd.f32 %v190, %v258
      %v260 = vpop.f32.mrf.mxu0
      %v261 = vadd.f32 %v190, %v260
      %262 = vmatmul.bf16.gmra.mxu0 %v241
      %v263 = vpop.f32.mrf.mxu0
      %v264 = vadd.f32 %v190, %v263
      %v265 = vpop.f32.mrf.mxu0
      %v266 = vadd.f32 %v190, %v265
      %267 = vmatmul.bf16.gmra.mxu0 %v244
      %v268 = vpop.f32.mrf.mxu0
      %v269 = vadd.f32 %v190, %v268
      %v270 = vpop.f32.mrf.mxu0
      %v271 = vadd.f32 %v190, %v270
      %272 = vmatmul.bf16.gmra.mxu0 %v247
      %v273 = vpop.f32.mrf.mxu0
      %v274 = vadd.f32 %v190, %v273
      %v275 = vpop.f32.mrf.mxu0
      %v276 = vadd.f32 %v190, %v275
      %277 = vdwg.mxu0
      %v278 = vpack.c.bf16 %v259, %v259
      %v279 = vpack.c.bf16 %v261, %v261
      %v280 = vpack.c.bf16 %v264, %v264
      %v281 = vpack.c.bf16 %v266, %v266
      %v282 = vpack.c.bf16 %v269, %v269
      %v283 = vpack.c.bf16 %v271, %v271
      %v284 = vpack.c.bf16 %v274, %v274
      %v285 = vpack.c.bf16 %v276, %v276
      %286 = vst [vmem:[%s170] sm:$0xf] %v278
      %287 = vst [vmem:[%s170 + $0x4] sm:$0xf] %v279
      %288 = vst [vmem:[%s170 + $0x8] sm:$0xf] %v280
      %289 = vst [vmem:[%s170 + $0xc] sm:$0xf] %v281
      %290 = vst [vmem:[%s170 + $0x10] sm:$0xf] %v282
      %291 = vst [vmem:[%s170 + $0x14] sm:$0xf] %v283
      %292 = vst [vmem:[%s170 + $0x18] sm:$0xf] %v284
      %293 = vst [vmem:[%s170 + $0x1c] sm:$0xf] %v285
      %p294 = scmp.lt.s32.totalorder %s14, 1
      %s295 = scalar_select %p294, %s14, 1
      %s296 = smul.addr %s295, 8
      %s297 = smul.addr %s296, 4
      %s298 = scalar_lea.vmem %s3, %s297
      // Predicated region
      $region33: #{decoder_block_forward.2} parent=31 // pred_check
        %p299 = pneg %p100
      $region34: #{decoder_block_forward.2} parent=31 // pred_check_branch
        %301 = sbr.rel (%p299) target = $region36
      $region35: #{decoder_block_forward.2} parent=31 // pred_region
        _
      $region36: #{decoder_block_forward.2} parent=31 // pred_fallthru
        _
    $region32: #{decoder_block_forward.2} parent=5 // pred_fallthru
      _
    %p302 = scmp.le.s32.totalorder 2, %s9
    // Predicated region
    $region37: #{decoder_block_forward.2} parent=5 // pred_check
      %p303 = pneg %p302
    $region38: #{decoder_block_forward.2} parent=5 // pred_check_branch
      %305 = sbr.rel (%p303) target = $region40
    $region39: #{decoder_block_forward.2} parent=5 // pred_region
      %s306 = ssub.s32 %s9, 2
      // Predicated region
      $region41: #{decoder_block_forward.2} parent=39 // pred_check
        %p307 = pneg %p106
      $region42: #{decoder_block_forward.2} parent=39 // pred_check_branch
        %309 = sbr.rel (%p307) target = $region44
      $region43: #{decoder_block_forward.2} parent=39 // pred_region
        %p310 = scmp.lt.s32.totalorder %s15, 1
        %s311 = scalar_select %p310, %s15, 1
        %s312 = smul.addr %s311, 8
        %s313 = smul.addr %s312, 4
        %s314 = scalar_lea.vmem %s3, %s313
      $region44: #{decoder_block_forward.2} parent=39 // pred_fallthru
        _
    $region40: #{decoder_block_forward.2} parent=5 // pred_fallthru
      _
  $region6: #{decoder_block_forward.2} parent=0 // loop_footer
    %s13 = sadd.s32 1, %s9
  $region7: #{decoder_block_forward.2} parent=0 // loop_footer_branch
    %8 = sbr.rel target = $region3
  $region8: #{decoder_block_forward.2} parent=0 // loop_exit
    _

// kernel: decoder_block_forward.3
$region0: #{decoder_block_forward.3}
  #allocation0 [shape = 'u32[]', space=smem, size = 0x4, offset = 0x4, fixed_abs, tag = 'smem constant byte address 0x4 - core index']
  #allocation1 [shape = 'u32[72,128]{1,0:T(1,128)}', space=vmem, size = 0x9000, scoped, tag = 'internal scratch']
  #allocation2 [shape = 'f32[342,64]{1,0:T(8,128)}', space=vmem, size = 0x2b000, scoped, tag = 'scratch operand']
  #allocation3 [shape = 'f32[288,32]{1,0:T(8,128)}', space=vmem, size = 0x24000, scoped, tag = 'scratch operand']
  #allocation4 [shape = 'f32[342,32]{1,0:T(8,128)}', space=vmem, size = 0x2b000, scoped, tag = 'scratch operand']
  %s0 = inlined_call_operand.vmem [shape: bf16[2,342,64], index: 0, kind: input, shape index: {}]
  %s1 = inlined_call_operand.vmem [shape: bf16[9,64,32], index: 1, kind: input, shape index: {}]
  %s2 = inlined_call_operand.vmem [shape: f32[1,32], index: 2, kind: input, shape index: {}]
  %s3 = inlined_call_operand.vmem [shape: bf16[9,32,32], index: 3, kind: input, shape index: {}]
  %s4 = inlined_call_operand.vmem [shape: f32[1,32], index: 4, kind: input, shape index: {}]
  %s5 = inlined_call_operand.vmem [shape: f32[2,288,32], index: 5, kind: output, shape index: {}]
  %s6 = sld [smem:[#allocation0]]
  $region53: #{decoder_block_forward.3} parent=0
    _
  %s8 = ssub.s32 1, %s6
  %s9 = scalar_select 0, %s8, %s6
  loop: start=0, step=1, limit=4
  $region2: #{decoder_block_forward.3} parent=0 // loop_pre_header
    _
  $region3: #{decoder_block_forward.3} parent=0 // loop_header
    %s11 = sphi 0, %s15
    %p12 = scmp.ge.s32.totalorder %s11, 4
    %s21 = sphi 0, %s23
    %s24 = sphi 0, %s21
    %s25 = sphi 0, %s24
    %s41 = sphi 0, %s25
    %s45 = sphi 0, %s45
    %s47 = sphi 0, %s45
    %s48 = sphi 0, %s47
    %s62 = sphi 0, %s48
    %s66 = sphi 0, %s66
    %s68 = sphi 0, %s66
    %s69 = sphi 0, %s68
    %s83 = sphi 0, %s69
    %s87 = sphi 0, %s87
    %s89 = sphi 0, %s87
    %s90 = sphi 0, %s89
    %s104 = sphi 0, %s90
    %s108 = sphi 0, %s108
    %s110 = sphi 0, %s108
    %s111 = sphi 0, %s110
    %s125 = sphi 0, %s111
    %s131 = sphi 0, %s133
    %s134 = sphi 0, %s131
    %s135 = sphi 0, %s134
    %s151 = sphi 0, %s135
  $region4: #{decoder_block_forward.3} parent=0 // loop_header_branch
    %14 = sbr.rel (%p12) target = $region8
  $region5: #{decoder_block_forward.3} parent=0 // loop_body
    %s16 = ssub.s32 %s11, 1
    %s17 = ssub.s32 %s11, 2
    %s18 = sadd.s32 %s11, 1
    %s19 = ssub.s32 %s11, %s18
    %p20 = scmp.eq.s32.totalorder %s19, 0
    %s22 = sadd.s32 %s21, 1
    %s23 = scalar_select %p20, %s21, %s22
    %p26 = pneg %p20
    %p27 = scmp.eq.s32.totalorder %s11, 1
    %p28 = por %p26, %p27
    %p29 = scmp.ne.s32.totalorder %s21, %s24
    %p30 = scmp.eq.s32.totalorder %s11, 0
    %p31 = por %p29, %p30
    %p32 = scmp.ne.s32.totalorder %s21, %s24
    %p33 = scmp.eq.s32.totalorder %s16, 1
    %p34 = por %p32, %p33
    %p35 = scmp.ne.s32.totalorder %s24, %s25
    %p36 = scmp.eq.s32.totalorder %s16, 0
    %p37 = por %p35, %p36
    %p38 = scmp.ne.s32.totalorder %s24, %s25
    %p39 = scmp.eq.s32.totalorder %s17, 1
    %p40 = por %p38, %p39
    %p42 = scmp.ne.s32.totalorder %s25, %s41
    %p43 = scmp.eq.s32.totalorder %s17, 0
    %p44 = por %p42, %p43
    %s46 = sadd.s32 %s45, 1
    %p49 = scmp.eq.s32.totalorder %s11, 1
    %p50 = scmp.ne.s32.totalorder %s45, %s47
    %p51 = scmp.eq.s32.totalorder %s11, 0
    %p52 = por %p50, %p51
    %p53 = scmp.ne.s32.totalorder %s45, %s47
    %p54 = scmp.eq.s32.totalorder %s16, 1
    %p55 = por %p53, %p54
    %p56 = scmp.ne.s32.totalorder %s47, %s48
    %p57 = scmp.eq.s32.totalorder %s16, 0
    %p58 = por %p56, %p57
    %p59 = scmp.ne.s32.totalorder %s47, %s48
    %p60 = scmp.eq.s32.totalorder %s17, 1
    %p61 = por %p59, %p60
    %p63 = scmp.ne.s32.totalorder %s48, %s62
    %p64 = scmp.eq.s32.totalorder %s17, 0
    %p65 = por %p63, %p64
    %s67 = sadd.s32 %s66, 1
    %p70 = scmp.eq.s32.totalorder %s11, 1
    %p71 = scmp.ne.s32.totalorder %s66, %s68
    %p72 = scmp.eq.s32.totalorder %s11, 0
    %p73 = por %p71, %p72
    %p74 = scmp.ne.s32.totalorder %s66, %s68
    %p75 = scmp.eq.s32.totalorder %s16, 1
    %p76 = por %p74, %p75
    %p77 = scmp.ne.s32.totalorder %s68, %s69
    %p78 = scmp.eq.s32.totalorder %s16, 0
    %p79 = por %p77, %p78
    %p80 = scmp.ne.s32.totalorder %s68, %s69
    %p81 = scmp.eq.s32.totalorder %s17, 1
    %p82 = por %p80, %p81
    %p84 = scmp.ne.s32.totalorder %s69, %s83
    %p85 = scmp.eq.s32.totalorder %s17, 0
    %p86 = por %p84, %p85
    %s88 = sadd.s32 %s87, 1
    %p91 = scmp.eq.s32.totalorder %s11, 1
    %p92 = scmp.ne.s32.totalorder %s87, %s89
    %p93 = scmp.eq.s32.totalorder %s11, 0
    %p94 = por %p92, %p93
    %p95 = scmp.ne.s32.totalorder %s87, %s89
    %p96 = scmp.eq.s32.totalorder %s16, 1
    %p97 = por %p95, %p96
    %p98 = scmp.ne.s32.totalorder %s89, %s90
    %p99 = scmp.eq.s32.totalorder %s16, 0
    %p100 = por %p98, %p99
    %p101 = scmp.ne.s32.totalorder %s89, %s90
    %p102 = scmp.eq.s32.totalorder %s17, 1
    %p103 = por %p101, %p102
    %p105 = scmp.ne.s32.totalorder %s90, %s104
    %p106 = scmp.eq.s32.totalorder %s17, 0
    %p107 = por %p105, %p106
    %s109 = sadd.s32 %s108, 1
    %p112 = scmp.eq.s32.totalorder %s11, 1
    %p113 = scmp.ne.s32.totalorder %s108, %s110
    %p114 = scmp.eq.s32.totalorder %s11, 0
    %p115 = por %p113, %p114
    %p116 = scmp.ne.s32.totalorder %s108, %s110
    %p117 = scmp.eq.s32.totalorder %s16, 1
    %p118 = por %p116, %p117
    %p119 = scmp.ne.s32.totalorder %s110, %s111
    %p120 = scmp.eq.s32.totalorder %s16, 0
    %p121 = por %p119, %p120
    %p122 = scmp.ne.s32.totalorder %s110, %s111
    %p123 = scmp.eq.s32.totalorder %s17, 1
    %p124 = por %p122, %p123
    %p126 = scmp.ne.s32.totalorder %s111, %s125
    %p127 = scmp.eq.s32.totalorder %s17, 0
    %p128 = por %p126, %p127
    %s129 = ssub.s32 %s11, %s18
    %p130 = scmp.eq.s32.totalorder %s129, 0
    %s132 = sadd.s32 %s131, 1
    %s133 = scalar_select %p130, %s131, %s132
    %p136 = pneg %p130
    %p137 = scmp.eq.s32.totalorder %s11, 1
    %p138 = por %p136, %p137
    %p139 = scmp.ne.s32.totalorder %s131, %s134
    %p140 = scmp.eq.s32.totalorder %s11, 0
    %p141 = por %p139, %p140
    %p142 = scmp.ne.s32.totalorder %s131, %s134
    %p143 = scmp.eq.s32.totalorder %s16, 1
    %p144 = por %p142, %p143
    %p145 = scmp.ne.s32.totalorder %s134, %s135
    %p146 = scmp.eq.s32.totalorder %s16, 0
    %p147 = por %p145, %p146
    %p148 = scmp.ne.s32.totalorder %s134, %s135
    %p149 = scmp.eq.s32.totalorder %s17, 1
    %p150 = por %p148, %p149
    %p152 = scmp.ne.s32.totalorder %s135, %s151
    %p153 = scmp.eq.s32.totalorder %s17, 0
    %p154 = por %p152, %p153
    %p155 = scmp.le.s32.totalorder 1, %s11
    %p156 = scmp.lt.s32.totalorder %s11, 3
    %p157 = pnand %p155, %p156
    %p158 = pneg %p157
    // Predicated region
    $region9: #{decoder_block_forward.3} parent=5 // pred_check
      _
    $region10: #{decoder_block_forward.3} parent=5 // pred_check_branch
      %160 = sbr.rel (%p157) target = $region12
    $region11: #{decoder_block_forward.3} parent=5 // pred_region
      %s161 = ssub.s32 %s11, 1
      // Predicated region
      $region13: #{decoder_block_forward.3} parent=11 // pred_check
        %p162 = pneg %p58
      $region14: #{decoder_block_forward.3} parent=11 // pred_check_branch
        %164 = sbr.rel (%p162) target = $region16
      $region15: #{decoder_block_forward.3} parent=11 // pred_region
        _
      $region16: #{decoder_block_forward.3} parent=11 // pred_fallthru
        _
      // Predicated region
      $region17: #{decoder_block_forward.3} parent=11 // pred_check
        %p165 = pneg %p79
      $region18: #{decoder_block_forward.3} parent=11 // pred_check_branch
        %167 = sbr.rel (%p165) target = $region20
      $region19: #{decoder_block_forward.3} parent=11 // pred_region
        _
      $region20: #{decoder_block_forward.3} parent=11 // pred_fallthru
        _
      // Predicated region
      $region21: #{decoder_block_forward.3} parent=11 // pred_check
        %p168 = pneg %p100
      $region22: #{decoder_block_forward.3} parent=11 // pred_check_branch
        %170 = sbr.rel (%p168) target = $region24
      $region23: #{decoder_block_forward.3} parent=11 // pred_region
        _
      $region24: #{decoder_block_forward.3} parent=11 // pred_fallthru
        _
      // Predicated region
      $region25: #{decoder_block_forward.3} parent=11 // pred_check
        %p171 = pneg %p121
      $region26: #{decoder_block_forward.3} parent=11 // pred_check_branch
        %173 = sbr.rel (%p171) target = $region28
      $region27: #{decoder_block_forward.3} parent=11 // pred_region
        _
      $region28: #{decoder_block_forward.3} parent=11 // pred_fallthru
        _
    $region12: #{decoder_block_forward.3} parent=5 // pred_fallthru
      _
    %p174 = scmp.lt.s32.totalorder %s11, 2
    // Predicated region
    $region29: #{decoder_block_forward.3} parent=5 // pred_check
      %p175 = pneg %p174
    $region30: #{decoder_block_forward.3} parent=5 // pred_check_branch
      %177 = sbr.rel (%p175) target = $region32
    $region31: #{decoder_block_forward.3} parent=5 // pred_region
      // Predicated region
      $region33: #{decoder_block_forward.3} parent=31 // pred_check
        %p178 = pneg %p31
      $region34: #{decoder_block_forward.3} parent=31 // pred_check_branch
        %180 = sbr.rel (%p178) target = $region36
      $region35: #{decoder_block_forward.3} parent=31 // pred_region
        %p181 = scmp.lt.s32.totalorder %s11, 1
        %s182 = scalar_select %p181, %s11, 1
        %s183 = smul.addr %s182, 43
        %s184 = smul.addr %s183, 4
        %s185 = scalar_lea.vmem %s0, %s184
      $region36: #{decoder_block_forward.3} parent=31 // pred_fallthru
        _
    $region32: #{decoder_block_forward.3} parent=5 // pred_fallthru
      _
    %p186 = scmp.le.s32.totalorder 1, %s11
    %p187 = scmp.lt.s32.totalorder %s11, 3
    %p188 = pnand %p186, %p187
    %p189 = pneg %p188
    // Predicated region
    $region37: #{decoder_block_forward.3} parent=5 // pred_check
      _
    $region38: #{decoder_block_forward.3} parent=5 // pred_check_branch
      %191 = sbr.rel (%p188) target = $region40
    $region39: #{decoder_block_forward.3} parent=5 // pred_region
      %s192 = ssub.s32 %s11, 1
      %p193 = scmp.lt.s32.totalorder %s16, 1
      %s194 = scalar_select %p193, %s16, 1
      %s195 = smul.addr %s194, 43
      %s196 = smul.addr %s195, 4
      %s197 = scalar_lea.vmem %s0, %s196
      %p198 = pneg %p37
      %p199 = pneg %p34
      %p200 = pneg %p58
      %p201 = pneg %p55
      %p202 = pneg %p79
      %p203 = pneg %p76
      %p204 = pneg %p100
      %p205 = pneg %p97
      %p206 = pneg %p121
      %p207 = pneg %p118
      %p208 = pneg %p147
      %p209 = pneg %p144
      %p210 = scmp.lt.s32.totalorder %s16, 1
      %s211 = scalar_select %p210, %s16, 1
      %s212 = smul.addr %s211, 36
      %s213 = smul.addr %s212, 8
      %s214 = scalar_lea.vmem %s5, %s213
      %p215 = scmp.lt.s32.totalorder %s16, 1
      %s216 = scalar_select %p215, %s16, 1
      %s217 = smul.addr %s216, 43
      %s218 = smul.addr %s217, 4
      %s219 = scalar_lea.vmem %s0, %s218
      %p220 = scmp.lt.s32.totalorder %s16, 1
      %s221 = scalar_select %p220, %s16, 1
      %s222 = smul.addr %s221, 36
      %s223 = smul.addr %s222, 8
      %s224 = scalar_lea.vmem %s5, %s223
      %v226 = vld [vmem:[%s219] sm:$0xf]
      %v227 = vld [vmem:[%s219 + $0x4] sm:$0xf]
      %v228 = vld [vmem:[%s219 + $0x8] sm:$0xf]
      %v229 = vld [vmem:[%s219 + $0xc] sm:$0xf]
      %v230 = vld [vmem:[%s219 + $0x10] sm:$0xf]
      %v231 = vld [vmem:[%s219 + $0x14] sm:$0xf]
      %v232 = vld [vmem:[%s219 + $0x18] sm:$0xf]
      %v233 = vld [vmem:[%s219 + $0x1c] sm:$0xf]
      %v234 = vld [vmem:[%s219 + $0x20] sm:$0xf]
      %v235 = vld [vmem:[%s219 + $0x24] sm:$0xf]
      %v236 = vld [vmem:[%s219 + $0x28] sm:$0xf]
      %v237 = vld [vmem:[%s219 + $0x2c] sm:$0xf]
      %v238 = vld [vmem:[%s219 + $0x30] sm:$0xf]
      %v239 = vld [vmem:[%s219 + $0x34] sm:$0xf]
      %v240 = vld [vmem:[%s219 + $0x38] sm:$0xf]
      %v241 = vld [vmem:[%s219 + $0x3c] sm:$0xf]
      %v242 = vld [vmem:[%s219 + $0x40] sm:$0xf]
      %v243 = vld [vmem:[%s219 + $0x44] sm:$0xf]
      %v244 = vld [vmem:[%s219 + $0x48] sm:$0xf]
      %v245 = vld [vmem:[%s219 + $0x4c] sm:$0xf]
      %v246 = vld [vmem:[%s219 + $0x50] sm:$0xf]
      %v247 = vld [vmem:[%s219 + $0x54] sm:$0xf]
      %v248 = vld [vmem:[%s219 + $0x58] sm:$0xf]
      %v249 = vld [vmem:[%s219 + $0x5c] sm:$0xf]
      %v250 = vld [vmem:[%s219 + $0x60] sm:$0xf]
      %v251 = vld [vmem:[%s219 + $0x64] sm:$0xf]
      %v252 = vld [vmem:[%s219 + $0x68] sm:$0xf]
      %v253 = vld [vmem:[%s219 + $0x6c] sm:$0xf]
      %v254 = vld [vmem:[%s219 + $0x70] sm:$0xf]
      %v255 = vld [vmem:[%s219 + $0x74] sm:$0xf]
      %v256 = vld [vmem:[%s219 + $0x78] sm:$0xf]
      %v257 = vld [vmem:[%s219 + $0x7c] sm:$0xf]
      %v258 = vld [vmem:[%s219 + $0x80] sm:$0xf]
      %v259 = vld [vmem:[%s219 + $0x84] sm:$0xf]
      %v260 = vld [vmem:[%s219 + $0x88] sm:$0xf]
      %v261 = vld [vmem:[%s219 + $0x8c] sm:$0xf]
      %v262 = vld [vmem:[%s219 + $0x90] sm:$0xf]
      %v263 = vld [vmem:[%s219 + $0x94] sm:$0xf]
      %v264 = vld [vmem:[%s219 + $0x98] sm:$0xf]
      %v265 = vld [vmem:[%s219 + $0x9c] sm:$0xf]
      %v266 = vld [vmem:[%s219 + $0xa0] sm:$0xf]
      %v267 = vld [vmem:[%s219 + $0xa4] sm:$0xf]
      %v268 = vld [vmem:[%s219 + $0xa8] sm:$0x7]
      %v269 = vunpack.c.l.bf16 %v226
      %v270 = vunpack.c.l.bf16 %v227
      %v271 = vunpack.c.l.bf16 %v228
      %v272 = vunpack.c.l.bf16 %v229
      %v273 = vunpack.c.l.bf16 %v230
      %v274 = vunpack.c.l.bf16 %v231
      %v275 = vunpack.c.l.bf16 %v232
      %v276 = vunpack.c.l.bf16 %v233
      %v277 = vunpack.c.l.bf16 %v234
      %v278 = vunpack.c.l.bf16 %v235
      %v279 = vunpack.c.l.bf16 %v236
      %v280 = vunpack.c.l.bf16 %v237
      %v281 = vunpack.c.l.bf16 %v238
      %v282 = vunpack.c.l.bf16 %v239
      %v283 = vunpack.c.l.bf16 %v240
      %v284 = vunpack.c.l.bf16 %v241
      %v285 = vunpack.c.l.bf16 %v242
      %v286 = vunpack.c.l.bf16 %v243
      %v287 = vunpack.c.l.bf16 %v244
      %v288 = vunpack.c.l.bf16 %v245
      %v289 = vunpack.c.l.bf16 %v246
      %v290 = vunpack.c.l.bf16 %v247
      %v291 = vunpack.c.l.bf16 %v248
      %v292 = vunpack.c.l.bf16 %v249
      %v293 = vunpack.c.l.bf16 %v250
      %v294 = vunpack.c.l.bf16 %v251
      %v295 = vunpack.c.l.bf16 %v252
      %v296 = vunpack.c.l.bf16 %v253
      %v297 = vunpack.c.l.bf16 %v254
      %v298 = vunpack.c.l.bf16 %v255
      %v299 = vunpack.c.l.bf16 %v256
      %v300 = vunpack.c.l.bf16 %v257
      %v301 = vunpack.c.l.bf16 %v258
      %v302 = vunpack.c.l.bf16 %v259
      %v303 = vunpack.c.l.bf16 %v260
      %v304 = vunpack.c.l.bf16 %v261
      %v305 = vunpack.c.l.bf16 %v262
      %v306 = vunpack.c.l.bf16 %v263
      %v307 = vunpack.c.l.bf16 %v264
      %v308 = vunpack.c.l.bf16 %v265
      %v309 = vunpack.c.l.bf16 %v266
      %v310 = vunpack.c.l.bf16 %v267
      %v311 = vunpack.c.l.bf16 %v268
      %vm312 = vcmask 523264
      %313 = vst.msk [vmem:[#allocation2] sm:$0xff] %vm312, %v269
      %314 = vst.msk [vmem:[#allocation2 + $0x8] sm:$0xff] %vm312, %v270
      %315 = vst.msk [vmem:[#allocation2 + $0x10] sm:$0xff] %vm312, %v271
      %316 = vst.msk [vmem:[#allocation2 + $0x18] sm:$0xff] %vm312, %v272
      %317 = vst.msk [vmem:[#allocation2 + $0x20] sm:$0xff] %vm312, %v273
      %318 = vst.msk [vmem:[#allocation2 + $0x28] sm:$0xff] %vm312, %v274
      %319 = vst.msk [vmem:[#allocation2 + $0x30] sm:$0xff] %vm312, %v275
      %320 = vst.msk [vmem:[#allocation2 + $0x38] sm:$0xff] %vm312, %v276
      %321 = vst.msk [vmem:[#allocation2 + $0x40] sm:$0xff] %vm312, %v277
      %322 = vst.msk [vmem:[#allocation2 + $0x48] sm:$0xff] %vm312, %v278
      %323 = vst.msk [vmem:[#allocation2 + $0x50] sm:$0xff] %vm312, %v279
      %324 = vst.msk [vmem:[#allocation2 + $0x58] sm:$0xff] %vm312, %v280
      %325 = vst.msk [vmem:[#allocation2 + $0x60] sm:$0xff] %vm312, %v281
      %326 = vst.msk [vmem:[#allocation2 + $0x68] sm:$0xff] %vm312, %v282
      %327 = vst.msk [vmem:[#allocation2 + $0x70] sm:$0xff] %vm312, %v283
      %328 = vst.msk [vmem:[#allocation2 + $0x78] sm:$0xff] %vm312, %v284
      %329 = vst.msk [vmem:[#allocation2 + $0x80] sm:$0xff] %vm312, %v285
      %330 = vst.msk [vmem:[#allocation2 + $0x88] sm:$0xff] %vm312, %v286
      %331 = vst.msk [vmem:[#allocation2 + $0x90] sm:$0xff] %vm312, %v287
      %332 = vst.msk [vmem:[#allocation2 + $0x98] sm:$0xff] %vm312, %v288
      %333 = vst.msk [vmem:[#allocation2 + $0xa0] sm:$0xff] %vm312, %v289
      %334 = vst.msk [vmem:[#allocation2 + $0xa8] sm:$0xff] %vm312, %v290
      %335 = vst.msk [vmem:[#allocation2 + $0xb0] sm:$0xff] %vm312, %v291
      %336 = vst.msk [vmem:[#allocation2 + $0xb8] sm:$0xff] %vm312, %v292
      %337 = vst.msk [vmem:[#allocation2 + $0xc0] sm:$0xff] %vm312, %v293
      %338 = vst.msk [vmem:[#allocation2 + $0xc8] sm:$0xff] %vm312, %v294
      %339 = vst.msk [vmem:[#allocation2 + $0xd0] sm:$0xff] %vm312, %v295
      %340 = vst.msk [vmem:[#allocation2 + $0xd8] sm:$0xff] %vm312, %v296
      %341 = vst.msk [vmem:[#allocation2 + $0xe0] sm:$0xff] %vm312, %v297
      %342 = vst.msk [vmem:[#allocation2 + $0xe8] sm:$0xff] %vm312, %v298
      %343 = vst.msk [vmem:[#allocation2 + $0xf0] sm:$0xff] %vm312, %v299
      %344 = vst.msk [vmem:[#allocation2 + $0xf8] sm:$0xff] %vm312, %v300
      %345 = vst.msk [vmem:[#allocation2 + $0x100] sm:$0xff] %vm312, %v301
      %346 = vst.msk [vmem:[#allocation2 + $0x108] sm:$0xff] %vm312, %v302
      %347 = vst.msk [vmem:[#allocation2 + $0x110] sm:$0xff] %vm312, %v303
      %348 = vst.msk [vmem:[#allocation2 + $0x118] sm:$0xff] %vm312, %v304
      %349 = vst.msk [vmem:[#allocation2 + $0x120] sm:$0xff] %vm312, %v305
      %350 = vst.msk [vmem:[#allocation2 + $0x128] sm:$0xff] %vm312, %v306
      %351 = vst.msk [vmem:[#allocation2 + $0x130] sm:$0xff] %vm312, %v307
      %352 = vst.msk [vmem:[#allocation2 + $0x138] sm:$0xff] %vm312, %v308
      %353 = vst.msk [vmem:[#allocation2 + $0x140] sm:$0xff] %vm312, %v309
      %354 = vst.msk [vmem:[#allocation2 + $0x148] sm:$0xff] %vm312, %v310
      %vm355 = vcmask 521216
      %356 = vst.msk [vmem:[#allocation2 + $0x150] sm:$0x3f] %vm355, %v311
      %vm357 = vcmask 261120
      %358 = vst.msk [vmem:[#allocation3] sm:$0xff] %vm357, 0.0
      %359 = vst.msk [vmem:[#allocation3 + $0x8] sm:$0xff] %vm357, 0.0
      %360 = vst.msk [vmem:[#allocation3 + $0x10] sm:$0xff] %vm357, 0.0
      %361 = vst.msk [vmem:[#allocation3 + $0x18] sm:$0xff] %vm357, 0.0
      %362 = vst.msk [vmem:[#allocation3 + $0x20] sm:$0xff] %vm357, 0.0
      %363 = vst.msk [vmem:[#allocation3 + $0x28] sm:$0xff] %vm357, 0.0
      %364 = vst.msk [vmem:[#allocation3 + $0x30] sm:$0xff] %vm357, 0.0
      %365 = vst.msk [vmem:[#allocation3 + $0x38] sm:$0xff] %vm357, 0.0
      %366 = vst.msk [vmem:[#allocation3 + $0x40] sm:$0xff] %vm357, 0.0
      %367 = vst.msk [vmem:[#allocation3 + $0x48] sm:$0xff] %vm357, 0.0
      %368 = vst.msk [vmem:[#allocation3 + $0x50] sm:$0xff] %vm357, 0.0
      %369 = vst.msk [vmem:[#allocation3 + $0x58] sm:$0xff] %vm357, 0.0
      %370 = vst.msk [vmem:[#allocation3 + $0x60] sm:$0xff] %vm357, 0.0
      %371 = vst.msk [vmem:[#allocation3 + $0x68] sm:$0xff] %vm357, 0.0
      %372 = vst.msk [vmem:[#allocation3 + $0x70] sm:$0xff] %vm357, 0.0
      %373 = vst.msk [vmem:[#allocation3 + $0x78] sm:$0xff] %vm357, 0.0
      %374 = vst.msk [vmem:[#allocation3 + $0x80] sm:$0xff] %vm357, 0.0
      %375 = vst.msk [vmem:[#allocation3 + $0x88] sm:$0xff] %vm357, 0.0
      %376 = vst.msk [vmem:[#allocation3 + $0x90] sm:$0xff] %vm357, 0.0
      %377 = vst.msk [vmem:[#allocation3 + $0x98] sm:$0xff] %vm357, 0.0
      %378 = vst.msk [vmem:[#allocation3 + $0xa0] sm:$0xff] %vm357, 0.0
      %379 = vst.msk [vmem:[#allocation3 + $0xa8] sm:$0xff] %vm357, 0.0
      %380 = vst.msk [vmem:[#allocation3 + $0xb0] sm:$0xff] %vm357, 0.0
      %381 = vst.msk [vmem:[#allocation3 + $0xb8] sm:$0xff] %vm357, 0.0
      %382 = vst.msk [vmem:[#allocation3 + $0xc0] sm:$0xff] %vm357, 0.0
      %383 = vst.msk [vmem:[#allocation3 + $0xc8] sm:$0xff] %vm357, 0.0
      %384 = vst.msk [vmem:[#allocation3 + $0xd0] sm:$0xff] %vm357, 0.0
      %385 = vst.msk [vmem:[#allocation3 + $0xd8] sm:$0xff] %vm357, 0.0
      %386 = vst.msk [vmem:[#allocation3 + $0xe0] sm:$0xff] %vm357, 0.0
      %387 = vst.msk [vmem:[#allocation3 + $0xe8] sm:$0xff] %vm357, 0.0
      %388 = vst.msk [vmem:[#allocation3 + $0xf0] sm:$0xff] %vm357, 0.0
      %389 = vst.msk [vmem:[#allocation3 + $0xf8] sm:$0xff] %vm357, 0.0
      %390 = vst.msk [vmem:[#allocation3 + $0x100] sm:$0xff] %vm357, 0.0
      %391 = vst.msk [vmem:[#allocation3 + $0x108] sm:$0xff] %vm357, 0.0
      %392 = vst.msk [vmem:[#allocation3 + $0x110] sm:$0xff] %vm357, 0.0
      %393 = vst.msk [vmem:[#allocation3 + $0x118] sm:$0xff] %vm357, 0.0
      %v394 = vld [vmem:[#allocation2] sm:$0xff]
      %v395 = vld [vmem:[#allocation2 + $0x8] sm:$0xff]
      %v396 = vld [vmem:[#allocation2 + $0x10] sm:$0xff]
      %v397 = vld [vmem:[#allocation2 + $0x18] sm:$0xff]
      %v398 = vld [vmem:[#allocation2 + $0x20] sm:$0xff]
      %v399 = vld [vmem:[#allocation2 + $0x28] sm:$0xff]
      %v400 = vld [vmem:[#allocation2 + $0x30] sm:$0xff]
      %v401 = vld [vmem:[#allocation2 + $0x38] sm:$0xff]
      %v402 = vld [vmem:[#allocation2 + $0x40] sm:$0xff]
      %v403 = vld [vmem:[#allocation2 + $0x48] sm:$0xff]
      %v404 = vld [vmem:[#allocation2 + $0x50] sm:$0xff]
      %v405 = vld [vmem:[#allocation2 + $0x58] sm:$0xff]
      %v406 = vld [vmem:[#allocation2 + $0x60] sm:$0xff]
      %v407 = vld [vmem:[#allocation2 + $0x68] sm:$0xff]
      %v408 = vld [vmem:[#allocation2 + $0x70] sm:$0xff]
      %v409 = vld [vmem:[#allocation2 + $0x78] sm:$0xff]
      %v410 = vld [vmem:[#allocation2 + $0x80] sm:$0xff]
      %v411 = vld [vmem:[#allocation2 + $0x88] sm:$0xff]
      %v412 = vld [vmem:[#allocation2 + $0x90] sm:$0xff]
      %v413 = vld [vmem:[#allocation2 + $0x98] sm:$0xff]
      %v414 = vld [vmem:[#allocation2 + $0xa0] sm:$0xff]
      %v415 = vld [vmem:[#allocation2 + $0xa8] sm:$0xff]
      %v416 = vld [vmem:[#allocation2 + $0xb0] sm:$0xff]
      %v417 = vld [vmem:[#allocation2 + $0xb8] sm:$0xff]
      %v418 = vld [vmem:[#allocation2 + $0xc0] sm:$0xff]
      %v419 = vld [vmem:[#allocation2 + $0xc8] sm:$0xff]
      %v420 = vld [vmem:[#allocation2 + $0xd0] sm:$0xff]
      %v421 = vld [vmem:[#allocation2 + $0xd8] sm:$0xff]
      %v422 = vld [vmem:[#allocation2 + $0xe0] sm:$0xff]
      %v423 = vld [vmem:[#allocation2 + $0xe8] sm:$0xff]
      %v424 = vld [vmem:[#allocation2 + $0xf0] sm:$0xff]
      %v425 = vld [vmem:[#allocation2 + $0xf8] sm:$0xff]
      %v426 = vld [vmem:[#allocation2 + $0x100] sm:$0xff]
      %v427 = vld [vmem:[#allocation2 + $0x108] sm:$0xff]
      %v428 = vld [vmem:[#allocation2 + $0x110] sm:$0xff]
      %v429 = vld [vmem:[#allocation2 + $0x118] sm:$0xff]
      %v430 = vpack.c.bf16 %v395, %v394
      %v431 = vpack.c.bf16 %v397, %v396
      %v432 = vpack.c.bf16 %v399, %v398
      %v433 = vpack.c.bf16 %v401, %v400
      %v434 = vpack.c.bf16 %v403, %v402
      %v435 = vpack.c.bf16 %v405, %v404
      %v436 = vpack.c.bf16 %v407, %v406
      %v437 = vpack.c.bf16 %v409, %v408
      %v438 = vpack.c.bf16 %v411, %v410
      %v439 = vpack.c.bf16 %v413, %v412
      %v440 = vpack.c.bf16 %v415, %v414
      %v441 = vpack.c.bf16 %v417, %v416
      %v442 = vpack.c.bf16 %v419, %v418
      %v443 = vpack.c.bf16 %v421, %v420
      %v444 = vpack.c.bf16 %v423, %v422
      %v445 = vpack.c.bf16 %v425, %v424
      %v446 = vpack.c.bf16 %v427, %v426
      %v447 = vpack.c.bf16 %v429, %v428
      %v448 = vld [vmem:[#allocation3] sm:$0xff]
      %v449 = vld [vmem:[#allocation3 + $0x8] sm:$0xff]
      %v450 = vld [vmem:[#allocation3 + $0x10] sm:$0xff]
      %v451 = vld [vmem:[#allocation3 + $0x18] sm:$0xff]
      %v452 = vld [vmem:[#allocation3 + $0x20] sm:$0xff]
      %v453 = vld [vmem:[#allocation3 + $0x28] sm:$0xff]
      %v454 = vld [vmem:[#allocation3 + $0x30] sm:$0xff]
      %v455 = vld [vmem:[#allocation3 + $0x38] sm:$0xff]
      %v456 = vld [vmem:[#allocation3 + $0x40] sm:$0xff]
      %v457 = vld [vmem:[#allocation3 + $0x48] sm:$0xff]
      %v458 = vld [vmem:[#allocation3 + $0x50] sm:$0xff]
      %v459 = vld [vmem:[#allocation3 + $0x58] sm:$0xff]
      %v460 = vld [vmem:[#allocation3 + $0x60] sm:$0xff]
      %v461 = vld [vmem:[#allocation3 + $0x68] sm:$0xff]
      %v462 = vld [vmem:[#allocation3 + $0x70] sm:$0xff]
      %v463 = vld [vmem:[#allocation3 + $0x78] sm:$0xff]
      %v464 = vld [vmem:[#allocation3 + $0x80] sm:$0xff]
      %v465 = vld [vmem:[#allocation3 + $0x88] sm:$0xff]
      %v466 = vld [vmem:[#allocation3 + $0x90] sm:$0xff]
      %v467 = vld [vmem:[#allocation3 + $0x98] sm:$0xff]
      %v468 = vld [vmem:[#allocation3 + $0xa0] sm:$0xff]
      %v469 = vld [vmem:[#allocation3 + $0xa8] sm:$0xff]
      %v470 = vld [vmem:[#allocation3 + $0xb0] sm:$0xff]
      %v471 = vld [vmem:[#allocation3 + $0xb8] sm:$0xff]
      %v472 = vld [vmem:[#allocation3 + $0xc0] sm:$0xff]
      %v473 = vld [vmem:[#allocation3 + $0xc8] sm:$0xff]
      %v474 = vld [vmem:[#allocation3 + $0xd0] sm:$0xff]
      %v475 = vld [vmem:[#allocation3 + $0xd8] sm:$0xff]
      %v476 = vld [vmem:[#allocation3 + $0xe0] sm:$0xff]
      %v477 = vld [vmem:[#allocation3 + $0xe8] sm:$0xff]
      %v478 = vld [vmem:[#allocation3 + $0xf0] sm:$0xff]
      %v479 = vld [vmem:[#allocation3 + $0xf8] sm:$0xff]
      %v480 = vld [vmem:[#allocation3 + $0x100] sm:$0xff]
      %v481 = vld [vmem:[#allocation3 + $0x108] sm:$0xff]
      %v482 = vld [vmem:[#allocation3 + $0x110] sm:$0xff]
      %v483 = vld [vmem:[#allocation3 + $0x118] sm:$0xff]
      %v484 = vld [vmem:[%s1] sm:$0xf]
      %v485 = vld [vmem:[%s1 + $0x4] sm:$0xf]
      %v486 = vld [vmem:[%s1 + $0x8] sm:$0xf]
      %v487 = vld [vmem:[%s1 + $0xc] sm:$0xf]
      %v488 = vld [vmem:[%s1 + $0x10] sm:$0xf]
      %v489 = vld [vmem:[%s1 + $0x14] sm:$0xf]
      %v490 = vld [vmem:[%s1 + $0x18] sm:$0xf]
      %v491 = vld [vmem:[%s1 + $0x1c] sm:$0xf]
      %v500 = vunpack.c.l.b16 %v484
      %v501 = vunpack.c.l.b16 %v485
      %v502 = vunpack.c.l.b16 %v486
      %v503 = vunpack.c.l.b16 %v487
      %v504 = vunpack.c.l.b16 %v488
      %v505 = vunpack.c.l.b16 %v489
      %v506 = vunpack.c.l.b16 %v490
      %v507 = vunpack.c.l.b16 %v491
      %v508 = vpack.c.b16 %v501, %v500
      %v509 = vpack.c.b16 %v503, %v502
      %v510 = vpack.c.b16 %v505, %v504
      %v511 = vpack.c.b16 %v507, %v506
      %v517 = vsel %vm312, %v430, 0
      %v520 = vsel %vm312, %v431, 0
      %v523 = vsel %vm312, %v432, 0
      %v526 = vsel %vm312, %v433, 0
      %v529 = vsel %vm312, %v434, 0
      %v532 = vsel %vm312, %v435, 0
      %v535 = vsel %vm312, %v436, 0
      %v538 = vsel %vm312, %v437, 0
      %v541 = vsel %vm312, %v438, 0
      %v544 = vsel %vm312, %v439, 0
      %v547 = vsel %vm312, %v440, 0
      %v550 = vsel %vm312, %v441, 0
      %v553 = vsel %vm312, %v442, 0
      %v556 = vsel %vm312, %v443, 0
      %v559 = vsel %vm312, %v444, 0
      %v562 = vsel %vm312, %v445, 0
      %v565 = vsel %vm312, %v446, 0
      %v568 = vsel %vm312, %v447, 0
      %570 = vmatpush.bf16.msra.mxu0 0
      %571 = vmatpush.bf16.msra.mxu0 0
      %572 = vmatpush.bf16.msra.mxu0 0
      %573 = vmatpush.bf16.msra.mxu0 0
      %574 = vmatpush.bf16.msra.mxu0 %v511
      %575 = vmatpush.bf16.msra.mxu0 %v510
      %576 = vmatpush.bf16.msra.mxu0 %v509
      %577 = vmatpush.bf16.msra.mxu0 %v508
      %578 = vmatmul.bf16.gmra.mxu0 %v517
      %v579 = vpop.f32.mrf.mxu0
      %v580 = vadd.f32 0.0, %v579
      %v581 = vpop.f32.mrf.mxu0
      %v582 = vadd.f32 0.0, %v581
      %583 = vmatmul.bf16.gmra.mxu0 %v520
      %v584 = vpop.f32.mrf.mxu0
      %v585 = vadd.f32 0.0, %v584
      %v586 = vpop.f32.mrf.mxu0
      %v587 = vadd.f32 0.0, %v586
      %588 = vmatmul.bf16.gmra.mxu0 %v523
      %v589 = vpop.f32.mrf.mxu0
      %v590 = vadd.f32 0.0, %v589
      %v591 = vpop.f32.mrf.mxu0
      %v592 = vadd.f32 0.0, %v591
      %593 = vmatmul.bf16.gmra.mxu0 %v526
      %v594 = vpop.f32.mrf.mxu0
      %v595 = vadd.f32 0.0, %v594
      %v596 = vpop.f32.mrf.mxu0
      %v597 = vadd.f32 0.0, %v596
      %598 = vmatmul.bf16.gmra.mxu0 %v529
      %v599 = vpop.f32.mrf.mxu0
      %v600 = vadd.f32 0.0, %v599
      %v601 = vpop.f32.mrf.mxu0
      %v602 = vadd.f32 0.0, %v601
      %603 = vmatmul.bf16.gmra.mxu0 %v532
      %v604 = vpop.f32.mrf.mxu0
      %v605 = vadd.f32 0.0, %v604
      %v606 = vpop.f32.mrf.mxu0
      %v607 = vadd.f32 0.0, %v606
      %608 = vmatmul.bf16.gmra.mxu0 %v535
      %v609 = vpop.f32.mrf.mxu0
      %v610 = vadd.f32 0.0, %v609
      %v611 = vpop.f32.mrf.mxu0
      %v612 = vadd.f32 0.0, %v611
      %613 = vmatmul.bf16.gmra.mxu0 %v538
      %v614 = vpop.f32.mrf.mxu0
      %v615 = vadd.f32 0.0, %v614
      %v616 = vpop.f32.mrf.mxu0
      %v617 = vadd.f32 0.0, %v616
      %618 = vmatmul.bf16.gmra.mxu0 %v541
      %v619 = vpop.f32.mrf.mxu0
      %v620 = vadd.f32 0.0, %v619
      %v621 = vpop.f32.mrf.mxu0
      %v622 = vadd.f32 0.0, %v621
      %623 = vmatmul.bf16.gmra.mxu0 %v544
      %v624 = vpop.f32.mrf.mxu0
      %v625 = vadd.f32 0.0, %v624
      %v626 = vpop.f32.mrf.mxu0
      %v627 = vadd.f32 0.0, %v626
      %628 = vmatmul.bf16.gmra.mxu0 %v547
      %v629 = vpop.f32.mrf.mxu0
      %v630 = vadd.f32 0.0, %v629
      %v631 = vpop.f32.mrf.mxu0
      %v632 = vadd.f32 0.0, %v631
      %633 = vmatmul.bf16.gmra.mxu0 %v550
      %v634 = vpop.f32.mrf.mxu0
      %v635 = vadd.f32 0.0, %v634
      %v636 = vpop.f32.mrf.mxu0
      %v637 = vadd.f32 0.0, %v636
      %638 = vmatmul.bf16.gmra.mxu0 %v553
      %v639 = vpop.f32.mrf.mxu0
      %v640 = vadd.f32 0.0, %v639
      %v641 = vpop.f32.mrf.mxu0
      %v642 = vadd.f32 0.0, %v641
      %643 = vmatmul.bf16.gmra.mxu0 %v556
      %v644 = vpop.f32.mrf.mxu0
      %v645 = vadd.f32 0.0, %v644
      %v646 = vpop.f32.mrf.mxu0
      %v647 = vadd.f32 0.0, %v646
      %648 = vmatmul.bf16.gmra.mxu0 %v559
      %v649 = vpop.f32.mrf.mxu0
      %v650 = vadd.f32 0.0, %v649
      %v651 = vpop.f32.mrf.mxu0
      %v652 = vadd.f32 0.0, %v651
      %653 = vmatmul.bf16.gmra.mxu0 %v562
      %v654 = vpop.f32.mrf.mxu0
      %v655 = vadd.f32 0.0, %v654
      %v656 = vpop.f32.mrf.mxu0
      %v657 = vadd.f32 0.0, %v656
      %658 = vmatmul.bf16.gmra.mxu0 %v565
      %v659 = vpop.f32.mrf.mxu0
      %v660 = vadd.f32 0.0, %v659
      %v661 = vpop.f32.mrf.mxu0
      %v662 = vadd.f32 0.0, %v661
      %663 = vmatmul.bf16.gmra.mxu0 %v568
      %v664 = vpop.f32.mrf.mxu0
      %v665 = vadd.f32 0.0, %v664
      %v666 = vpop.f32.mrf.mxu0
      %v667 = vadd.f32 0.0, %v666
      %668 = vdwg.mxu0
      %v669 = vadd.f32 %v448, %v580
      %v670 = vadd.f32 %v449, %v582
      %v671 = vadd.f32 %v450, %v585
      %v672 = vadd.f32 %v451, %v587
      %v673 = vadd.f32 %v452, %v590
      %v674 = vadd.f32 %v453, %v592
      %v675 = vadd.f32 %v454, %v595
      %v676 = vadd.f32 %v455, %v597
      %v677 = vadd.f32 %v456, %v600
      %v678 = vadd.f32 %v457, %v602
      %v679 = vadd.f32 %v458, %v605
      %v680 = vadd.f32 %v459, %v607
      %v681 = vadd.f32 %v460, %v610
      %v682 = vadd.f32 %v461, %v612
      %v683 = vadd.f32 %v462, %v615
      %v684 = vadd.f32 %v463, %v617
      %v685 = vadd.f32 %v464, %v620
      %v686 = vadd.f32 %v465, %v622
      %v687 = vadd.f32 %v466, %v625
      %v688 = vadd.f32 %v467, %v627
      %v689 = vadd.f32 %v468, %v630
      %v690 = vadd.f32 %v469, %v632
      %v691 = vadd.f32 %v470, %v635
      %v692 = vadd.f32 %v471, %v637
      %v693 = vadd.f32 %v472, %v640
      %v694 = vadd.f32 %v473, %v642
      %v695 = vadd.f32 %v474, %v645
      %v696 = vadd.f32 %v475, %v647
      %v697 = vadd.f32 %v476, %v650
      %v698 = vadd.f32 %v477, %v652
      %v699 = vadd.f32 %v478, %v655
      %v700 = vadd.f32 %v479, %v657
      %v701 = vadd.f32 %v480, %v660
      %v702 = vadd.f32 %v481, %v662
      %v703 = vadd.f32 %v482, %v665
      %v704 = vadd.f32 %v483, %v667
      %705 = vst.msk [vmem:[#allocation3] sm:$0xff] %vm357, %v669
      %706 = vst.msk [vmem:[#allocation3 + $0x8] sm:$0xff] %vm357, %v670
      %707 = vst.msk [vmem:[#allocation3 + $0x10] sm:$0xff] %vm357, %v671
      %708 = vst.msk [vmem:[#allocation3 + $0x18] sm:$0xff] %vm357, %v672
      %709 = vst.msk [vmem:[#allocation3 + $0x20] sm:$0xff] %vm357, %v673
      %710 = vst.msk [vmem:[#allocation3 + $0x28] sm:$0xff] %vm357, %v674
      %711 = vst.msk [vmem:[#allocation3 + $0x30] sm:$0xff] %vm357, %v675
      %712 = vst.msk [vmem:[#allocation3 + $0x38] sm:$0xff] %vm357, %v676
      %713 = vst.msk [vmem:[#allocation3 + $0x40] sm:$0xff] %vm357, %v677
      %714 = vst.msk [vmem:[#allocation3 + $0x48] sm:$0xff] %vm357, %v678
      %715 = vst.msk [vmem:[#allocation3 + $0x50] sm:$0xff] %vm357, %v679
      %716 = vst.msk [vmem:[#allocation3 + $0x58] sm:$0xff] %vm357, %v680
      %717 = vst.msk [vmem:[#allocation3 + $0x60] sm:$0xff] %vm357, %v681
      %718 = vst.msk [vmem:[#allocation3 + $0x68] sm:$0xff] %vm357, %v682
      %719 = vst.msk [vmem:[#allocation3 + $0x70] sm:$0xff] %vm357, %v683
      %720 = vst.msk [vmem:[#allocation3 + $0x78] sm:$0xff] %vm357, %v684
      %721 = vst.msk [vmem:[#allocation3 + $0x80] sm:$0xff] %vm357, %v685
      %722 = vst.msk [vmem:[#allocation3 + $0x88] sm:$0xff] %vm357, %v686
      %723 = vst.msk [vmem:[#allocation3 + $0x90] sm:$0xff] %vm357, %v687
      %724 = vst.msk [vmem:[#allocation3 + $0x98] sm:$0xff] %vm357, %v688
      %725 = vst.msk [vmem:[#allocation3 + $0xa0] sm:$0xff] %vm357, %v689
      %726 = vst.msk [vmem:[#allocation3 + $0xa8] sm:$0xff] %vm357, %v690
      %727 = vst.msk [vmem:[#allocation3 + $0xb0] sm:$0xff] %vm357, %v691
      %728 = vst.msk [vmem:[#allocation3 + $0xb8] sm:$0xff] %vm357, %v692
      %729 = vst.msk [vmem:[#allocation3 + $0xc0] sm:$0xff] %vm357, %v693
      %730 = vst.msk [vmem:[#allocation3 + $0xc8] sm:$0xff] %vm357, %v694
      %731 = vst.msk [vmem:[#allocation3 + $0xd0] sm:$0xff] %vm357, %v695
      %732 = vst.msk [vmem:[#allocation3 + $0xd8] sm:$0xff] %vm357, %v696
      %733 = vst.msk [vmem:[#allocation3 + $0xe0] sm:$0xff] %vm357, %v697
      %734 = vst.msk [vmem:[#allocation3 + $0xe8] sm:$0xff] %vm357, %v698
      %735 = vst.msk [vmem:[#allocation3 + $0xf0] sm:$0xff] %vm357, %v699
      %736 = vst.msk [vmem:[#allocation3 + $0xf8] sm:$0xff] %vm357, %v700
      %737 = vst.msk [vmem:[#allocation3 + $0x100] sm:$0xff] %vm357, %v701
      %738 = vst.msk [vmem:[#allocation3 + $0x108] sm:$0xff] %vm357, %v702
      %739 = vst.msk [vmem:[#allocation3 + $0x110] sm:$0xff] %vm357, %v703
      %740 = vst.msk [vmem:[#allocation3 + $0x118] sm:$0xff] %vm357, %v704
      %v741 = vld [vmem:[#allocation2 + $0x1] sm:$0xff]
      %v742 = vld [vmem:[#allocation2 + $0x9] sm:$0xff]
      %v743 = vld [vmem:[#allocation2 + $0x11] sm:$0xff]
      %v744 = vld [vmem:[#allocation2 + $0x19] sm:$0xff]
      %v745 = vld [vmem:[#allocation2 + $0x21] sm:$0xff]
      %v746 = vld [vmem:[#allocation2 + $0x29] sm:$0xff]
      %v747 = vld [vmem:[#allocation2 + $0x31] sm:$0xff]
      %v748 = vld [vmem:[#allocation2 + $0x39] sm:$0xff]
      %v749 = vld [vmem:[#allocation2 + $0x41] sm:$0xff]
      %v750 = vld [vmem:[#allocation2 + $0x49] sm:$0xff]
      %v751 = vld [vmem:[#allocation2 + $0x51] sm:$0xff]
      %v752 = vld [vmem:[#allocation2 + $0x59] sm:$0xff]
      %v753 = vld [vmem:[#allocation2 + $0x61] sm:$0xff]
      %v754 = vld [vmem:[#allocation2 + $0x69] sm:$0xff]
      %v755 = vld [vmem:[#allocation2 + $0x71] sm:$0xff]
      %v756 = vld [vmem:[#allocation2 + $0x79] sm:$0xff]
      %v757 = vld [vmem:[#allocation2 + $0x81] sm:$0xff]
      %v758 = vld [vmem:[#allocation2 + $0x89] sm:$0xff]
      %v759 = vld [vmem:[#allocation2 + $0x91] sm:$0xff]
      %v760 = vld [vmem:[#allocation2 + $0x99] sm:$0xff]
      %v761 = vld [vmem:[#allocation2 + $0xa1] sm:$0xff]
      %v762 = vld [vmem:[#allocation2 + $0xa9] sm:$0xff]
      %v763 = vld [vmem:[#allocation2 + $0xb1] sm:$0xff]
      %v764 = vld [vmem:[#allocation2 + $0xb9] sm:$0xff]
      %v765 = vld [vmem:[#allocation2 + $0xc1] sm:$0xff]
      %v766 = vld [vmem:[#allocation2 + $0xc9] sm:$0xff]
      %v767 = vld [vmem:[#allocation2 + $0xd1] sm:$0xff]
      %v768 = vld [vmem:[#allocation2 + $0xd9] sm:$0xff]
      %v769 = vld [vmem:[#allocation2 + $0xe1] sm:$0xff]
      %v770 = vld [vmem:[#allocation2 + $0xe9] sm:$0xff]
      %v771 = vld [vmem:[#allocation2 + $0xf1] sm:$0xff]
      %v772 = vld [vmem:[#allocation2 + $0xf9] sm:$0xff]
      %v773 = vld [vmem:[#allocation2 + $0x101] sm:$0xff]
      %v774 = vld [vmem:[#allocation2 + $0x109] sm:$0xff]
      %v775 = vld [vmem:[#allocation2 + $0x111] sm:$0xff]
      %v776 = vld [vmem:[#allocation2 + $0x119] sm:$0xff]
      %v777 = vpack.c.bf16 %v742, %v741
      %v778 = vpack.c.bf16 %v744, %v743
      %v779 = vpack.c.bf16 %v746, %v745
      %v780 = vpack.c.bf16 %v748, %v747
      %v781 = vpack.c.bf16 %v750, %v749
      %v782 = vpack.c.bf16 %v752, %v751
      %v783 = vpack.c.bf16 %v754, %v753
      %v784 = vpack.c.bf16 %v756, %v755
      %v785 = vpack.c.bf16 %v758, %v757
      %v786 = vpack.c.bf16 %v760, %v759
      %v787 = vpack.c.bf16 %v762, %v761
      %v788 = vpack.c.bf16 %v764, %v763
      %v789 = vpack.c.bf16 %v766, %v765
      %v790 = vpack.c.bf16 %v768, %v767
      %v791 = vpack.c.bf16 %v770, %v769
      %v792 = vpack.c.bf16 %v772, %v771
      %v793 = vpack.c.bf16 %v774, %v773
      %v794 = vpack.c.bf16 %v776, %v775
      %v795 = vld [vmem:[#allocation3] sm:$0xff]
      %v796 = vld [vmem:[#allocation3 + $0x8] sm:$0xff]
      %v797 = vld [vmem:[#allocation3 + $0x10] sm:$0xff]
      %v798 = vld [vmem:[#allocation3 + $0x18] sm:$0xff]
      %v799 = vld [vmem:[#allocation3 + $0x20] sm:$0xff]
      %v800 = vld [vmem:[#allocation3 + $0x28] sm:$0xff]
      %v801 = vld [vmem:[#allocation3 + $0x30] sm:$0xff]
      %v802 = vld [vmem:[#allocation3 + $0x38] sm:$0xff]
      %v803 = vld [vmem:[#allocation3 + $0x40] sm:$0xff]
      %v804 = vld [vmem:[#allocation3 + $0x48] sm:$0xff]
      %v805 = vld [vmem:[#allocation3 + $0x50] sm:$0xff]
      %v806 = vld [vmem:[#allocation3 + $0x58] sm:$0xff]
      %v807 = vld [vmem:[#allocation3 + $0x60] sm:$0xff]
      %v808 = vld [vmem:[#allocation3 + $0x68] sm:$0xff]
      %v809 = vld [vmem:[#allocation3 + $0x70] sm:$0xff]
      %v810 = vld [vmem:[#allocation3 + $0x78] sm:$0xff]
      %v811 = vld [vmem:[#allocation3 + $0x80] sm:$0xff]
      %v812 = vld [vmem:[#allocation3 + $0x88] sm:$0xff]
      %v813 = vld [vmem:[#allocation3 + $0x90] sm:$0xff]
      %v814 = vld [vmem:[#allocation3 + $0x98] sm:$0xff]
      %v815 = vld [vmem:[#allocation3 + $0xa0] sm:$0xff]
      %v816 = vld [vmem:[#allocation3 + $0xa8] sm:$0xff]
      %v817 = vld [vmem:[#allocation3 + $0xb0] sm:$0xff]
      %v818 = vld [vmem:[#allocation3 + $0xb8] sm:$0xff]
      %v819 = vld [vmem:[#allocation3 + $0xc0] sm:$0xff]
      %v820 = vld [vmem:[#allocation3 + $0xc8] sm:$0xff]
      %v821 = vld [vmem:[#allocation3 + $0xd0] sm:$0xff]
      %v822 = vld [vmem:[#allocation3 + $0xd8] sm:$0xff]
      %v823 = vld [vmem:[#allocation3 + $0xe0] sm:$0xff]
      %v824 = vld [vmem:[#allocation3 + $0xe8] sm:$0xff]
      %v825 = vld [vmem:[#allocation3 + $0xf0] sm:$0xff]
      %v826 = vld [vmem:[#allocation3 + $0xf8] sm:$0xff]
      %v827 = vld [vmem:[#allocation3 + $0x100] sm:$0xff]
      %v828 = vld [vmem:[#allocation3 + $0x108] sm:$0xff]
      %v829 = vld [vmem:[#allocation3 + $0x110] sm:$0xff]
      %v830 = vld [vmem:[#allocation3 + $0x118] sm:$0xff]
      %s831 = scalar_lea.vmem %s1, 32
      %v832 = vld [vmem:[%s831] sm:$0xf]
      %v833 = vld [vmem:[%s831 + $0x4] sm:$0xf]
      %v834 = vld [vmem:[%s831 + $0x8] sm:$0xf]
      %v835 = vld [vmem:[%s831 + $0xc] sm:$0xf]
      %v836 = vld [vmem:[%s831 + $0x10] sm:$0xf]
      %v837 = vld [vmem:[%s831 + $0x14] sm:$0xf]
      %v838 = vld [vmem:[%s831 + $0x18] sm:$0xf]
      %v839 = vld [vmem:[%s831 + $0x1c] sm:$0xf]
      %v848 = vunpack.c.l.b16 %v832
      %v849 = vunpack.c.l.b16 %v833
      %v850 = vunpack.c.l.b16 %v834
      %v851 = vunpack.c.l.b16 %v835
      %v852 = vunpack.c.l.b16 %v836
      %v853 = vunpack.c.l.b16 %v837
      %v854 = vunpack.c.l.b16 %v838
      %v855 = vunpack.c.l.b16 %v839
      %v856 = vpack.c.b16 %v849, %v848
      %v857 = vpack.c.b16 %v851, %v850
      %v858 = vpack.c.b16 %v853, %v852
      %v859 = vpack.c.b16 %v855, %v854
      %v865 = vsel %vm312, %v777, 0
      %v868 = vsel %vm312, %v778, 0
      %v871 = vsel %vm312, %v779, 0
      %v874 = vsel %vm312, %v780, 0
      %v877 = vsel %vm312, %v781, 0
      %v880 = vsel %vm312, %v782, 0
      %v883 = vsel %vm312, %v783, 0
      %v886 = vsel %vm312, %v784, 0
      %v889 = vsel %vm312, %v785, 0
      %v892 = vsel %vm312, %v786, 0
      %v895 = vsel %vm312, %v787, 0
      %v898 = vsel %vm312, %v788, 0
      %v901 = vsel %vm312, %v789, 0
      %v904 = vsel %vm312, %v790, 0
      %v907 = vsel %vm312, %v791, 0
      %v910 = vsel %vm312, %v792, 0
      %v913 = vsel %vm312, %v793, 0
      %v916 = vsel %vm312, %v794, 0
      %918 = vmatpush.bf16.msra.mxu0 0
      %919 = vmatpush.bf16.msra.mxu0 0
      %920 = vmatpush.bf16.msra.mxu0 0
      %921 = vmatpush.bf16.msra.mxu0 0
      %922 = vmatpush.bf16.msra.mxu0 %v859
      %923 = vmatpush.bf16.msra.mxu0 %v858
      %924 = vmatpush.bf16.msra.mxu0 %v857
      %925 = vmatpush.bf16.msra.mxu0 %v856
      %926 = vmatmul.bf16.gmra.mxu0 %v865
      %v927 = vpop.f32.mrf.mxu0
      %v928 = vadd.f32 0.0, %v927
      %v929 = vpop.f32.mrf.mxu0
      %v930 = vadd.f32 0.0, %v929
      %931 = vmatmul.bf16.gmra.mxu0 %v868
      %v932 = vpop.f32.mrf.mxu0
      %v933 = vadd.f32 0.0, %v932
      %v934 = vpop.f32.mrf.mxu0
      %v935 = vadd.f32 0.0, %v934
      %936 = vmatmul.bf16.gmra.mxu0 %v871
      %v937 = vpop.f32.mrf.mxu0
      %v938 = vadd.f32 0.0, %v937
      %v939 = vpop.f32.mrf.mxu0
      %v940 = vadd.f32 0.0, %v939
      %941 = vmatmul.bf16.gmra.mxu0 %v874
      %v942 = vpop.f32.mrf.mxu0
      %v943 = vadd.f32 0.0, %v942
      %v944 = vpop.f32.mrf.mxu0
      %v945 = vadd.f32 0.0, %v944
      %946 = vmatmul.bf16.gmra.mxu0 %v877
      %v947 = vpop.f32.mrf.mxu0
      %v948 = vadd.f32 0.0, %v947
      %v949 = vpop.f32.mrf.mxu0
      %v950 = vadd.f32 0.0, %v949
      %951 = vmatmul.bf16.gmra.mxu0 %v880
      %v952 = vpop.f32.mrf.mxu0
      %v953 = vadd.f32 0.0, %v952
      %v954 = vpop.f32.mrf.mxu0
      %v955 = vadd.f32 0.0, %v954
      %956 = vmatmul.bf16.gmra.mxu0 %v883
      %v957 = vpop.f32.mrf.mxu0
      %v958 = vadd.f32 0.0, %v957
      %v959 = vpop.f32.mrf.mxu0
      %v960 = vadd.f32 0.0, %v959
      %961 = vmatmul.bf16.gmra.mxu0 %v886
      %v962 = vpop.f32.mrf.mxu0
      %v963 = vadd.f32 0.0, %v962
      %v964 = vpop.f32.mrf.mxu0
      %v965 = vadd.f32 0.0, %v964
      %966 = vmatmul.bf16.gmra.mxu0 %v889
      %v967 = vpop.f32.mrf.mxu0
      %v968 = vadd.f32 0.0, %v967
      %v969 = vpop.f32.mrf.mxu0
      %v970 = vadd.f32 0.0, %v969
      %971 = vmatmul.bf16.gmra.mxu0 %v892
      %v972 = vpop.f32.mrf.mxu0
      %v973 = vadd.f32 0.0, %v972
      %v974 = vpop.f32.mrf.mxu0
      %v975 = vadd.f32 0.0, %v974
      %976 = vmatmul.bf16.gmra.mxu0 %v895
      %v977 = vpop.f32.mrf.mxu0
      %v978 = vadd.f32 0.0, %v977
      %v979 = vpop.f32.mrf.mxu0
      %v980 = vadd.f32 0.0, %v979
      %981 = vmatmul.bf16.gmra.mxu0 %v898
      %v982 = vpop.f32.mrf.mxu0
      %v983 = vadd.f32 0.0, %v982
      %v984 = vpop.f32.mrf.mxu0
      %v985 = vadd.f32 0.0, %v984
      %986 = vmatmul.bf16.gmra.mxu0 %v901
      %v987 = vpop.f32.mrf.mxu0
      %v988 = vadd.f32 0.0, %v987
      %v989 = vpop.f32.mrf.mxu0
      %v990 = vadd.f32 0.0, %v989
      %991 = vmatmul.bf16.gmra.mxu0 %v904
      %v992 = vpop.f32.mrf.mxu0
      %v993 = vadd.f32 0.0, %v992
      %v994 = vpop.f32.mrf.mxu0
      %v995 = vadd.f32 0.0, %v994
      %996 = vmatmul.bf16.gmra.mxu0 %v907
      %v997 = vpop.f32.mrf.mxu0
      %v998 = vadd.f32 0.0, %v997
      %v999 = vpop.f32.mrf.mxu0
      %v1000 = vadd.f32 0.0, %v999
      %1001 = vmatmul.bf16.gmra.mxu0 %v910
      %v1002 = vpop.f32.mrf.mxu0
      %v1003 = vadd.f32 0.0, %v1002
      %v1004 = vpop.f32.mrf.mxu0
      %v1005 = vadd.f32 0.0, %v1004
      %1006 = vmatmul.bf16.gmra.mxu0 %v913
      %v1007 = vpop.f32.mrf.mxu0
      %v1008 = vadd.f32 0.0, %v1007
      %v1009 = vpop.f32.mrf.mxu0
      %v1010 = vadd.f32 0.0, %v1009
      %1011 = vmatmul.bf16.gmra.mxu0 %v916
      %v1012 = vpop.f32.mrf.mxu0
      %v1013 = vadd.f32 0.0, %v1012
      %v1014 = vpop.f32.mrf.mxu0
      %v1015 = vadd.f32 0.0, %v1014
      %1016 = vdwg.mxu0
      %v1017 = vadd.f32 %v795, %v928
      %v1018 = vadd.f32 %v796, %v930
      %v1019 = vadd.f32 %v797, %v933
      %v1020 = vadd.f32 %v798, %v935
      %v1021 = vadd.f32 %v799, %v938
      %v1022 = vadd.f32 %v800, %v940
      %v1023 = vadd.f32 %v801, %v943
      %v1024 = vadd.f32 %v802, %v945
      %v1025 = vadd.f32 %v803, %v948
      %v1026 = vadd.f32 %v804, %v950
      %v1027 = vadd.f32 %v805, %v953
      %v1028 = vadd.f32 %v806, %v955
      %v1029 = vadd.f32 %v807, %v958
      %v1030 = vadd.f32 %v808, %v960
      %v1031 = vadd.f32 %v809, %v963
      %v1032 = vadd.f32 %v810, %v965
      %v1033 = vadd.f32 %v811, %v968
      %v1034 = vadd.f32 %v812, %v970
      %v1035 = vadd.f32 %v813, %v973
      %v1036 = vadd.f32 %v814, %v975
      %v1037 = vadd.f32 %v815, %v978
      %v1038 = vadd.f32 %v816, %v980
      %v1039 = vadd.f32 %v817, %v983
      %v1040 = vadd.f32 %v818, %v985
      %v1041 = vadd.f32 %v819, %v988
      %v1042 = vadd.f32 %v820, %v990
      %v1043 = vadd.f32 %v821, %v993
      %v1044 = vadd.f32 %v822, %v995
      %v1045 = vadd.f32 %v823, %v998
      %v1046 = vadd.f32 %v824, %v1000
      %v1047 = vadd.f32 %v825, %v1003
      %v1048 = vadd.f32 %v826, %v1005
      %v1049 = vadd.f32 %v827, %v1008
      %v1050 = vadd.f32 %v828, %v1010
      %v1051 = vadd.f32 %v829, %v1013
      %v1052 = vadd.f32 %v830, %v1015
      %1053 = vst.msk [vmem:[#allocation3] sm:$0xff] %vm357, %v1017
      %1054 = vst.msk [vmem:[#allocation3 + $0x8] sm:$0xff] %vm357, %v1018
      %1055 = vst.msk [vmem:[#allocation3 + $0x10] sm:$0xff] %vm357, %v1019
      %1056 = vst.msk [vmem:[#allocation3 + $0x18] sm:$0xff] %vm357, %v1020
      %1057 = vst.msk [vmem:[#allocation3 + $0x20] sm:$0xff] %vm357, %v1021
      %1058 = vst.msk [vmem:[#allocation3 + $0x28] sm:$0xff] %vm357, %v1022
      %1059 = vst.msk [vmem:[#allocation3 + $0x30] sm:$0xff] %vm357, %v1023
      %1060 = vst.msk [vmem:[#allocation3 + $0x38] sm:$0xff] %vm357, %v1024
      %1061 = vst.msk [vmem:[#allocation3 + $0x40] sm:$0xff] %vm357, %v1025
      %1062 = vst.msk [vmem:[#allocation3 + $0x48] sm:$0xff] %vm357, %v1026
      %1063 = vst.msk [vmem:[#allocation3 + $0x50] sm:$0xff] %vm357, %v1027
      %1064 = vst.msk [vmem:[#allocation3 + $0x58] sm:$0xff] %vm357, %v1028
      %1065 = vst.msk [vmem:[#allocation3 + $0x60] sm:$0xff] %vm357, %v1029
      %1066 = vst.msk [vmem:[#allocation3 + $0x68] sm:$0xff] %vm357, %v1030
      %1067 = vst.msk [vmem:[#allocation3 + $0x70] sm:$0xff] %vm357, %v1031
      %1068 = vst.msk [vmem:[#allocation3 + $0x78] sm:$0xff] %vm357, %v1032
      %1069 = vst.msk [vmem:[#allocation3 + $0x80] sm:$0xff] %vm357, %v1033
      %1070 = vst.msk [vmem:[#allocation3 + $0x88] sm:$0xff] %vm357, %v1034
      %1071 = vst.msk [vmem:[#allocation3 + $0x90] sm:$0xff] %vm357, %v1035
      %1072 = vst.msk [vmem:[#allocation3 + $0x98] sm:$0xff] %vm357, %v1036
      %1073 = vst.msk [vmem:[#allocation3 + $0xa0] sm:$0xff] %vm357, %v1037
      %1074 = vst.msk [vmem:[#allocation3 + $0xa8] sm:$0xff] %vm357, %v1038
      %1075 = vst.msk [vmem:[#allocation3 + $0xb0] sm:$0xff] %vm357, %v1039
      %1076 = vst.msk [vmem:[#allocation3 + $0xb8] sm:$0xff] %vm357, %v1040
      %1077 = vst.msk [vmem:[#allocation3 + $0xc0] sm:$0xff] %vm357, %v1041
      %1078 = vst.msk [vmem:[#allocation3 + $0xc8] sm:$0xff] %vm357, %v1042
      %1079 = vst.msk [vmem:[#allocation3 + $0xd0] sm:$0xff] %vm357, %v1043
      %1080 = vst.msk [vmem:[#allocation3 + $0xd8] sm:$0xff] %vm357, %v1044
      %1081 = vst.msk [vmem:[#allocation3 + $0xe0] sm:$0xff] %vm357, %v1045
      %1082 = vst.msk [vmem:[#allocation3 + $0xe8] sm:$0xff] %vm357, %v1046
      %1083 = vst.msk [vmem:[#allocation3 + $0xf0] sm:$0xff] %vm357, %v1047
      %1084 = vst.msk [vmem:[#allocation3 + $0xf8] sm:$0xff] %vm357, %v1048
      %1085 = vst.msk [vmem:[#allocation3 + $0x100] sm:$0xff] %vm357, %v1049
      %1086 = vst.msk [vmem:[#allocation3 + $0x108] sm:$0xff] %vm357, %v1050
      %1087 = vst.msk [vmem:[#allocation3 + $0x110] sm:$0xff] %vm357, %v1051
      %1088 = vst.msk [vmem:[#allocation3 + $0x118] sm:$0xff] %vm357, %v1052
      %v1089 = vld [vmem:[#allocation2 + $0x2] sm:$0xff]
      %v1090 = vld [vmem:[#allocation2 + $0xa] sm:$0xff]
      %v1091 = vld [vmem:[#allocation2 + $0x12] sm:$0xff]
      %v1092 = vld [vmem:[#allocation2 + $0x1a] sm:$0xff]
      %v1093 = vld [vmem:[#allocation2 + $0x22] sm:$0xff]
      %v1094 = vld [vmem:[#allocation2 + $0x2a] sm:$0xff]
      %v1095 = vld [vmem:[#allocation2 + $0x32] sm:$0xff]
      %v1096 = vld [vmem:[#allocation2 + $0x3a] sm:$0xff]
      %v1097 = vld [vmem:[#allocation2 + $0x42] sm:$0xff]
      %v1098 = vld [vmem:[#allocation2 + $0x4a] sm:$0xff]
      %v1099 = vld [vmem:[#allocation2 + $0x52] sm:$0xff]
      %v1100 = vld [vmem:[#allocation2 + $0x5a] sm:$0xff]
      %v1101 = vld [vmem:[#allocation2 + $0x62] sm:$0xff]
      %v1102 = vld [vmem:[#allocation2 + $0x6a] sm:$0xff]
      %v1103 = vld [vmem:[#allocation2 + $0x72] sm:$0xff]
      %v1104 = vld [vmem:[#allocation2 + $0x7a] sm:$0xff]
      %v1105 = vld [vmem:[#allocation2 + $0x82] sm:$0xff]
      %v1106 = vld [vmem:[#allocation2 + $0x8a] sm:$0xff]
      %v1107 = vld [vmem:[#allocation2 + $0x92] sm:$0xff]
      %v1108 = vld [vmem:[#allocation2 + $0x9a] sm:$0xff]
      %v1109 = vld [vmem:[#allocation2 + $0xa2] sm:$0xff]
      %v1110 = vld [vmem:[#allocation2 + $0xaa] sm:$0xff]
      %v1111 = vld [vmem:[#allocation2 + $0xb2] sm:$0xff]
      %v1112 = vld [vmem:[#allocation2 + $0xba] sm:$0xff]
      %v1113 = vld [vmem:[#allocation2 + $0xc2] sm:$0xff]
      %v1114 = vld [vmem:[#allocation2 + $0xca] sm:$0xff]
      %v1115 = vld [vmem:[#allocation2 + $0xd2] sm:$0xff]
      %v1116 = vld [vmem:[#allocation2 + $0xda] sm:$0xff]
      %v1117 = vld [vmem:[#allocation2 + $0xe2] sm:$0xff]
      %v1118 = vld [vmem:[#allocation2 + $0xea] sm:$0xff]
      %v1119 = vld [vmem:[#allocation2 + $0xf2] sm:$0xff]
      %v1120 = vld [vmem:[#allocation2 + $0xfa] sm:$0xff]
      %v1121 = vld [vmem:[#allocation2 + $0x102] sm:$0xff]
      %v1122 = vld [vmem:[#allocation2 + $0x10a] sm:$0xff]
      %v1123 = vld [vmem:[#allocation2 + $0x112] sm:$0xff]
      %v1124 = vld [vmem:[#allocation2 + $0x11a] sm:$0xff]
      %v1125 = vpack.c.bf16 %v1090, %v1089
      %v1126 = vpack.c.bf16 %v1092, %v1091
      %v1127 = vpack.c.bf16 %v1094, %v1093
      %v1128 = vpack.c.bf16 %v1096, %v1095
      %v1129 = vpack.c.bf16 %v1098, %v1097
      %v1130 = vpack.c.bf16 %v1100, %v1099
      %v1131 = vpack.c.bf16 %v1102, %v1101
      %v1132 = vpack.c.bf16 %v1104, %v1103
      %v1133 = vpack.c.bf16 %v1106, %v1105
      %v1134 = vpack.c.bf16 %v1108, %v1107
      %v1135 = vpack.c.bf16 %v1110, %v1109
      %v1136 = vpack.c.bf16 %v1112, %v1111
      %v1137 = vpack.c.bf16 %v1114, %v1113
      %v1138 = vpack.c.bf16 %v1116, %v1115
      %v1139 = vpack.c.bf16 %v1118, %v1117
      %v1140 = vpack.c.bf16 %v1120, %v1119
      %v1141 = vpack.c.bf16 %v1122, %v1121
      %v1142 = vpack.c.bf16 %v1124, %v1123
      %v1143 = vld [vmem:[#allocation3] sm:$0xff]
      %v1144 = vld [vmem:[#allocation3 + $0x8] sm:$0xff]
      %v1145 = vld [vmem:[#allocation3 + $0x10] sm:$0xff]
      %v1146 = vld [vmem:[#allocation3 + $0x18] sm:$0xff]
      %v1147 = vld [vmem:[#allocation3 + $0x20] sm:$0xff]
      %v1148 = vld [vmem:[#allocation3 + $0x28] sm:$0xff]
      %v1149 = vld [vmem:[#allocation3 + $0x30] sm:$0xff]
      %v1150 = vld [vmem:[#allocation3 + $0x38] sm:$0xff]
      %v1151 = vld [vmem:[#allocation3 + $0x40] sm:$0xff]
      %v1152 = vld [vmem:[#allocation3 + $0x48] sm:$0xff]
      %v1153 = vld [vmem:[#allocation3 + $0x50] sm:$0xff]
      %v1154 = vld [vmem:[#allocation3 + $0x58] sm:$0xff]
      %v1155 = vld [vmem:[#allocation3 + $0x60] sm:$0xff]
      %v1156 = vld [vmem:[#allocation3 + $0x68] sm:$0xff]
      %v1157 = vld [vmem:[#allocation3 + $0x70] sm:$0xff]
      %v1158 = vld [vmem:[#allocation3 + $0x78] sm:$0xff]
      %v1159 = vld [vmem:[#allocation3 + $0x80] sm:$0xff]
      %v1160 = vld [vmem:[#allocation3 + $0x88] sm:$0xff]
      %v1161 = vld [vmem:[#allocation3 + $0x90] sm:$0xff]
      %v1162 = vld [vmem:[#allocation3 + $0x98] sm:$0xff]
      %v1163 = vld [vmem:[#allocation3 + $0xa0] sm:$0xff]
      %v1164 = vld [vmem:[#allocation3 + $0xa8] sm:$0xff]
      %v1165 = vld [vmem:[#allocation3 + $0xb0] sm:$0xff]
      %v1166 = vld [vmem:[#allocation3 + $0xb8] sm:$0xff]
      %v1167 = vld [vmem:[#allocation3 + $0xc0] sm:$0xff]
      %v1168 = vld [vmem:[#allocation3 + $0xc8] sm:$0xff]
      %v1169 = vld [vmem:[#allocation3 + $0xd0] sm:$0xff]
      %v1170 = vld [vmem:[#allocation3 + $0xd8] sm:$0xff]
      %v1171 = vld [vmem:[#allocation3 + $0xe0] sm:$0xff]
      %v1172 = vld [vmem:[#allocation3 + $0xe8] sm:$0xff]
      %v1173 = vld [vmem:[#allocation3 + $0xf0] sm:$0xff]
      %v1174 = vld [vmem:[#allocation3 + $0xf8] sm:$0xff]
      %v1175 = vld [vmem:[#allocation3 + $0x100] sm:$0xff]
      %v1176 = vld [vmem:[#allocation3 + $0x108] sm:$0xff]
      %v1177 = vld [vmem:[#allocation3 + $0x110] sm:$0xff]
      %v1178 = vld [vmem:[#allocation3 + $0x118] sm:$0xff]
      %s1179 = scalar_lea.vmem %s1, 64
      %v1180 = vld [vmem:[%s1179] sm:$0xf]
      %v1181 = vld [vmem:[%s1179 + $0x4] sm:$0xf]
      %v1182 = vld [vmem:[%s1179 + $0x8] sm:$0xf]
      %v1183 = vld [vmem:[%s1179 + $0xc] sm:$0xf]
      %v1184 = vld [vmem:[%s1179 + $0x10] sm:$0xf]
      %v1185 = vld [vmem:[%s1179 + $0x14] sm:$0xf]
      %v1186 = vld [vmem:[%s1179 + $0x18] sm:$0xf]
      %v1187 = vld [vmem:[%s1179 + $0x1c] sm:$0xf]
      %v1196 = vunpack.c.l.b16 %v1180
      %v1197 = vunpack.c.l.b16 %v1181
      %v1198 = vunpack.c.l.b16 %v1182
      %v1199 = vunpack.c.l.b16 %v1183
      %v1200 = vunpack.c.l.b16 %v1184
      %v1201 = vunpack.c.l.b16 %v1185
      %v1202 = vunpack.c.l.b16 %v1186
      %v1203 = vunpack.c.l.b16 %v1187
      %v1204 = vpack.c.b16 %v1197, %v1196
      %v1205 = vpack.c.b16 %v1199, %v1198
      %v1206 = vpack.c.b16 %v1201, %v1200
      %v1207 = vpack.c.b16 %v1203, %v1202
      %v1213 = vsel %vm312, %v1125, 0
      %v1216 = vsel %vm312, %v1126, 0
      %v1219 = vsel %vm312, %v1127, 0
      %v1222 = vsel %vm312, %v1128, 0
      %v1225 = vsel %vm312, %v1129, 0
      %v1228 = vsel %vm312, %v1130, 0
      %v1231 = vsel %vm312, %v1131, 0
      %v1234 = vsel %vm312, %v1132, 0
      %v1237 = vsel %vm312, %v1133, 0
      %v1240 = vsel %vm312, %v1134, 0
      %v1243 = vsel %vm312, %v1135, 0
      %v1246 = vsel %vm312, %v1136, 0
      %v1249 = vsel %vm312, %v1137, 0
      %v1252 = vsel %vm312, %v1138, 0
      %v1255 = vsel %vm312, %v1139, 0
      %v1258 = vsel %vm312, %v1140, 0
      %v1261 = vsel %vm312, %v1141, 0
      %v1264 = vsel %vm312, %v1142, 0
      %1266 = vmatpush.bf16.msra.mxu0 0
      %1267 = vmatpush.bf16.msra.mxu0 0
      %1268 = vmatpush.bf16.msra.mxu0 0
      %1269 = vmatpush.bf16.msra.mxu0 0
      %1270 = vmatpush.bf16.msra.mxu0 %v1207
      %1271 = vmatpush.bf16.msra.mxu0 %v1206
      %1272 = vmatpush.bf16.msra.mxu0 %v1205
      %1273 = vmatpush.bf16.msra.mxu0 %v1204
      %1274 = vmatmul.bf16.gmra.mxu0 %v1213
      %v1275 = vpop.f32.mrf.mxu0
      %v1276 = vadd.f32 0.0, %v1275
      %v1277 = vpop.f32.mrf.mxu0
      %v1278 = vadd.f32 0.0, %v1277
      %1279 = vmatmul.bf16.gmra.mxu0 %v1216
      %v1280 = vpop.f32.mrf.mxu0
      %v1281 = vadd.f32 0.0, %v1280
      %v1282 = vpop.f32.mrf.mxu0
      %v1283 = vadd.f32 0.0, %v1282
      %1284 = vmatmul.bf16.gmra.mxu0 %v1219
      %v1285 = vpop.f32.mrf.mxu0
      %v1286 = vadd.f32 0.0, %v1285
      %v1287 = vpop.f32.mrf.mxu0
      %v1288 = vadd.f32 0.0, %v1287
      %1289 = vmatmul.bf16.gmra.mxu0 %v1222
      %v1290 = vpop.f32.mrf.mxu0
      %v1291 = vadd.f32 0.0, %v1290
      %v1292 = vpop.f32.mrf.mxu0
      %v1293 = vadd.f32 0.0, %v1292
      %1294 = vmatmul.bf16.gmra.mxu0 %v1225
      %v1295 = vpop.f32.mrf.mxu0
      %v1296 = vadd.f32 0.0, %v1295
      %v1297 = vpop.f32.mrf.mxu0
      %v1298 = vadd.f32 0.0, %v1297
      %1299 = vmatmul.bf16.gmra.mxu0 %v1228
      %v1300 = vpop.f32.mrf.mxu0
      %v1301 = vadd.f32 0.0, %v1300
      %v1302 = vpop.f32.mrf.mxu0
      %v1303 = vadd.f32 0.0, %v1302
      %1304 = vmatmul.bf16.gmra.mxu0 %v1231
      %v1305 = vpop.f32.mrf.mxu0
      %v1306 = vadd.f32 0.0, %v1305
      %v1307 = vpop.f32.mrf.mxu0
      %v1308 = vadd.f32 0.0, %v1307
      %1309 = vmatmul.bf16.gmra.mxu0 %v1234
      %v1310 = vpop.f32.mrf.mxu0
      %v1311 = vadd.f32 0.0, %v1310
      %v1312 = vpop.f32.mrf.mxu0
      %v1313 = vadd.f32 0.0, %v1312
      %1314 = vmatmul.bf16.gmra.mxu0 %v1237
      %v1315 = vpop.f32.mrf.mxu0
      %v1316 = vadd.f32 0.0, %v1315
      %v1317 = vpop.f32.mrf.mxu0
      %v1318 = vadd.f32 0.0, %v1317
      %1319 = vmatmul.bf16.gmra.mxu0 %v1240
      %v1320 = vpop.f32.mrf.mxu0
      %v1321 = vadd.f32 0.0, %v1320
      %v1322 = vpop.f32.mrf.mxu0
      %v1323 = vadd.f32 0.0, %v1322
      %1324 = vmatmul.bf16.gmra.mxu0 %v1243
      %v1325 = vpop.f32.mrf.mxu0
      %v1326 = vadd.f32 0.0, %v1325
      %v1327 = vpop.f32.mrf.mxu0
      %v1328 = vadd.f32 0.0, %v1327
      %1329 = vmatmul.bf16.gmra.mxu0 %v1246
      %v1330 = vpop.f32.mrf.mxu0
      %v1331 = vadd.f32 0.0, %v1330
      %v1332 = vpop.f32.mrf.mxu0
      %v1333 = vadd.f32 0.0, %v1332
      %1334 = vmatmul.bf16.gmra.mxu0 %v1249
      %v1335 = vpop.f32.mrf.mxu0
      %v1336 = vadd.f32 0.0, %v1335
      %v1337 = vpop.f32.mrf.mxu0
      %v1338 = vadd.f32 0.0, %v1337
      %1339 = vmatmul.bf16.gmra.mxu0 %v1252
      %v1340 = vpop.f32.mrf.mxu0
      %v1341 = vadd.f32 0.0, %v1340
      %v1342 = vpop.f32.mrf.mxu0
      %v1343 = vadd.f32 0.0, %v1342
      %1344 = vmatmul.bf16.gmra.mxu0 %v1255
      %v1345 = vpop.f32.mrf.mxu0
      %v1346 = vadd.f32 0.0, %v1345
      %v1347 = vpop.f32.mrf.mxu0
      %v1348 = vadd.f32 0.0, %v1347
      %1349 = vmatmul.bf16.gmra.mxu0 %v1258
      %v1350 = vpop.f32.mrf.mxu0
      %v1351 = vadd.f32 0.0, %v1350
      %v1352 = vpop.f32.mrf.mxu0
      %v1353 = vadd.f32 0.0, %v1352
      %1354 = vmatmul.bf16.gmra.mxu0 %v1261
      %v1355 = vpop.f32.mrf.mxu0
      %v1356 = vadd.f32 0.0, %v1355
      %v1357 = vpop.f32.mrf.mxu0
      %v1358 = vadd.f32 0.0, %v1357
      %1359 = vmatmul.bf16.gmra.mxu0 %v1264
      %v1360 = vpop.f32.mrf.mxu0
      %v1361 = vadd.f32 0.0, %v1360
      %v1362 = vpop.f32.mrf.mxu0
      %v1363 = vadd.f32 0.0, %v1362
      %1364 = vdwg.mxu0
      %v1365 = vadd.f32 %v1143, %v1276
      %v1366 = vadd.f32 %v1144, %v1278
      %v1367 = vadd.f32 %v1145, %v1281
      %v1368 = vadd.f32 %v1146, %v1283
      %v1369 = vadd.f32 %v1147, %v1286
      %v1370 = vadd.f32 %v1148, %v1288
      %v1371 = vadd.f32 %v1149, %v1291
      %v1372 = vadd.f32 %v1150, %v1293
      %v1373 = vadd.f32 %v1151, %v1296
      %v1374 = vadd.f32 %v1152, %v1298
      %v1375 = vadd.f32 %v1153, %v1301
      %v1376 = vadd.f32 %v1154, %v1303
      %v1377 = vadd.f32 %v1155, %v1306
      %v1378 = vadd.f32 %v1156, %v1308
      %v1379 = vadd.f32 %v1157, %v1311
      %v1380 = vadd.f32 %v1158, %v1313
      %v1381 = vadd.f32 %v1159, %v1316
      %v1382 = vadd.f32 %v1160, %v1318
      %v1383 = vadd.f32 %v1161, %v1321
      %v1384 = vadd.f32 %v1162, %v1323
      %v1385 = vadd.f32 %v1163, %v1326
      %v1386 = vadd.f32 %v1164, %v1328
      %v1387 = vadd.f32 %v1165, %v1331
      %v1388 = vadd.f32 %v1166, %v1333
      %v1389 = vadd.f32 %v1167, %v1336
      %v1390 = vadd.f32 %v1168, %v1338
      %v1391 = vadd.f32 %v1169, %v1341
      %v1392 = vadd.f32 %v1170, %v1343
      %v1393 = vadd.f32 %v1171, %v1346
      %v1394 = vadd.f32 %v1172, %v1348
      %v1395 = vadd.f32 %v1173, %v1351
      %v1396 = vadd.f32 %v1174, %v1353
      %v1397 = vadd.f32 %v1175, %v1356
      %v1398 = vadd.f32 %v1176, %v1358
      %v1399 = vadd.f32 %v1177, %v1361
      %v1400 = vadd.f32 %v1178, %v1363
      %1401 = vst.msk [vmem:[#allocation3] sm:$0xff] %vm357, %v1365
      %1402 = vst.msk [vmem:[#allocation3 + $0x8] sm:$0xff] %vm357, %v1366
      %1403 = vst.msk [vmem:[#allocation3 + $0x10] sm:$0xff] %vm357, %v1367
      %1404 = vst.msk [vmem:[#allocation3 + $0x18] sm:$0xff] %vm357, %v1368
      %1405 = vst.msk [vmem:[#allocation3 + $0x20] sm:$0xff] %vm357, %v1369
      %1406 = vst.msk [vmem:[#allocation3 + $0x28] sm:$0xff] %vm357, %v1370
      %1407 = vst.msk [vmem:[#allocation3 + $0x30] sm:$0xff] %vm357, %v1371
      %1408 = vst.msk [vmem:[#allocation3 + $0x38] sm:$0xff] %vm357, %v1372
      %1409 = vst.msk [vmem:[#allocation3 + $0x40] sm:$0xff] %vm357, %v1373
      %1410 = vst.msk [vmem:[#allocation3 + $0x48] sm:$0xff] %vm357, %v1374
      %1411 = vst.msk [vmem:[#allocation3 + $0x50] sm:$0xff] %vm357, %v1375
      %1412 = vst.msk [vmem:[#allocation3 + $0x58] sm:$0xff] %vm357, %v1376
      %1413 = vst.msk [vmem:[#allocation3 + $0x60] sm:$0xff] %vm357, %v1377
      %1414 = vst.msk [vmem:[#allocation3 + $0x68] sm:$0xff] %vm357, %v1378
      %1415 = vst.msk [vmem:[#allocation3 + $0x70] sm:$0xff] %vm357, %v1379
      %1416 = vst.msk [vmem:[#allocation3 + $0x78] sm:$0xff] %vm357, %v1380
      %1417 = vst.msk [vmem:[#allocation3 + $0x80] sm:$0xff] %vm357, %v1381
      %1418 = vst.msk [vmem:[#allocation3 + $0x88] sm:$0xff] %vm357, %v1382
      %1419 = vst.msk [vmem:[#allocation3 + $0x90] sm:$0xff] %vm357, %v1383
      %1420 = vst.msk [vmem:[#allocation3 + $0x98] sm:$0xff] %vm357, %v1384
      %1421 = vst.msk [vmem:[#allocation3 + $0xa0] sm:$0xff] %vm357, %v1385
      %1422 = vst.msk [vmem:[#allocation3 + $0xa8] sm:$0xff] %vm357, %v1386
      %1423 = vst.msk [vmem:[#allocation3 + $0xb0] sm:$0xff] %vm357, %v1387
      %1424 = vst.msk [vmem:[#allocation3 + $0xb8] sm:$0xff] %vm357, %v1388
      %1425 = vst.msk [vmem:[#allocation3 + $0xc0] sm:$0xff] %vm357, %v1389
      %1426 = vst.msk [vmem:[#allocation3 + $0xc8] sm:$0xff] %vm357, %v1390
      %1427 = vst.msk [vmem:[#allocation3 + $0xd0] sm:$0xff] %vm357, %v1391
      %1428 = vst.msk [vmem:[#allocation3 + $0xd8] sm:$0xff] %vm357, %v1392
      %1429 = vst.msk [vmem:[#allocation3 + $0xe0] sm:$0xff] %vm357, %v1393
      %1430 = vst.msk [vmem:[#allocation3 + $0xe8] sm:$0xff] %vm357, %v1394
      %1431 = vst.msk [vmem:[#allocation3 + $0xf0] sm:$0xff] %vm357, %v1395
      %1432 = vst.msk [vmem:[#allocation3 + $0xf8] sm:$0xff] %vm357, %v1396
      %1433 = vst.msk [vmem:[#allocation3 + $0x100] sm:$0xff] %vm357, %v1397
      %1434 = vst.msk [vmem:[#allocation3 + $0x108] sm:$0xff] %vm357, %v1398
      %1435 = vst.msk [vmem:[#allocation3 + $0x110] sm:$0xff] %vm357, %v1399
      %1436 = vst.msk [vmem:[#allocation3 + $0x118] sm:$0xff] %vm357, %v1400
      %v1437 = vld [vmem:[#allocation2 + $0x12] sm:$0xff]
      %v1438 = vld [vmem:[#allocation2 + $0x1a] sm:$0xff]
      %v1439 = vld [vmem:[#allocation2 + $0x22] sm:$0xff]
      %v1440 = vld [vmem:[#allocation2 + $0x2a] sm:$0xff]
      %v1441 = vld [vmem:[#allocation2 + $0x32] sm:$0xff]
      %v1442 = vld [vmem:[#allocation2 + $0x3a] sm:$0xff]
      %v1443 = vld [vmem:[#allocation2 + $0x42] sm:$0xff]
      %v1444 = vld [vmem:[#allocation2 + $0x4a] sm:$0xff]
      %v1445 = vld [vmem:[#allocation2 + $0x52] sm:$0xff]
      %v1446 = vld [vmem:[#allocation2 + $0x5a] sm:$0xff]
      %v1447 = vld [vmem:[#allocation2 + $0x62] sm:$0xff]
      %v1448 = vld [vmem:[#allocation2 + $0x6a] sm:$0xff]
      %v1449 = vld [vmem:[#allocation2 + $0x72] sm:$0xff]
      %v1450 = vld [vmem:[#allocation2 + $0x7a] sm:$0xff]
      %v1451 = vld [vmem:[#allocation2 + $0x82] sm:$0xff]
      %v1452 = vld [vmem:[#allocation2 + $0x8a] sm:$0xff]
      %v1453 = vld [vmem:[#allocation2 + $0x92] sm:$0xff]
      %v1454 = vld [vmem:[#allocation2 + $0x9a] sm:$0xff]
      %v1455 = vld [vmem:[#allocation2 + $0xa2] sm:$0xff]
      %v1456 = vld [vmem:[#allocation2 + $0xaa] sm:$0xff]
      %v1457 = vld [vmem:[#allocation2 + $0xb2] sm:$0xff]
      %v1458 = vld [vmem:[#allocation2 + $0xba] sm:$0xff]
      %v1459 = vld [vmem:[#allocation2 + $0xc2] sm:$0xff]
      %v1460 = vld [vmem:[#allocation2 + $0xca] sm:$0xff]
      %v1461 = vld [vmem:[#allocation2 + $0xd2] sm:$0xff]
      %v1462 = vld [vmem:[#allocation2 + $0xda] sm:$0xff]
      %v1463 = vld [vmem:[#allocation2 + $0xe2] sm:$0xff]
      %v1464 = vld [vmem:[#allocation2 + $0xea] sm:$0xff]
      %v1465 = vld [vmem:[#allocation2 + $0xf2] sm:$0xff]
      %v1466 = vld [vmem:[#allocation2 + $0xfa] sm:$0xff]
      %v1467 = vld [vmem:[#allocation2 + $0x102] sm:$0xff]
      %v1468 = vld [vmem:[#allocation2 + $0x10a] sm:$0xff]
      %v1469 = vld [vmem:[#allocation2 + $0x112] sm:$0xff]
      %v1470 = vld [vmem:[#allocation2 + $0x11a] sm:$0xff]
      %v1471 = vld [vmem:[#allocation2 + $0x122] sm:$0xff]
      %v1472 = vld [vmem:[#allocation2 + $0x12a] sm:$0xff]
      %v1473 = vpack.c.bf16 %v1438, %v1437
      %v1474 = vpack.c.bf16 %v1440, %v1439
      %v1475 = vpack.c.bf16 %v1442, %v1441
      %v1476 = vpack.c.bf16 %v1444, %v1443
      %v1477 = vpack.c.bf16 %v1446, %v1445
      %v1478 = vpack.c.bf16 %v1448, %v1447
      %v1479 = vpack.c.bf16 %v1450, %v1449
      %v1480 = vpack.c.bf16 %v1452, %v1451
      %v1481 = vpack.c.bf16 %v1454, %v1453
      %v1482 = vpack.c.bf16 %v1456, %v1455
      %v1483 = vpack.c.bf16 %v1458, %v1457
      %v1484 = vpack.c.bf16 %v1460, %v1459
      %v1485 = vpack.c.bf16 %v1462, %v1461
      %v1486 = vpack.c.bf16 %v1464, %v1463
      %v1487 = vpack.c.bf16 %v1466, %v1465
      %v1488 = vpack.c.bf16 %v1468, %v1467
      %v1489 = vpack.c.bf16 %v1470, %v1469
      %v1490 = vpack.c.bf16 %v1472, %v1471
      %v1491 = vld [vmem:[#allocation3] sm:$0xff]
      %v1492 = vld [vmem:[#allocation3 + $0x8] sm:$0xff]
      %v1493 = vld [vmem:[#allocation3 + $0x10] sm:$0xff]
      %v1494 = vld [vmem:[#allocation3 + $0x18] sm:$0xff]
      %v1495 = vld [vmem:[#allocation3 + $0x20] sm:$0xff]
      %v1496 = vld [vmem:[#allocation3 + $0x28] sm:$0xff]
      %v1497 = vld [vmem:[#allocation3 + $0x30] sm:$0xff]
      %v1498 = vld [vmem:[#allocation3 + $0x38] sm:$0xff]
      %v1499 = vld [vmem:[#allocation3 + $0x40] sm:$0xff]
      %v1500 = vld [vmem:[#allocation3 + $0x48] sm:$0xff]
      %v1501 = vld [vmem:[#allocation3 + $0x50] sm:$0xff]
      %v1502 = vld [vmem:[#allocation3 + $0x58] sm:$0xff]
      %v1503 = vld [vmem:[#allocation3 + $0x60] sm:$0xff]
      %v1504 = vld [vmem:[#allocation3 + $0x68] sm:$0xff]
      %v1505 = vld [vmem:[#allocation3 + $0x70] sm:$0xff]
      %v1506 = vld [vmem:[#allocation3 + $0x78] sm:$0xff]
      %v1507 = vld [vmem:[#allocation3 + $0x80] sm:$0xff]
      %v1508 = vld [vmem:[#allocation3 + $0x88] sm:$0xff]
      %v1509 = vld [vmem:[#allocation3 + $0x90] sm:$0xff]
      %v1510 = vld [vmem:[#allocation3 + $0x98] sm:$0xff]
      %v1511 = vld [vmem:[#allocation3 + $0xa0] sm:$0xff]
      %v1512 = vld [vmem:[#allocation3 + $0xa8] sm:$0xff]
      %v1513 = vld [vmem:[#allocation3 + $0xb0] sm:$0xff]
      %v1514 = vld [vmem:[#allocation3 + $0xb8] sm:$0xff]
      %v1515 = vld [vmem:[#allocation3 + $0xc0] sm:$0xff]
      %v1516 = vld [vmem:[#allocation3 + $0xc8] sm:$0xff]
      %v1517 = vld [vmem:[#allocation3 + $0xd0] sm:$0xff]
      %v1518 = vld [vmem:[#allocation3 + $0xd8] sm:$0xff]
      %v1519 = vld [vmem:[#allocation3 + $0xe0] sm:$0xff]
      %v1520 = vld [vmem:[#allocation3 + $0xe8] sm:$0xff]
      %v1521 = vld [vmem:[#allocation3 + $0xf0] sm:$0xff]
      %v1522 = vld [vmem:[#allocation3 + $0xf8] sm:$0xff]
      %v1523 = vld [vmem:[#allocation3 + $0x100] sm:$0xff]
      %v1524 = vld [vmem:[#allocation3 + $0x108] sm:$0xff]
      %v1525 = vld [vmem:[#allocation3 + $0x110] sm:$0xff]
      %v1526 = vld [vmem:[#allocation3 + $0x118] sm:$0xff]
      %s1527 = scalar_lea.vmem %s1, 96
      %v1528 = vld [vmem:[%s1527] sm:$0xf]
      %v1529 = vld [vmem:[%s1527 + $0x4] sm:$0xf]
      %v1530 = vld [vmem:[%s1527 + $0x8] sm:$0xf]
      %v1531 = vld [vmem:[%s1527 + $0xc] sm:$0xf]
      %v1532 = vld [vmem:[%s1527 + $0x10] sm:$0xf]
      %v1533 = vld [vmem:[%s1527 + $0x14] sm:$0xf]
      %v1534 = vld [vmem:[%s1527 + $0x18] sm:$0xf]
      %v1535 = vld [vmem:[%s1527 + $0x1c] sm:$0xf]
      %v1544 = vunpack.c.l.b16 %v1528
      %v1545 = vunpack.c.l.b16 %v1529
      %v1546 = vunpack.c.l.b16 %v1530
      %v1547 = vunpack.c.l.b16 %v1531
      %v1548 = vunpack.c.l.b16 %v1532
      %v1549 = vunpack.c.l.b16 %v1533
      %v1550 = vunpack.c.l.b16 %v1534
      %v1551 = vunpack.c.l.b16 %v1535
      %v1552 = vpack.c.b16 %v1545, %v1544
      %v1553 = vpack.c.b16 %v1547, %v1546
      %v1554 = vpack.c.b16 %v1549, %v1548
      %v1555 = vpack.c.b16 %v1551, %v1550
      %v1561 = vsel %vm312, %v1473, 0
      %v1564 = vsel %vm312, %v1474, 0
      %v1567 = vsel %vm312, %v1475, 0
      %v1570 = vsel %vm312, %v1476, 0
      %v1573 = vsel %vm312, %v1477, 0
      %v1576 = vsel %vm312, %v1478, 0
      %v1579 = vsel %vm312, %v1479, 0
      %v1582 = vsel %vm312, %v1480, 0
      %v1585 = vsel %vm312, %v1481, 0
      %v1588 = vsel %vm312, %v1482, 0
      %v1591 = vsel %vm312, %v1483, 0
      %v1594 = vsel %vm312, %v1484, 0
      %v1597 = vsel %vm312, %v1485, 0
      %v1600 = vsel %vm312, %v1486, 0
      %v1603 = vsel %vm312, %v1487, 0
      %v1606 = vsel %vm312, %v1488, 0
      %v1609 = vsel %vm312, %v1489, 0
      %v1612 = vsel %vm312, %v1490, 0
      %1614 = vmatpush.bf16.msra.mxu0 0
      %1615 = vmatpush.bf16.msra.mxu0 0
      %1616 = vmatpush.bf16.msra.mxu0 0
      %1617 = vmatpush.bf16.msra.mxu0 0
      %1618 = vmatpush.bf16.msra.mxu0 %v1555
      %1619 = vmatpush.bf16.msra.mxu0 %v1554
      %1620 = vmatpush.bf16.msra.mxu0 %v1553
      %1621 = vmatpush.bf16.msra.mxu0 %v1552
      %1622 = vmatmul.bf16.gmra.mxu0 %v1561
      %v1623 = vpop.f32.mrf.mxu0
      %v1624 = vadd.f32 0.0, %v1623
      %v1625 = vpop.f32.mrf.mxu0
      %v1626 = vadd.f32 0.0, %v1625
      %1627 = vmatmul.bf16.gmra.mxu0 %v1564
      %v1628 = vpop.f32.mrf.mxu0
      %v1629 = vadd.f32 0.0, %v1628
      %v1630 = vpop.f32.mrf.mxu0
      %v1631 = vadd.f32 0.0, %v1630
      %1632 = vmatmul.bf16.gmra.mxu0 %v1567
      %v1633 = vpop.f32.mrf.mxu0
      %v1634 = vadd.f32 0.0, %v1633
      %v1635 = vpop.f32.mrf.mxu0
      %v1636 = vadd.f32 0.0, %v1635
      %1637 = vmatmul.bf16.gmra.mxu0 %v1570
      %v1638 = vpop.f32.mrf.mxu0
      %v1639 = vadd.f32 0.0, %v1638
      %v1640 = vpop.f32.mrf.mxu0
      %v1641 = vadd.f32 0.0, %v1640
      %1642 = vmatmul.bf16.gmra.mxu0 %v1573
      %v1643 = vpop.f32.mrf.mxu0
      %v1644 = vadd.f32 0.0, %v1643
      %v1645 = vpop.f32.mrf.mxu0
      %v1646 = vadd.f32 0.0, %v1645
      %1647 = vmatmul.bf16.gmra.mxu0 %v1576
      %v1648 = vpop.f32.mrf.mxu0
      %v1649 = vadd.f32 0.0, %v1648
      %v1650 = vpop.f32.mrf.mxu0
      %v1651 = vadd.f32 0.0, %v1650
      %1652 = vmatmul.bf16.gmra.mxu0 %v1579
      %v1653 = vpop.f32.mrf.mxu0
      %v1654 = vadd.f32 0.0, %v1653
      %v1655 = vpop.f32.mrf.mxu0
      %v1656 = vadd.f32 0.0, %v1655
      %1657 = vmatmul.bf16.gmra.mxu0 %v1582
      %v1658 = vpop.f32.mrf.mxu0
      %v1659 = vadd.f32 0.0, %v1658
      %v1660 = vpop.f32.mrf.mxu0
      %v1661 = vadd.f32 0.0, %v1660
      %1662 = vmatmul.bf16.gmra.mxu0 %v1585
      %v1663 = vpop.f32.mrf.mxu0
      %v1664 = vadd.f32 0.0, %v1663
      %v1665 = vpop.f32.mrf.mxu0
      %v1666 = vadd.f32 0.0, %v1665
      %1667 = vmatmul.bf16.gmra.mxu0 %v1588
      %v1668 = vpop.f32.mrf.mxu0
      %v1669 = vadd.f32 0.0, %v1668
      %v1670 = vpop.f32.mrf.mxu0
      %v1671 = vadd.f32 0.0, %v1670
      %1672 = vmatmul.bf16.gmra.mxu0 %v1591
      %v1673 = vpop.f32.mrf.mxu0
      %v1674 = vadd.f32 0.0, %v1673
      %v1675 = vpop.f32.mrf.mxu0
      %v1676 = vadd.f32 0.0, %v1675
      %1677 = vmatmul.bf16.gmra.mxu0 %v1594
      %v1678 = vpop.f32.mrf.mxu0
      %v1679 = vadd.f32 0.0, %v1678
      %v1680 = vpop.f32.mrf.mxu0
      %v1681 = vadd.f32 0.0, %v1680
      %1682 = vmatmul.bf16.gmra.mxu0 %v1597
      %v1683 = vpop.f32.mrf.mxu0
      %v1684 = vadd.f32 0.0, %v1683
      %v1685 = vpop.f32.mrf.mxu0
      %v1686 = vadd.f32 0.0, %v1685
      %1687 = vmatmul.bf16.gmra.mxu0 %v1600
      %v1688 = vpop.f32.mrf.mxu0
      %v1689 = vadd.f32 0.0, %v1688
      %v1690 = vpop.f32.mrf.mxu0
      %v1691 = vadd.f32 0.0, %v1690
      %1692 = vmatmul.bf16.gmra.mxu0 %v1603
      %v1693 = vpop.f32.mrf.mxu0
      %v1694 = vadd.f32 0.0, %v1693
      %v1695 = vpop.f32.mrf.mxu0
      %v1696 = vadd.f32 0.0, %v1695
      %1697 = vmatmul.bf16.gmra.mxu0 %v1606
      %v1698 = vpop.f32.mrf.mxu0
      %v1699 = vadd.f32 0.0, %v1698
      %v1700 = vpop.f32.mrf.mxu0
      %v1701 = vadd.f32 0.0, %v1700
      %1702 = vmatmul.bf16.gmra.mxu0 %v1609
      %v1703 = vpop.f32.mrf.mxu0
      %v1704 = vadd.f32 0.0, %v1703
      %v1705 = vpop.f32.mrf.mxu0
      %v1706 = vadd.f32 0.0, %v1705
      %1707 = vmatmul.bf16.gmra.mxu0 %v1612
      %v1708 = vpop.f32.mrf.mxu0
      %v1709 = vadd.f32 0.0, %v1708
      %v1710 = vpop.f32.mrf.mxu0
      %v1711 = vadd.f32 0.0, %v1710
      %1712 = vdwg.mxu0
      %v1713 = vadd.f32 %v1491, %v1624
      %v1714 = vadd.f32 %v1492, %v1626
      %v1715 = vadd.f32 %v1493, %v1629
      %v1716 = vadd.f32 %v1494, %v1631
      %v1717 = vadd.f32 %v1495, %v1634
      %v1718 = vadd.f32 %v1496, %v1636
      %v1719 = vadd.f32 %v1497, %v1639
      %v1720 = vadd.f32 %v1498, %v1641
      %v1721 = vadd.f32 %v1499, %v1644
      %v1722 = vadd.f32 %v1500, %v1646
      %v1723 = vadd.f32 %v1501, %v1649
      %v1724 = vadd.f32 %v1502, %v1651
      %v1725 = vadd.f32 %v1503, %v1654
      %v1726 = vadd.f32 %v1504, %v1656
      %v1727 = vadd.f32 %v1505, %v1659
      %v1728 = vadd.f32 %v1506, %v1661
      %v1729 = vadd.f32 %v1507, %v1664
      %v1730 = vadd.f32 %v1508, %v1666
      %v1731 = vadd.f32 %v1509, %v1669
      %v1732 = vadd.f32 %v1510, %v1671
      %v1733 = vadd.f32 %v1511, %v1674
      %v1734 = vadd.f32 %v1512, %v1676
      %v1735 = vadd.f32 %v1513, %v1679
      %v1736 = vadd.f32 %v1514, %v1681
      %v1737 = vadd.f32 %v1515, %v1684
      %v1738 = vadd.f32 %v1516, %v1686
      %v1739 = vadd.f32 %v1517, %v1689
      %v1740 = vadd.f32 %v1518, %v1691
      %v1741 = vadd.f32 %v1519, %v1694
      %v1742 = vadd.f32 %v1520, %v1696
      %v1743 = vadd.f32 %v1521, %v1699
      %v1744 = vadd.f32 %v1522, %v1701
      %v1745 = vadd.f32 %v1523, %v1704
      %v1746 = vadd.f32 %v1524, %v1706
      %v1747 = vadd.f32 %v1525, %v1709
      %v1748 = vadd.f32 %v1526, %v1711
      %1749 = vst.msk [vmem:[#allocation3] sm:$0xff] %vm357, %v1713
      %1750 = vst.msk [vmem:[#allocation3 + $0x8] sm:$0xff] %vm357, %v1714
      %1751 = vst.msk [vmem:[#allocation3 + $0x10] sm:$0xff] %vm357, %v1715
      %1752 = vst.msk [vmem:[#allocation3 + $0x18] sm:$0xff] %vm357, %v1716
      %1753 = vst.msk [vmem:[#allocation3 + $0x20] sm:$0xff] %vm357, %v1717
      %1754 = vst.msk [vmem:[#allocation3 + $0x28] sm:$0xff] %vm357, %v1718
      %1755 = vst.msk [vmem:[#allocation3 + $0x30] sm:$0xff] %vm357, %v1719
      %1756 = vst.msk [vmem:[#allocation3 + $0x38] sm:$0xff] %vm357, %v1720
      %1757 = vst.msk [vmem:[#allocation3 + $0x40] sm:$0xff] %vm357, %v1721
      %1758 = vst.msk [vmem:[#allocation3 + $0x48] sm:$0xff] %vm357, %v1722
      %1759 = vst.msk [vmem:[#allocation3 + $0x50] sm:$0xff] %vm357, %v1723
      %1760 = vst.msk [vmem:[#allocation3 + $0x58] sm:$0xff] %vm357, %v1724
      %1761 = vst.msk [vmem:[#allocation3 + $0x60] sm:$0xff] %vm357, %v1725
      %1762 = vst.msk [vmem:[#allocation3 + $0x68] sm:$0xff] %vm357, %v1726
      %1763 = vst.msk [vmem:[#allocation3 + $0x70] sm:$0xff] %vm357, %v1727
      %1764 = vst.msk [vmem:[#allocation3 + $0x78] sm:$0xff] %vm357, %v1728
      %1765 = vst.msk [vmem:[#allocation3 + $0x80] sm:$0xff] %vm357, %v1729
      %1766 = vst.msk [vmem:[#allocation3 + $0x88] sm:$0xff] %vm357, %v1730
      %1767 = vst.msk [vmem:[#allocation3 + $0x90] sm:$0xff] %vm357, %v1731
      %1768 = vst.msk [vmem:[#allocation3 + $0x98] sm:$0xff] %vm357, %v1732
      %1769 = vst.msk [vmem:[#allocation3 + $0xa0] sm:$0xff] %vm357, %v1733
      %1770 = vst.msk [vmem:[#allocation3 + $0xa8] sm:$0xff] %vm357, %v1734
      %1771 = vst.msk [vmem:[#allocation3 + $0xb0] sm:$0xff] %vm357, %v1735
      %1772 = vst.msk [vmem:[#allocation3 + $0xb8] sm:$0xff] %vm357, %v1736
      %1773 = vst.msk [vmem:[#allocation3 + $0xc0] sm:$0xff] %vm357, %v1737
      %1774 = vst.msk [vmem:[#allocation3 + $0xc8] sm:$0xff] %vm357, %v1738
      %1775 = vst.msk [vmem:[#allocation3 + $0xd0] sm:$0xff] %vm357, %v1739
      %1776 = vst.msk [vmem:[#allocation3 + $0xd8] sm:$0xff] %vm357, %v1740
      %1777 = vst.msk [vmem:[#allocation3 + $0xe0] sm:$0xff] %vm357, %v1741
      %1778 = vst.msk [vmem:[#allocation3 + $0xe8] sm:$0xff] %vm357, %v1742
      %1779 = vst.msk [vmem:[#allocation3 + $0xf0] sm:$0xff] %vm357, %v1743
      %1780 = vst.msk [vmem:[#allocation3 + $0xf8] sm:$0xff] %vm357, %v1744
      %1781 = vst.msk [vmem:[#allocation3 + $0x100] sm:$0xff] %vm357, %v1745
      %1782 = vst.msk [vmem:[#allocation3 + $0x108] sm:$0xff] %vm357, %v1746
      %1783 = vst.msk [vmem:[#allocation3 + $0x110] sm:$0xff] %vm357, %v1747
      %1784 = vst.msk [vmem:[#allocation3 + $0x118] sm:$0xff] %vm357, %v1748
      %v1785 = vld [vmem:[#allocation2 + $0x13] sm:$0xff]
      %v1786 = vld [vmem:[#allocation2 + $0x1b] sm:$0xff]
      %v1787 = vld [vmem:[#allocation2 + $0x23] sm:$0xff]
      %v1788 = vld [vmem:[#allocation2 + $0x2b] sm:$0xff]
      %v1789 = vld [vmem:[#allocation2 + $0x33] sm:$0xff]
      %v1790 = vld [vmem:[#allocation2 + $0x3b] sm:$0xff]
      %v1791 = vld [vmem:[#allocation2 + $0x43] sm:$0xff]
      %v1792 = vld [vmem:[#allocation2 + $0x4b] sm:$0xff]
      %v1793 = vld [vmem:[#allocation2 + $0x53] sm:$0xff]
      %v1794 = vld [vmem:[#allocation2 + $0x5b] sm:$0xff]
      %v1795 = vld [vmem:[#allocation2 + $0x63] sm:$0xff]
      %v1796 = vld [vmem:[#allocation2 + $0x6b] sm:$0xff]
      %v1797 = vld [vmem:[#allocation2 + $0x73] sm:$0xff]
      %v1798 = vld [vmem:[#allocation2 + $0x7b] sm:$0xff]
      %v1799 = vld [vmem:[#allocation2 + $0x83] sm:$0xff]
      %v1800 = vld [vmem:[#allocation2 + $0x8b] sm:$0xff]
      %v1801 = vld [vmem:[#allocation2 + $0x93] sm:$0xff]
      %v1802 = vld [vmem:[#allocation2 + $0x9b] sm:$0xff]
      %v1803 = vld [vmem:[#allocation2 + $0xa3] sm:$0xff]
      %v1804 = vld [vmem:[#allocation2 + $0xab] sm:$0xff]
      %v1805 = vld [vmem:[#allocation2 + $0xb3] sm:$0xff]
      %v1806 = vld [vmem:[#allocation2 + $0xbb] sm:$0xff]
      %v1807 = vld [vmem:[#allocation2 + $0xc3] sm:$0xff]
      %v1808 = vld [vmem:[#allocation2 + $0xcb] sm:$0xff]
      %v1809 = vld [vmem:[#allocation2 + $0xd3] sm:$0xff]
      %v1810 = vld [vmem:[#allocation2 + $0xdb] sm:$0xff]
      %v1811 = vld [vmem:[#allocation2 + $0xe3] sm:$0xff]
      %v1812 = vld [vmem:[#allocation2 + $0xeb] sm:$0xff]
      %v1813 = vld [vmem:[#allocation2 + $0xf3] sm:$0xff]
      %v1814 = vld [vmem:[#allocation2 + $0xfb] sm:$0xff]
      %v1815 = vld [vmem:[#allocation2 + $0x103] sm:$0xff]
      %v1816 = vld [vmem:[#allocation2 + $0x10b] sm:$0xff]
      %v1817 = vld [vmem:[#allocation2 + $0x113] sm:$0xff]
      %v1818 = vld [vmem:[#allocation2 + $0x11b] sm:$0xff]
      %v1819 = vld [vmem:[#allocation2 + $0x123] sm:$0xff]
      %v1820 = vld [vmem:[#allocation2 + $0x12b] sm:$0xff]
      %v1821 = vpack.c.bf16 %v1786, %v1785
      %v1822 = vpack.c.bf16 %v1788, %v1787
      %v1823 = vpack.c.bf16 %v1790, %v1789
      %v1824 = vpack.c.bf16 %v1792, %v1791
      %v1825 = vpack.c.bf16 %v1794, %v1793
      %v1826 = vpack.c.bf16 %v1796, %v1795
      %v1827 = vpack.c.bf16 %v1798, %v1797
      %v1828 = vpack.c.bf16 %v1800, %v1799
      %v1829 = vpack.c.bf16 %v1802, %v1801
      %v1830 = vpack.c.bf16 %v1804, %v1803
      %v1831 = vpack.c.bf16 %v1806, %v1805
      %v1832 = vpack.c.bf16 %v1808, %v1807
      %v1833 = vpack.c.bf16 %v1810, %v1809
      %v1834 = vpack.c.bf16 %v1812, %v1811
      %v1835 = vpack.c.bf16 %v1814, %v1813
      %v1836 = vpack.c.bf16 %v1816, %v1815
      %v1837 = vpack.c.bf16 %v1818, %v1817
      %v1838 = vpack.c.bf16 %v1820, %v1819
      %v1839 = vld [vmem:[#allocation3] sm:$0xff]
      %v1840 = vld [vmem:[#allocation3 + $0x8] sm:$0xff]
      %v1841 = vld [vmem:[#allocation3 + $0x10] sm:$0xff]
      %v1842 = vld [vmem:[#allocation3 + $0x18] sm:$0xff]
      %v1843 = vld [vmem:[#allocation3 + $0x20] sm:$0xff]
      %v1844 = vld [vmem:[#allocation3 + $0x28] sm:$0xff]
      %v1845 = vld [vmem:[#allocation3 + $0x30] sm:$0xff]
      %v1846 = vld [vmem:[#allocation3 + $0x38] sm:$0xff]
      %v1847 = vld [vmem:[#allocation3 + $0x40] sm:$0xff]
      %v1848 = vld [vmem:[#allocation3 + $0x48] sm:$0xff]
      %v1849 = vld [vmem:[#allocation3 + $0x50] sm:$0xff]
      %v1850 = vld [vmem:[#allocation3 + $0x58] sm:$0xff]
      %v1851 = vld [vmem:[#allocation3 + $0x60] sm:$0xff]
      %v1852 = vld [vmem:[#allocation3 + $0x68] sm:$0xff]
      %v1853 = vld [vmem:[#allocation3 + $0x70] sm:$0xff]
      %v1854 = vld [vmem:[#allocation3 + $0x78] sm:$0xff]
      %v1855 = vld [vmem:[#allocation3 + $0x80] sm:$0xff]
      %v1856 = vld [vmem:[#allocation3 + $0x88] sm:$0xff]
      %v1857 = vld [vmem:[#allocation3 + $0x90] sm:$0xff]
      %v1858 = vld [vmem:[#allocation3 + $0x98] sm:$0xff]
      %v1859 = vld [vmem:[#allocation3 + $0xa0] sm:$0xff]
      %v1860 = vld [vmem:[#allocation3 + $0xa8] sm:$0xff]
      %v1861 = vld [vmem:[#allocation3 + $0xb0] sm:$0xff]
      %v1862 = vld [vmem:[#allocation3 + $0xb8] sm:$0xff]
      %v1863 = vld [vmem:[#allocation3 + $0xc0] sm:$0xff]
      %v1864 = vld [vmem:[#allocation3 + $0xc8] sm:$0xff]
      %v1865 = vld [vmem:[#allocation3 + $0xd0] sm:$0xff]
      %v1866 = vld [vmem:[#allocation3 + $0xd8] sm:$0xff]
      %v1867 = vld [vmem:[#allocation3 + $0xe0] sm:$0xff]
      %v1868 = vld [vmem:[#allocation3 + $0xe8] sm:$0xff]
      %v1869 = vld [vmem:[#allocation3 + $0xf0] sm:$0xff]
      %v1870 = vld [vmem:[#allocation3 + $0xf8] sm:$0xff]
      %v1871 = vld [vmem:[#allocation3 + $0x100] sm:$0xff]
      %v1872 = vld [vmem:[#allocation3 + $0x108] sm:$0xff]
      %v1873 = vld [vmem:[#allocation3 + $0x110] sm:$0xff]
      %v1874 = vld [vmem:[#allocation3 + $0x118] sm:$0xff]
      %s1875 = scalar_lea.vmem %s1, 128
      %v1876 = vld [vmem:[%s1875] sm:$0xf]
      %v1877 = vld [vmem:[%s1875 + $0x4] sm:$0xf]
      %v1878 = vld [vmem:[%s1875 + $0x8] sm:$0xf]
      %v1879 = vld [vmem:[%s1875 + $0xc] sm:$0xf]
      %v1880 = vld [vmem:[%s1875 + $0x10] sm:$0xf]
      %v1881 = vld [vmem:[%s1875 + $0x14] sm:$0xf]
      %v1882 = vld [vmem:[%s1875 + $0x18] sm:$0xf]
      %v1883 = vld [vmem:[%s1875 + $0x1c] sm:$0xf]
      %v1892 = vunpack.c.l.b16 %v1876
      %v1893 = vunpack.c.l.b16 %v1877
      %v1894 = vunpack.c.l.b16 %v1878
      %v1895 = vunpack.c.l.b16 %v1879
      %v1896 = vunpack.c.l.b16 %v1880
      %v1897 = vunpack.c.l.b16 %v1881
      %v1898 = vunpack.c.l.b16 %v1882
      %v1899 = vunpack.c.l.b16 %v1883
      %v1900 = vpack.c.b16 %v1893, %v1892
      %v1901 = vpack.c.b16 %v1895, %v1894
      %v1902 = vpack.c.b16 %v1897, %v1896
      %v1903 = vpack.c.b16 %v1899, %v1898
      %v1909 = vsel %vm312, %v1821, 0
      %v1912 = vsel %vm312, %v1822, 0
      %v1915 = vsel %vm312, %v1823, 0
      %v1918 = vsel %vm312, %v1824, 0
      %v1921 = vsel %vm312, %v1825, 0
      %v1924 = vsel %vm312, %v1826, 0
      %v1927 = vsel %vm312, %v1827, 0
      %v1930 = vsel %vm312, %v1828, 0
      %v1933 = vsel %vm312, %v1829, 0
      %v1936 = vsel %vm312, %v1830, 0
      %v1939 = vsel %vm312, %v1831, 0
      %v1942 = vsel %vm312, %v1832, 0
      %v1945 = vsel %vm312, %v1833, 0
      %v1948 = vsel %vm312, %v1834, 0
      %v1951 = vsel %vm312, %v1835, 0
      %v1954 = vsel %vm312, %v1836, 0
      %v1957 = vsel %vm312, %v1837, 0
      %v1960 = vsel %vm312, %v1838, 0
      %1962 = vmatpush.bf16.msra.mxu0 0
      %1963 = vmatpush.bf16.msra.mxu0 0
      %1964 = vmatpush.bf16.msra.mxu0 0
      %1965 = vmatpush.bf16.msra.mxu0 0
      %1966 = vmatpush.bf16.msra.mxu0 %v1903
      %1967 = vmatpush.bf16.msra.mxu0 %v1902
      %1968 = vmatpush.bf16.msra.mxu0 %v1901
      %1969 = vmatpush.bf16.msra.mxu0 %v1900
      %1970 = vmatmul.bf16.gmra.mxu0 %v1909
      %v1971 = vpop.f32.mrf.mxu0
      %v1972 = vadd.f32 0.0, %v1971
      %v1973 = vpop.f32.mrf.mxu0
      %v1974 = vadd.f32 0.0, %v1973
      %1975 = vmatmul.bf16.gmra.mxu0 %v1912
      %v1976 = vpop.f32.mrf.mxu0
      %v1977 = vadd.f32 0.0, %v1976
      %v1978 = vpop.f32.mrf.mxu0
      %v1979 = vadd.f32 0.0, %v1978
      %1980 = vmatmul.bf16.gmra.mxu0 %v1915
      %v1981 = vpop.f32.mrf.mxu0
      %v1982 = vadd.f32 0.0, %v1981
      %v1983 = vpop.f32.mrf.mxu0
      %v1984 = vadd.f32 0.0, %v1983
      %1985 = vmatmul.bf16.gmra.mxu0 %v1918
      %v1986 = vpop.f32.mrf.mxu0
      %v1987 = vadd.f32 0.0, %v1986
      %v1988 = vpop.f32.mrf.mxu0
      %v1989 = vadd.f32 0.0, %v1988
      %1990 = vmatmul.bf16.gmra.mxu0 %v1921
      %v1991 = vpop.f32.mrf.mxu0
      %v1992 = vadd.f32 0.0, %v1991
      %v1993 = vpop.f32.mrf.mxu0
      %v1994 = vadd.f32 0.0, %v1993
      %1995 = vmatmul.bf16.gmra.mxu0 %v1924
      %v1996 = vpop.f32.mrf.mxu0
      %v1997 = vadd.f32 0.0, %v1996
      %v1998 = vpop.f32.mrf.mxu0
      %v1999 = vadd.f32 0.0, %v1998
      %2000 = vmatmul.bf16.gmra.mxu0 %v1927
      %v2001 = vpop.f32.mrf.mxu0
      %v2002 = vadd.f32 0.0, %v2001
      %v2003 = vpop.f32.mrf.mxu0
      %v2004 = vadd.f32 0.0, %v2003
      %2005 = vmatmul.bf16.gmra.mxu0 %v1930
      %v2006 = vpop.f32.mrf.mxu0
      %v2007 = vadd.f32 0.0, %v2006
      %v2008 = vpop.f32.mrf.mxu0
      %v2009 = vadd.f32 0.0, %v2008
      %2010 = vmatmul.bf16.gmra.mxu0 %v1933
      %v2011 = vpop.f32.mrf.mxu0
      %v2012 = vadd.f32 0.0, %v2011
      %v2013 = vpop.f32.mrf.mxu0
      %v2014 = vadd.f32 0.0, %v2013
      %2015 = vmatmul.bf16.gmra.mxu0 %v1936
      %v2016 = vpop.f32.mrf.mxu0
      %v2017 = vadd.f32 0.0, %v2016
      %v2018 = vpop.f32.mrf.mxu0
      %v2019 = vadd.f32 0.0, %v2018
      %2020 = vmatmul.bf16.gmra.mxu0 %v1939
      %v2021 = vpop.f32.mrf.mxu0
      %v2022 = vadd.f32 0.0, %v2021
      %v2023 = vpop.f32.mrf.mxu0
      %v2024 = vadd.f32 0.0, %v2023
      %2025 = vmatmul.bf16.gmra.mxu0 %v1942
      %v2026 = vpop.f32.mrf.mxu0
      %v2027 = vadd.f32 0.0, %v2026
      %v2028 = vpop.f32.mrf.mxu0
      %v2029 = vadd.f32 0.0, %v2028
      %2030 = vmatmul.bf16.gmra.mxu0 %v1945
      %v2031 = vpop.f32.mrf.mxu0
      %v2032 = vadd.f32 0.0, %v2031
      %v2033 = vpop.f32.mrf.mxu0
      %v2034 = vadd.f32 0.0, %v2033
      %2035 = vmatmul.bf16.gmra.mxu0 %v1948
      %v2036 = vpop.f32.mrf.mxu0
      %v2037 = vadd.f32 0.0, %v2036
      %v2038 = vpop.f32.mrf.mxu0
      %v2039 = vadd.f32 0.0, %v2038
      %2040 = vmatmul.bf16.gmra.mxu0 %v1951
      %v2041 = vpop.f32.mrf.mxu0
      %v2042 = vadd.f32 0.0, %v2041
      %v2043 = vpop.f32.mrf.mxu0
      %v2044 = vadd.f32 0.0, %v2043
      %2045 = vmatmul.bf16.gmra.mxu0 %v1954
      %v2046 = vpop.f32.mrf.mxu0
      %v2047 = vadd.f32 0.0, %v2046
      %v2048 = vpop.f32.mrf.mxu0
      %v2049 = vadd.f32 0.0, %v2048
      %2050 = vmatmul.bf16.gmra.mxu0 %v1957
      %v2051 = vpop.f32.mrf.mxu0
      %v2052 = vadd.f32 0.0, %v2051
      %v2053 = vpop.f32.mrf.mxu0
      %v2054 = vadd.f32 0.0, %v2053
      %2055 = vmatmul.bf16.gmra.mxu0 %v1960
      %v2056 = vpop.f32.mrf.mxu0
      %v2057 = vadd.f32 0.0, %v2056
      %v2058 = vpop.f32.mrf.mxu0
      %v2059 = vadd.f32 0.0, %v2058
      %2060 = vdwg.mxu0
      %v2061 = vadd.f32 %v1839, %v1972
      %v2062 = vadd.f32 %v1840, %v1974
      %v2063 = vadd.f32 %v1841, %v1977
      %v2064 = vadd.f32 %v1842, %v1979
      %v2065 = vadd.f32 %v1843, %v1982
      %v2066 = vadd.f32 %v1844, %v1984
      %v2067 = vadd.f32 %v1845, %v1987
      %v2068 = vadd.f32 %v1846, %v1989
      %v2069 = vadd.f32 %v1847, %v1992
      %v2070 = vadd.f32 %v1848, %v1994
      %v2071 = vadd.f32 %v1849, %v1997
      %v2072 = vadd.f32 %v1850, %v1999
      %v2073 = vadd.f32 %v1851, %v2002
      %v2074 = vadd.f32 %v1852, %v2004
      %v2075 = vadd.f32 %v1853, %v2007
      %v2076 = vadd.f32 %v1854, %v2009
      %v2077 = vadd.f32 %v1855, %v2012
      %v2078 = vadd.f32 %v1856, %v2014
      %v2079 = vadd.f32 %v1857, %v2017
      %v2080 = vadd.f32 %v1858, %v2019
      %v2081 = vadd.f32 %v1859, %v2022
      %v2082 = vadd.f32 %v1860, %v2024
      %v2083 = vadd.f32 %v1861, %v2027
      %v2084 = vadd.f32 %v1862, %v2029
      %v2085 = vadd.f32 %v1863, %v2032
      %v2086 = vadd.f32 %v1864, %v2034
      %v2087 = vadd.f32 %v1865, %v2037
      %v2088 = vadd.f32 %v1866, %v2039
      %v2089 = vadd.f32 %v1867, %v2042
      %v2090 = vadd.f32 %v1868, %v2044
      %v2091 = vadd.f32 %v1869, %v2047
      %v2092 = vadd.f32 %v1870, %v2049
      %v2093 = vadd.f32 %v1871, %v2052
      %v2094 = vadd.f32 %v1872, %v2054
      %v2095 = vadd.f32 %v1873, %v2057
      %v2096 = vadd.f32 %v1874, %v2059
      %2097 = vst.msk [vmem:[#allocation3] sm:$0xff] %vm357, %v2061
      %2098 = vst.msk [vmem:[#allocation3 + $0x8] sm:$0xff] %vm357, %v2062
      %2099 = vst.msk [vmem:[#allocation3 + $0x10] sm:$0xff] %vm357, %v2063
      %2100 = vst.msk [vmem:[#allocation3 + $0x18] sm:$0xff] %vm357, %v2064
      %2101 = vst.msk [vmem:[#allocation3 + $0x20] sm:$0xff] %vm357, %v2065
      %2102 = vst.msk [vmem:[#allocation3 + $0x28] sm:$0xff] %vm357, %v2066
      %2103 = vst.msk [vmem:[#allocation3 + $0x30] sm:$0xff] %vm357, %v2067
      %2104 = vst.msk [vmem:[#allocation3 + $0x38] sm:$0xff] %vm357, %v2068
      %2105 = vst.msk [vmem:[#allocation3 + $0x40] sm:$0xff] %vm357, %v2069
      %2106 = vst.msk [vmem:[#allocation3 + $0x48] sm:$0xff] %vm357, %v2070
      %2107 = vst.msk [vmem:[#allocation3 + $0x50] sm:$0xff] %vm357, %v2071
      %2108 = vst.msk [vmem:[#allocation3 + $0x58] sm:$0xff] %vm357, %v2072
      %2109 = vst.msk [vmem:[#allocation3 + $0x60] sm:$0xff] %vm357, %v2073
      %2110 = vst.msk [vmem:[#allocation3 + $0x68] sm:$0xff] %vm357, %v2074
      %2111 = vst.msk [vmem:[#allocation3 + $0x70] sm:$0xff] %vm357, %v2075
      %2112 = vst.msk [vmem:[#allocation3 + $0x78] sm:$0xff] %vm357, %v2076
      %2113 = vst.msk [vmem:[#allocation3 + $0x80] sm:$0xff] %vm357, %v2077
      %2114 = vst.msk [vmem:[#allocation3 + $0x88] sm:$0xff] %vm357, %v2078
      %2115 = vst.msk [vmem:[#allocation3 + $0x90] sm:$0xff] %vm357, %v2079
      %2116 = vst.msk [vmem:[#allocation3 + $0x98] sm:$0xff] %vm357, %v2080
      %2117 = vst.msk [vmem:[#allocation3 + $0xa0] sm:$0xff] %vm357, %v2081
      %2118 = vst.msk [vmem:[#allocation3 + $0xa8] sm:$0xff] %vm357, %v2082
      %2119 = vst.msk [vmem:[#allocation3 + $0xb0] sm:$0xff] %vm357, %v2083
      %2120 = vst.msk [vmem:[#allocation3 + $0xb8] sm:$0xff] %vm357, %v2084
      %2121 = vst.msk [vmem:[#allocation3 + $0xc0] sm:$0xff] %vm357, %v2085
      %2122 = vst.msk [vmem:[#allocation3 + $0xc8] sm:$0xff] %vm357, %v2086
      %2123 = vst.msk [vmem:[#allocation3 + $0xd0] sm:$0xff] %vm357, %v2087
      %2124 = vst.msk [vmem:[#allocation3 + $0xd8] sm:$0xff] %vm357, %v2088
      %2125 = vst.msk [vmem:[#allocation3 + $0xe0] sm:$0xff] %vm357, %v2089
      %2126 = vst.msk [vmem:[#allocation3 + $0xe8] sm:$0xff] %vm357, %v2090
      %2127 = vst.msk [vmem:[#allocation3 + $0xf0] sm:$0xff] %vm357, %v2091
      %2128 = vst.msk [vmem:[#allocation3 + $0xf8] sm:$0xff] %vm357, %v2092
      %2129 = vst.msk [vmem:[#allocation3 + $0x100] sm:$0xff] %vm357, %v2093
      %2130 = vst.msk [vmem:[#allocation3 + $0x108] sm:$0xff] %vm357, %v2094
      %2131 = vst.msk [vmem:[#allocation3 + $0x110] sm:$0xff] %vm357, %v2095
      %2132 = vst.msk [vmem:[#allocation3 + $0x118] sm:$0xff] %vm357, %v2096
      %v2133 = vld [vmem:[#allocation2 + $0x14] sm:$0xff]
      %v2134 = vld [vmem:[#allocation2 + $0x1c] sm:$0xff]
      %v2135 = vld [vmem:[#allocation2 + $0x24] sm:$0xff]
      %v2136 = vld [vmem:[#allocation2 + $0x2c] sm:$0xff]
      %v2137 = vld [vmem:[#allocation2 + $0x34] sm:$0xff]
      %v2138 = vld [vmem:[#allocation2 + $0x3c] sm:$0xff]
      %v2139 = vld [vmem:[#allocation2 + $0x44] sm:$0xff]
      %v2140 = vld [vmem:[#allocation2 + $0x4c] sm:$0xff]
      %v2141 = vld [vmem:[#allocation2 + $0x54] sm:$0xff]
      %v2142 = vld [vmem:[#allocation2 + $0x5c] sm:$0xff]
      %v2143 = vld [vmem:[#allocation2 + $0x64] sm:$0xff]
      %v2144 = vld [vmem:[#allocation2 + $0x6c] sm:$0xff]
      %v2145 = vld [vmem:[#allocation2 + $0x74] sm:$0xff]
      %v2146 = vld [vmem:[#allocation2 + $0x7c] sm:$0xff]
      %v2147 = vld [vmem:[#allocation2 + $0x84] sm:$0xff]
      %v2148 = vld [vmem:[#allocation2 + $0x8c] sm:$0xff]
      %v2149 = vld [vmem:[#allocation2 + $0x94] sm:$0xff]
      %v2150 = vld [vmem:[#allocation2 + $0x9c] sm:$0xff]
      %v2151 = vld [vmem:[#allocation2 + $0xa4] sm:$0xff]
      %v2152 = vld [vmem:[#allocation2 + $0xac] sm:$0xff]
      %v2153 = vld [vmem:[#allocation2 + $0xb4] sm:$0xff]
      %v2154 = vld [vmem:[#allocation2 + $0xbc] sm:$0xff]
      %v2155 = vld [vmem:[#allocation2 + $0xc4] sm:$0xff]
      %v2156 = vld [vmem:[#allocation2 + $0xcc] sm:$0xff]
      %v2157 = vld [vmem:[#allocation2 + $0xd4] sm:$0xff]
      %v2158 = vld [vmem:[#allocation2 + $0xdc] sm:$0xff]
      %v2159 = vld [vmem:[#allocation2 + $0xe4] sm:$0xff]
      %v2160 = vld [vmem:[#allocation2 + $0xec] sm:$0xff]
      %v2161 = vld [vmem:[#allocation2 + $0xf4] sm:$0xff]
      %v2162 = vld [vmem:[#allocation2 + $0xfc] sm:$0xff]
      %v2163 = vld [vmem:[#allocation2 + $0x104] sm:$0xff]
      %v2164 = vld [vmem:[#allocation2 + $0x10c] sm:$0xff]
      %v2165 = vld [vmem:[#allocation2 + $0x114] sm:$0xff]
      %v2166 = vld [vmem:[#allocation2 + $0x11c] sm:$0xff]
      %v2167 = vld [vmem:[#allocation2 + $0x124] sm:$0xff]
      %v2168 = vld [vmem:[#allocation2 + $0x12c] sm:$0xff]
      %v2169 = vpack.c.bf16 %v2134, %v2133
      %v2170 = vpack.c.bf16 %v2136, %v2135
      %v2171 = vpack.c.bf16 %v2138, %v2137
      %v2172 = vpack.c.bf16 %v2140, %v2139
      %v2173 = vpack.c.bf16 %v2142, %v2141
      %v2174 = vpack.c.bf16 %v2144, %v2143
      %v2175 = vpack.c.bf16 %v2146, %v2145
      %v2176 = vpack.c.bf16 %v2148, %v2147
      %v2177 = vpack.c.bf16 %v2150, %v2149
      %v2178 = vpack.c.bf16 %v2152, %v2151
      %v2179 = vpack.c.bf16 %v2154, %v2153
      %v2180 = vpack.c.bf16 %v2156, %v2155
      %v2181 = vpack.c.bf16 %v2158, %v2157
      %v2182 = vpack.c.bf16 %v2160, %v2159
      %v2183 = vpack.c.bf16 %v2162, %v2161
      %v2184 = vpack.c.bf16 %v2164, %v2163
      %v2185 = vpack.c.bf16 %v2166, %v2165
      %v2186 = vpack.c.bf16 %v2168, %v2167
      %v2187 = vld [vmem:[#allocation3] sm:$0xff]
      %v2188 = vld [vmem:[#allocation3 + $0x8] sm:$0xff]
      %v2189 = vld [vmem:[#allocation3 + $0x10] sm:$0xff]
      %v2190 = vld [vmem:[#allocation3 + $0x18] sm:$0xff]
      %v2191 = vld [vmem:[#allocation3 + $0x20] sm:$0xff]
      %v2192 = vld [vmem:[#allocation3 + $0x28] sm:$0xff]
      %v2193 = vld [vmem:[#allocation3 + $0x30] sm:$0xff]
      %v2194 = vld [vmem:[#allocation3 + $0x38] sm:$0xff]
      %v2195 = vld [vmem:[#allocation3 + $0x40] sm:$0xff]
      %v2196 = vld [vmem:[#allocation3 + $0x48] sm:$0xff]
      %v2197 = vld [vmem:[#allocation3 + $0x50] sm:$0xff]
      %v2198 = vld [vmem:[#allocation3 + $0x58] sm:$0xff]
      %v2199 = vld [vmem:[#allocation3 + $0x60] sm:$0xff]
      %v2200 = vld [vmem:[#allocation3 + $0x68] sm:$0xff]
      %v2201 = vld [vmem:[#allocation3 + $0x70] sm:$0xff]
      %v2202 = vld [vmem:[#allocation3 + $0x78] sm:$0xff]
      %v2203 = vld [vmem:[#allocation3 + $0x80] sm:$0xff]
      %v2204 = vld [vmem:[#allocation3 + $0x88] sm:$0xff]
      %v2205 = vld [vmem:[#allocation3 + $0x90] sm:$0xff]
      %v2206 = vld [vmem:[#allocation3 + $0x98] sm:$0xff]
      %v2207 = vld [vmem:[#allocation3 + $0xa0] sm:$0xff]
      %v2208 = vld [vmem:[#allocation3 + $0xa8] sm:$0xff]
      %v2209 = vld [vmem:[#allocation3 + $0xb0] sm:$0xff]
      %v2210 = vld [vmem:[#allocation3 + $0xb8] sm:$0xff]
      %v2211 = vld [vmem:[#allocation3 + $0xc0] sm:$0xff]
      %v2212 = vld [vmem:[#allocation3 + $0xc8] sm:$0xff]
      %v2213 = vld [vmem:[#allocation3 + $0xd0] sm:$0xff]
      %v2214 = vld [vmem:[#allocation3 + $0xd8] sm:$0xff]
      %v2215 = vld [vmem:[#allocation3 + $0xe0] sm:$0xff]
      %v2216 = vld [vmem:[#allocation3 + $0xe8] sm:$0xff]
      %v2217 = vld [vmem:[#allocation3 + $0xf0] sm:$0xff]
      %v2218 = vld [vmem:[#allocation3 + $0xf8] sm:$0xff]
      %v2219 = vld [vmem:[#allocation3 + $0x100] sm:$0xff]
      %v2220 = vld [vmem:[#allocation3 + $0x108] sm:$0xff]
      %v2221 = vld [vmem:[#allocation3 + $0x110] sm:$0xff]
      %v2222 = vld [vmem:[#allocation3 + $0x118] sm:$0xff]
      %s2223 = scalar_lea.vmem %s1, 160
      %v2224 = vld [vmem:[%s2223] sm:$0xf]
      %v2225 = vld [vmem:[%s2223 + $0x4] sm:$0xf]
      %v2226 = vld [vmem:[%s2223 + $0x8] sm:$0xf]
      %v2227 = vld [vmem:[%s2223 + $0xc] sm:$0xf]
      %v2228 = vld [vmem:[%s2223 + $0x10] sm:$0xf]
      %v2229 = vld [vmem:[%s2223 + $0x14] sm:$0xf]
      %v2230 = vld [vmem:[%s2223 + $0x18] sm:$0xf]
      %v2231 = vld [vmem:[%s2223 + $0x1c] sm:$0xf]
      %v2240 = vunpack.c.l.b16 %v2224
      %v2241 = vunpack.c.l.b16 %v2225
      %v2242 = vunpack.c.l.b16 %v2226
      %v2243 = vunpack.c.l.b16 %v2227
      %v2244 = vunpack.c.l.b16 %v2228
      %v2245 = vunpack.c.l.b16 %v2229
      %v2246 = vunpack.c.l.b16 %v2230
      %v2247 = vunpack.c.l.b16 %v2231
      %v2248 = vpack.c.b16 %v2241, %v2240
      %v2249 = vpack.c.b16 %v2243, %v2242
      %v2250 = vpack.c.b16 %v2245, %v2244
      %v2251 = vpack.c.b16 %v2247, %v2246
      %v2257 = vsel %vm312, %v2169, 0
      %v2260 = vsel %vm312, %v2170, 0
      %v2263 = vsel %vm312, %v2171, 0
      %v2266 = vsel %vm312, %v2172, 0
      %v2269 = vsel %vm312, %v2173, 0
      %v2272 = vsel %vm312, %v2174, 0
      %v2275 = vsel %vm312, %v2175, 0
      %v2278 = vsel %vm312, %v2176, 0
      %v2281 = vsel %vm312, %v2177, 0
      %v2284 = vsel %vm312, %v2178, 0
      %v2287 = vsel %vm312, %v2179, 0
      %v2290 = vsel %vm312, %v2180, 0
      %v2293 = vsel %vm312, %v2181, 0
      %v2296 = vsel %vm312, %v2182, 0
      %v2299 = vsel %vm312, %v2183, 0
      %v2302 = vsel %vm312, %v2184, 0
      %v2305 = vsel %vm312, %v2185, 0
      %v2308 = vsel %vm312, %v2186, 0
      %2310 = vmatpush.bf16.msra.mxu0 0
      %2311 = vmatpush.bf16.msra.mxu0 0
      %2312 = vmatpush.bf16.msra.mxu0 0
      %2313 = vmatpush.bf16.msra.mxu0 0
      %2314 = vmatpush.bf16.msra.mxu0 %v2251
      %2315 = vmatpush.bf16.msra.mxu0 %v2250
      %2316 = vmatpush.bf16.msra.mxu0 %v2249
      %2317 = vmatpush.bf16.msra.mxu0 %v2248
      %2318 = vmatmul.bf16.gmra.mxu0 %v2257
      %v2319 = vpop.f32.mrf.mxu0
      %v2320 = vadd.f32 0.0, %v2319
      %v2321 = vpop.f32.mrf.mxu0
      %v2322 = vadd.f32 0.0, %v2321
      %2323 = vmatmul.bf16.gmra.mxu0 %v2260
      %v2324 = vpop.f32.mrf.mxu0
      %v2325 = vadd.f32 0.0, %v2324
      %v2326 = vpop.f32.mrf.mxu0
      %v2327 = vadd.f32 0.0, %v2326
      %2328 = vmatmul.bf16.gmra.mxu0 %v2263
      %v2329 = vpop.f32.mrf.mxu0
      %v2330 = vadd.f32 0.0, %v2329
      %v2331 = vpop.f32.mrf.mxu0
      %v2332 = vadd.f32 0.0, %v2331
      %2333 = vmatmul.bf16.gmra.mxu0 %v2266
      %v2334 = vpop.f32.mrf.mxu0
      %v2335 = vadd.f32 0.0, %v2334
      %v2336 = vpop.f32.mrf.mxu0
      %v2337 = vadd.f32 0.0, %v2336
      %2338 = vmatmul.bf16.gmra.mxu0 %v2269
      %v2339 = vpop.f32.mrf.mxu0
      %v2340 = vadd.f32 0.0, %v2339
      %v2341 = vpop.f32.mrf.mxu0
      %v2342 = vadd.f32 0.0, %v2341
      %2343 = vmatmul.bf16.gmra.mxu0 %v2272
      %v2344 = vpop.f32.mrf.mxu0
      %v2345 = vadd.f32 0.0, %v2344
      %v2346 = vpop.f32.mrf.mxu0
      %v2347 = vadd.f32 0.0, %v2346
      %2348 = vmatmul.bf16.gmra.mxu0 %v2275
      %v2349 = vpop.f32.mrf.mxu0
      %v2350 = vadd.f32 0.0, %v2349
      %v2351 = vpop.f32.mrf.mxu0
      %v2352 = vadd.f32 0.0, %v2351
      %2353 = vmatmul.bf16.gmra.mxu0 %v2278
      %v2354 = vpop.f32.mrf.mxu0
      %v2355 = vadd.f32 0.0, %v2354
      %v2356 = vpop.f32.mrf.mxu0
      %v2357 = vadd.f32 0.0, %v2356
      %2358 = vmatmul.bf16.gmra.mxu0 %v2281
      %v2359 = vpop.f32.mrf.mxu0
      %v2360 = vadd.f32 0.0, %v2359
      %v2361 = vpop.f32.mrf.mxu0
      %v2362 = vadd.f32 0.0, %v2361
      %2363 = vmatmul.bf16.gmra.mxu0 %v2284
      %v2364 = vpop.f32.mrf.mxu0
      %v2365 = vadd.f32 0.0, %v2364
      %v2366 = vpop.f32.mrf.mxu0
      %v2367 = vadd.f32 0.0, %v2366
      %2368 = vmatmul.bf16.gmra.mxu0 %v2287
      %v2369 = vpop.f32.mrf.mxu0
      %v2370 = vadd.f32 0.0, %v2369
      %v2371 = vpop.f32.mrf.mxu0
      %v2372 = vadd.f32 0.0, %v2371
      %2373 = vmatmul.bf16.gmra.mxu0 %v2290
      %v2374 = vpop.f32.mrf.mxu0
      %v2375 = vadd.f32 0.0, %v2374
      %v2376 = vpop.f32.mrf.mxu0
      %v2377 = vadd.f32 0.0, %v2376
      %2378 = vmatmul.bf16.gmra.mxu0 %v2293
      %v2379 = vpop.f32.mrf.mxu0
      %v2380 = vadd.f32 0.0, %v2379
      %v2381 = vpop.f32.mrf.mxu0
      %v2382 = vadd.f32 0.0, %v2381
      %2383 = vmatmul.bf16.gmra.mxu0 %v2296
      %v2384 = vpop.f32.mrf.mxu0
      %v2385 = vadd.f32 0.0, %v2384
      %v2386 = vpop.f32.mrf.mxu0
      %v2387 = vadd.f32 0.0, %v2386
      %2388 = vmatmul.bf16.gmra.mxu0 %v2299
      %v2389 = vpop.f32.mrf.mxu0
      %v2390 = vadd.f32 0.0, %v2389
      %v2391 = vpop.f32.mrf.mxu0
      %v2392 = vadd.f32 0.0, %v2391
      %2393 = vmatmul.bf16.gmra.mxu0 %v2302
      %v2394 = vpop.f32.mrf.mxu0
      %v2395 = vadd.f32 0.0, %v2394
      %v2396 = vpop.f32.mrf.mxu0
      %v2397 = vadd.f32 0.0, %v2396
      %2398 = vmatmul.bf16.gmra.mxu0 %v2305
      %v2399 = vpop.f32.mrf.mxu0
      %v2400 = vadd.f32 0.0, %v2399
      %v2401 = vpop.f32.mrf.mxu0
      %v2402 = vadd.f32 0.0, %v2401
      %2403 = vmatmul.bf16.gmra.mxu0 %v2308
      %v2404 = vpop.f32.mrf.mxu0
      %v2405 = vadd.f32 0.0, %v2404
      %v2406 = vpop.f32.mrf.mxu0
      %v2407 = vadd.f32 0.0, %v2406
      %2408 = vdwg.mxu0
      %v2409 = vadd.f32 %v2187, %v2320
      %v2410 = vadd.f32 %v2188, %v2322
      %v2411 = vadd.f32 %v2189, %v2325
      %v2412 = vadd.f32 %v2190, %v2327
      %v2413 = vadd.f32 %v2191, %v2330
      %v2414 = vadd.f32 %v2192, %v2332
      %v2415 = vadd.f32 %v2193, %v2335
      %v2416 = vadd.f32 %v2194, %v2337
      %v2417 = vadd.f32 %v2195, %v2340
      %v2418 = vadd.f32 %v2196, %v2342
      %v2419 = vadd.f32 %v2197, %v2345
      %v2420 = vadd.f32 %v2198, %v2347
      %v2421 = vadd.f32 %v2199, %v2350
      %v2422 = vadd.f32 %v2200, %v2352
      %v2423 = vadd.f32 %v2201, %v2355
      %v2424 = vadd.f32 %v2202, %v2357
      %v2425 = vadd.f32 %v2203, %v2360
      %v2426 = vadd.f32 %v2204, %v2362
      %v2427 = vadd.f32 %v2205, %v2365
      %v2428 = vadd.f32 %v2206, %v2367
      %v2429 = vadd.f32 %v2207, %v2370
      %v2430 = vadd.f32 %v2208, %v2372
      %v2431 = vadd.f32 %v2209, %v2375
      %v2432 = vadd.f32 %v2210, %v2377
      %v2433 = vadd.f32 %v2211, %v2380
      %v2434 = vadd.f32 %v2212, %v2382
      %v2435 = vadd.f32 %v2213, %v2385
      %v2436 = vadd.f32 %v2214, %v2387
      %v2437 = vadd.f32 %v2215, %v2390
      %v2438 = vadd.f32 %v2216, %v2392
      %v2439 = vadd.f32 %v2217, %v2395
      %v2440 = vadd.f32 %v2218, %v2397
      %v2441 = vadd.f32 %v2219, %v2400
      %v2442 = vadd.f32 %v2220, %v2402
      %v2443 = vadd.f32 %v2221, %v2405
      %v2444 = vadd.f32 %v2222, %v2407
      %2445 = vst.msk [vmem:[#allocation3] sm:$0xff] %vm357, %v2409
      %2446 = vst.msk [vmem:[#allocation3 + $0x8] sm:$0xff] %vm357, %v2410
      %2447 = vst.msk [vmem:[#allocation3 + $0x10] sm:$0xff] %vm357, %v2411
      %2448 = vst.msk [vmem:[#allocation3 + $0x18] sm:$0xff] %vm357, %v2412
      %2449 = vst.msk [vmem:[#allocation3 + $0x20] sm:$0xff] %vm357, %v2413
      %2450 = vst.msk [vmem:[#allocation3 + $0x28] sm:$0xff] %vm357, %v2414
      %2451 = vst.msk [vmem:[#allocation3 + $0x30] sm:$0xff] %vm357, %v2415
      %2452 = vst.msk [vmem:[#allocation3 + $0x38] sm:$0xff] %vm357, %v2416
      %2453 = vst.msk [vmem:[#allocation3 + $0x40] sm:$0xff] %vm357, %v2417
      %2454 = vst.msk [vmem:[#allocation3 + $0x48] sm:$0xff] %vm357, %v2418
      %2455 = vst.msk [vmem:[#allocation3 + $0x50] sm:$0xff] %vm357, %v2419
      %2456 = vst.msk [vmem:[#allocation3 + $0x58] sm:$0xff] %vm357, %v2420
      %2457 = vst.msk [vmem:[#allocation3 + $0x60] sm:$0xff] %vm357, %v2421
      %2458 = vst.msk [vmem:[#allocation3 + $0x68] sm:$0xff] %vm357, %v2422
      %2459 = vst.msk [vmem:[#allocation3 + $0x70] sm:$0xff] %vm357, %v2423
      %2460 = vst.msk [vmem:[#allocation3 + $0x78] sm:$0xff] %vm357, %v2424
      %2461 = vst.msk [vmem:[#allocation3 + $0x80] sm:$0xff] %vm357, %v2425
      %2462 = vst.msk [vmem:[#allocation3 + $0x88] sm:$0xff] %vm357, %v2426
      %2463 = vst.msk [vmem:[#allocation3 + $0x90] sm:$0xff] %vm357, %v2427
      %2464 = vst.msk [vmem:[#allocation3 + $0x98] sm:$0xff] %vm357, %v2428
      %2465 = vst.msk [vmem:[#allocation3 + $0xa0] sm:$0xff] %vm357, %v2429
      %2466 = vst.msk [vmem:[#allocation3 + $0xa8] sm:$0xff] %vm357, %v2430
      %2467 = vst.msk [vmem:[#allocation3 + $0xb0] sm:$0xff] %vm357, %v2431
      %2468 = vst.msk [vmem:[#allocation3 + $0xb8] sm:$0xff] %vm357, %v2432
      %2469 = vst.msk [vmem:[#allocation3 + $0xc0] sm:$0xff] %vm357, %v2433
      %2470 = vst.msk [vmem:[#allocation3 + $0xc8] sm:$0xff] %vm357, %v2434
      %2471 = vst.msk [vmem:[#allocation3 + $0xd0] sm:$0xff] %vm357, %v2435
      %2472 = vst.msk [vmem:[#allocation3 + $0xd8] sm:$0xff] %vm357, %v2436
      %2473 = vst.msk [vmem:[#allocation3 + $0xe0] sm:$0xff] %vm357, %v2437
      %2474 = vst.msk [vmem:[#allocation3 + $0xe8] sm:$0xff] %vm357, %v2438
      %2475 = vst.msk [vmem:[#allocation3 + $0xf0] sm:$0xff] %vm357, %v2439
      %2476 = vst.msk [vmem:[#allocation3 + $0xf8] sm:$0xff] %vm357, %v2440
      %2477 = vst.msk [vmem:[#allocation3 + $0x100] sm:$0xff] %vm357, %v2441
      %2478 = vst.msk [vmem:[#allocation3 + $0x108] sm:$0xff] %vm357, %v2442
      %2479 = vst.msk [vmem:[#allocation3 + $0x110] sm:$0xff] %vm357, %v2443
      %2480 = vst.msk [vmem:[#allocation3 + $0x118] sm:$0xff] %vm357, %v2444
      %v2481 = vld [vmem:[#allocation2 + $0x24] sm:$0xff]
      %v2482 = vld [vmem:[#allocation2 + $0x2c] sm:$0xff]
      %v2483 = vld [vmem:[#allocation2 + $0x34] sm:$0xff]
      %v2484 = vld [vmem:[#allocation2 + $0x3c] sm:$0xff]
      %v2485 = vld [vmem:[#allocation2 + $0x44] sm:$0xff]
      %v2486 = vld [vmem:[#allocation2 + $0x4c] sm:$0xff]
      %v2487 = vld [vmem:[#allocation2 + $0x54] sm:$0xff]
      %v2488 = vld [vmem:[#allocation2 + $0x5c] sm:$0xff]
      %v2489 = vld [vmem:[#allocation2 + $0x64] sm:$0xff]
      %v2490 = vld [vmem:[#allocation2 + $0x6c] sm:$0xff]
      %v2491 = vld [vmem:[#allocation2 + $0x74] sm:$0xff]
      %v2492 = vld [vmem:[#allocation2 + $0x7c] sm:$0xff]
      %v2493 = vld [vmem:[#allocation2 + $0x84] sm:$0xff]
      %v2494 = vld [vmem:[#allocation2 + $0x8c] sm:$0xff]
      %v2495 = vld [vmem:[#allocation2 + $0x94] sm:$0xff]
      %v2496 = vld [vmem:[#allocation2 + $0x9c] sm:$0xff]
      %v2497 = vld [vmem:[#allocation2 + $0xa4] sm:$0xff]
      %v2498 = vld [vmem:[#allocation2 + $0xac] sm:$0xff]
      %v2499 = vld [vmem:[#allocation2 + $0xb4] sm:$0xff]
      %v2500 = vld [vmem:[#allocation2 + $0xbc] sm:$0xff]
      %v2501 = vld [vmem:[#allocation2 + $0xc4] sm:$0xff]
      %v2502 = vld [vmem:[#allocation2 + $0xcc] sm:$0xff]
      %v2503 = vld [vmem:[#allocation2 + $0xd4] sm:$0xff]
      %v2504 = vld [vmem:[#allocation2 + $0xdc] sm:$0xff]
      %v2505 = vld [vmem:[#allocation2 + $0xe4] sm:$0xff]
      %v2506 = vld [vmem:[#allocation2 + $0xec] sm:$0xff]
      %v2507 = vld [vmem:[#allocation2 + $0xf4] sm:$0xff]
      %v2508 = vld [vmem:[#allocation2 + $0xfc] sm:$0xff]
      %v2509 = vld [vmem:[#allocation2 + $0x104] sm:$0xff]
      %v2510 = vld [vmem:[#allocation2 + $0x10c] sm:$0xff]
      %v2511 = vld [vmem:[#allocation2 + $0x114] sm:$0xff]
      %v2512 = vld [vmem:[#allocation2 + $0x11c] sm:$0xff]
      %v2513 = vld [vmem:[#allocation2 + $0x124] sm:$0xff]
      %v2514 = vld [vmem:[#allocation2 + $0x12c] sm:$0xff]
      %v2515 = vld [vmem:[#allocation2 + $0x134] sm:$0xff]
      %v2516 = vld [vmem:[#allocation2 + $0x13c] sm:$0xff]
      %v2517 = vpack.c.bf16 %v2482, %v2481
      %v2518 = vpack.c.bf16 %v2484, %v2483
      %v2519 = vpack.c.bf16 %v2486, %v2485
      %v2520 = vpack.c.bf16 %v2488, %v2487
      %v2521 = vpack.c.bf16 %v2490, %v2489
      %v2522 = vpack.c.bf16 %v2492, %v2491
      %v2523 = vpack.c.bf16 %v2494, %v2493
      %v2524 = vpack.c.bf16 %v2496, %v2495
      %v2525 = vpack.c.bf16 %v2498, %v2497
      %v2526 = vpack.c.bf16 %v2500, %v2499
      %v2527 = vpack.c.bf16 %v2502, %v2501
      %v2528 = vpack.c.bf16 %v2504, %v2503
      %v2529 = vpack.c.bf16 %v2506, %v2505
      %v2530 = vpack.c.bf16 %v2508, %v2507
      %v2531 = vpack.c.bf16 %v2510, %v2509
      %v2532 = vpack.c.bf16 %v2512, %v2511
      %v2533 = vpack.c.bf16 %v2514, %v2513
      %v2534 = vpack.c.bf16 %v2516, %v2515
      %v2535 = vld [vmem:[#allocation3] sm:$0xff]
      %v2536 = vld [vmem:[#allocation3 + $0x8] sm:$0xff]
      %v2537 = vld [vmem:[#allocation3 + $0x10] sm:$0xff]
      %v2538 = vld [vmem:[#allocation3 + $0x18] sm:$0xff]
      %v2539 = vld [vmem:[#allocation3 + $0x20] sm:$0xff]
      %v2540 = vld [vmem:[#allocation3 + $0x28] sm:$0xff]
      %v2541 = vld [vmem:[#allocation3 + $0x30] sm:$0xff]
      %v2542 = vld [vmem:[#allocation3 + $0x38] sm:$0xff]
      %v2543 = vld [vmem:[#allocation3 + $0x40] sm:$0xff]
      %v2544 = vld [vmem:[#allocation3 + $0x48] sm:$0xff]
      %v2545 = vld [vmem:[#allocation3 + $0x50] sm:$0xff]
      %v2546 = vld [vmem:[#allocation3 + $0x58] sm:$0xff]
      %v2547 = vld [vmem:[#allocation3 + $0x60] sm:$0xff]
      %v2548 = vld [vmem:[#allocation3 + $0x68] sm:$0xff]
      %v2549 = vld [vmem:[#allocation3 + $0x70] sm:$0xff]
      %v2550 = vld [vmem:[#allocation3 + $0x78] sm:$0xff]
      %v2551 = vld [vmem:[#allocation3 + $0x80] sm:$0xff]
      %v2552 = vld [vmem:[#allocation3 + $0x88] sm:$0xff]
      %v2553 = vld [vmem:[#allocation3 + $0x90] sm:$0xff]
      %v2554 = vld [vmem:[#allocation3 + $0x98] sm:$0xff]
      %v2555 = vld [vmem:[#allocation3 + $0xa0] sm:$0xff]
      %v2556 = vld [vmem:[#allocation3 + $0xa8] sm:$0xff]
      %v2557 = vld [vmem:[#allocation3 + $0xb0] sm:$0xff]
      %v2558 = vld [vmem:[#allocation3 + $0xb8] sm:$0xff]
      %v2559 = vld [vmem:[#allocation3 + $0xc0] sm:$0xff]
      %v2560 = vld [vmem:[#allocation3 + $0xc8] sm:$0xff]
      %v2561 = vld [vmem:[#allocation3 + $0xd0] sm:$0xff]
      %v2562 = vld [vmem:[#allocation3 + $0xd8] sm:$0xff]
      %v2563 = vld [vmem:[#allocation3 + $0xe0] sm:$0xff]
      %v2564 = vld [vmem:[#allocation3 + $0xe8] sm:$0xff]
      %v2565 = vld [vmem:[#allocation3 + $0xf0] sm:$0xff]
      %v2566 = vld [vmem:[#allocation3 + $0xf8] sm:$0xff]
      %v2567 = vld [vmem:[#allocation3 + $0x100] sm:$0xff]
      %v2568 = vld [vmem:[#allocation3 + $0x108] sm:$0xff]
      %v2569 = vld [vmem:[#allocation3 + $0x110] sm:$0xff]
      %v2570 = vld [vmem:[#allocation3 + $0x118] sm:$0xff]
      %s2571 = scalar_lea.vmem %s1, 192
      %v2572 = vld [vmem:[%s2571] sm:$0xf]
      %v2573 = vld [vmem:[%s2571 + $0x4] sm:$0xf]
      %v2574 = vld [vmem:[%s2571 + $0x8] sm:$0xf]
      %v2575 = vld [vmem:[%s2571 + $0xc] sm:$0xf]
      %v2576 = vld [vmem:[%s2571 + $0x10] sm:$0xf]
      %v2577 = vld [vmem:[%s2571 + $0x14] sm:$0xf]
      %v2578 = vld [vmem:[%s2571 + $0x18] sm:$0xf]
      %v2579 = vld [vmem:[%s2571 + $0x1c] sm:$0xf]
      %v2588 = vunpack.c.l.b16 %v2572
      %v2589 = vunpack.c.l.b16 %v2573
      %v2590 = vunpack.c.l.b16 %v2574
      %v2591 = vunpack.c.l.b16 %v2575
      %v2592 = vunpack.c.l.b16 %v2576
      %v2593 = vunpack.c.l.b16 %v2577
      %v2594 = vunpack.c.l.b16 %v2578
      %v2595 = vunpack.c.l.b16 %v2579
      %v2596 = vpack.c.b16 %v2589, %v2588
      %v2597 = vpack.c.b16 %v2591, %v2590
      %v2598 = vpack.c.b16 %v2593, %v2592
      %v2599 = vpack.c.b16 %v2595, %v2594
      %v2605 = vsel %vm312, %v2517, 0
      %v2608 = vsel %vm312, %v2518, 0
      %v2611 = vsel %vm312, %v2519, 0
      %v2614 = vsel %vm312, %v2520, 0
      %v2617 = vsel %vm312, %v2521, 0
      %v2620 = vsel %vm312, %v2522, 0
      %v2623 = vsel %vm312, %v2523, 0
      %v2626 = vsel %vm312, %v2524, 0
      %v2629 = vsel %vm312, %v2525, 0
      %v2632 = vsel %vm312, %v2526, 0
      %v2635 = vsel %vm312, %v2527, 0
      %v2638 = vsel %vm312, %v2528, 0
      %v2641 = vsel %vm312, %v2529, 0
      %v2644 = vsel %vm312, %v2530, 0
      %v2647 = vsel %vm312, %v2531, 0
      %v2650 = vsel %vm312, %v2532, 0
      %v2653 = vsel %vm312, %v2533, 0
      %v2656 = vsel %vm312, %v2534, 0
      %2658 = vmatpush.bf16.msra.mxu0 0
      %2659 = vmatpush.bf16.msra.mxu0 0
      %2660 = vmatpush.bf16.msra.mxu0 0
      %2661 = vmatpush.bf16.msra.mxu0 0
      %2662 = vmatpush.bf16.msra.mxu0 %v2599
      %2663 = vmatpush.bf16.msra.mxu0 %v2598
      %2664 = vmatpush.bf16.msra.mxu0 %v2597
      %2665 = vmatpush.bf16.msra.mxu0 %v2596
      %2666 = vmatmul.bf16.gmra.mxu0 %v2605
      %v2667 = vpop.f32.mrf.mxu0
      %v2668 = vadd.f32 0.0, %v2667
      %v2669 = vpop.f32.mrf.mxu0
      %v2670 = vadd.f32 0.0, %v2669
      %2671 = vmatmul.bf16.gmra.mxu0 %v2608
      %v2672 = vpop.f32.mrf.mxu0
      %v2673 = vadd.f32 0.0, %v2672
      %v2674 = vpop.f32.mrf.mxu0
      %v2675 = vadd.f32 0.0, %v2674
      %2676 = vmatmul.bf16.gmra.mxu0 %v2611
      %v2677 = vpop.f32.mrf.mxu0
      %v2678 = vadd.f32 0.0, %v2677
      %v2679 = vpop.f32.mrf.mxu0
      %v2680 = vadd.f32 0.0, %v2679
      %2681 = vmatmul.bf16.gmra.mxu0 %v2614
      %v2682 = vpop.f32.mrf.mxu0
      %v2683 = vadd.f32 0.0, %v2682
      %v2684 = vpop.f32.mrf.mxu0
      %v2685 = vadd.f32 0.0, %v2684
      %2686 = vmatmul.bf16.gmra.mxu0 %v2617
      %v2687 = vpop.f32.mrf.mxu0
      %v2688 = vadd.f32 0.0, %v2687
      %v2689 = vpop.f32.mrf.mxu0
      %v2690 = vadd.f32 0.0, %v2689
      %2691 = vmatmul.bf16.gmra.mxu0 %v2620
      %v2692 = vpop.f32.mrf.mxu0
      %v2693 = vadd.f32 0.0, %v2692
      %v2694 = vpop.f32.mrf.mxu0
      %v2695 = vadd.f32 0.0, %v2694
      %2696 = vmatmul.bf16.gmra.mxu0 %v2623
      %v2697 = vpop.f32.mrf.mxu0
      %v2698 = vadd.f32 0.0, %v2697
      %v2699 = vpop.f32.mrf.mxu0
      %v2700 = vadd.f32 0.0, %v2699
      %2701 = vmatmul.bf16.gmra.mxu0 %v2626
      %v2702 = vpop.f32.mrf.mxu0
      %v2703 = vadd.f32 0.0, %v2702
      %v2704 = vpop.f32.mrf.mxu0
      %v2705 = vadd.f32 0.0, %v2704
      %2706 = vmatmul.bf16.gmra.mxu0 %v2629
      %v2707 = vpop.f32.mrf.mxu0
      %v2708 = vadd.f32 0.0, %v2707
      %v2709 = vpop.f32.mrf.mxu0
      %v2710 = vadd.f32 0.0, %v2709
      %2711 = vmatmul.bf16.gmra.mxu0 %v2632
      %v2712 = vpop.f32.mrf.mxu0
      %v2713 = vadd.f32 0.0, %v2712
      %v2714 = vpop.f32.mrf.mxu0
      %v2715 = vadd.f32 0.0, %v2714
      %2716 = vmatmul.bf16.gmra.mxu0 %v2635
      %v2717 = vpop.f32.mrf.mxu0
      %v2718 = vadd.f32 0.0, %v2717
      %v2719 = vpop.f32.mrf.mxu0
      %v2720 = vadd.f32 0.0, %v2719
      %2721 = vmatmul.bf16.gmra.mxu0 %v2638
      %v2722 = vpop.f32.mrf.mxu0
      %v2723 = vadd.f32 0.0, %v2722
      %v2724 = vpop.f32.mrf.mxu0
      %v2725 = vadd.f32 0.0, %v2724
      %2726 = vmatmul.bf16.gmra.mxu0 %v2641
      %v2727 = vpop.f32.mrf.mxu0
      %v2728 = vadd.f32 0.0, %v2727
      %v2729 = vpop.f32.mrf.mxu0
      %v2730 = vadd.f32 0.0, %v2729
      %2731 = vmatmul.bf16.gmra.mxu0 %v2644
      %v2732 = vpop.f32.mrf.mxu0
      %v2733 = vadd.f32 0.0, %v2732
      %v2734 = vpop.f32.mrf.mxu0
      %v2735 = vadd.f32 0.0, %v2734
      %2736 = vmatmul.bf16.gmra.mxu0 %v2647
      %v2737 = vpop.f32.mrf.mxu0
      %v2738 = vadd.f32 0.0, %v2737
      %v2739 = vpop.f32.mrf.mxu0
      %v2740 = vadd.f32 0.0, %v2739
      %2741 = vmatmul.bf16.gmra.mxu0 %v2650
      %v2742 = vpop.f32.mrf.mxu0
      %v2743 = vadd.f32 0.0, %v2742
      %v2744 = vpop.f32.mrf.mxu0
      %v2745 = vadd.f32 0.0, %v2744
      %2746 = vmatmul.bf16.gmra.mxu0 %v2653
      %v2747 = vpop.f32.mrf.mxu0
      %v2748 = vadd.f32 0.0, %v2747
      %v2749 = vpop.f32.mrf.mxu0
      %v2750 = vadd.f32 0.0, %v2749
      %2751 = vmatmul.bf16.gmra.mxu0 %v2656
      %v2752 = vpop.f32.mrf.mxu0
      %v2753 = vadd.f32 0.0, %v2752
      %v2754 = vpop.f32.mrf.mxu0
      %v2755 = vadd.f32 0.0, %v2754
      %2756 = vdwg.mxu0
      %v2757 = vadd.f32 %v2535, %v2668
      %v2758 = vadd.f32 %v2536, %v2670
      %v2759 = vadd.f32 %v2537, %v2673
      %v2760 = vadd.f32 %v2538, %v2675
      %v2761 = vadd.f32 %v2539, %v2678
      %v2762 = vadd.f32 %v2540, %v2680
      %v2763 = vadd.f32 %v2541, %v2683
      %v2764 = vadd.f32 %v2542, %v2685
      %v2765 = vadd.f32 %v2543, %v2688
      %v2766 = vadd.f32 %v2544, %v2690
      %v2767 = vadd.f32 %v2545, %v2693
      %v2768 = vadd.f32 %v2546, %v2695
      %v2769 = vadd.f32 %v2547, %v2698
      %v2770 = vadd.f32 %v2548, %v2700
      %v2771 = vadd.f32 %v2549, %v2703
      %v2772 = vadd.f32 %v2550, %v2705
      %v2773 = vadd.f32 %v2551, %v2708
      %v2774 = vadd.f32 %v2552, %v2710
      %v2775 = vadd.f32 %v2553, %v2713
      %v2776 = vadd.f32 %v2554, %v2715
      %v2777 = vadd.f32 %v2555, %v2718
      %v2778 = vadd.f32 %v2556, %v2720
      %v2779 = vadd.f32 %v2557, %v2723
      %v2780 = vadd.f32 %v2558, %v2725
      %v2781 = vadd.f32 %v2559, %v2728
      %v2782 = vadd.f32 %v2560, %v2730
      %v2783 = vadd.f32 %v2561, %v2733
      %v2784 = vadd.f32 %v2562, %v2735
      %v2785 = vadd.f32 %v2563, %v2738
      %v2786 = vadd.f32 %v2564, %v2740
      %v2787 = vadd.f32 %v2565, %v2743
      %v2788 = vadd.f32 %v2566, %v2745
      %v2789 = vadd.f32 %v2567, %v2748
      %v2790 = vadd.f32 %v2568, %v2750
      %v2791 = vadd.f32 %v2569, %v2753
      %v2792 = vadd.f32 %v2570, %v2755
      %2793 = vst.msk [vmem:[#allocation3] sm:$0xff] %vm357, %v2757
      %2794 = vst.msk [vmem:[#allocation3 + $0x8] sm:$0xff] %vm357, %v2758
      %2795 = vst.msk [vmem:[#allocation3 + $0x10] sm:$0xff] %vm357, %v2759
      %2796 = vst.msk [vmem:[#allocation3 + $0x18] sm:$0xff] %vm357, %v2760
      %2797 = vst.msk [vmem:[#allocation3 + $0x20] sm:$0xff] %vm357, %v2761
      %2798 = vst.msk [vmem:[#allocation3 + $0x28] sm:$0xff] %vm357, %v2762
      %2799 = vst.msk [vmem:[#allocation3 + $0x30] sm:$0xff] %vm357, %v2763
      %2800 = vst.msk [vmem:[#allocation3 + $0x38] sm:$0xff] %vm357, %v2764
      %2801 = vst.msk [vmem:[#allocation3 + $0x40] sm:$0xff] %vm357, %v2765
      %2802 = vst.msk [vmem:[#allocation3 + $0x48] sm:$0xff] %vm357, %v2766
      %2803 = vst.msk [vmem:[#allocation3 + $0x50] sm:$0xff] %vm357, %v2767
      %2804 = vst.msk [vmem:[#allocation3 + $0x58] sm:$0xff] %vm357, %v2768
      %2805 = vst.msk [vmem:[#allocation3 + $0x60] sm:$0xff] %vm357, %v2769
      %2806 = vst.msk [vmem:[#allocation3 + $0x68] sm:$0xff] %vm357, %v2770
      %2807 = vst.msk [vmem:[#allocation3 + $0x70] sm:$0xff] %vm357, %v2771
      %2808 = vst.msk [vmem:[#allocation3 + $0x78] sm:$0xff] %vm357, %v2772
      %2809 = vst.msk [vmem:[#allocation3 + $0x80] sm:$0xff] %vm357, %v2773
      %2810 = vst.msk [vmem:[#allocation3 + $0x88] sm:$0xff] %vm357, %v2774
      %2811 = vst.msk [vmem:[#allocation3 + $0x90] sm:$0xff] %vm357, %v2775
      %2812 = vst.msk [vmem:[#allocation3 + $0x98] sm:$0xff] %vm357, %v2776
      %2813 = vst.msk [vmem:[#allocation3 + $0xa0] sm:$0xff] %vm357, %v2777
      %2814 = vst.msk [vmem:[#allocation3 + $0xa8] sm:$0xff] %vm357, %v2778
      %2815 = vst.msk [vmem:[#allocation3 + $0xb0] sm:$0xff] %vm357, %v2779
      %2816 = vst.msk [vmem:[#allocation3 + $0xb8] sm:$0xff] %vm357, %v2780
      %2817 = vst.msk [vmem:[#allocation3 + $0xc0] sm:$0xff] %vm357, %v2781
      %2818 = vst.msk [vmem:[#allocation3 + $0xc8] sm:$0xff] %vm357, %v2782
      %2819 = vst.msk [vmem:[#allocation3 + $0xd0] sm:$0xff] %vm357, %v2783
      %2820 = vst.msk [vmem:[#allocation3 + $0xd8] sm:$0xff] %vm357, %v2784
      %2821 = vst.msk [vmem:[#allocation3 + $0xe0] sm:$0xff] %vm357, %v2785
      %2822 = vst.msk [vmem:[#allocation3 + $0xe8] sm:$0xff] %vm357, %v2786
      %2823 = vst.msk [vmem:[#allocation3 + $0xf0] sm:$0xff] %vm357, %v2787
      %2824 = vst.msk [vmem:[#allocation3 + $0xf8] sm:$0xff] %vm357, %v2788
      %2825 = vst.msk [vmem:[#allocation3 + $0x100] sm:$0xff] %vm357, %v2789
      %2826 = vst.msk [vmem:[#allocation3 + $0x108] sm:$0xff] %vm357, %v2790
      %2827 = vst.msk [vmem:[#allocation3 + $0x110] sm:$0xff] %vm357, %v2791
      %2828 = vst.msk [vmem:[#allocation3 + $0x118] sm:$0xff] %vm357, %v2792
      %v2829 = vld [vmem:[#allocation2 + $0x25] sm:$0xff]
      %v2830 = vld [vmem:[#allocation2 + $0x2d] sm:$0xff]
      %v2831 = vld [vmem:[#allocation2 + $0x35] sm:$0xff]
      %v2832 = vld [vmem:[#allocation2 + $0x3d] sm:$0xff]
      %v2833 = vld [vmem:[#allocation2 + $0x45] sm:$0xff]
      %v2834 = vld [vmem:[#allocation2 + $0x4d] sm:$0xff]
      %v2835 = vld [vmem:[#allocation2 + $0x55] sm:$0xff]
      %v2836 = vld [vmem:[#allocation2 + $0x5d] sm:$0xff]
      %v2837 = vld [vmem:[#allocation2 + $0x65] sm:$0xff]
      %v2838 = vld [vmem:[#allocation2 + $0x6d] sm:$0xff]
      %v2839 = vld [vmem:[#allocation2 + $0x75] sm:$0xff]
      %v2840 = vld [vmem:[#allocation2 + $0x7d] sm:$0xff]
      %v2841 = vld [vmem:[#allocation2 + $0x85] sm:$0xff]
      %v2842 = vld [vmem:[#allocation2 + $0x8d] sm:$0xff]
      %v2843 = vld [vmem:[#allocation2 + $0x95] sm:$0xff]
      %v2844 = vld [vmem:[#allocation2 + $0x9d] sm:$0xff]
      %v2845 = vld [vmem:[#allocation2 + $0xa5] sm:$0xff]
      %v2846 = vld [vmem:[#allocation2 + $0xad] sm:$0xff]
      %v2847 = vld [vmem:[#allocation2 + $0xb5] sm:$0xff]
      %v2848 = vld [vmem:[#allocation2 + $0xbd] sm:$0xff]
      %v2849 = vld [vmem:[#allocation2 + $0xc5] sm:$0xff]
      %v2850 = vld [vmem:[#allocation2 + $0xcd] sm:$0xff]
      %v2851 = vld [vmem:[#allocation2 + $0xd5] sm:$0xff]
      %v2852 = vld [vmem:[#allocation2 + $0xdd] sm:$0xff]
      %v2853 = vld [vmem:[#allocation2 + $0xe5] sm:$0xff]
      %v2854 = vld [vmem:[#allocation2 + $0xed] sm:$0xff]
      %v2855 = vld [vmem:[#allocation2 + $0xf5] sm:$0xff]
      %v2856 = vld [vmem:[#allocation2 + $0xfd] sm:$0xff]
      %v2857 = vld [vmem:[#allocation2 + $0x105] sm:$0xff]
      %v2858 = vld [vmem:[#allocation2 + $0x10d] sm:$0xff]
      %v2859 = vld [vmem:[#allocation2 + $0x115] sm:$0xff]
      %v2860 = vld [vmem:[#allocation2 + $0x11d] sm:$0xff]
      %v2861 = vld [vmem:[#allocation2 + $0x125] sm:$0xff]
      %v2862 = vld [vmem:[#allocation2 + $0x12d] sm:$0xff]
      %v2863 = vld [vmem:[#allocation2 + $0x135] sm:$0xff]
      %v2864 = vld [vmem:[#allocation2 + $0x13d] sm:$0xff]
      %v2865 = vpack.c.bf16 %v2830, %v2829
      %v2866 = vpack.c.bf16 %v2832, %v2831
      %v2867 = vpack.c.bf16 %v2834, %v2833
      %v2868 = vpack.c.bf16 %v2836, %v2835
      %v2869 = vpack.c.bf16 %v2838, %v2837
      %v2870 = vpack.c.bf16 %v2840, %v2839
      %v2871 = vpack.c.bf16 %v2842, %v2841
      %v2872 = vpack.c.bf16 %v2844, %v2843
      %v2873 = vpack.c.bf16 %v2846, %v2845
      %v2874 = vpack.c.bf16 %v2848, %v2847
      %v2875 = vpack.c.bf16 %v2850, %v2849
      %v2876 = vpack.c.bf16 %v2852, %v2851
      %v2877 = vpack.c.bf16 %v2854, %v2853
      %v2878 = vpack.c.bf16 %v2856, %v2855
      %v2879 = vpack.c.bf16 %v2858, %v2857
      %v2880 = vpack.c.bf16 %v2860, %v2859
      %v2881 = vpack.c.bf16 %v2862, %v2861
      %v2882 = vpack.c.bf16 %v2864, %v2863
      %v2883 = vld [vmem:[#allocation3] sm:$0xff]
      %v2884 = vld [vmem:[#allocation3 + $0x8] sm:$0xff]
      %v2885 = vld [vmem:[#allocation3 + $0x10] sm:$0xff]
      %v2886 = vld [vmem:[#allocation3 + $0x18] sm:$0xff]
      %v2887 = vld [vmem:[#allocation3 + $0x20] sm:$0xff]
      %v2888 = vld [vmem:[#allocation3 + $0x28] sm:$0xff]
      %v2889 = vld [vmem:[#allocation3 + $0x30] sm:$0xff]
      %v2890 = vld [vmem:[#allocation3 + $0x38] sm:$0xff]
      %v2891 = vld [vmem:[#allocation3 + $0x40] sm:$0xff]
      %v2892 = vld [vmem:[#allocation3 + $0x48] sm:$0xff]
      %v2893 = vld [vmem:[#allocation3 + $0x50] sm:$0xff]
      %v2894 = vld [vmem:[#allocation3 + $0x58] sm:$0xff]
      %v2895 = vld [vmem:[#allocation3 + $0x60] sm:$0xff]
      %v2896 = vld [vmem:[#allocation3 + $0x68] sm:$0xff]
      %v2897 = vld [vmem:[#allocation3 + $0x70] sm:$0xff]
      %v2898 = vld [vmem:[#allocation3 + $0x78] sm:$0xff]
      %v2899 = vld [vmem:[#allocation3 + $0x80] sm:$0xff]
      %v2900 = vld [vmem:[#allocation3 + $0x88] sm:$0xff]
      %v2901 = vld [vmem:[#allocation3 + $0x90] sm:$0xff]
      %v2902 = vld [vmem:[#allocation3 + $0x98] sm:$0xff]
      %v2903 = vld [vmem:[#allocation3 + $0xa0] sm:$0xff]
      %v2904 = vld [vmem:[#allocation3 + $0xa8] sm:$0xff]
      %v2905 = vld [vmem:[#allocation3 + $0xb0] sm:$0xff]
      %v2906 = vld [vmem:[#allocation3 + $0xb8] sm:$0xff]
      %v2907 = vld [vmem:[#allocation3 + $0xc0] sm:$0xff]
      %v2908 = vld [vmem:[#allocation3 + $0xc8] sm:$0xff]
      %v2909 = vld [vmem:[#allocation3 + $0xd0] sm:$0xff]
      %v2910 = vld [vmem:[#allocation3 + $0xd8] sm:$0xff]
      %v2911 = vld [vmem:[#allocation3 + $0xe0] sm:$0xff]
      %v2912 = vld [vmem:[#allocation3 + $0xe8] sm:$0xff]
      %v2913 = vld [vmem:[#allocation3 + $0xf0] sm:$0xff]
      %v2914 = vld [vmem:[#allocation3 + $0xf8] sm:$0xff]
      %v2915 = vld [vmem:[#allocation3 + $0x100] sm:$0xff]
      %v2916 = vld [vmem:[#allocation3 + $0x108] sm:$0xff]
      %v2917 = vld [vmem:[#allocation3 + $0x110] sm:$0xff]
      %v2918 = vld [vmem:[#allocation3 + $0x118] sm:$0xff]
      %s2919 = scalar_lea.vmem %s1, 224
      %v2920 = vld [vmem:[%s2919] sm:$0xf]
      %v2921 = vld [vmem:[%s2919 + $0x4] sm:$0xf]
      %v2922 = vld [vmem:[%s2919 + $0x8] sm:$0xf]
      %v2923 = vld [vmem:[%s2919 + $0xc] sm:$0xf]
      %v2924 = vld [vmem:[%s2919 + $0x10] sm:$0xf]
      %v2925 = vld [vmem:[%s2919 + $0x14] sm:$0xf]
      %v2926 = vld [vmem:[%s2919 + $0x18] sm:$0xf]
      %v2927 = vld [vmem:[%s2919 + $0x1c] sm:$0xf]
      %v2936 = vunpack.c.l.b16 %v2920
      %v2937 = vunpack.c.l.b16 %v2921
      %v2938 = vunpack.c.l.b16 %v2922
      %v2939 = vunpack.c.l.b16 %v2923
      %v2940 = vunpack.c.l.b16 %v2924
      %v2941 = vunpack.c.l.b16 %v2925
      %v2942 = vunpack.c.l.b16 %v2926
      %v2943 = vunpack.c.l.b16 %v2927
      %v2944 = vpack.c.b16 %v2937, %v2936
      %v2945 = vpack.c.b16 %v2939, %v2938
      %v2946 = vpack.c.b16 %v2941, %v2940
      %v2947 = vpack.c.b16 %v2943, %v2942
      %v2953 = vsel %vm312, %v2865, 0
      %v2956 = vsel %vm312, %v2866, 0
      %v2959 = vsel %vm312, %v2867, 0
      %v2962 = vsel %vm312, %v2868, 0
      %v2965 = vsel %vm312, %v2869, 0
      %v2968 = vsel %vm312, %v2870, 0
      %v2971 = vsel %vm312, %v2871, 0
      %v2974 = vsel %vm312, %v2872, 0
      %v2977 = vsel %vm312, %v2873, 0
      %v2980 = vsel %vm312, %v2874, 0
      %v2983 = vsel %vm312, %v2875, 0
      %v2986 = vsel %vm312, %v2876, 0
      %v2989 = vsel %vm312, %v2877, 0
      %v2992 = vsel %vm312, %v2878, 0
      %v2995 = vsel %vm312, %v2879, 0
      %v2998 = vsel %vm312, %v2880, 0
      %v3001 = vsel %vm312, %v2881, 0
      %v3004 = vsel %vm312, %v2882, 0
      %3006 = vmatpush.bf16.msra.mxu0 0
      %3007 = vmatpush.bf16.msra.mxu0 0
      %3008 = vmatpush.bf16.msra.mxu0 0
      %3009 = vmatpush.bf16.msra.mxu0 0
      %3010 = vmatpush.bf16.msra.mxu0 %v2947
      %3011 = vmatpush.bf16.msra.mxu0 %v2946
      %3012 = vmatpush.bf16.msra.mxu0 %v2945
      %3013 = vmatpush.bf16.msra.mxu0 %v2944
      %3014 = vmatmul.bf16.gmra.mxu0 %v2953
      %v3015 = vpop.f32.mrf.mxu0
      %v3016 = vadd.f32 0.0, %v3015
      %v3017 = vpop.f32.mrf.mxu0
      %v3018 = vadd.f32 0.0, %v3017
      %3019 = vmatmul.bf16.gmra.mxu0 %v2956
      %v3020 = vpop.f32.mrf.mxu0
      %v3021 = vadd.f32 0.0, %v3020
      %v3022 = vpop.f32.mrf.mxu0
      %v3023 = vadd.f32 0.0, %v3022
      %3024 = vmatmul.bf16.gmra.mxu0 %v2959
      %v3025 = vpop.f32.mrf.mxu0
      %v3026 = vadd.f32 0.0, %v3025
      %v3027 = vpop.f32.mrf.mxu0
      %v3028 = vadd.f32 0.0, %v3027
      %3029 = vmatmul.bf16.gmra.mxu0 %v2962
      %v3030 = vpop.f32.mrf.mxu0
      %v3031 = vadd.f32 0.0, %v3030
      %v3032 = vpop.f32.mrf.mxu0
      %v3033 = vadd.f32 0.0, %v3032
      %3034 = vmatmul.bf16.gmra.mxu0 %v2965
      %v3035 = vpop.f32.mrf.mxu0
      %v3036 = vadd.f32 0.0, %v3035
      %v3037 = vpop.f32.mrf.mxu0
      %v3038 = vadd.f32 0.0, %v3037
      %3039 = vmatmul.bf16.gmra.mxu0 %v2968
      %v3040 = vpop.f32.mrf.mxu0
      %v3041 = vadd.f32 0.0, %v3040
      %v3042 = vpop.f32.mrf.mxu0
      %v3043 = vadd.f32 0.0, %v3042
      %3044 = vmatmul.bf16.gmra.mxu0 %v2971
      %v3045 = vpop.f32.mrf.mxu0
      %v3046 = vadd.f32 0.0, %v3045
      %v3047 = vpop.f32.mrf.mxu0
      %v3048 = vadd.f32 0.0, %v3047
      %3049 = vmatmul.bf16.gmra.mxu0 %v2974
      %v3050 = vpop.f32.mrf.mxu0
      %v3051 = vadd.f32 0.0, %v3050
      %v3052 = vpop.f32.mrf.mxu0
      %v3053 = vadd.f32 0.0, %v3052
      %3054 = vmatmul.bf16.gmra.mxu0 %v2977
      %v3055 = vpop.f32.mrf.mxu0
      %v3056 = vadd.f32 0.0, %v3055
      %v3057 = vpop.f32.mrf.mxu0
      %v3058 = vadd.f32 0.0, %v3057
      %3059 = vmatmul.bf16.gmra.mxu0 %v2980
      %v3060 = vpop.f32.mrf.mxu0
      %v3061 = vadd.f32 0.0, %v3060
      %v3062 = vpop.f32.mrf.mxu0
      %v3063 = vadd.f32 0.0, %v3062
      %3064 = vmatmul.bf16.gmra.mxu0 %v2983
      %v3065 = vpop.f32.mrf.mxu0
      %v3066 = vadd.f32 0.0, %v3065
      %v3067 = vpop.f32.mrf.mxu0
      %v3068 = vadd.f32 0.0, %v3067
      %3069 = vmatmul.bf16.gmra.mxu0 %v2986
      %v3070 = vpop.f32.mrf.mxu0
      %v3071 = vadd.f32 0.0, %v3070
      %v3072 = vpop.f32.mrf.mxu0
      %v3073 = vadd.f32 0.0, %v3072
      %3074 = vmatmul.bf16.gmra.mxu0 %v2989
      %v3075 = vpop.f32.mrf.mxu0
      %v3076 = vadd.f32 0.0, %v3075
      %v3077 = vpop.f32.mrf.mxu0
      %v3078 = vadd.f32 0.0, %v3077
      %3079 = vmatmul.bf16.gmra.mxu0 %v2992
      %v3080 = vpop.f32.mrf.mxu0
      %v3081 = vadd.f32 0.0, %v3080
      %v3082 = vpop.f32.mrf.mxu0
      %v3083 = vadd.f32 0.0, %v3082
      %3084 = vmatmul.bf16.gmra.mxu0 %v2995
      %v3085 = vpop.f32.mrf.mxu0
      %v3086 = vadd.f32 0.0, %v3085
      %v3087 = vpop.f32.mrf.mxu0
      %v3088 = vadd.f32 0.0, %v3087
      %3089 = vmatmul.bf16.gmra.mxu0 %v2998
      %v3090 = vpop.f32.mrf.mxu0
      %v3091 = vadd.f32 0.0, %v3090
      %v3092 = vpop.f32.mrf.mxu0
      %v3093 = vadd.f32 0.0, %v3092
      %3094 = vmatmul.bf16.gmra.mxu0 %v3001
      %v3095 = vpop.f32.mrf.mxu0
      %v3096 = vadd.f32 0.0, %v3095
      %v3097 = vpop.f32.mrf.mxu0
      %v3098 = vadd.f32 0.0, %v3097
      %3099 = vmatmul.bf16.gmra.mxu0 %v3004
      %v3100 = vpop.f32.mrf.mxu0
      %v3101 = vadd.f32 0.0, %v3100
      %v3102 = vpop.f32.mrf.mxu0
      %v3103 = vadd.f32 0.0, %v3102
      %3104 = vdwg.mxu0
      %v3105 = vadd.f32 %v2883, %v3016
      %v3106 = vadd.f32 %v2884, %v3018
      %v3107 = vadd.f32 %v2885, %v3021
      %v3108 = vadd.f32 %v2886, %v3023
      %v3109 = vadd.f32 %v2887, %v3026
      %v3110 = vadd.f32 %v2888, %v3028
      %v3111 = vadd.f32 %v2889, %v3031
      %v3112 = vadd.f32 %v2890, %v3033
      %v3113 = vadd.f32 %v2891, %v3036
      %v3114 = vadd.f32 %v2892, %v3038
      %v3115 = vadd.f32 %v2893, %v3041
      %v3116 = vadd.f32 %v2894, %v3043
      %v3117 = vadd.f32 %v2895, %v3046
      %v3118 = vadd.f32 %v2896, %v3048
      %v3119 = vadd.f32 %v2897, %v3051
      %v3120 = vadd.f32 %v2898, %v3053
      %v3121 = vadd.f32 %v2899, %v3056
      %v3122 = vadd.f32 %v2900, %v3058
      %v3123 = vadd.f32 %v2901, %v3061
      %v3124 = vadd.f32 %v2902, %v3063
      %v3125 = vadd.f32 %v2903, %v3066
      %v3126 = vadd.f32 %v2904, %v3068
      %v3127 = vadd.f32 %v2905, %v3071
      %v3128 = vadd.f32 %v2906, %v3073
      %v3129 = vadd.f32 %v2907, %v3076
      %v3130 = vadd.f32 %v2908, %v3078
      %v3131 = vadd.f32 %v2909, %v3081
      %v3132 = vadd.f32 %v2910, %v3083
      %v3133 = vadd.f32 %v2911, %v3086
      %v3134 = vadd.f32 %v2912, %v3088
      %v3135 = vadd.f32 %v2913, %v3091
      %v3136 = vadd.f32 %v2914, %v3093
      %v3137 = vadd.f32 %v2915, %v3096
      %v3138 = vadd.f32 %v2916, %v3098
      %v3139 = vadd.f32 %v2917, %v3101
      %v3140 = vadd.f32 %v2918, %v3103
      %3141 = vst.msk [vmem:[#allocation3] sm:$0xff] %vm357, %v3105
      %3142 = vst.msk [vmem:[#allocation3 + $0x8] sm:$0xff] %vm357, %v3106
      %3143 = vst.msk [vmem:[#allocation3 + $0x10] sm:$0xff] %vm357, %v3107
      %3144 = vst.msk [vmem:[#allocation3 + $0x18] sm:$0xff] %vm357, %v3108
      %3145 = vst.msk [vmem:[#allocation3 + $0x20] sm:$0xff] %vm357, %v3109
      %3146 = vst.msk [vmem:[#allocation3 + $0x28] sm:$0xff] %vm357, %v3110
      %3147 = vst.msk [vmem:[#allocation3 + $0x30] sm:$0xff] %vm357, %v3111
      %3148 = vst.msk [vmem:[#allocation3 + $0x38] sm:$0xff] %vm357, %v3112
      %3149 = vst.msk [vmem:[#allocation3 + $0x40] sm:$0xff] %vm357, %v3113
      %3150 = vst.msk [vmem:[#allocation3 + $0x48] sm:$0xff] %vm357, %v3114
      %3151 = vst.msk [vmem:[#allocation3 + $0x50] sm:$0xff] %vm357, %v3115
      %3152 = vst.msk [vmem:[#allocation3 + $0x58] sm:$0xff] %vm357, %v3116
      %3153 = vst.msk [vmem:[#allocation3 + $0x60] sm:$0xff] %vm357, %v3117
      %3154 = vst.msk [vmem:[#allocation3 + $0x68] sm:$0xff] %vm357, %v3118
      %3155 = vst.msk [vmem:[#allocation3 + $0x70] sm:$0xff] %vm357, %v3119
      %3156 = vst.msk [vmem:[#allocation3 + $0x78] sm:$0xff] %vm357, %v3120
      %3157 = vst.msk [vmem:[#allocation3 + $0x80] sm:$0xff] %vm357, %v3121
      %3158 = vst.msk [vmem:[#allocation3 + $0x88] sm:$0xff] %vm357, %v3122
      %3159 = vst.msk [vmem:[#allocation3 + $0x90] sm:$0xff] %vm357, %v3123
      %3160 = vst.msk [vmem:[#allocation3 + $0x98] sm:$0xff] %vm357, %v3124
      %3161 = vst.msk [vmem:[#allocation3 + $0xa0] sm:$0xff] %vm357, %v3125
      %3162 = vst.msk [vmem:[#allocation3 + $0xa8] sm:$0xff] %vm357, %v3126
      %3163 = vst.msk [vmem:[#allocation3 + $0xb0] sm:$0xff] %vm357, %v3127
      %3164 = vst.msk [vmem:[#allocation3 + $0xb8] sm:$0xff] %vm357, %v3128
      %3165 = vst.msk [vmem:[#allocation3 + $0xc0] sm:$0xff] %vm357, %v3129
      %3166 = vst.msk [vmem:[#allocation3 + $0xc8] sm:$0xff] %vm357, %v3130
      %3167 = vst.msk [vmem:[#allocation3 + $0xd0] sm:$0xff] %vm357, %v3131
      %3168 = vst.msk [vmem:[#allocation3 + $0xd8] sm:$0xff] %vm357, %v3132
      %3169 = vst.msk [vmem:[#allocation3 + $0xe0] sm:$0xff] %vm357, %v3133
      %3170 = vst.msk [vmem:[#allocation3 + $0xe8] sm:$0xff] %vm357, %v3134
      %3171 = vst.msk [vmem:[#allocation3 + $0xf0] sm:$0xff] %vm357, %v3135
      %3172 = vst.msk [vmem:[#allocation3 + $0xf8] sm:$0xff] %vm357, %v3136
      %3173 = vst.msk [vmem:[#allocation3 + $0x100] sm:$0xff] %vm357, %v3137
      %3174 = vst.msk [vmem:[#allocation3 + $0x108] sm:$0xff] %vm357, %v3138
      %3175 = vst.msk [vmem:[#allocation3 + $0x110] sm:$0xff] %vm357, %v3139
      %3176 = vst.msk [vmem:[#allocation3 + $0x118] sm:$0xff] %vm357, %v3140
      %v3177 = vld [vmem:[#allocation2 + $0x26] sm:$0xff]
      %v3178 = vld [vmem:[#allocation2 + $0x2e] sm:$0xff]
      %v3179 = vld [vmem:[#allocation2 + $0x36] sm:$0xff]
      %v3180 = vld [vmem:[#allocation2 + $0x3e] sm:$0xff]
      %v3181 = vld [vmem:[#allocation2 + $0x46] sm:$0xff]
      %v3182 = vld [vmem:[#allocation2 + $0x4e] sm:$0xff]
      %v3183 = vld [vmem:[#allocation2 + $0x56] sm:$0xff]
      %v3184 = vld [vmem:[#allocation2 + $0x5e] sm:$0xff]
      %v3185 = vld [vmem:[#allocation2 + $0x66] sm:$0xff]
      %v3186 = vld [vmem:[#allocation2 + $0x6e] sm:$0xff]
      %v3187 = vld [vmem:[#allocation2 + $0x76] sm:$0xff]
      %v3188 = vld [vmem:[#allocation2 + $0x7e] sm:$0xff]
      %v3189 = vld [vmem:[#allocation2 + $0x86] sm:$0xff]
      %v3190 = vld [vmem:[#allocation2 + $0x8e] sm:$0xff]
      %v3191 = vld [vmem:[#allocation2 + $0x96] sm:$0xff]
      %v3192 = vld [vmem:[#allocation2 + $0x9e] sm:$0xff]
      %v3193 = vld [vmem:[#allocation2 + $0xa6] sm:$0xff]
      %v3194 = vld [vmem:[#allocation2 + $0xae] sm:$0xff]
      %v3195 = vld [vmem:[#allocation2 + $0xb6] sm:$0xff]
      %v3196 = vld [vmem:[#allocation2 + $0xbe] sm:$0xff]
      %v3197 = vld [vmem:[#allocation2 + $0xc6] sm:$0xff]
      %v3198 = vld [vmem:[#allocation2 + $0xce] sm:$0xff]
      %v3199 = vld [vmem:[#allocation2 + $0xd6] sm:$0xff]
      %v3200 = vld [vmem:[#allocation2 + $0xde] sm:$0xff]
      %v3201 = vld [vmem:[#allocation2 + $0xe6] sm:$0xff]
      %v3202 = vld [vmem:[#allocation2 + $0xee] sm:$0xff]
      %v3203 = vld [vmem:[#allocation2 + $0xf6] sm:$0xff]
      %v3204 = vld [vmem:[#allocation2 + $0xfe] sm:$0xff]
      %v3205 = vld [vmem:[#allocation2 + $0x106] sm:$0xff]
      %v3206 = vld [vmem:[#allocation2 + $0x10e] sm:$0xff]
      %v3207 = vld [vmem:[#allocation2 + $0x116] sm:$0xff]
      %v3208 = vld [vmem:[#allocation2 + $0x11e] sm:$0xff]
      %v3209 = vld [vmem:[#allocation2 + $0x126] sm:$0xff]
      %v3210 = vld [vmem:[#allocation2 + $0x12e] sm:$0xff]
      %v3211 = vld [vmem:[#allocation2 + $0x136] sm:$0xff]
      %v3212 = vld [vmem:[#allocation2 + $0x13e] sm:$0xff]
      %v3213 = vpack.c.bf16 %v3178, %v3177
      %v3214 = vpack.c.bf16 %v3180, %v3179
      %v3215 = vpack.c.bf16 %v3182, %v3181
      %v3216 = vpack.c.bf16 %v3184, %v3183
      %v3217 = vpack.c.bf16 %v3186, %v3185
      %v3218 = vpack.c.bf16 %v3188, %v3187
      %v3219 = vpack.c.bf16 %v3190, %v3189
      %v3220 = vpack.c.bf16 %v3192, %v3191
      %v3221 = vpack.c.bf16 %v3194, %v3193
      %v3222 = vpack.c.bf16 %v3196, %v3195
      %v3223 = vpack.c.bf16 %v3198, %v3197
      %v3224 = vpack.c.bf16 %v3200, %v3199
      %v3225 = vpack.c.bf16 %v3202, %v3201
      %v3226 = vpack.c.bf16 %v3204, %v3203
      %v3227 = vpack.c.bf16 %v3206, %v3205
      %v3228 = vpack.c.bf16 %v3208, %v3207
      %v3229 = vpack.c.bf16 %v3210, %v3209
      %v3230 = vpack.c.bf16 %v3212, %v3211
      %v3231 = vld [vmem:[#allocation3] sm:$0xff]
      %v3232 = vld [vmem:[#allocation3 + $0x8] sm:$0xff]
      %v3233 = vld [vmem:[#allocation3 + $0x10] sm:$0xff]
      %v3234 = vld [vmem:[#allocation3 + $0x18] sm:$0xff]
      %v3235 = vld [vmem:[#allocation3 + $0x20] sm:$0xff]
      %v3236 = vld [vmem:[#allocation3 + $0x28] sm:$0xff]
      %v3237 = vld [vmem:[#allocation3 + $0x30] sm:$0xff]
      %v3238 = vld [vmem:[#allocation3 + $0x38] sm:$0xff]
      %v3239 = vld [vmem:[#allocation3 + $0x40] sm:$0xff]
      %v3240 = vld [vmem:[#allocation3 + $0x48] sm:$0xff]
      %v3241 = vld [vmem:[#allocation3 + $0x50] sm:$0xff]
      %v3242 = vld [vmem:[#allocation3 + $0x58] sm:$0xff]
      %v3243 = vld [vmem:[#allocation3 + $0x60] sm:$0xff]
      %v3244 = vld [vmem:[#allocation3 + $0x68] sm:$0xff]
      %v3245 = vld [vmem:[#allocation3 + $0x70] sm:$0xff]
      %v3246 = vld [vmem:[#allocation3 + $0x78] sm:$0xff]
      %v3247 = vld [vmem:[#allocation3 + $0x80] sm:$0xff]
      %v3248 = vld [vmem:[#allocation3 + $0x88] sm:$0xff]
      %v3249 = vld [vmem:[#allocation3 + $0x90] sm:$0xff]
      %v3250 = vld [vmem:[#allocation3 + $0x98] sm:$0xff]
      %v3251 = vld [vmem:[#allocation3 + $0xa0] sm:$0xff]
      %v3252 = vld [vmem:[#allocation3 + $0xa8] sm:$0xff]
      %v3253 = vld [vmem:[#allocation3 + $0xb0] sm:$0xff]
      %v3254 = vld [vmem:[#allocation3 + $0xb8] sm:$0xff]
      %v3255 = vld [vmem:[#allocation3 + $0xc0] sm:$0xff]
      %v3256 = vld [vmem:[#allocation3 + $0xc8] sm:$0xff]
      %v3257 = vld [vmem:[#allocation3 + $0xd0] sm:$0xff]
      %v3258 = vld [vmem:[#allocation3 + $0xd8] sm:$0xff]
      %v3259 = vld [vmem:[#allocation3 + $0xe0] sm:$0xff]
      %v3260 = vld [vmem:[#allocation3 + $0xe8] sm:$0xff]
      %v3261 = vld [vmem:[#allocation3 + $0xf0] sm:$0xff]
      %v3262 = vld [vmem:[#allocation3 + $0xf8] sm:$0xff]
      %v3263 = vld [vmem:[#allocation3 + $0x100] sm:$0xff]
      %v3264 = vld [vmem:[#allocation3 + $0x108] sm:$0xff]
      %v3265 = vld [vmem:[#allocation3 + $0x110] sm:$0xff]
      %v3266 = vld [vmem:[#allocation3 + $0x118] sm:$0xff]
      %s3267 = scalar_lea.vmem %s1, 256
      %v3268 = vld [vmem:[%s3267] sm:$0xf]
      %v3269 = vld [vmem:[%s3267 + $0x4] sm:$0xf]
      %v3270 = vld [vmem:[%s3267 + $0x8] sm:$0xf]
      %v3271 = vld [vmem:[%s3267 + $0xc] sm:$0xf]
      %v3272 = vld [vmem:[%s3267 + $0x10] sm:$0xf]
      %v3273 = vld [vmem:[%s3267 + $0x14] sm:$0xf]
      %v3274 = vld [vmem:[%s3267 + $0x18] sm:$0xf]
      %v3275 = vld [vmem:[%s3267 + $0x1c] sm:$0xf]
      %v3284 = vunpack.c.l.b16 %v3268
      %v3285 = vunpack.c.l.b16 %v3269
      %v3286 = vunpack.c.l.b16 %v3270
      %v3287 = vunpack.c.l.b16 %v3271
      %v3288 = vunpack.c.l.b16 %v3272
      %v3289 = vunpack.c.l.b16 %v3273
      %v3290 = vunpack.c.l.b16 %v3274
      %v3291 = vunpack.c.l.b16 %v3275
      %v3292 = vpack.c.b16 %v3285, %v3284
      %v3293 = vpack.c.b16 %v3287, %v3286
      %v3294 = vpack.c.b16 %v3289, %v3288
      %v3295 = vpack.c.b16 %v3291, %v3290
      %v3301 = vsel %vm312, %v3213, 0
      %v3304 = vsel %vm312, %v3214, 0
      %v3307 = vsel %vm312, %v3215, 0
      %v3310 = vsel %vm312, %v3216, 0
      %v3313 = vsel %vm312, %v3217, 0
      %v3316 = vsel %vm312, %v3218, 0
      %v3319 = vsel %vm312, %v3219, 0
      %v3322 = vsel %vm312, %v3220, 0
      %v3325 = vsel %vm312, %v3221, 0
      %v3328 = vsel %vm312, %v3222, 0
      %v3331 = vsel %vm312, %v3223, 0
      %v3334 = vsel %vm312, %v3224, 0
      %v3337 = vsel %vm312, %v3225, 0
      %v3340 = vsel %vm312, %v3226, 0
      %v3343 = vsel %vm312, %v3227, 0
      %v3346 = vsel %vm312, %v3228, 0
      %v3349 = vsel %vm312, %v3229, 0
      %v3352 = vsel %vm312, %v3230, 0
      %3354 = vmatpush.bf16.msra.mxu0 0
      %3355 = vmatpush.bf16.msra.mxu0 0
      %3356 = vmatpush.bf16.msra.mxu0 0
      %3357 = vmatpush.bf16.msra.mxu0 0
      %3358 = vmatpush.bf16.msra.mxu0 %v3295
      %3359 = vmatpush.bf16.msra.mxu0 %v3294
      %3360 = vmatpush.bf16.msra.mxu0 %v3293
      %3361 = vmatpush.bf16.msra.mxu0 %v3292
      %3362 = vmatmul.bf16.gmra.mxu0 %v3301
      %v3363 = vpop.f32.mrf.mxu0
      %v3364 = vadd.f32 0.0, %v3363
      %v3365 = vpop.f32.mrf.mxu0
      %v3366 = vadd.f32 0.0, %v3365
      %3367 = vmatmul.bf16.gmra.mxu0 %v3304
      %v3368 = vpop.f32.mrf.mxu0
      %v3369 = vadd.f32 0.0, %v3368
      %v3370 = vpop.f32.mrf.mxu0
      %v3371 = vadd.f32 0.0, %v3370
      %3372 = vmatmul.bf16.gmra.mxu0 %v3307
      %v3373 = vpop.f32.mrf.mxu0
      %v3374 = vadd.f32 0.0, %v3373
      %v3375 = vpop.f32.mrf.mxu0
      %v3376 = vadd.f32 0.0, %v3375
      %3377 = vmatmul.bf16.gmra.mxu0 %v3310
      %v3378 = vpop.f32.mrf.mxu0
      %v3379 = vadd.f32 0.0, %v3378
      %v3380 = vpop.f32.mrf.mxu0
      %v3381 = vadd.f32 0.0, %v3380
      %3382 = vmatmul.bf16.gmra.mxu0 %v3313
      %v3383 = vpop.f32.mrf.mxu0
      %v3384 = vadd.f32 0.0, %v3383
      %v3385 = vpop.f32.mrf.mxu0
      %v3386 = vadd.f32 0.0, %v3385
      %3387 = vmatmul.bf16.gmra.mxu0 %v3316
      %v3388 = vpop.f32.mrf.mxu0
      %v3389 = vadd.f32 0.0, %v3388
      %v3390 = vpop.f32.mrf.mxu0
      %v3391 = vadd.f32 0.0, %v3390
      %3392 = vmatmul.bf16.gmra.mxu0 %v3319
      %v3393 = vpop.f32.mrf.mxu0
      %v3394 = vadd.f32 0.0, %v3393
      %v3395 = vpop.f32.mrf.mxu0
      %v3396 = vadd.f32 0.0, %v3395
      %3397 = vmatmul.bf16.gmra.mxu0 %v3322
      %v3398 = vpop.f32.mrf.mxu0
      %v3399 = vadd.f32 0.0, %v3398
      %v3400 = vpop.f32.mrf.mxu0
      %v3401 = vadd.f32 0.0, %v3400
      %3402 = vmatmul.bf16.gmra.mxu0 %v3325
      %v3403 = vpop.f32.mrf.mxu0
      %v3404 = vadd.f32 0.0, %v3403
      %v3405 = vpop.f32.mrf.mxu0
      %v3406 = vadd.f32 0.0, %v3405
      %3407 = vmatmul.bf16.gmra.mxu0 %v3328
      %v3408 = vpop.f32.mrf.mxu0
      %v3409 = vadd.f32 0.0, %v3408
      %v3410 = vpop.f32.mrf.mxu0
      %v3411 = vadd.f32 0.0, %v3410
      %3412 = vmatmul.bf16.gmra.mxu0 %v3331
      %v3413 = vpop.f32.mrf.mxu0
      %v3414 = vadd.f32 0.0, %v3413
      %v3415 = vpop.f32.mrf.mxu0
      %v3416 = vadd.f32 0.0, %v3415
      %3417 = vmatmul.bf16.gmra.mxu0 %v3334
      %v3418 = vpop.f32.mrf.mxu0
      %v3419 = vadd.f32 0.0, %v3418
      %v3420 = vpop.f32.mrf.mxu0
      %v3421 = vadd.f32 0.0, %v3420
      %3422 = vmatmul.bf16.gmra.mxu0 %v3337
      %v3423 = vpop.f32.mrf.mxu0
      %v3424 = vadd.f32 0.0, %v3423
      %v3425 = vpop.f32.mrf.mxu0
      %v3426 = vadd.f32 0.0, %v3425
      %3427 = vmatmul.bf16.gmra.mxu0 %v3340
      %v3428 = vpop.f32.mrf.mxu0
      %v3429 = vadd.f32 0.0, %v3428
      %v3430 = vpop.f32.mrf.mxu0
      %v3431 = vadd.f32 0.0, %v3430
      %3432 = vmatmul.bf16.gmra.mxu0 %v3343
      %v3433 = vpop.f32.mrf.mxu0
      %v3434 = vadd.f32 0.0, %v3433
      %v3435 = vpop.f32.mrf.mxu0
      %v3436 = vadd.f32 0.0, %v3435
      %3437 = vmatmul.bf16.gmra.mxu0 %v3346
      %v3438 = vpop.f32.mrf.mxu0
      %v3439 = vadd.f32 0.0, %v3438
      %v3440 = vpop.f32.mrf.mxu0
      %v3441 = vadd.f32 0.0, %v3440
      %3442 = vmatmul.bf16.gmra.mxu0 %v3349
      %v3443 = vpop.f32.mrf.mxu0
      %v3444 = vadd.f32 0.0, %v3443
      %v3445 = vpop.f32.mrf.mxu0
      %v3446 = vadd.f32 0.0, %v3445
      %3447 = vmatmul.bf16.gmra.mxu0 %v3352
      %v3448 = vpop.f32.mrf.mxu0
      %v3449 = vadd.f32 0.0, %v3448
      %v3450 = vpop.f32.mrf.mxu0
      %v3451 = vadd.f32 0.0, %v3450
      %3452 = vdwg.mxu0
      %v3453 = vadd.f32 %v3231, %v3364
      %v3454 = vadd.f32 %v3232, %v3366
      %v3455 = vadd.f32 %v3233, %v3369
      %v3456 = vadd.f32 %v3234, %v3371
      %v3457 = vadd.f32 %v3235, %v3374
      %v3458 = vadd.f32 %v3236, %v3376
      %v3459 = vadd.f32 %v3237, %v3379
      %v3460 = vadd.f32 %v3238, %v3381
      %v3461 = vadd.f32 %v3239, %v3384
      %v3462 = vadd.f32 %v3240, %v3386
      %v3463 = vadd.f32 %v3241, %v3389
      %v3464 = vadd.f32 %v3242, %v3391
      %v3465 = vadd.f32 %v3243, %v3394
      %v3466 = vadd.f32 %v3244, %v3396
      %v3467 = vadd.f32 %v3245, %v3399
      %v3468 = vadd.f32 %v3246, %v3401
      %v3469 = vadd.f32 %v3247, %v3404
      %v3470 = vadd.f32 %v3248, %v3406
      %v3471 = vadd.f32 %v3249, %v3409
      %v3472 = vadd.f32 %v3250, %v3411
      %v3473 = vadd.f32 %v3251, %v3414
      %v3474 = vadd.f32 %v3252, %v3416
      %v3475 = vadd.f32 %v3253, %v3419
      %v3476 = vadd.f32 %v3254, %v3421
      %v3477 = vadd.f32 %v3255, %v3424
      %v3478 = vadd.f32 %v3256, %v3426
      %v3479 = vadd.f32 %v3257, %v3429
      %v3480 = vadd.f32 %v3258, %v3431
      %v3481 = vadd.f32 %v3259, %v3434
      %v3482 = vadd.f32 %v3260, %v3436
      %v3483 = vadd.f32 %v3261, %v3439
      %v3484 = vadd.f32 %v3262, %v3441
      %v3485 = vadd.f32 %v3263, %v3444
      %v3486 = vadd.f32 %v3264, %v3446
      %v3487 = vadd.f32 %v3265, %v3449
      %v3488 = vadd.f32 %v3266, %v3451
      %3489 = vst.msk [vmem:[#allocation3] sm:$0xff] %vm357, %v3453
      %3490 = vst.msk [vmem:[#allocation3 + $0x8] sm:$0xff] %vm357, %v3454
      %3491 = vst.msk [vmem:[#allocation3 + $0x10] sm:$0xff] %vm357, %v3455
      %3492 = vst.msk [vmem:[#allocation3 + $0x18] sm:$0xff] %vm357, %v3456
      %3493 = vst.msk [vmem:[#allocation3 + $0x20] sm:$0xff] %vm357, %v3457
      %3494 = vst.msk [vmem:[#allocation3 + $0x28] sm:$0xff] %vm357, %v3458
      %3495 = vst.msk [vmem:[#allocation3 + $0x30] sm:$0xff] %vm357, %v3459
      %3496 = vst.msk [vmem:[#allocation3 + $0x38] sm:$0xff] %vm357, %v3460
      %3497 = vst.msk [vmem:[#allocation3 + $0x40] sm:$0xff] %vm357, %v3461
      %3498 = vst.msk [vmem:[#allocation3 + $0x48] sm:$0xff] %vm357, %v3462
      %3499 = vst.msk [vmem:[#allocation3 + $0x50] sm:$0xff] %vm357, %v3463
      %3500 = vst.msk [vmem:[#allocation3 + $0x58] sm:$0xff] %vm357, %v3464
      %3501 = vst.msk [vmem:[#allocation3 + $0x60] sm:$0xff] %vm357, %v3465
      %3502 = vst.msk [vmem:[#allocation3 + $0x68] sm:$0xff] %vm357, %v3466
      %3503 = vst.msk [vmem:[#allocation3 + $0x70] sm:$0xff] %vm357, %v3467
      %3504 = vst.msk [vmem:[#allocation3 + $0x78] sm:$0xff] %vm357, %v3468
      %3505 = vst.msk [vmem:[#allocation3 + $0x80] sm:$0xff] %vm357, %v3469
      %3506 = vst.msk [vmem:[#allocation3 + $0x88] sm:$0xff] %vm357, %v3470
      %3507 = vst.msk [vmem:[#allocation3 + $0x90] sm:$0xff] %vm357, %v3471
      %3508 = vst.msk [vmem:[#allocation3 + $0x98] sm:$0xff] %vm357, %v3472
      %3509 = vst.msk [vmem:[#allocation3 + $0xa0] sm:$0xff] %vm357, %v3473
      %3510 = vst.msk [vmem:[#allocation3 + $0xa8] sm:$0xff] %vm357, %v3474
      %3511 = vst.msk [vmem:[#allocation3 + $0xb0] sm:$0xff] %vm357, %v3475
      %3512 = vst.msk [vmem:[#allocation3 + $0xb8] sm:$0xff] %vm357, %v3476
      %3513 = vst.msk [vmem:[#allocation3 + $0xc0] sm:$0xff] %vm357, %v3477
      %3514 = vst.msk [vmem:[#allocation3 + $0xc8] sm:$0xff] %vm357, %v3478
      %3515 = vst.msk [vmem:[#allocation3 + $0xd0] sm:$0xff] %vm357, %v3479
      %3516 = vst.msk [vmem:[#allocation3 + $0xd8] sm:$0xff] %vm357, %v3480
      %3517 = vst.msk [vmem:[#allocation3 + $0xe0] sm:$0xff] %vm357, %v3481
      %3518 = vst.msk [vmem:[#allocation3 + $0xe8] sm:$0xff] %vm357, %v3482
      %3519 = vst.msk [vmem:[#allocation3 + $0xf0] sm:$0xff] %vm357, %v3483
      %3520 = vst.msk [vmem:[#allocation3 + $0xf8] sm:$0xff] %vm357, %v3484
      %3521 = vst.msk [vmem:[#allocation3 + $0x100] sm:$0xff] %vm357, %v3485
      %3522 = vst.msk [vmem:[#allocation3 + $0x108] sm:$0xff] %vm357, %v3486
      %3523 = vst.msk [vmem:[#allocation3 + $0x110] sm:$0xff] %vm357, %v3487
      %3524 = vst.msk [vmem:[#allocation3 + $0x118] sm:$0xff] %vm357, %v3488
      %v3525 = vld [vmem:[#allocation3] sm:$0xff]
      %v3526 = vld [vmem:[#allocation3 + $0x8] sm:$0xff]
      %v3527 = vld [vmem:[#allocation3 + $0x10] sm:$0xff]
      %v3528 = vld [vmem:[#allocation3 + $0x18] sm:$0xff]
      %v3529 = vld [vmem:[#allocation3 + $0x20] sm:$0xff]
      %v3530 = vld [vmem:[#allocation3 + $0x28] sm:$0xff]
      %v3531 = vld [vmem:[#allocation3 + $0x30] sm:$0xff]
      %v3532 = vld [vmem:[#allocation3 + $0x38] sm:$0xff]
      %v3533 = vld [vmem:[#allocation3 + $0x40] sm:$0xff]
      %v3534 = vld [vmem:[#allocation3 + $0x48] sm:$0xff]
      %v3535 = vld [vmem:[#allocation3 + $0x50] sm:$0xff]
      %v3536 = vld [vmem:[#allocation3 + $0x58] sm:$0xff]
      %v3537 = vld [vmem:[#allocation3 + $0x60] sm:$0xff]
      %v3538 = vld [vmem:[#allocation3 + $0x68] sm:$0xff]
      %v3539 = vld [vmem:[#allocation3 + $0x70] sm:$0xff]
      %v3540 = vld [vmem:[#allocation3 + $0x78] sm:$0xff]
      %v3541 = vld [vmem:[#allocation3 + $0x80] sm:$0xff]
      %v3542 = vld [vmem:[#allocation3 + $0x88] sm:$0xff]
      %v3543 = vld [vmem:[#allocation3 + $0x90] sm:$0xff]
      %v3544 = vld [vmem:[#allocation3 + $0x98] sm:$0xff]
      %v3545 = vld [vmem:[#allocation3 + $0xa0] sm:$0xff]
      %v3546 = vld [vmem:[#allocation3 + $0xa8] sm:$0xff]
      %v3547 = vld [vmem:[#allocation3 + $0xb0] sm:$0xff]
      %v3548 = vld [vmem:[#allocation3 + $0xb8] sm:$0xff]
      %v3549 = vld [vmem:[#allocation3 + $0xc0] sm:$0xff]
      %v3550 = vld [vmem:[#allocation3 + $0xc8] sm:$0xff]
      %v3551 = vld [vmem:[#allocation3 + $0xd0] sm:$0xff]
      %v3552 = vld [vmem:[#allocation3 + $0xd8] sm:$0xff]
      %v3553 = vld [vmem:[#allocation3 + $0xe0] sm:$0xff]
      %v3554 = vld [vmem:[#allocation3 + $0xe8] sm:$0xff]
      %v3555 = vld [vmem:[#allocation3 + $0xf0] sm:$0xff]
      %v3556 = vld [vmem:[#allocation3 + $0xf8] sm:$0xff]
      %v3557 = vld [vmem:[#allocation3 + $0x100] sm:$0xff]
      %v3558 = vld [vmem:[#allocation3 + $0x108] sm:$0xff]
      %v3559 = vld [vmem:[#allocation3 + $0x110] sm:$0xff]
      %v3560 = vld [vmem:[#allocation3 + $0x118] sm:$0xff]
      %v3561 = vld [vmem:[%s2] sm:$0x1]
      %v3563 = vperm.slane %v3561, 0
      %v3565 = vadd.f32 %v3525, %v3563
      %v3566 = vadd.f32 %v3526, %v3563
      %v3567 = vadd.f32 %v3527, %v3563
      %v3568 = vadd.f32 %v3528, %v3563
      %v3569 = vadd.f32 %v3529, %v3563
      %v3570 = vadd.f32 %v3530, %v3563
      %v3571 = vadd.f32 %v3531, %v3563
      %v3572 = vadd.f32 %v3532, %v3563
      %v3573 = vadd.f32 %v3533, %v3563
      %v3574 = vadd.f32 %v3534, %v3563
      %v3575 = vadd.f32 %v3535, %v3563
      %v3576 = vadd.f32 %v3536, %v3563
      %v3577 = vadd.f32 %v3537, %v3563
      %v3578 = vadd.f32 %v3538, %v3563
      %v3579 = vadd.f32 %v3539, %v3563
      %v3580 = vadd.f32 %v3540, %v3563
      %v3581 = vadd.f32 %v3541, %v3563
      %v3582 = vadd.f32 %v3542, %v3563
      %v3583 = vadd.f32 %v3543, %v3563
      %v3584 = vadd.f32 %v3544, %v3563
      %v3585 = vadd.f32 %v3545, %v3563
      %v3586 = vadd.f32 %v3546, %v3563
      %v3587 = vadd.f32 %v3547, %v3563
      %v3588 = vadd.f32 %v3548, %v3563
      %v3589 = vadd.f32 %v3549, %v3563
      %v3590 = vadd.f32 %v3550, %v3563
      %v3591 = vadd.f32 %v3551, %v3563
      %v3592 = vadd.f32 %v3552, %v3563
      %v3593 = vadd.f32 %v3553, %v3563
      %v3594 = vadd.f32 %v3554, %v3563
      %v3595 = vadd.f32 %v3555, %v3563
      %v3596 = vadd.f32 %v3556, %v3563
      %v3597 = vadd.f32 %v3557, %v3563
      %v3598 = vadd.f32 %v3558, %v3563
      %v3599 = vadd.f32 %v3559, %v3563
      %v3600 = vadd.f32 %v3560, %v3563
      %v3601 = vmax.f32 %v3565, 0.0
      %v3602 = vmax.f32 %v3566, 0.0
      %v3603 = vmax.f32 %v3567, 0.0
      %v3604 = vmax.f32 %v3568, 0.0
      %v3605 = vmax.f32 %v3569, 0.0
      %v3606 = vmax.f32 %v3570, 0.0
      %v3607 = vmax.f32 %v3571, 0.0
      %v3608 = vmax.f32 %v3572, 0.0
      %v3609 = vmax.f32 %v3573, 0.0
      %v3610 = vmax.f32 %v3574, 0.0
      %v3611 = vmax.f32 %v3575, 0.0
      %v3612 = vmax.f32 %v3576, 0.0
      %v3613 = vmax.f32 %v3577, 0.0
      %v3614 = vmax.f32 %v3578, 0.0
      %v3615 = vmax.f32 %v3579, 0.0
      %v3616 = vmax.f32 %v3580, 0.0
      %v3617 = vmax.f32 %v3581, 0.0
      %v3618 = vmax.f32 %v3582, 0.0
      %v3619 = vmax.f32 %v3583, 0.0
      %v3620 = vmax.f32 %v3584, 0.0
      %v3621 = vmax.f32 %v3585, 0.0
      %v3622 = vmax.f32 %v3586, 0.0
      %v3623 = vmax.f32 %v3587, 0.0
      %v3624 = vmax.f32 %v3588, 0.0
      %v3625 = vmax.f32 %v3589, 0.0
      %v3626 = vmax.f32 %v3590, 0.0
      %v3627 = vmax.f32 %v3591, 0.0
      %v3628 = vmax.f32 %v3592, 0.0
      %v3629 = vmax.f32 %v3593, 0.0
      %v3630 = vmax.f32 %v3594, 0.0
      %v3631 = vmax.f32 %v3595, 0.0
      %v3632 = vmax.f32 %v3596, 0.0
      %v3633 = vmax.f32 %v3597, 0.0
      %v3634 = vmax.f32 %v3598, 0.0
      %v3635 = vmax.f32 %v3599, 0.0
      %v3636 = vmax.f32 %v3600, 0.0
      %3637 = vst.msk [vmem:[#allocation3] sm:$0xff] %vm357, %v3601
      %3638 = vst.msk [vmem:[#allocation3 + $0x8] sm:$0xff] %vm357, %v3602
      %3639 = vst.msk [vmem:[#allocation3 + $0x10] sm:$0xff] %vm357, %v3603
      %3640 = vst.msk [vmem:[#allocation3 + $0x18] sm:$0xff] %vm357, %v3604
      %3641 = vst.msk [vmem:[#allocation3 + $0x20] sm:$0xff] %vm357, %v3605
      %3642 = vst.msk [vmem:[#allocation3 + $0x28] sm:$0xff] %vm357, %v3606
      %3643 = vst.msk [vmem:[#allocation3 + $0x30] sm:$0xff] %vm357, %v3607
      %3644 = vst.msk [vmem:[#allocation3 + $0x38] sm:$0xff] %vm357, %v3608
      %3645 = vst.msk [vmem:[#allocation3 + $0x40] sm:$0xff] %vm357, %v3609
      %3646 = vst.msk [vmem:[#allocation3 + $0x48] sm:$0xff] %vm357, %v3610
      %3647 = vst.msk [vmem:[#allocation3 + $0x50] sm:$0xff] %vm357, %v3611
      %3648 = vst.msk [vmem:[#allocation3 + $0x58] sm:$0xff] %vm357, %v3612
      %3649 = vst.msk [vmem:[#allocation3 + $0x60] sm:$0xff] %vm357, %v3613
      %3650 = vst.msk [vmem:[#allocation3 + $0x68] sm:$0xff] %vm357, %v3614
      %3651 = vst.msk [vmem:[#allocation3 + $0x70] sm:$0xff] %vm357, %v3615
      %3652 = vst.msk [vmem:[#allocation3 + $0x78] sm:$0xff] %vm357, %v3616
      %3653 = vst.msk [vmem:[#allocation3 + $0x80] sm:$0xff] %vm357, %v3617
      %3654 = vst.msk [vmem:[#allocation3 + $0x88] sm:$0xff] %vm357, %v3618
      %3655 = vst.msk [vmem:[#allocation3 + $0x90] sm:$0xff] %vm357, %v3619
      %3656 = vst.msk [vmem:[#allocation3 + $0x98] sm:$0xff] %vm357, %v3620
      %3657 = vst.msk [vmem:[#allocation3 + $0xa0] sm:$0xff] %vm357, %v3621
      %3658 = vst.msk [vmem:[#allocation3 + $0xa8] sm:$0xff] %vm357, %v3622
      %3659 = vst.msk [vmem:[#allocation3 + $0xb0] sm:$0xff] %vm357, %v3623
      %3660 = vst.msk [vmem:[#allocation3 + $0xb8] sm:$0xff] %vm357, %v3624
      %3661 = vst.msk [vmem:[#allocation3 + $0xc0] sm:$0xff] %vm357, %v3625
      %3662 = vst.msk [vmem:[#allocation3 + $0xc8] sm:$0xff] %vm357, %v3626
      %3663 = vst.msk [vmem:[#allocation3 + $0xd0] sm:$0xff] %vm357, %v3627
      %3664 = vst.msk [vmem:[#allocation3 + $0xd8] sm:$0xff] %vm357, %v3628
      %3665 = vst.msk [vmem:[#allocation3 + $0xe0] sm:$0xff] %vm357, %v3629
      %3666 = vst.msk [vmem:[#allocation3 + $0xe8] sm:$0xff] %vm357, %v3630
      %3667 = vst.msk [vmem:[#allocation3 + $0xf0] sm:$0xff] %vm357, %v3631
      %3668 = vst.msk [vmem:[#allocation3 + $0xf8] sm:$0xff] %vm357, %v3632
      %3669 = vst.msk [vmem:[#allocation3 + $0x100] sm:$0xff] %vm357, %v3633
      %3670 = vst.msk [vmem:[#allocation3 + $0x108] sm:$0xff] %vm357, %v3634
      %3671 = vst.msk [vmem:[#allocation3 + $0x110] sm:$0xff] %vm357, %v3635
      %3672 = vst.msk [vmem:[#allocation3 + $0x118] sm:$0xff] %vm357, %v3636
      %v3673 = vlaneseq
      %v3674 = vshrl.u32 %v3673, 7
      %v3675 = vadd.s32 %v3674, 8
      %v3676 = vadd.s32 %v3674, 16
      %v3677 = vadd.s32 %v3674, 24
      %v3678 = vadd.s32 %v3674, 32
      %v3679 = vadd.s32 %v3674, 40
      %v3680 = vadd.s32 %v3674, 48
      %v3681 = vadd.s32 %v3674, 56
      %v3682 = vadd.s32 %v3674, 64
      %v3683 = vadd.s32 %v3674, 72
      %v3684 = vadd.s32 %v3674, 80
      %v3685 = vadd.s32 %v3674, 88
      %v3686 = vadd.s32 %v3674, 96
      %v3687 = vadd.s32 %v3674, 104
      %v3688 = vadd.s32 %v3674, 112
      %v3689 = vadd.s32 %v3674, 120
      %v3690 = vadd.s32 %v3674, 128
      %v3691 = vadd.s32 %v3674, 136
      %v3692 = vadd.s32 %v3674, 144
      %v3693 = vadd.s32 %v3674, 152
      %v3694 = vadd.s32 %v3674, 160
      %v3695 = vadd.s32 %v3674, 168
      %v3696 = vadd.s32 %v3674, 176
      %v3697 = vadd.s32 %v3674, 184
      %v3698 = vadd.s32 %v3674, 192
      %v3699 = vadd.s32 %v3674, 200
      %v3700 = vadd.s32 %v3674, 208
      %v3701 = vadd.s32 %v3674, 216
      %v3702 = vadd.s32 %v3674, 224
      %v3703 = vadd.s32 %v3674, 232
      %v3704 = vadd.s32 %v3674, 240
      %v3705 = vadd.s32 %v3674, 248
      %v3706 = vadd.s32 %v3674, 256
      %v3707 = vadd.s32 %v3674, 264
      %v3708 = vadd.s32 %v3674, 272
      %v3709 = vadd.s32 %v3674, 280
      %vm3710 = vcmp.lt.s32.totalorder %v3674, 0
      %v3711 = vsub.s32 0, %v3674
      %v3712 = vsel %vm3710, %v3711, %v3674
      %v3713 = vand.u32 %v3712, 65535
      %v3714 = vshrl.u32 %v3712, 16
      %v3716 = vmul.u32 %v3713, 14564
      %v3717 = vmul.u32 %v3713, 58254
      %v3718 = vmul.u32 %v3714, 14564
      %v3719 = vmul.u32 %v3714, 58254
      %v3720 = vshll.u32 %v3717, 16
      %v3721 = vshrl.u32 %v3717, 16
      %v3722 = vshll.u32 %v3718, 16
      %v3723 = vshrl.u32 %v3718, 16
      %vm3724 = vc.u32 %v3716, %v3720
      %v3725 = vsel %vm3724, 1, 0
      %v3726 = vadd.s32 %v3716, %v3720
      %v3727 = vadd.s32 %v3719, %v3725
      %vm3728 = vc.u32 %v3726, %v3722
      %v3729 = vsel %vm3728, 1, 0
      %v3730 = vadd.s32 %v3726, %v3722
      %v3731 = vadd.s32 %v3727, %v3729
      %v3732 = vadd.s32 %v3731, %v3721
      %v3733 = vadd.s32 %v3732, %v3723
      %v3734 = vshrl.u32 %v3733, 4
      %v3735 = vmul.u32 %v3734, 18
      %v3736 = vsub.s32 %v3712, %v3735
      %v3737 = vsub.s32 0, %v3736
      %v3738 = vsel %vm3710, %v3737, %v3736
      %vm3739 = vcmp.lt.s32.totalorder %v3675, 0
      %v3740 = vsub.s32 0, %v3675
      %v3741 = vsel %vm3739, %v3740, %v3675
      %v3742 = vand.u32 %v3741, 65535
      %v3743 = vshrl.u32 %v3741, 16
      %v3745 = vmul.u32 %v3742, 14564
      %v3746 = vmul.u32 %v3742, 58254
      %v3747 = vmul.u32 %v3743, 14564
      %v3748 = vmul.u32 %v3743, 58254
      %v3749 = vshll.u32 %v3746, 16
      %v3750 = vshrl.u32 %v3746, 16
      %v3751 = vshll.u32 %v3747, 16
      %v3752 = vshrl.u32 %v3747, 16
      %vm3753 = vc.u32 %v3745, %v3749
      %v3754 = vsel %vm3753, 1, 0
      %v3755 = vadd.s32 %v3745, %v3749
      %v3756 = vadd.s32 %v3748, %v3754
      %vm3757 = vc.u32 %v3755, %v3751
      %v3758 = vsel %vm3757, 1, 0
      %v3759 = vadd.s32 %v3755, %v3751
      %v3760 = vadd.s32 %v3756, %v3758
      %v3761 = vadd.s32 %v3760, %v3750
      %v3762 = vadd.s32 %v3761, %v3752
      %v3763 = vshrl.u32 %v3762, 4
      %v3764 = vmul.u32 %v3763, 18
      %v3765 = vsub.s32 %v3741, %v3764
      %v3766 = vsub.s32 0, %v3765
      %v3767 = vsel %vm3739, %v3766, %v3765
      %vm3768 = vcmp.lt.s32.totalorder %v3676, 0
      %v3769 = vsub.s32 0, %v3676
      %v3770 = vsel %vm3768, %v3769, %v3676
      %v3771 = vand.u32 %v3770, 65535
      %v3772 = vshrl.u32 %v3770, 16
      %v3774 = vmul.u32 %v3771, 14564
      %v3775 = vmul.u32 %v3771, 58254
      %v3776 = vmul.u32 %v3772, 14564
      %v3777 = vmul.u32 %v3772, 58254
      %v3778 = vshll.u32 %v3775, 16
      %v3779 = vshrl.u32 %v3775, 16
      %v3780 = vshll.u32 %v3776, 16
      %v3781 = vshrl.u32 %v3776, 16
      %vm3782 = vc.u32 %v3774, %v3778
      %v3783 = vsel %vm3782, 1, 0
      %v3784 = vadd.s32 %v3774, %v3778
      %v3785 = vadd.s32 %v3777, %v3783
      %vm3786 = vc.u32 %v3784, %v3780
      %v3787 = vsel %vm3786, 1, 0
      %v3788 = vadd.s32 %v3784, %v3780
      %v3789 = vadd.s32 %v3785, %v3787
      %v3790 = vadd.s32 %v3789, %v3779
      %v3791 = vadd.s32 %v3790, %v3781
      %v3792 = vshrl.u32 %v3791, 4
      %v3793 = vmul.u32 %v3792, 18
      %v3794 = vsub.s32 %v3770, %v3793
      %v3795 = vsub.s32 0, %v3794
      %v3796 = vsel %vm3768, %v3795, %v3794
      %vm3797 = vcmp.lt.s32.totalorder %v3677, 0
      %v3798 = vsub.s32 0, %v3677
      %v3799 = vsel %vm3797, %v3798, %v3677
      %v3800 = vand.u32 %v3799, 65535
      %v3801 = vshrl.u32 %v3799, 16
      %v3803 = vmul.u32 %v3800, 14564
      %v3804 = vmul.u32 %v3800, 58254
      %v3805 = vmul.u32 %v3801, 14564
      %v3806 = vmul.u32 %v3801, 58254
      %v3807 = vshll.u32 %v3804, 16
      %v3808 = vshrl.u32 %v3804, 16
      %v3809 = vshll.u32 %v3805, 16
      %v3810 = vshrl.u32 %v3805, 16
      %vm3811 = vc.u32 %v3803, %v3807
      %v3812 = vsel %vm3811, 1, 0
      %v3813 = vadd.s32 %v3803, %v3807
      %v3814 = vadd.s32 %v3806, %v3812
      %vm3815 = vc.u32 %v3813, %v3809
      %v3816 = vsel %vm3815, 1, 0
      %v3817 = vadd.s32 %v3813, %v3809
      %v3818 = vadd.s32 %v3814, %v3816
      %v3819 = vadd.s32 %v3818, %v3808
      %v3820 = vadd.s32 %v3819, %v3810
      %v3821 = vshrl.u32 %v3820, 4
      %v3822 = vmul.u32 %v3821, 18
      %v3823 = vsub.s32 %v3799, %v3822
      %v3824 = vsub.s32 0, %v3823
      %v3825 = vsel %vm3797, %v3824, %v3823
      %vm3826 = vcmp.lt.s32.totalorder %v3678, 0
      %v3827 = vsub.s32 0, %v3678
      %v3828 = vsel %vm3826, %v3827, %v3678
      %v3829 = vand.u32 %v3828, 65535
      %v3830 = vshrl.u32 %v3828, 16
      %v3832 = vmul.u32 %v3829, 14564
      %v3833 = vmul.u32 %v3829, 58254
      %v3834 = vmul.u32 %v3830, 14564
      %v3835 = vmul.u32 %v3830, 58254
      %v3836 = vshll.u32 %v3833, 16
      %v3837 = vshrl.u32 %v3833, 16
      %v3838 = vshll.u32 %v3834, 16
      %v3839 = vshrl.u32 %v3834, 16
      %vm3840 = vc.u32 %v3832, %v3836
      %v3841 = vsel %vm3840, 1, 0
      %v3842 = vadd.s32 %v3832, %v3836
      %v3843 = vadd.s32 %v3835, %v3841
      %vm3844 = vc.u32 %v3842, %v3838
      %v3845 = vsel %vm3844, 1, 0
      %v3846 = vadd.s32 %v3842, %v3838
      %v3847 = vadd.s32 %v3843, %v3845
      %v3848 = vadd.s32 %v3847, %v3837
      %v3849 = vadd.s32 %v3848, %v3839
      %v3850 = vshrl.u32 %v3849, 4
      %v3851 = vmul.u32 %v3850, 18
      %v3852 = vsub.s32 %v3828, %v3851
      %v3853 = vsub.s32 0, %v3852
      %v3854 = vsel %vm3826, %v3853, %v3852
      %vm3855 = vcmp.lt.s32.totalorder %v3679, 0
      %v3856 = vsub.s32 0, %v3679
      %v3857 = vsel %vm3855, %v3856, %v3679
      %v3858 = vand.u32 %v3857, 65535
      %v3859 = vshrl.u32 %v3857, 16
      %v3861 = vmul.u32 %v3858, 14564
      %v3862 = vmul.u32 %v3858, 58254
      %v3863 = vmul.u32 %v3859, 14564
      %v3864 = vmul.u32 %v3859, 58254
      %v3865 = vshll.u32 %v3862, 16
      %v3866 = vshrl.u32 %v3862, 16
      %v3867 = vshll.u32 %v3863, 16
      %v3868 = vshrl.u32 %v3863, 16
      %vm3869 = vc.u32 %v3861, %v3865
      %v3870 = vsel %vm3869, 1, 0
      %v3871 = vadd.s32 %v3861, %v3865
      %v3872 = vadd.s32 %v3864, %v3870
      %vm3873 = vc.u32 %v3871, %v3867
      %v3874 = vsel %vm3873, 1, 0
      %v3875 = vadd.s32 %v3871, %v3867
      %v3876 = vadd.s32 %v3872, %v3874
      %v3877 = vadd.s32 %v3876, %v3866
      %v3878 = vadd.s32 %v3877, %v3868
      %v3879 = vshrl.u32 %v3878, 4
      %v3880 = vmul.u32 %v3879, 18
      %v3881 = vsub.s32 %v3857, %v3880
      %v3882 = vsub.s32 0, %v3881
      %v3883 = vsel %vm3855, %v3882, %v3881
      %vm3884 = vcmp.lt.s32.totalorder %v3680, 0
      %v3885 = vsub.s32 0, %v3680
      %v3886 = vsel %vm3884, %v3885, %v3680
      %v3887 = vand.u32 %v3886, 65535
      %v3888 = vshrl.u32 %v3886, 16
      %v3890 = vmul.u32 %v3887, 14564
      %v3891 = vmul.u32 %v3887, 58254
      %v3892 = vmul.u32 %v3888, 14564
      %v3893 = vmul.u32 %v3888, 58254
      %v3894 = vshll.u32 %v3891, 16
      %v3895 = vshrl.u32 %v3891, 16
      %v3896 = vshll.u32 %v3892, 16
      %v3897 = vshrl.u32 %v3892, 16
      %vm3898 = vc.u32 %v3890, %v3894
      %v3899 = vsel %vm3898, 1, 0
      %v3900 = vadd.s32 %v3890, %v3894
      %v3901 = vadd.s32 %v3893, %v3899
      %vm3902 = vc.u32 %v3900, %v3896
      %v3903 = vsel %vm3902, 1, 0
      %v3904 = vadd.s32 %v3900, %v3896
      %v3905 = vadd.s32 %v3901, %v3903
      %v3906 = vadd.s32 %v3905, %v3895
      %v3907 = vadd.s32 %v3906, %v3897
      %v3908 = vshrl.u32 %v3907, 4
      %v3909 = vmul.u32 %v3908, 18
      %v3910 = vsub.s32 %v3886, %v3909
      %v3911 = vsub.s32 0, %v3910
      %v3912 = vsel %vm3884, %v3911, %v3910
      %vm3913 = vcmp.lt.s32.totalorder %v3681, 0
      %v3914 = vsub.s32 0, %v3681
      %v3915 = vsel %vm3913, %v3914, %v3681
      %v3916 = vand.u32 %v3915, 65535
      %v3917 = vshrl.u32 %v3915, 16
      %v3919 = vmul.u32 %v3916, 14564
      %v3920 = vmul.u32 %v3916, 58254
      %v3921 = vmul.u32 %v3917, 14564
      %v3922 = vmul.u32 %v3917, 58254
      %v3923 = vshll.u32 %v3920, 16
      %v3924 = vshrl.u32 %v3920, 16
      %v3925 = vshll.u32 %v3921, 16
      %v3926 = vshrl.u32 %v3921, 16
      %vm3927 = vc.u32 %v3919, %v3923
      %v3928 = vsel %vm3927, 1, 0
      %v3929 = vadd.s32 %v3919, %v3923
      %v3930 = vadd.s32 %v3922, %v3928
      %vm3931 = vc.u32 %v3929, %v3925
      %v3932 = vsel %vm3931, 1, 0
      %v3933 = vadd.s32 %v3929, %v3925
      %v3934 = vadd.s32 %v3930, %v3932
      %v3935 = vadd.s32 %v3934, %v3924
      %v3936 = vadd.s32 %v3935, %v3926
      %v3937 = vshrl.u32 %v3936, 4
      %v3938 = vmul.u32 %v3937, 18
      %v3939 = vsub.s32 %v3915, %v3938
      %v3940 = vsub.s32 0, %v3939
      %v3941 = vsel %vm3913, %v3940, %v3939
      %vm3942 = vcmp.lt.s32.totalorder %v3682, 0
      %v3943 = vsub.s32 0, %v3682
      %v3944 = vsel %vm3942, %v3943, %v3682
      %v3945 = vand.u32 %v3944, 65535
      %v3946 = vshrl.u32 %v3944, 16
      %v3948 = vmul.u32 %v3945, 14564
      %v3949 = vmul.u32 %v3945, 58254
      %v3950 = vmul.u32 %v3946, 14564
      %v3951 = vmul.u32 %v3946, 58254
      %v3952 = vshll.u32 %v3949, 16
      %v3953 = vshrl.u32 %v3949, 16
      %v3954 = vshll.u32 %v3950, 16
      %v3955 = vshrl.u32 %v3950, 16
      %vm3956 = vc.u32 %v3948, %v3952
      %v3957 = vsel %vm3956, 1, 0
      %v3958 = vadd.s32 %v3948, %v3952
      %v3959 = vadd.s32 %v3951, %v3957
      %vm3960 = vc.u32 %v3958, %v3954
      %v3961 = vsel %vm3960, 1, 0
      %v3962 = vadd.s32 %v3958, %v3954
      %v3963 = vadd.s32 %v3959, %v3961
      %v3964 = vadd.s32 %v3963, %v3953
      %v3965 = vadd.s32 %v3964, %v3955
      %v3966 = vshrl.u32 %v3965, 4
      %v3967 = vmul.u32 %v3966, 18
      %v3968 = vsub.s32 %v3944, %v3967
      %v3969 = vsub.s32 0, %v3968
      %v3970 = vsel %vm3942, %v3969, %v3968
      %vm3971 = vcmp.lt.s32.totalorder %v3683, 0
      %v3972 = vsub.s32 0, %v3683
      %v3973 = vsel %vm3971, %v3972, %v3683
      %v3974 = vand.u32 %v3973, 65535
      %v3975 = vshrl.u32 %v3973, 16
      %v3977 = vmul.u32 %v3974, 14564
      %v3978 = vmul.u32 %v3974, 58254
      %v3979 = vmul.u32 %v3975, 14564
      %v3980 = vmul.u32 %v3975, 58254
      %v3981 = vshll.u32 %v3978, 16
      %v3982 = vshrl.u32 %v3978, 16
      %v3983 = vshll.u32 %v3979, 16
      %v3984 = vshrl.u32 %v3979, 16
      %vm3985 = vc.u32 %v3977, %v3981
      %v3986 = vsel %vm3985, 1, 0
      %v3987 = vadd.s32 %v3977, %v3981
      %v3988 = vadd.s32 %v3980, %v3986
      %vm3989 = vc.u32 %v3987, %v3983
      %v3990 = vsel %vm3989, 1, 0
      %v3991 = vadd.s32 %v3987, %v3983
      %v3992 = vadd.s32 %v3988, %v3990
      %v3993 = vadd.s32 %v3992, %v3982
      %v3994 = vadd.s32 %v3993, %v3984
      %v3995 = vshrl.u32 %v3994, 4
      %v3996 = vmul.u32 %v3995, 18
      %v3997 = vsub.s32 %v3973, %v3996
      %v3998 = vsub.s32 0, %v3997
      %v3999 = vsel %vm3971, %v3998, %v3997
      %vm4000 = vcmp.lt.s32.totalorder %v3684, 0
      %v4001 = vsub.s32 0, %v3684
      %v4002 = vsel %vm4000, %v4001, %v3684
      %v4003 = vand.u32 %v4002, 65535
      %v4004 = vshrl.u32 %v4002, 16
      %v4006 = vmul.u32 %v4003, 14564
      %v4007 = vmul.u32 %v4003, 58254
      %v4008 = vmul.u32 %v4004, 14564
      %v4009 = vmul.u32 %v4004, 58254
      %v4010 = vshll.u32 %v4007, 16
      %v4011 = vshrl.u32 %v4007, 16
      %v4012 = vshll.u32 %v4008, 16
      %v4013 = vshrl.u32 %v4008, 16
      %vm4014 = vc.u32 %v4006, %v4010
      %v4015 = vsel %vm4014, 1, 0
      %v4016 = vadd.s32 %v4006, %v4010
      %v4017 = vadd.s32 %v4009, %v4015
      %vm4018 = vc.u32 %v4016, %v4012
      %v4019 = vsel %vm4018, 1, 0
      %v4020 = vadd.s32 %v4016, %v4012
      %v4021 = vadd.s32 %v4017, %v4019
      %v4022 = vadd.s32 %v4021, %v4011
      %v4023 = vadd.s32 %v4022, %v4013
      %v4024 = vshrl.u32 %v4023, 4
      %v4025 = vmul.u32 %v4024, 18
      %v4026 = vsub.s32 %v4002, %v4025
      %v4027 = vsub.s32 0, %v4026
      %v4028 = vsel %vm4000, %v4027, %v4026
      %vm4029 = vcmp.lt.s32.totalorder %v3685, 0
      %v4030 = vsub.s32 0, %v3685
      %v4031 = vsel %vm4029, %v4030, %v3685
      %v4032 = vand.u32 %v4031, 65535
      %v4033 = vshrl.u32 %v4031, 16
      %v4035 = vmul.u32 %v4032, 14564
      %v4036 = vmul.u32 %v4032, 58254
      %v4037 = vmul.u32 %v4033, 14564
      %v4038 = vmul.u32 %v4033, 58254
      %v4039 = vshll.u32 %v4036, 16
      %v4040 = vshrl.u32 %v4036, 16
      %v4041 = vshll.u32 %v4037, 16
      %v4042 = vshrl.u32 %v4037, 16
      %vm4043 = vc.u32 %v4035, %v4039
      %v4044 = vsel %vm4043, 1, 0
      %v4045 = vadd.s32 %v4035, %v4039
      %v4046 = vadd.s32 %v4038, %v4044
      %vm4047 = vc.u32 %v4045, %v4041
      %v4048 = vsel %vm4047, 1, 0
      %v4049 = vadd.s32 %v4045, %v4041
      %v4050 = vadd.s32 %v4046, %v4048
      %v4051 = vadd.s32 %v4050, %v4040
      %v4052 = vadd.s32 %v4051, %v4042
      %v4053 = vshrl.u32 %v4052, 4
      %v4054 = vmul.u32 %v4053, 18
      %v4055 = vsub.s32 %v4031, %v4054
      %v4056 = vsub.s32 0, %v4055
      %v4057 = vsel %vm4029, %v4056, %v4055
      %vm4058 = vcmp.lt.s32.totalorder %v3686, 0
      %v4059 = vsub.s32 0, %v3686
      %v4060 = vsel %vm4058, %v4059, %v3686
      %v4061 = vand.u32 %v4060, 65535
      %v4062 = vshrl.u32 %v4060, 16
      %v4064 = vmul.u32 %v4061, 14564
      %v4065 = vmul.u32 %v4061, 58254
      %v4066 = vmul.u32 %v4062, 14564
      %v4067 = vmul.u32 %v4062, 58254
      %v4068 = vshll.u32 %v4065, 16
      %v4069 = vshrl.u32 %v4065, 16
      %v4070 = vshll.u32 %v4066, 16
      %v4071 = vshrl.u32 %v4066, 16
      %vm4072 = vc.u32 %v4064, %v4068
      %v4073 = vsel %vm4072, 1, 0
      %v4074 = vadd.s32 %v4064, %v4068
      %v4075 = vadd.s32 %v4067, %v4073
      %vm4076 = vc.u32 %v4074, %v4070
      %v4077 = vsel %vm4076, 1, 0
      %v4078 = vadd.s32 %v4074, %v4070
      %v4079 = vadd.s32 %v4075, %v4077
      %v4080 = vadd.s32 %v4079, %v4069
      %v4081 = vadd.s32 %v4080, %v4071
      %v4082 = vshrl.u32 %v4081, 4
      %v4083 = vmul.u32 %v4082, 18
      %v4084 = vsub.s32 %v4060, %v4083
      %v4085 = vsub.s32 0, %v4084
      %v4086 = vsel %vm4058, %v4085, %v4084
      %vm4087 = vcmp.lt.s32.totalorder %v3687, 0
      %v4088 = vsub.s32 0, %v3687
      %v4089 = vsel %vm4087, %v4088, %v3687
      %v4090 = vand.u32 %v4089, 65535
      %v4091 = vshrl.u32 %v4089, 16
      %v4093 = vmul.u32 %v4090, 14564
      %v4094 = vmul.u32 %v4090, 58254
      %v4095 = vmul.u32 %v4091, 14564
      %v4096 = vmul.u32 %v4091, 58254
      %v4097 = vshll.u32 %v4094, 16
      %v4098 = vshrl.u32 %v4094, 16
      %v4099 = vshll.u32 %v4095, 16
      %v4100 = vshrl.u32 %v4095, 16
      %vm4101 = vc.u32 %v4093, %v4097
      %v4102 = vsel %vm4101, 1, 0
      %v4103 = vadd.s32 %v4093, %v4097
      %v4104 = vadd.s32 %v4096, %v4102
      %vm4105 = vc.u32 %v4103, %v4099
      %v4106 = vsel %vm4105, 1, 0
      %v4107 = vadd.s32 %v4103, %v4099
      %v4108 = vadd.s32 %v4104, %v4106
      %v4109 = vadd.s32 %v4108, %v4098
      %v4110 = vadd.s32 %v4109, %v4100
      %v4111 = vshrl.u32 %v4110, 4
      %v4112 = vmul.u32 %v4111, 18
      %v4113 = vsub.s32 %v4089, %v4112
      %v4114 = vsub.s32 0, %v4113
      %v4115 = vsel %vm4087, %v4114, %v4113
      %vm4116 = vcmp.lt.s32.totalorder %v3688, 0
      %v4117 = vsub.s32 0, %v3688
      %v4118 = vsel %vm4116, %v4117, %v3688
      %v4119 = vand.u32 %v4118, 65535
      %v4120 = vshrl.u32 %v4118, 16
      %v4122 = vmul.u32 %v4119, 14564
      %v4123 = vmul.u32 %v4119, 58254
      %v4124 = vmul.u32 %v4120, 14564
      %v4125 = vmul.u32 %v4120, 58254
      %v4126 = vshll.u32 %v4123, 16
      %v4127 = vshrl.u32 %v4123, 16
      %v4128 = vshll.u32 %v4124, 16
      %v4129 = vshrl.u32 %v4124, 16
      %vm4130 = vc.u32 %v4122, %v4126
      %v4131 = vsel %vm4130, 1, 0
      %v4132 = vadd.s32 %v4122, %v4126
      %v4133 = vadd.s32 %v4125, %v4131
      %vm4134 = vc.u32 %v4132, %v4128
      %v4135 = vsel %vm4134, 1, 0
      %v4136 = vadd.s32 %v4132, %v4128
      %v4137 = vadd.s32 %v4133, %v4135
      %v4138 = vadd.s32 %v4137, %v4127
      %v4139 = vadd.s32 %v4138, %v4129
      %v4140 = vshrl.u32 %v4139, 4
      %v4141 = vmul.u32 %v4140, 18
      %v4142 = vsub.s32 %v4118, %v4141
      %v4143 = vsub.s32 0, %v4142
      %v4144 = vsel %vm4116, %v4143, %v4142
      %vm4145 = vcmp.lt.s32.totalorder %v3689, 0
      %v4146 = vsub.s32 0, %v3689
      %v4147 = vsel %vm4145, %v4146, %v3689
      %v4148 = vand.u32 %v4147, 65535
      %v4149 = vshrl.u32 %v4147, 16
      %v4151 = vmul.u32 %v4148, 14564
      %v4152 = vmul.u32 %v4148, 58254
      %v4153 = vmul.u32 %v4149, 14564
      %v4154 = vmul.u32 %v4149, 58254
      %v4155 = vshll.u32 %v4152, 16
      %v4156 = vshrl.u32 %v4152, 16
      %v4157 = vshll.u32 %v4153, 16
      %v4158 = vshrl.u32 %v4153, 16
      %vm4159 = vc.u32 %v4151, %v4155
      %v4160 = vsel %vm4159, 1, 0
      %v4161 = vadd.s32 %v4151, %v4155
      %v4162 = vadd.s32 %v4154, %v4160
      %vm4163 = vc.u32 %v4161, %v4157
      %v4164 = vsel %vm4163, 1, 0
      %v4165 = vadd.s32 %v4161, %v4157
      %v4166 = vadd.s32 %v4162, %v4164
      %v4167 = vadd.s32 %v4166, %v4156
      %v4168 = vadd.s32 %v4167, %v4158
      %v4169 = vshrl.u32 %v4168, 4
      %v4170 = vmul.u32 %v4169, 18
      %v4171 = vsub.s32 %v4147, %v4170
      %v4172 = vsub.s32 0, %v4171
      %v4173 = vsel %vm4145, %v4172, %v4171
      %vm4174 = vcmp.lt.s32.totalorder %v3690, 0
      %v4175 = vsub.s32 0, %v3690
      %v4176 = vsel %vm4174, %v4175, %v3690
      %v4177 = vand.u32 %v4176, 65535
      %v4178 = vshrl.u32 %v4176, 16
      %v4180 = vmul.u32 %v4177, 14564
      %v4181 = vmul.u32 %v4177, 58254
      %v4182 = vmul.u32 %v4178, 14564
      %v4183 = vmul.u32 %v4178, 58254
      %v4184 = vshll.u32 %v4181, 16
      %v4185 = vshrl.u32 %v4181, 16
      %v4186 = vshll.u32 %v4182, 16
      %v4187 = vshrl.u32 %v4182, 16
      %vm4188 = vc.u32 %v4180, %v4184
      %v4189 = vsel %vm4188, 1, 0
      %v4190 = vadd.s32 %v4180, %v4184
      %v4191 = vadd.s32 %v4183, %v4189
      %vm4192 = vc.u32 %v4190, %v4186
      %v4193 = vsel %vm4192, 1, 0
      %v4194 = vadd.s32 %v4190, %v4186
      %v4195 = vadd.s32 %v4191, %v4193
      %v4196 = vadd.s32 %v4195, %v4185
      %v4197 = vadd.s32 %v4196, %v4187
      %v4198 = vshrl.u32 %v4197, 4
      %v4199 = vmul.u32 %v4198, 18
      %v4200 = vsub.s32 %v4176, %v4199
      %v4201 = vsub.s32 0, %v4200
      %v4202 = vsel %vm4174, %v4201, %v4200
      %vm4203 = vcmp.lt.s32.totalorder %v3691, 0
      %v4204 = vsub.s32 0, %v3691
      %v4205 = vsel %vm4203, %v4204, %v3691
      %v4206 = vand.u32 %v4205, 65535
      %v4207 = vshrl.u32 %v4205, 16
      %v4209 = vmul.u32 %v4206, 14564
      %v4210 = vmul.u32 %v4206, 58254
      %v4211 = vmul.u32 %v4207, 14564
      %v4212 = vmul.u32 %v4207, 58254
      %v4213 = vshll.u32 %v4210, 16
      %v4214 = vshrl.u32 %v4210, 16
      %v4215 = vshll.u32 %v4211, 16
      %v4216 = vshrl.u32 %v4211, 16
      %vm4217 = vc.u32 %v4209, %v4213
      %v4218 = vsel %vm4217, 1, 0
      %v4219 = vadd.s32 %v4209, %v4213
      %v4220 = vadd.s32 %v4212, %v4218
      %vm4221 = vc.u32 %v4219, %v4215
      %v4222 = vsel %vm4221, 1, 0
      %v4223 = vadd.s32 %v4219, %v4215
      %v4224 = vadd.s32 %v4220, %v4222
      %v4225 = vadd.s32 %v4224, %v4214
      %v4226 = vadd.s32 %v4225, %v4216
      %v4227 = vshrl.u32 %v4226, 4
      %v4228 = vmul.u32 %v4227, 18
      %v4229 = vsub.s32 %v4205, %v4228
      %v4230 = vsub.s32 0, %v4229
      %v4231 = vsel %vm4203, %v4230, %v4229
      %vm4232 = vcmp.lt.s32.totalorder %v3692, 0
      %v4233 = vsub.s32 0, %v3692
      %v4234 = vsel %vm4232, %v4233, %v3692
      %v4235 = vand.u32 %v4234, 65535
      %v4236 = vshrl.u32 %v4234, 16
      %v4238 = vmul.u32 %v4235, 14564
      %v4239 = vmul.u32 %v4235, 58254
      %v4240 = vmul.u32 %v4236, 14564
      %v4241 = vmul.u32 %v4236, 58254
      %v4242 = vshll.u32 %v4239, 16
      %v4243 = vshrl.u32 %v4239, 16
      %v4244 = vshll.u32 %v4240, 16
      %v4245 = vshrl.u32 %v4240, 16
      %vm4246 = vc.u32 %v4238, %v4242
      %v4247 = vsel %vm4246, 1, 0
      %v4248 = vadd.s32 %v4238, %v4242
      %v4249 = vadd.s32 %v4241, %v4247
      %vm4250 = vc.u32 %v4248, %v4244
      %v4251 = vsel %vm4250, 1, 0
      %v4252 = vadd.s32 %v4248, %v4244
      %v4253 = vadd.s32 %v4249, %v4251
      %v4254 = vadd.s32 %v4253, %v4243
      %v4255 = vadd.s32 %v4254, %v4245
      %v4256 = vshrl.u32 %v4255, 4
      %v4257 = vmul.u32 %v4256, 18
      %v4258 = vsub.s32 %v4234, %v4257
      %v4259 = vsub.s32 0, %v4258
      %v4260 = vsel %vm4232, %v4259, %v4258
      %vm4261 = vcmp.lt.s32.totalorder %v3693, 0
      %v4262 = vsub.s32 0, %v3693
      %v4263 = vsel %vm4261, %v4262, %v3693
      %v4264 = vand.u32 %v4263, 65535
      %v4265 = vshrl.u32 %v4263, 16
      %v4267 = vmul.u32 %v4264, 14564
      %v4268 = vmul.u32 %v4264, 58254
      %v4269 = vmul.u32 %v4265, 14564
      %v4270 = vmul.u32 %v4265, 58254
      %v4271 = vshll.u32 %v4268, 16
      %v4272 = vshrl.u32 %v4268, 16
      %v4273 = vshll.u32 %v4269, 16
      %v4274 = vshrl.u32 %v4269, 16
      %vm4275 = vc.u32 %v4267, %v4271
      %v4276 = vsel %vm4275, 1, 0
      %v4277 = vadd.s32 %v4267, %v4271
      %v4278 = vadd.s32 %v4270, %v4276
      %vm4279 = vc.u32 %v4277, %v4273
      %v4280 = vsel %vm4279, 1, 0
      %v4281 = vadd.s32 %v4277, %v4273
      %v4282 = vadd.s32 %v4278, %v4280
      %v4283 = vadd.s32 %v4282, %v4272
      %v4284 = vadd.s32 %v4283, %v4274
      %v4285 = vshrl.u32 %v4284, 4
      %v4286 = vmul.u32 %v4285, 18
      %v4287 = vsub.s32 %v4263, %v4286
      %v4288 = vsub.s32 0, %v4287
      %v4289 = vsel %vm4261, %v4288, %v4287
      %vm4290 = vcmp.lt.s32.totalorder %v3694, 0
      %v4291 = vsub.s32 0, %v3694
      %v4292 = vsel %vm4290, %v4291, %v3694
      %v4293 = vand.u32 %v4292, 65535
      %v4294 = vshrl.u32 %v4292, 16
      %v4296 = vmul.u32 %v4293, 14564
      %v4297 = vmul.u32 %v4293, 58254
      %v4298 = vmul.u32 %v4294, 14564
      %v4299 = vmul.u32 %v4294, 58254
      %v4300 = vshll.u32 %v4297, 16
      %v4301 = vshrl.u32 %v4297, 16
      %v4302 = vshll.u32 %v4298, 16
      %v4303 = vshrl.u32 %v4298, 16
      %vm4304 = vc.u32 %v4296, %v4300
      %v4305 = vsel %vm4304, 1, 0
      %v4306 = vadd.s32 %v4296, %v4300
      %v4307 = vadd.s32 %v4299, %v4305
      %vm4308 = vc.u32 %v4306, %v4302
      %v4309 = vsel %vm4308, 1, 0
      %v4310 = vadd.s32 %v4306, %v4302
      %v4311 = vadd.s32 %v4307, %v4309
      %v4312 = vadd.s32 %v4311, %v4301
      %v4313 = vadd.s32 %v4312, %v4303
      %v4314 = vshrl.u32 %v4313, 4
      %v4315 = vmul.u32 %v4314, 18
      %v4316 = vsub.s32 %v4292, %v4315
      %v4317 = vsub.s32 0, %v4316
      %v4318 = vsel %vm4290, %v4317, %v4316
      %vm4319 = vcmp.lt.s32.totalorder %v3695, 0
      %v4320 = vsub.s32 0, %v3695
      %v4321 = vsel %vm4319, %v4320, %v3695
      %v4322 = vand.u32 %v4321, 65535
      %v4323 = vshrl.u32 %v4321, 16
      %v4325 = vmul.u32 %v4322, 14564
      %v4326 = vmul.u32 %v4322, 58254
      %v4327 = vmul.u32 %v4323, 14564
      %v4328 = vmul.u32 %v4323, 58254
      %v4329 = vshll.u32 %v4326, 16
      %v4330 = vshrl.u32 %v4326, 16
      %v4331 = vshll.u32 %v4327, 16
      %v4332 = vshrl.u32 %v4327, 16
      %vm4333 = vc.u32 %v4325, %v4329
      %v4334 = vsel %vm4333, 1, 0
      %v4335 = vadd.s32 %v4325, %v4329
      %v4336 = vadd.s32 %v4328, %v4334
      %vm4337 = vc.u32 %v4335, %v4331
      %v4338 = vsel %vm4337, 1, 0
      %v4339 = vadd.s32 %v4335, %v4331
      %v4340 = vadd.s32 %v4336, %v4338
      %v4341 = vadd.s32 %v4340, %v4330
      %v4342 = vadd.s32 %v4341, %v4332
      %v4343 = vshrl.u32 %v4342, 4
      %v4344 = vmul.u32 %v4343, 18
      %v4345 = vsub.s32 %v4321, %v4344
      %v4346 = vsub.s32 0, %v4345
      %v4347 = vsel %vm4319, %v4346, %v4345
      %vm4348 = vcmp.lt.s32.totalorder %v3696, 0
      %v4349 = vsub.s32 0, %v3696
      %v4350 = vsel %vm4348, %v4349, %v3696
      %v4351 = vand.u32 %v4350, 65535
      %v4352 = vshrl.u32 %v4350, 16
      %v4354 = vmul.u32 %v4351, 14564
      %v4355 = vmul.u32 %v4351, 58254
      %v4356 = vmul.u32 %v4352, 14564
      %v4357 = vmul.u32 %v4352, 58254
      %v4358 = vshll.u32 %v4355, 16
      %v4359 = vshrl.u32 %v4355, 16
      %v4360 = vshll.u32 %v4356, 16
      %v4361 = vshrl.u32 %v4356, 16
      %vm4362 = vc.u32 %v4354, %v4358
      %v4363 = vsel %vm4362, 1, 0
      %v4364 = vadd.s32 %v4354, %v4358
      %v4365 = vadd.s32 %v4357, %v4363
      %vm4366 = vc.u32 %v4364, %v4360
      %v4367 = vsel %vm4366, 1, 0
      %v4368 = vadd.s32 %v4364, %v4360
      %v4369 = vadd.s32 %v4365, %v4367
      %v4370 = vadd.s32 %v4369, %v4359
      %v4371 = vadd.s32 %v4370, %v4361
      %v4372 = vshrl.u32 %v4371, 4
      %v4373 = vmul.u32 %v4372, 18
      %v4374 = vsub.s32 %v4350, %v4373
      %v4375 = vsub.s32 0, %v4374
      %v4376 = vsel %vm4348, %v4375, %v4374
      %vm4377 = vcmp.lt.s32.totalorder %v3697, 0
      %v4378 = vsub.s32 0, %v3697
      %v4379 = vsel %vm4377, %v4378, %v3697
      %v4380 = vand.u32 %v4379, 65535
      %v4381 = vshrl.u32 %v4379, 16
      %v4383 = vmul.u32 %v4380, 14564
      %v4384 = vmul.u32 %v4380, 58254
      %v4385 = vmul.u32 %v4381, 14564
      %v4386 = vmul.u32 %v4381, 58254
      %v4387 = vshll.u32 %v4384, 16
      %v4388 = vshrl.u32 %v4384, 16
      %v4389 = vshll.u32 %v4385, 16
      %v4390 = vshrl.u32 %v4385, 16
      %vm4391 = vc.u32 %v4383, %v4387
      %v4392 = vsel %vm4391, 1, 0
      %v4393 = vadd.s32 %v4383, %v4387
      %v4394 = vadd.s32 %v4386, %v4392
      %vm4395 = vc.u32 %v4393, %v4389
      %v4396 = vsel %vm4395, 1, 0
      %v4397 = vadd.s32 %v4393, %v4389
      %v4398 = vadd.s32 %v4394, %v4396
      %v4399 = vadd.s32 %v4398, %v4388
      %v4400 = vadd.s32 %v4399, %v4390
      %v4401 = vshrl.u32 %v4400, 4
      %v4402 = vmul.u32 %v4401, 18
      %v4403 = vsub.s32 %v4379, %v4402
      %v4404 = vsub.s32 0, %v4403
      %v4405 = vsel %vm4377, %v4404, %v4403
      %vm4406 = vcmp.lt.s32.totalorder %v3698, 0
      %v4407 = vsub.s32 0, %v3698
      %v4408 = vsel %vm4406, %v4407, %v3698
      %v4409 = vand.u32 %v4408, 65535
      %v4410 = vshrl.u32 %v4408, 16
      %v4412 = vmul.u32 %v4409, 14564
      %v4413 = vmul.u32 %v4409, 58254
      %v4414 = vmul.u32 %v4410, 14564
      %v4415 = vmul.u32 %v4410, 58254
      %v4416 = vshll.u32 %v4413, 16
      %v4417 = vshrl.u32 %v4413, 16
      %v4418 = vshll.u32 %v4414, 16
      %v4419 = vshrl.u32 %v4414, 16
      %vm4420 = vc.u32 %v4412, %v4416
      %v4421 = vsel %vm4420, 1, 0
      %v4422 = vadd.s32 %v4412, %v4416
      %v4423 = vadd.s32 %v4415, %v4421
      %vm4424 = vc.u32 %v4422, %v4418
      %v4425 = vsel %vm4424, 1, 0
      %v4426 = vadd.s32 %v4422, %v4418
      %v4427 = vadd.s32 %v4423, %v4425
      %v4428 = vadd.s32 %v4427, %v4417
      %v4429 = vadd.s32 %v4428, %v4419
      %v4430 = vshrl.u32 %v4429, 4
      %v4431 = vmul.u32 %v4430, 18
      %v4432 = vsub.s32 %v4408, %v4431
      %v4433 = vsub.s32 0, %v4432
      %v4434 = vsel %vm4406, %v4433, %v4432
      %vm4435 = vcmp.lt.s32.totalorder %v3699, 0
      %v4436 = vsub.s32 0, %v3699
      %v4437 = vsel %vm4435, %v4436, %v3699
      %v4438 = vand.u32 %v4437, 65535
      %v4439 = vshrl.u32 %v4437, 16
      %v4441 = vmul.u32 %v4438, 14564
      %v4442 = vmul.u32 %v4438, 58254
      %v4443 = vmul.u32 %v4439, 14564
      %v4444 = vmul.u32 %v4439, 58254
      %v4445 = vshll.u32 %v4442, 16
      %v4446 = vshrl.u32 %v4442, 16
      %v4447 = vshll.u32 %v4443, 16
      %v4448 = vshrl.u32 %v4443, 16
      %vm4449 = vc.u32 %v4441, %v4445
      %v4450 = vsel %vm4449, 1, 0
      %v4451 = vadd.s32 %v4441, %v4445
      %v4452 = vadd.s32 %v4444, %v4450
      %vm4453 = vc.u32 %v4451, %v4447
      %v4454 = vsel %vm4453, 1, 0
      %v4455 = vadd.s32 %v4451, %v4447
      %v4456 = vadd.s32 %v4452, %v4454
      %v4457 = vadd.s32 %v4456, %v4446
      %v4458 = vadd.s32 %v4457, %v4448
      %v4459 = vshrl.u32 %v4458, 4
      %v4460 = vmul.u32 %v4459, 18
      %v4461 = vsub.s32 %v4437, %v4460
      %v4462 = vsub.s32 0, %v4461
      %v4463 = vsel %vm4435, %v4462, %v4461
      %vm4464 = vcmp.lt.s32.totalorder %v3700, 0
      %v4465 = vsub.s32 0, %v3700
      %v4466 = vsel %vm4464, %v4465, %v3700
      %v4467 = vand.u32 %v4466, 65535
      %v4468 = vshrl.u32 %v4466, 16
      %v4470 = vmul.u32 %v4467, 14564
      %v4471 = vmul.u32 %v4467, 58254
      %v4472 = vmul.u32 %v4468, 14564
      %v4473 = vmul.u32 %v4468, 58254
      %v4474 = vshll.u32 %v4471, 16
      %v4475 = vshrl.u32 %v4471, 16
      %v4476 = vshll.u32 %v4472, 16
      %v4477 = vshrl.u32 %v4472, 16
      %vm4478 = vc.u32 %v4470, %v4474
      %v4479 = vsel %vm4478, 1, 0
      %v4480 = vadd.s32 %v4470, %v4474
      %v4481 = vadd.s32 %v4473, %v4479
      %vm4482 = vc.u32 %v4480, %v4476
      %v4483 = vsel %vm4482, 1, 0
      %v4484 = vadd.s32 %v4480, %v4476
      %v4485 = vadd.s32 %v4481, %v4483
      %v4486 = vadd.s32 %v4485, %v4475
      %v4487 = vadd.s32 %v4486, %v4477
      %v4488 = vshrl.u32 %v4487, 4
      %v4489 = vmul.u32 %v4488, 18
      %v4490 = vsub.s32 %v4466, %v4489
      %v4491 = vsub.s32 0, %v4490
      %v4492 = vsel %vm4464, %v4491, %v4490
      %vm4493 = vcmp.lt.s32.totalorder %v3701, 0
      %v4494 = vsub.s32 0, %v3701
      %v4495 = vsel %vm4493, %v4494, %v3701
      %v4496 = vand.u32 %v4495, 65535
      %v4497 = vshrl.u32 %v4495, 16
      %v4499 = vmul.u32 %v4496, 14564
      %v4500 = vmul.u32 %v4496, 58254
      %v4501 = vmul.u32 %v4497, 14564
      %v4502 = vmul.u32 %v4497, 58254
      %v4503 = vshll.u32 %v4500, 16
      %v4504 = vshrl.u32 %v4500, 16
      %v4505 = vshll.u32 %v4501, 16
      %v4506 = vshrl.u32 %v4501, 16
      %vm4507 = vc.u32 %v4499, %v4503
      %v4508 = vsel %vm4507, 1, 0
      %v4509 = vadd.s32 %v4499, %v4503
      %v4510 = vadd.s32 %v4502, %v4508
      %vm4511 = vc.u32 %v4509, %v4505
      %v4512 = vsel %vm4511, 1, 0
      %v4513 = vadd.s32 %v4509, %v4505
      %v4514 = vadd.s32 %v4510, %v4512
      %v4515 = vadd.s32 %v4514, %v4504
      %v4516 = vadd.s32 %v4515, %v4506
      %v4517 = vshrl.u32 %v4516, 4
      %v4518 = vmul.u32 %v4517, 18
      %v4519 = vsub.s32 %v4495, %v4518
      %v4520 = vsub.s32 0, %v4519
      %v4521 = vsel %vm4493, %v4520, %v4519
      %vm4522 = vcmp.lt.s32.totalorder %v3702, 0
      %v4523 = vsub.s32 0, %v3702
      %v4524 = vsel %vm4522, %v4523, %v3702
      %v4525 = vand.u32 %v4524, 65535
      %v4526 = vshrl.u32 %v4524, 16
      %v4528 = vmul.u32 %v4525, 14564
      %v4529 = vmul.u32 %v4525, 58254
      %v4530 = vmul.u32 %v4526, 14564
      %v4531 = vmul.u32 %v4526, 58254
      %v4532 = vshll.u32 %v4529, 16
      %v4533 = vshrl.u32 %v4529, 16
      %v4534 = vshll.u32 %v4530, 16
      %v4535 = vshrl.u32 %v4530, 16
      %vm4536 = vc.u32 %v4528, %v4532
      %v4537 = vsel %vm4536, 1, 0
      %v4538 = vadd.s32 %v4528, %v4532
      %v4539 = vadd.s32 %v4531, %v4537
      %vm4540 = vc.u32 %v4538, %v4534
      %v4541 = vsel %vm4540, 1, 0
      %v4542 = vadd.s32 %v4538, %v4534
      %v4543 = vadd.s32 %v4539, %v4541
      %v4544 = vadd.s32 %v4543, %v4533
      %v4545 = vadd.s32 %v4544, %v4535
      %v4546 = vshrl.u32 %v4545, 4
      %v4547 = vmul.u32 %v4546, 18
      %v4548 = vsub.s32 %v4524, %v4547
      %v4549 = vsub.s32 0, %v4548
      %v4550 = vsel %vm4522, %v4549, %v4548
      %vm4551 = vcmp.lt.s32.totalorder %v3703, 0
      %v4552 = vsub.s32 0, %v3703
      %v4553 = vsel %vm4551, %v4552, %v3703
      %v4554 = vand.u32 %v4553, 65535
      %v4555 = vshrl.u32 %v4553, 16
      %v4557 = vmul.u32 %v4554, 14564
      %v4558 = vmul.u32 %v4554, 58254
      %v4559 = vmul.u32 %v4555, 14564
      %v4560 = vmul.u32 %v4555, 58254
      %v4561 = vshll.u32 %v4558, 16
      %v4562 = vshrl.u32 %v4558, 16
      %v4563 = vshll.u32 %v4559, 16
      %v4564 = vshrl.u32 %v4559, 16
      %vm4565 = vc.u32 %v4557, %v4561
      %v4566 = vsel %vm4565, 1, 0
      %v4567 = vadd.s32 %v4557, %v4561
      %v4568 = vadd.s32 %v4560, %v4566
      %vm4569 = vc.u32 %v4567, %v4563
      %v4570 = vsel %vm4569, 1, 0
      %v4571 = vadd.s32 %v4567, %v4563
      %v4572 = vadd.s32 %v4568, %v4570
      %v4573 = vadd.s32 %v4572, %v4562
      %v4574 = vadd.s32 %v4573, %v4564
      %v4575 = vshrl.u32 %v4574, 4
      %v4576 = vmul.u32 %v4575, 18
      %v4577 = vsub.s32 %v4553, %v4576
      %v4578 = vsub.s32 0, %v4577
      %v4579 = vsel %vm4551, %v4578, %v4577
      %vm4580 = vcmp.lt.s32.totalorder %v3704, 0
      %v4581 = vsub.s32 0, %v3704
      %v4582 = vsel %vm4580, %v4581, %v3704
      %v4583 = vand.u32 %v4582, 65535
      %v4584 = vshrl.u32 %v4582, 16
      %v4586 = vmul.u32 %v4583, 14564
      %v4587 = vmul.u32 %v4583, 58254
      %v4588 = vmul.u32 %v4584, 14564
      %v4589 = vmul.u32 %v4584, 58254
      %v4590 = vshll.u32 %v4587, 16
      %v4591 = vshrl.u32 %v4587, 16
      %v4592 = vshll.u32 %v4588, 16
      %v4593 = vshrl.u32 %v4588, 16
      %vm4594 = vc.u32 %v4586, %v4590
      %v4595 = vsel %vm4594, 1, 0
      %v4596 = vadd.s32 %v4586, %v4590
      %v4597 = vadd.s32 %v4589, %v4595
      %vm4598 = vc.u32 %v4596, %v4592
      %v4599 = vsel %vm4598, 1, 0
      %v4600 = vadd.s32 %v4596, %v4592
      %v4601 = vadd.s32 %v4597, %v4599
      %v4602 = vadd.s32 %v4601, %v4591
      %v4603 = vadd.s32 %v4602, %v4593
      %v4604 = vshrl.u32 %v4603, 4
      %v4605 = vmul.u32 %v4604, 18
      %v4606 = vsub.s32 %v4582, %v4605
      %v4607 = vsub.s32 0, %v4606
      %v4608 = vsel %vm4580, %v4607, %v4606
      %vm4609 = vcmp.lt.s32.totalorder %v3705, 0
      %v4610 = vsub.s32 0, %v3705
      %v4611 = vsel %vm4609, %v4610, %v3705
      %v4612 = vand.u32 %v4611, 65535
      %v4613 = vshrl.u32 %v4611, 16
      %v4615 = vmul.u32 %v4612, 14564
      %v4616 = vmul.u32 %v4612, 58254
      %v4617 = vmul.u32 %v4613, 14564
      %v4618 = vmul.u32 %v4613, 58254
      %v4619 = vshll.u32 %v4616, 16
      %v4620 = vshrl.u32 %v4616, 16
      %v4621 = vshll.u32 %v4617, 16
      %v4622 = vshrl.u32 %v4617, 16
      %vm4623 = vc.u32 %v4615, %v4619
      %v4624 = vsel %vm4623, 1, 0
      %v4625 = vadd.s32 %v4615, %v4619
      %v4626 = vadd.s32 %v4618, %v4624
      %vm4627 = vc.u32 %v4625, %v4621
      %v4628 = vsel %vm4627, 1, 0
      %v4629 = vadd.s32 %v4625, %v4621
      %v4630 = vadd.s32 %v4626, %v4628
      %v4631 = vadd.s32 %v4630, %v4620
      %v4632 = vadd.s32 %v4631, %v4622
      %v4633 = vshrl.u32 %v4632, 4
      %v4634 = vmul.u32 %v4633, 18
      %v4635 = vsub.s32 %v4611, %v4634
      %v4636 = vsub.s32 0, %v4635
      %v4637 = vsel %vm4609, %v4636, %v4635
      %vm4638 = vcmp.lt.s32.totalorder %v3706, 0
      %v4639 = vsub.s32 0, %v3706
      %v4640 = vsel %vm4638, %v4639, %v3706
      %v4641 = vand.u32 %v4640, 65535
      %v4642 = vshrl.u32 %v4640, 16
      %v4644 = vmul.u32 %v4641, 14564
      %v4645 = vmul.u32 %v4641, 58254
      %v4646 = vmul.u32 %v4642, 14564
      %v4647 = vmul.u32 %v4642, 58254
      %v4648 = vshll.u32 %v4645, 16
      %v4649 = vshrl.u32 %v4645, 16
      %v4650 = vshll.u32 %v4646, 16
      %v4651 = vshrl.u32 %v4646, 16
      %vm4652 = vc.u32 %v4644, %v4648
      %v4653 = vsel %vm4652, 1, 0
      %v4654 = vadd.s32 %v4644, %v4648
      %v4655 = vadd.s32 %v4647, %v4653
      %vm4656 = vc.u32 %v4654, %v4650
      %v4657 = vsel %vm4656, 1, 0
      %v4658 = vadd.s32 %v4654, %v4650
      %v4659 = vadd.s32 %v4655, %v4657
      %v4660 = vadd.s32 %v4659, %v4649
      %v4661 = vadd.s32 %v4660, %v4651
      %v4662 = vshrl.u32 %v4661, 4
      %v4663 = vmul.u32 %v4662, 18
      %v4664 = vsub.s32 %v4640, %v4663
      %v4665 = vsub.s32 0, %v4664
      %v4666 = vsel %vm4638, %v4665, %v4664
      %vm4667 = vcmp.lt.s32.totalorder %v3707, 0
      %v4668 = vsub.s32 0, %v3707
      %v4669 = vsel %vm4667, %v4668, %v3707
      %v4670 = vand.u32 %v4669, 65535
      %v4671 = vshrl.u32 %v4669, 16
      %v4673 = vmul.u32 %v4670, 14564
      %v4674 = vmul.u32 %v4670, 58254
      %v4675 = vmul.u32 %v4671, 14564
      %v4676 = vmul.u32 %v4671, 58254
      %v4677 = vshll.u32 %v4674, 16
      %v4678 = vshrl.u32 %v4674, 16
      %v4679 = vshll.u32 %v4675, 16
      %v4680 = vshrl.u32 %v4675, 16
      %vm4681 = vc.u32 %v4673, %v4677
      %v4682 = vsel %vm4681, 1, 0
      %v4683 = vadd.s32 %v4673, %v4677
      %v4684 = vadd.s32 %v4676, %v4682
      %vm4685 = vc.u32 %v4683, %v4679
      %v4686 = vsel %vm4685, 1, 0
      %v4687 = vadd.s32 %v4683, %v4679
      %v4688 = vadd.s32 %v4684, %v4686
      %v4689 = vadd.s32 %v4688, %v4678
      %v4690 = vadd.s32 %v4689, %v4680
      %v4691 = vshrl.u32 %v4690, 4
      %v4692 = vmul.u32 %v4691, 18
      %v4693 = vsub.s32 %v4669, %v4692
      %v4694 = vsub.s32 0, %v4693
      %v4695 = vsel %vm4667, %v4694, %v4693
      %vm4696 = vcmp.lt.s32.totalorder %v3708, 0
      %v4697 = vsub.s32 0, %v3708
      %v4698 = vsel %vm4696, %v4697, %v3708
      %v4699 = vand.u32 %v4698, 65535
      %v4700 = vshrl.u32 %v4698, 16
      %v4702 = vmul.u32 %v4699, 14564
      %v4703 = vmul.u32 %v4699, 58254
      %v4704 = vmul.u32 %v4700, 14564
      %v4705 = vmul.u32 %v4700, 58254
      %v4706 = vshll.u32 %v4703, 16
      %v4707 = vshrl.u32 %v4703, 16
      %v4708 = vshll.u32 %v4704, 16
      %v4709 = vshrl.u32 %v4704, 16
      %vm4710 = vc.u32 %v4702, %v4706
      %v4711 = vsel %vm4710, 1, 0
      %v4712 = vadd.s32 %v4702, %v4706
      %v4713 = vadd.s32 %v4705, %v4711
      %vm4714 = vc.u32 %v4712, %v4708
      %v4715 = vsel %vm4714, 1, 0
      %v4716 = vadd.s32 %v4712, %v4708
      %v4717 = vadd.s32 %v4713, %v4715
      %v4718 = vadd.s32 %v4717, %v4707
      %v4719 = vadd.s32 %v4718, %v4709
      %v4720 = vshrl.u32 %v4719, 4
      %v4721 = vmul.u32 %v4720, 18
      %v4722 = vsub.s32 %v4698, %v4721
      %v4723 = vsub.s32 0, %v4722
      %v4724 = vsel %vm4696, %v4723, %v4722
      %vm4725 = vcmp.lt.s32.totalorder %v3709, 0
      %v4726 = vsub.s32 0, %v3709
      %v4727 = vsel %vm4725, %v4726, %v3709
      %v4728 = vand.u32 %v4727, 65535
      %v4729 = vshrl.u32 %v4727, 16
      %v4731 = vmul.u32 %v4728, 14564
      %v4732 = vmul.u32 %v4728, 58254
      %v4733 = vmul.u32 %v4729, 14564
      %v4734 = vmul.u32 %v4729, 58254
      %v4735 = vshll.u32 %v4732, 16
      %v4736 = vshrl.u32 %v4732, 16
      %v4737 = vshll.u32 %v4733, 16
      %v4738 = vshrl.u32 %v4733, 16
      %vm4739 = vc.u32 %v4731, %v4735
      %v4740 = vsel %vm4739, 1, 0
      %v4741 = vadd.s32 %v4731, %v4735
      %v4742 = vadd.s32 %v4734, %v4740
      %vm4743 = vc.u32 %v4741, %v4737
      %v4744 = vsel %vm4743, 1, 0
      %v4745 = vadd.s32 %v4741, %v4737
      %v4746 = vadd.s32 %v4742, %v4744
      %v4747 = vadd.s32 %v4746, %v4736
      %v4748 = vadd.s32 %v4747, %v4738
      %v4749 = vshrl.u32 %v4748, 4
      %v4750 = vmul.u32 %v4749, 18
      %v4751 = vsub.s32 %v4727, %v4750
      %v4752 = vsub.s32 0, %v4751
      %v4753 = vsel %vm4725, %v4752, %v4751
      %vm4754 = vcmp.ne.s32.totalorder %v3738, 0
      %vm4755 = vcmp.ne.s32.totalorder %v3767, 0
      %vm4756 = vcmp.ne.s32.totalorder %v3796, 0
      %vm4757 = vcmp.ne.s32.totalorder %v3825, 0
      %vm4758 = vcmp.ne.s32.totalorder %v3854, 0
      %vm4759 = vcmp.ne.s32.totalorder %v3883, 0
      %vm4760 = vcmp.ne.s32.totalorder %v3912, 0
      %vm4761 = vcmp.ne.s32.totalorder %v3941, 0
      %vm4762 = vcmp.ne.s32.totalorder %v3970, 0
      %vm4763 = vcmp.ne.s32.totalorder %v3999, 0
      %vm4764 = vcmp.ne.s32.totalorder %v4028, 0
      %vm4765 = vcmp.ne.s32.totalorder %v4057, 0
      %vm4766 = vcmp.ne.s32.totalorder %v4086, 0
      %vm4767 = vcmp.ne.s32.totalorder %v4115, 0
      %vm4768 = vcmp.ne.s32.totalorder %v4144, 0
      %vm4769 = vcmp.ne.s32.totalorder %v4173, 0
      %vm4770 = vcmp.ne.s32.totalorder %v4202, 0
      %vm4771 = vcmp.ne.s32.totalorder %v4231, 0
      %vm4772 = vcmp.ne.s32.totalorder %v4260, 0
      %vm4773 = vcmp.ne.s32.totalorder %v4289, 0
      %vm4774 = vcmp.ne.s32.totalorder %v4318, 0
      %vm4775 = vcmp.ne.s32.totalorder %v4347, 0
      %vm4776 = vcmp.ne.s32.totalorder %v4376, 0
      %vm4777 = vcmp.ne.s32.totalorder %v4405, 0
      %vm4778 = vcmp.ne.s32.totalorder %v4434, 0
      %vm4779 = vcmp.ne.s32.totalorder %v4463, 0
      %vm4780 = vcmp.ne.s32.totalorder %v4492, 0
      %vm4781 = vcmp.ne.s32.totalorder %v4521, 0
      %vm4782 = vcmp.ne.s32.totalorder %v4550, 0
      %vm4783 = vcmp.ne.s32.totalorder %v4579, 0
      %vm4784 = vcmp.ne.s32.totalorder %v4608, 0
      %vm4785 = vcmp.ne.s32.totalorder %v4637, 0
      %vm4786 = vcmp.ne.s32.totalorder %v4666, 0
      %vm4787 = vcmp.ne.s32.totalorder %v4695, 0
      %vm4788 = vcmp.ne.s32.totalorder %v4724, 0
      %vm4789 = vcmp.ne.s32.totalorder %v4753, 0
      %vm4790 = vcmp.lt.s32.totalorder %v3738, 0
      %vm4791 = vcmp.lt.s32.totalorder %v3767, 0
      %vm4792 = vcmp.lt.s32.totalorder %v3796, 0
      %vm4793 = vcmp.lt.s32.totalorder %v3825, 0
      %vm4794 = vcmp.lt.s32.totalorder %v3854, 0
      %vm4795 = vcmp.lt.s32.totalorder %v3883, 0
      %vm4796 = vcmp.lt.s32.totalorder %v3912, 0
      %vm4797 = vcmp.lt.s32.totalorder %v3941, 0
      %vm4798 = vcmp.lt.s32.totalorder %v3970, 0
      %vm4799 = vcmp.lt.s32.totalorder %v3999, 0
      %vm4800 = vcmp.lt.s32.totalorder %v4028, 0
      %vm4801 = vcmp.lt.s32.totalorder %v4057, 0
      %vm4802 = vcmp.lt.s32.totalorder %v4086, 0
      %vm4803 = vcmp.lt.s32.totalorder %v4115, 0
      %vm4804 = vcmp.lt.s32.totalorder %v4144, 0
      %vm4805 = vcmp.lt.s32.totalorder %v4173, 0
      %vm4806 = vcmp.lt.s32.totalorder %v4202, 0
      %vm4807 = vcmp.lt.s32.totalorder %v4231, 0
      %vm4808 = vcmp.lt.s32.totalorder %v4260, 0
      %vm4809 = vcmp.lt.s32.totalorder %v4289, 0
      %vm4810 = vcmp.lt.s32.totalorder %v4318, 0
      %vm4811 = vcmp.lt.s32.totalorder %v4347, 0
      %vm4812 = vcmp.lt.s32.totalorder %v4376, 0
      %vm4813 = vcmp.lt.s32.totalorder %v4405, 0
      %vm4814 = vcmp.lt.s32.totalorder %v4434, 0
      %vm4815 = vcmp.lt.s32.totalorder %v4463, 0
      %vm4816 = vcmp.lt.s32.totalorder %v4492, 0
      %vm4817 = vcmp.lt.s32.totalorder %v4521, 0
      %vm4818 = vcmp.lt.s32.totalorder %v4550, 0
      %vm4819 = vcmp.lt.s32.totalorder %v4579, 0
      %vm4820 = vcmp.lt.s32.totalorder %v4608, 0
      %vm4821 = vcmp.lt.s32.totalorder %v4637, 0
      %vm4822 = vcmp.lt.s32.totalorder %v4666, 0
      %vm4823 = vcmp.lt.s32.totalorder %v4695, 0
      %vm4824 = vcmp.lt.s32.totalorder %v4724, 0
      %vm4825 = vcmp.lt.s32.totalorder %v4753, 0
      %vm4826 = vmand %vm4790, %vm4754
      %vm4827 = vmand %vm4791, %vm4755
      %vm4828 = vmand %vm4792, %vm4756
      %vm4829 = vmand %vm4793, %vm4757
      %vm4830 = vmand %vm4794, %vm4758
      %vm4831 = vmand %vm4795, %vm4759
      %vm4832 = vmand %vm4796, %vm4760
      %vm4833 = vmand %vm4797, %vm4761
      %vm4834 = vmand %vm4798, %vm4762
      %vm4835 = vmand %vm4799, %vm4763
      %vm4836 = vmand %vm4800, %vm4764
      %vm4837 = vmand %vm4801, %vm4765
      %vm4838 = vmand %vm4802, %vm4766
      %vm4839 = vmand %vm4803, %vm4767
      %vm4840 = vmand %vm4804, %vm4768
      %vm4841 = vmand %vm4805, %vm4769
      %vm4842 = vmand %vm4806, %vm4770
      %vm4843 = vmand %vm4807, %vm4771
      %vm4844 = vmand %vm4808, %vm4772
      %vm4845 = vmand %vm4809, %vm4773
      %vm4846 = vmand %vm4810, %vm4774
      %vm4847 = vmand %vm4811, %vm4775
      %vm4848 = vmand %vm4812, %vm4776
      %vm4849 = vmand %vm4813, %vm4777
      %vm4850 = vmand %vm4814, %vm4778
      %vm4851 = vmand %vm4815, %vm4779
      %vm4852 = vmand %vm4816, %vm4780
      %vm4853 = vmand %vm4817, %vm4781
      %vm4854 = vmand %vm4818, %vm4782
      %vm4855 = vmand %vm4819, %vm4783
      %vm4856 = vmand %vm4820, %vm4784
      %vm4857 = vmand %vm4821, %vm4785
      %vm4858 = vmand %vm4822, %vm4786
      %vm4859 = vmand %vm4823, %vm4787
      %vm4860 = vmand %vm4824, %vm4788
      %vm4861 = vmand %vm4825, %vm4789
      %v4862 = vadd.s32 %v3738, 18
      %v4863 = vadd.s32 %v3767, 18
      %v4864 = vadd.s32 %v3796, 18
      %v4865 = vadd.s32 %v3825, 18
      %v4866 = vadd.s32 %v3854, 18
      %v4867 = vadd.s32 %v3883, 18
      %v4868 = vadd.s32 %v3912, 18
      %v4869 = vadd.s32 %v3941, 18
      %v4870 = vadd.s32 %v3970, 18
      %v4871 = vadd.s32 %v3999, 18
      %v4872 = vadd.s32 %v4028, 18
      %v4873 = vadd.s32 %v4057, 18
      %v4874 = vadd.s32 %v4086, 18
      %v4875 = vadd.s32 %v4115, 18
      %v4876 = vadd.s32 %v4144, 18
      %v4877 = vadd.s32 %v4173, 18
      %v4878 = vadd.s32 %v4202, 18
      %v4879 = vadd.s32 %v4231, 18
      %v4880 = vadd.s32 %v4260, 18
      %v4881 = vadd.s32 %v4289, 18
      %v4882 = vadd.s32 %v4318, 18
      %v4883 = vadd.s32 %v4347, 18
      %v4884 = vadd.s32 %v4376, 18
      %v4885 = vadd.s32 %v4405, 18
      %v4886 = vadd.s32 %v4434, 18
      %v4887 = vadd.s32 %v4463, 18
      %v4888 = vadd.s32 %v4492, 18
      %v4889 = vadd.s32 %v4521, 18
      %v4890 = vadd.s32 %v4550, 18
      %v4891 = vadd.s32 %v4579, 18
      %v4892 = vadd.s32 %v4608, 18
      %v4893 = vadd.s32 %v4637, 18
      %v4894 = vadd.s32 %v4666, 18
      %v4895 = vadd.s32 %v4695, 18
      %v4896 = vadd.s32 %v4724, 18
      %v4897 = vadd.s32 %v4753, 18
      %v4898 = vsel %vm4826, %v4862, %v3738
      %v4899 = vsel %vm4827, %v4863, %v3767
      %v4900 = vsel %vm4828, %v4864, %v3796
      %v4901 = vsel %vm4829, %v4865, %v3825
      %v4902 = vsel %vm4830, %v4866, %v3854
      %v4903 = vsel %vm4831, %v4867, %v3883
      %v4904 = vsel %vm4832, %v4868, %v3912
      %v4905 = vsel %vm4833, %v4869, %v3941
      %v4906 = vsel %vm4834, %v4870, %v3970
      %v4907 = vsel %vm4835, %v4871, %v3999
      %v4908 = vsel %vm4836, %v4872, %v4028
      %v4909 = vsel %vm4837, %v4873, %v4057
      %v4910 = vsel %vm4838, %v4874, %v4086
      %v4911 = vsel %vm4839, %v4875, %v4115
      %v4912 = vsel %vm4840, %v4876, %v4144
      %v4913 = vsel %vm4841, %v4877, %v4173
      %v4914 = vsel %vm4842, %v4878, %v4202
      %v4915 = vsel %vm4843, %v4879, %v4231
      %v4916 = vsel %vm4844, %v4880, %v4260
      %v4917 = vsel %vm4845, %v4881, %v4289
      %v4918 = vsel %vm4846, %v4882, %v4318
      %v4919 = vsel %vm4847, %v4883, %v4347
      %v4920 = vsel %vm4848, %v4884, %v4376
      %v4921 = vsel %vm4849, %v4885, %v4405
      %v4922 = vsel %vm4850, %v4886, %v4434
      %v4923 = vsel %vm4851, %v4887, %v4463
      %v4924 = vsel %vm4852, %v4888, %v4492
      %v4925 = vsel %vm4853, %v4889, %v4521
      %v4926 = vsel %vm4854, %v4890, %v4550
      %v4927 = vsel %vm4855, %v4891, %v4579
      %v4928 = vsel %vm4856, %v4892, %v4608
      %v4929 = vsel %vm4857, %v4893, %v4637
      %v4930 = vsel %vm4858, %v4894, %v4666
      %v4931 = vsel %vm4859, %v4895, %v4695
      %v4932 = vsel %vm4860, %v4896, %v4724
      %v4933 = vsel %vm4861, %v4897, %v4753
      %vm4934 = vcmp.lt.s32.totalorder %v4898, 16
      %vm4935 = vcmp.lt.s32.totalorder %v4899, 16
      %vm4936 = vcmp.lt.s32.totalorder %v4900, 16
      %vm4937 = vcmp.lt.s32.totalorder %v4901, 16
      %vm4938 = vcmp.lt.s32.totalorder %v4902, 16
      %vm4939 = vcmp.lt.s32.totalorder %v4903, 16
      %vm4940 = vcmp.lt.s32.totalorder %v4904, 16
      %vm4941 = vcmp.lt.s32.totalorder %v4905, 16
      %vm4942 = vcmp.lt.s32.totalorder %v4906, 16
      %vm4943 = vcmp.lt.s32.totalorder %v4907, 16
      %vm4944 = vcmp.lt.s32.totalorder %v4908, 16
      %vm4945 = vcmp.lt.s32.totalorder %v4909, 16
      %vm4946 = vcmp.lt.s32.totalorder %v4910, 16
      %vm4947 = vcmp.lt.s32.totalorder %v4911, 16
      %vm4948 = vcmp.lt.s32.totalorder %v4912, 16
      %vm4949 = vcmp.lt.s32.totalorder %v4913, 16
      %vm4950 = vcmp.lt.s32.totalorder %v4914, 16
      %vm4951 = vcmp.lt.s32.totalorder %v4915, 16
      %vm4952 = vcmp.lt.s32.totalorder %v4916, 16
      %vm4953 = vcmp.lt.s32.totalorder %v4917, 16
      %vm4954 = vcmp.lt.s32.totalorder %v4918, 16
      %vm4955 = vcmp.lt.s32.totalorder %v4919, 16
      %vm4956 = vcmp.lt.s32.totalorder %v4920, 16
      %vm4957 = vcmp.lt.s32.totalorder %v4921, 16
      %vm4958 = vcmp.lt.s32.totalorder %v4922, 16
      %vm4959 = vcmp.lt.s32.totalorder %v4923, 16
      %vm4960 = vcmp.lt.s32.totalorder %v4924, 16
      %vm4961 = vcmp.lt.s32.totalorder %v4925, 16
      %vm4962 = vcmp.lt.s32.totalorder %v4926, 16
      %vm4963 = vcmp.lt.s32.totalorder %v4927, 16
      %vm4964 = vcmp.lt.s32.totalorder %v4928, 16
      %vm4965 = vcmp.lt.s32.totalorder %v4929, 16
      %vm4966 = vcmp.lt.s32.totalorder %v4930, 16
      %vm4967 = vcmp.lt.s32.totalorder %v4931, 16
      %vm4968 = vcmp.lt.s32.totalorder %v4932, 16
      %vm4969 = vcmp.lt.s32.totalorder %v4933, 16
      %v4970 = vld [vmem:[#allocation3] sm:$0xff]
      %v4971 = vld [vmem:[#allocation3 + $0x8] sm:$0xff]
      %v4972 = vld [vmem:[#allocation3 + $0x10] sm:$0xff]
      %v4973 = vld [vmem:[#allocation3 + $0x18] sm:$0xff]
      %v4974 = vld [vmem:[#allocation3 + $0x20] sm:$0xff]
      %v4975 = vld [vmem:[#allocation3 + $0x28] sm:$0xff]
      %v4976 = vld [vmem:[#allocation3 + $0x30] sm:$0xff]
      %v4977 = vld [vmem:[#allocation3 + $0x38] sm:$0xff]
      %v4978 = vld [vmem:[#allocation3 + $0x40] sm:$0xff]
      %v4979 = vld [vmem:[#allocation3 + $0x48] sm:$0xff]
      %v4980 = vld [vmem:[#allocation3 + $0x50] sm:$0xff]
      %v4981 = vld [vmem:[#allocation3 + $0x58] sm:$0xff]
      %v4982 = vld [vmem:[#allocation3 + $0x60] sm:$0xff]
      %v4983 = vld [vmem:[#allocation3 + $0x68] sm:$0xff]
      %v4984 = vld [vmem:[#allocation3 + $0x70] sm:$0xff]
      %v4985 = vld [vmem:[#allocation3 + $0x78] sm:$0xff]
      %v4986 = vld [vmem:[#allocation3 + $0x80] sm:$0xff]
      %v4987 = vld [vmem:[#allocation3 + $0x88] sm:$0xff]
      %v4988 = vld [vmem:[#allocation3 + $0x90] sm:$0xff]
      %v4989 = vld [vmem:[#allocation3 + $0x98] sm:$0xff]
      %v4990 = vld [vmem:[#allocation3 + $0xa0] sm:$0xff]
      %v4991 = vld [vmem:[#allocation3 + $0xa8] sm:$0xff]
      %v4992 = vld [vmem:[#allocation3 + $0xb0] sm:$0xff]
      %v4993 = vld [vmem:[#allocation3 + $0xb8] sm:$0xff]
      %v4994 = vld [vmem:[#allocation3 + $0xc0] sm:$0xff]
      %v4995 = vld [vmem:[#allocation3 + $0xc8] sm:$0xff]
      %v4996 = vld [vmem:[#allocation3 + $0xd0] sm:$0xff]
      %v4997 = vld [vmem:[#allocation3 + $0xd8] sm:$0xff]
      %v4998 = vld [vmem:[#allocation3 + $0xe0] sm:$0xff]
      %v4999 = vld [vmem:[#allocation3 + $0xe8] sm:$0xff]
      %v5000 = vld [vmem:[#allocation3 + $0xf0] sm:$0xff]
      %v5001 = vld [vmem:[#allocation3 + $0xf8] sm:$0xff]
      %v5002 = vld [vmem:[#allocation3 + $0x100] sm:$0xff]
      %v5003 = vld [vmem:[#allocation3 + $0x108] sm:$0xff]
      %v5004 = vld [vmem:[#allocation3 + $0x110] sm:$0xff]
      %v5005 = vld [vmem:[#allocation3 + $0x118] sm:$0xff]
      %v5006 = vsel %vm4934, 1, 0
      %v5007 = vsel %vm4935, 1, 0
      %v5008 = vsel %vm4936, 1, 0
      %v5009 = vsel %vm4937, 1, 0
      %v5010 = vsel %vm4938, 1, 0
      %v5011 = vsel %vm4939, 1, 0
      %v5012 = vsel %vm4940, 1, 0
      %v5013 = vsel %vm4941, 1, 0
      %v5014 = vsel %vm4942, 1, 0
      %v5015 = vsel %vm4943, 1, 0
      %v5016 = vsel %vm4944, 1, 0
      %v5017 = vsel %vm4945, 1, 0
      %v5018 = vsel %vm4946, 1, 0
      %v5019 = vsel %vm4947, 1, 0
      %v5020 = vsel %vm4948, 1, 0
      %v5021 = vsel %vm4949, 1, 0
      %v5022 = vsel %vm4950, 1, 0
      %v5023 = vsel %vm4951, 1, 0
      %v5024 = vsel %vm4952, 1, 0
      %v5025 = vsel %vm4953, 1, 0
      %v5026 = vsel %vm4954, 1, 0
      %v5027 = vsel %vm4955, 1, 0
      %v5028 = vsel %vm4956, 1, 0
      %v5029 = vsel %vm4957, 1, 0
      %v5030 = vsel %vm4958, 1, 0
      %v5031 = vsel %vm4959, 1, 0
      %v5032 = vsel %vm4960, 1, 0
      %v5033 = vsel %vm4961, 1, 0
      %v5034 = vsel %vm4962, 1, 0
      %v5035 = vsel %vm4963, 1, 0
      %v5036 = vsel %vm4964, 1, 0
      %v5037 = vsel %vm4965, 1, 0
      %v5038 = vsel %vm4966, 1, 0
      %v5039 = vsel %vm4967, 1, 0
      %v5040 = vsel %vm4968, 1, 0
      %v5041 = vsel %vm4969, 1, 0
      %vm5042 = vcmp.eq.s32.totalorder %v5006, 1
      %vm5043 = vcmp.eq.s32.totalorder %v5007, 1
      %vm5044 = vcmp.eq.s32.totalorder %v5008, 1
      %vm5045 = vcmp.eq.s32.totalorder %v5009, 1
      %vm5046 = vcmp.eq.s32.totalorder %v5010, 1
      %vm5047 = vcmp.eq.s32.totalorder %v5011, 1
      %vm5048 = vcmp.eq.s32.totalorder %v5012, 1
      %vm5049 = vcmp.eq.s32.totalorder %v5013, 1
      %vm5050 = vcmp.eq.s32.totalorder %v5014, 1
      %vm5051 = vcmp.eq.s32.totalorder %v5015, 1
      %vm5052 = vcmp.eq.s32.totalorder %v5016, 1
      %vm5053 = vcmp.eq.s32.totalorder %v5017, 1
      %vm5054 = vcmp.eq.s32.totalorder %v5018, 1
      %vm5055 = vcmp.eq.s32.totalorder %v5019, 1
      %vm5056 = vcmp.eq.s32.totalorder %v5020, 1
      %vm5057 = vcmp.eq.s32.totalorder %v5021, 1
      %vm5058 = vcmp.eq.s32.totalorder %v5022, 1
      %vm5059 = vcmp.eq.s32.totalorder %v5023, 1
      %vm5060 = vcmp.eq.s32.totalorder %v5024, 1
      %vm5061 = vcmp.eq.s32.totalorder %v5025, 1
      %vm5062 = vcmp.eq.s32.totalorder %v5026, 1
      %vm5063 = vcmp.eq.s32.totalorder %v5027, 1
      %vm5064 = vcmp.eq.s32.totalorder %v5028, 1
      %vm5065 = vcmp.eq.s32.totalorder %v5029, 1
      %vm5066 = vcmp.eq.s32.totalorder %v5030, 1
      %vm5067 = vcmp.eq.s32.totalorder %v5031, 1
      %vm5068 = vcmp.eq.s32.totalorder %v5032, 1
      %vm5069 = vcmp.eq.s32.totalorder %v5033, 1
      %vm5070 = vcmp.eq.s32.totalorder %v5034, 1
      %vm5071 = vcmp.eq.s32.totalorder %v5035, 1
      %vm5072 = vcmp.eq.s32.totalorder %v5036, 1
      %vm5073 = vcmp.eq.s32.totalorder %v5037, 1
      %vm5074 = vcmp.eq.s32.totalorder %v5038, 1
      %vm5075 = vcmp.eq.s32.totalorder %v5039, 1
      %vm5076 = vcmp.eq.s32.totalorder %v5040, 1
      %vm5077 = vcmp.eq.s32.totalorder %v5041, 1
      %v5078 = vsel %vm5042, %v4970, 0.0
      %v5079 = vsel %vm5043, %v4971, 0.0
      %v5080 = vsel %vm5044, %v4972, 0.0
      %v5081 = vsel %vm5045, %v4973, 0.0
      %v5082 = vsel %vm5046, %v4974, 0.0
      %v5083 = vsel %vm5047, %v4975, 0.0
      %v5084 = vsel %vm5048, %v4976, 0.0
      %v5085 = vsel %vm5049, %v4977, 0.0
      %v5086 = vsel %vm5050, %v4978, 0.0
      %v5087 = vsel %vm5051, %v4979, 0.0
      %v5088 = vsel %vm5052, %v4980, 0.0
      %v5089 = vsel %vm5053, %v4981, 0.0
      %v5090 = vsel %vm5054, %v4982, 0.0
      %v5091 = vsel %vm5055, %v4983, 0.0
      %v5092 = vsel %vm5056, %v4984, 0.0
      %v5093 = vsel %vm5057, %v4985, 0.0
      %v5094 = vsel %vm5058, %v4986, 0.0
      %v5095 = vsel %vm5059, %v4987, 0.0
      %v5096 = vsel %vm5060, %v4988, 0.0
      %v5097 = vsel %vm5061, %v4989, 0.0
      %v5098 = vsel %vm5062, %v4990, 0.0
      %v5099 = vsel %vm5063, %v4991, 0.0
      %v5100 = vsel %vm5064, %v4992, 0.0
      %v5101 = vsel %vm5065, %v4993, 0.0
      %v5102 = vsel %vm5066, %v4994, 0.0
      %v5103 = vsel %vm5067, %v4995, 0.0
      %v5104 = vsel %vm5068, %v4996, 0.0
      %v5105 = vsel %vm5069, %v4997, 0.0
      %v5106 = vsel %vm5070, %v4998, 0.0
      %v5107 = vsel %vm5071, %v4999, 0.0
      %v5108 = vsel %vm5072, %v5000, 0.0
      %v5109 = vsel %vm5073, %v5001, 0.0
      %v5110 = vsel %vm5074, %v5002, 0.0
      %v5111 = vsel %vm5075, %v5003, 0.0
      %v5112 = vsel %vm5076, %v5004, 0.0
      %v5113 = vsel %vm5077, %v5005, 0.0
      %5114 = vst.msk [vmem:[#allocation4] sm:$0xff] %vm357, 0.0
      %5115 = vst.msk [vmem:[#allocation4 + $0x8] sm:$0xff] %vm357, 0.0
      %5116 = vst.msk [vmem:[#allocation4 + $0x10] sm:$0xff] %vm357, 0.0
      %5117 = vst.msk [vmem:[#allocation4 + $0x18] sm:$0xff] %vm357, 0.0
      %5118 = vst.msk [vmem:[#allocation4 + $0x20] sm:$0xff] %vm357, 0.0
      %5119 = vst.msk [vmem:[#allocation4 + $0x28] sm:$0xff] %vm357, 0.0
      %5120 = vst.msk [vmem:[#allocation4 + $0x30] sm:$0xff] %vm357, 0.0
      %5121 = vst.msk [vmem:[#allocation4 + $0x38] sm:$0xff] %vm357, 0.0
      %5122 = vst.msk [vmem:[#allocation4 + $0x40] sm:$0xff] %vm357, 0.0
      %5123 = vst.msk [vmem:[#allocation4 + $0x48] sm:$0xff] %vm357, 0.0
      %5124 = vst.msk [vmem:[#allocation4 + $0x50] sm:$0xff] %vm357, 0.0
      %5125 = vst.msk [vmem:[#allocation4 + $0x58] sm:$0xff] %vm357, 0.0
      %5126 = vst.msk [vmem:[#allocation4 + $0x60] sm:$0xff] %vm357, 0.0
      %5127 = vst.msk [vmem:[#allocation4 + $0x68] sm:$0xff] %vm357, 0.0
      %5128 = vst.msk [vmem:[#allocation4 + $0x70] sm:$0xff] %vm357, 0.0
      %5129 = vst.msk [vmem:[#allocation4 + $0x78] sm:$0xff] %vm357, 0.0
      %5130 = vst.msk [vmem:[#allocation4 + $0x80] sm:$0xff] %vm357, 0.0
      %5131 = vst.msk [vmem:[#allocation4 + $0x88] sm:$0xff] %vm357, 0.0
      %5132 = vst.msk [vmem:[#allocation4 + $0x90] sm:$0xff] %vm357, 0.0
      %5133 = vst.msk [vmem:[#allocation4 + $0x98] sm:$0xff] %vm357, 0.0
      %5134 = vst.msk [vmem:[#allocation4 + $0xa0] sm:$0xff] %vm357, 0.0
      %5135 = vst.msk [vmem:[#allocation4 + $0xa8] sm:$0xff] %vm357, 0.0
      %5136 = vst.msk [vmem:[#allocation4 + $0xb0] sm:$0xff] %vm357, 0.0
      %5137 = vst.msk [vmem:[#allocation4 + $0xb8] sm:$0xff] %vm357, 0.0
      %5138 = vst.msk [vmem:[#allocation4 + $0xc0] sm:$0xff] %vm357, 0.0
      %5139 = vst.msk [vmem:[#allocation4 + $0xc8] sm:$0xff] %vm357, 0.0
      %5140 = vst.msk [vmem:[#allocation4 + $0xd0] sm:$0xff] %vm357, 0.0
      %5141 = vst.msk [vmem:[#allocation4 + $0xd8] sm:$0xff] %vm357, 0.0
      %5142 = vst.msk [vmem:[#allocation4 + $0xe0] sm:$0xff] %vm357, 0.0
      %5143 = vst.msk [vmem:[#allocation4 + $0xe8] sm:$0xff] %vm357, 0.0
      %5144 = vst.msk [vmem:[#allocation4 + $0xf0] sm:$0xff] %vm357, 0.0
      %5145 = vst.msk [vmem:[#allocation4 + $0xf8] sm:$0xff] %vm357, 0.0
      %5146 = vst.msk [vmem:[#allocation4 + $0x100] sm:$0xff] %vm357, 0.0
      %5147 = vst.msk [vmem:[#allocation4 + $0x108] sm:$0xff] %vm357, 0.0
      %5148 = vst.msk [vmem:[#allocation4 + $0x110] sm:$0xff] %vm357, 0.0
      %5149 = vst.msk [vmem:[#allocation4 + $0x118] sm:$0xff] %vm357, 0.0
      %5150 = vst.msk [vmem:[#allocation4 + $0x120] sm:$0xff] %vm357, 0.0
      %5151 = vst.msk [vmem:[#allocation4 + $0x128] sm:$0xff] %vm357, 0.0
      %5152 = vst.msk [vmem:[#allocation4 + $0x130] sm:$0xff] %vm357, 0.0
      %5153 = vst.msk [vmem:[#allocation4 + $0x138] sm:$0xff] %vm357, 0.0
      %5154 = vst.msk [vmem:[#allocation4 + $0x140] sm:$0xff] %vm357, 0.0
      %5155 = vst.msk [vmem:[#allocation4 + $0x148] sm:$0xff] %vm357, 0.0
      %vm5156 = vcmask 259072
      %5157 = vst.msk [vmem:[#allocation4 + $0x150] sm:$0x3f] %vm5156, 0.0
      %5158 = vst.msk [vmem:[#allocation4 + $0x13] sm:$0xff] %vm357, %v5078
      %5159 = vst.msk [vmem:[#allocation4 + $0x1b] sm:$0xff] %vm357, %v5079
      %5160 = vst.msk [vmem:[#allocation4 + $0x23] sm:$0xff] %vm357, %v5080
      %5161 = vst.msk [vmem:[#allocation4 + $0x2b] sm:$0xff] %vm357, %v5081
      %5162 = vst.msk [vmem:[#allocation4 + $0x33] sm:$0xff] %vm357, %v5082
      %5163 = vst.msk [vmem:[#allocation4 + $0x3b] sm:$0xff] %vm357, %v5083
      %5164 = vst.msk [vmem:[#allocation4 + $0x43] sm:$0xff] %vm357, %v5084
      %5165 = vst.msk [vmem:[#allocation4 + $0x4b] sm:$0xff] %vm357, %v5085
      %5166 = vst.msk [vmem:[#allocation4 + $0x53] sm:$0xff] %vm357, %v5086
      %5167 = vst.msk [vmem:[#allocation4 + $0x5b] sm:$0xff] %vm357, %v5087
      %5168 = vst.msk [vmem:[#allocation4 + $0x63] sm:$0xff] %vm357, %v5088
      %5169 = vst.msk [vmem:[#allocation4 + $0x6b] sm:$0xff] %vm357, %v5089
      %5170 = vst.msk [vmem:[#allocation4 + $0x73] sm:$0xff] %vm357, %v5090
      %5171 = vst.msk [vmem:[#allocation4 + $0x7b] sm:$0xff] %vm357, %v5091
      %5172 = vst.msk [vmem:[#allocation4 + $0x83] sm:$0xff] %vm357, %v5092
      %5173 = vst.msk [vmem:[#allocation4 + $0x8b] sm:$0xff] %vm357, %v5093
      %5174 = vst.msk [vmem:[#allocation4 + $0x93] sm:$0xff] %vm357, %v5094
      %5175 = vst.msk [vmem:[#allocation4 + $0x9b] sm:$0xff] %vm357, %v5095
      %5176 = vst.msk [vmem:[#allocation4 + $0xa3] sm:$0xff] %vm357, %v5096
      %5177 = vst.msk [vmem:[#allocation4 + $0xab] sm:$0xff] %vm357, %v5097
      %5178 = vst.msk [vmem:[#allocation4 + $0xb3] sm:$0xff] %vm357, %v5098
      %5179 = vst.msk [vmem:[#allocation4 + $0xbb] sm:$0xff] %vm357, %v5099
      %5180 = vst.msk [vmem:[#allocation4 + $0xc3] sm:$0xff] %vm357, %v5100
      %5181 = vst.msk [vmem:[#allocation4 + $0xcb] sm:$0xff] %vm357, %v5101
      %5182 = vst.msk [vmem:[#allocation4 + $0xd3] sm:$0xff] %vm357, %v5102
      %5183 = vst.msk [vmem:[#allocation4 + $0xdb] sm:$0xff] %vm357, %v5103
      %5184 = vst.msk [vmem:[#allocation4 + $0xe3] sm:$0xff] %vm357, %v5104
      %5185 = vst.msk [vmem:[#allocation4 + $0xeb] sm:$0xff] %vm357, %v5105
      %5186 = vst.msk [vmem:[#allocation4 + $0xf3] sm:$0xff] %vm357, %v5106
      %5187 = vst.msk [vmem:[#allocation4 + $0xfb] sm:$0xff] %vm357, %v5107
      %5188 = vst.msk [vmem:[#allocation4 + $0x103] sm:$0xff] %vm357, %v5108
      %5189 = vst.msk [vmem:[#allocation4 + $0x10b] sm:$0xff] %vm357, %v5109
      %5190 = vst.msk [vmem:[#allocation4 + $0x113] sm:$0xff] %vm357, %v5110
      %5191 = vst.msk [vmem:[#allocation4 + $0x11b] sm:$0xff] %vm357, %v5111
      %5192 = vst.msk [vmem:[#allocation4 + $0x123] sm:$0xff] %vm357, %v5112
      %5193 = vst.msk [vmem:[#allocation4 + $0x12b] sm:$0xff] %vm357, %v5113
      %5194 = vst.msk [vmem:[%s224] sm:$0xff] %vm357, 0.0
      %5195 = vst.msk [vmem:[%s224 + $0x8] sm:$0xff] %vm357, 0.0
      %5196 = vst.msk [vmem:[%s224 + $0x10] sm:$0xff] %vm357, 0.0
      %5197 = vst.msk [vmem:[%s224 + $0x18] sm:$0xff] %vm357, 0.0
      %5198 = vst.msk [vmem:[%s224 + $0x20] sm:$0xff] %vm357, 0.0
      %5199 = vst.msk [vmem:[%s224 + $0x28] sm:$0xff] %vm357, 0.0
      %5200 = vst.msk [vmem:[%s224 + $0x30] sm:$0xff] %vm357, 0.0
      %5201 = vst.msk [vmem:[%s224 + $0x38] sm:$0xff] %vm357, 0.0
      %5202 = vst.msk [vmem:[%s224 + $0x40] sm:$0xff] %vm357, 0.0
      %5203 = vst.msk [vmem:[%s224 + $0x48] sm:$0xff] %vm357, 0.0
      %5204 = vst.msk [vmem:[%s224 + $0x50] sm:$0xff] %vm357, 0.0
      %5205 = vst.msk [vmem:[%s224 + $0x58] sm:$0xff] %vm357, 0.0
      %5206 = vst.msk [vmem:[%s224 + $0x60] sm:$0xff] %vm357, 0.0
      %5207 = vst.msk [vmem:[%s224 + $0x68] sm:$0xff] %vm357, 0.0
      %5208 = vst.msk [vmem:[%s224 + $0x70] sm:$0xff] %vm357, 0.0
      %5209 = vst.msk [vmem:[%s224 + $0x78] sm:$0xff] %vm357, 0.0
      %5210 = vst.msk [vmem:[%s224 + $0x80] sm:$0xff] %vm357, 0.0
      %5211 = vst.msk [vmem:[%s224 + $0x88] sm:$0xff] %vm357, 0.0
      %5212 = vst.msk [vmem:[%s224 + $0x90] sm:$0xff] %vm357, 0.0
      %5213 = vst.msk [vmem:[%s224 + $0x98] sm:$0xff] %vm357, 0.0
      %5214 = vst.msk [vmem:[%s224 + $0xa0] sm:$0xff] %vm357, 0.0
      %5215 = vst.msk [vmem:[%s224 + $0xa8] sm:$0xff] %vm357, 0.0
      %5216 = vst.msk [vmem:[%s224 + $0xb0] sm:$0xff] %vm357, 0.0
      %5217 = vst.msk [vmem:[%s224 + $0xb8] sm:$0xff] %vm357, 0.0
      %5218 = vst.msk [vmem:[%s224 + $0xc0] sm:$0xff] %vm357, 0.0
      %5219 = vst.msk [vmem:[%s224 + $0xc8] sm:$0xff] %vm357, 0.0
      %5220 = vst.msk [vmem:[%s224 + $0xd0] sm:$0xff] %vm357, 0.0
      %5221 = vst.msk [vmem:[%s224 + $0xd8] sm:$0xff] %vm357, 0.0
      %5222 = vst.msk [vmem:[%s224 + $0xe0] sm:$0xff] %vm357, 0.0
      %5223 = vst.msk [vmem:[%s224 + $0xe8] sm:$0xff] %vm357, 0.0
      %5224 = vst.msk [vmem:[%s224 + $0xf0] sm:$0xff] %vm357, 0.0
      %5225 = vst.msk [vmem:[%s224 + $0xf8] sm:$0xff] %vm357, 0.0
      %5226 = vst.msk [vmem:[%s224 + $0x100] sm:$0xff] %vm357, 0.0
      %5227 = vst.msk [vmem:[%s224 + $0x108] sm:$0xff] %vm357, 0.0
      %5228 = vst.msk [vmem:[%s224 + $0x110] sm:$0xff] %vm357, 0.0
      %5229 = vst.msk [vmem:[%s224 + $0x118] sm:$0xff] %vm357, 0.0
      %v5230 = vld [vmem:[#allocation4] sm:$0xff]
      %v5231 = vld [vmem:[#allocation4 + $0x8] sm:$0xff]
      %v5232 = vld [vmem:[#allocation4 + $0x10] sm:$0xff]
      %v5233 = vld [vmem:[#allocation4 + $0x18] sm:$0xff]
      %v5234 = vld [vmem:[#allocation4 + $0x20] sm:$0xff]
      %v5235 = vld [vmem:[#allocation4 + $0x28] sm:$0xff]
      %v5236 = vld [vmem:[#allocation4 + $0x30] sm:$0xff]
      %v5237 = vld [vmem:[#allocation4 + $0x38] sm:$0xff]
      %v5238 = vld [vmem:[#allocation4 + $0x40] sm:$0xff]
      %v5239 = vld [vmem:[#allocation4 + $0x48] sm:$0xff]
      %v5240 = vld [vmem:[#allocation4 + $0x50] sm:$0xff]
      %v5241 = vld [vmem:[#allocation4 + $0x58] sm:$0xff]
      %v5242 = vld [vmem:[#allocation4 + $0x60] sm:$0xff]
      %v5243 = vld [vmem:[#allocation4 + $0x68] sm:$0xff]
      %v5244 = vld [vmem:[#allocation4 + $0x70] sm:$0xff]
      %v5245 = vld [vmem:[#allocation4 + $0x78] sm:$0xff]
      %v5246 = vld [vmem:[#allocation4 + $0x80] sm:$0xff]
      %v5247 = vld [vmem:[#allocation4 + $0x88] sm:$0xff]
      %v5248 = vld [vmem:[#allocation4 + $0x90] sm:$0xff]
      %v5249 = vld [vmem:[#allocation4 + $0x98] sm:$0xff]
      %v5250 = vld [vmem:[#allocation4 + $0xa0] sm:$0xff]
      %v5251 = vld [vmem:[#allocation4 + $0xa8] sm:$0xff]
      %v5252 = vld [vmem:[#allocation4 + $0xb0] sm:$0xff]
      %v5253 = vld [vmem:[#allocation4 + $0xb8] sm:$0xff]
      %v5254 = vld [vmem:[#allocation4 + $0xc0] sm:$0xff]
      %v5255 = vld [vmem:[#allocation4 + $0xc8] sm:$0xff]
      %v5256 = vld [vmem:[#allocation4 + $0xd0] sm:$0xff]
      %v5257 = vld [vmem:[#allocation4 + $0xd8] sm:$0xff]
      %v5258 = vld [vmem:[#allocation4 + $0xe0] sm:$0xff]
      %v5259 = vld [vmem:[#allocation4 + $0xe8] sm:$0xff]
      %v5260 = vld [vmem:[#allocation4 + $0xf0] sm:$0xff]
      %v5261 = vld [vmem:[#allocation4 + $0xf8] sm:$0xff]
      %v5262 = vld [vmem:[#allocation4 + $0x100] sm:$0xff]
      %v5263 = vld [vmem:[#allocation4 + $0x108] sm:$0xff]
      %v5264 = vld [vmem:[#allocation4 + $0x110] sm:$0xff]
      %v5265 = vld [vmem:[#allocation4 + $0x118] sm:$0xff]
      %v5266 = vpack.c.bf16 %v5231, %v5230
      %v5267 = vpack.c.bf16 %v5233, %v5232
      %v5268 = vpack.c.bf16 %v5235, %v5234
      %v5269 = vpack.c.bf16 %v5237, %v5236
      %v5270 = vpack.c.bf16 %v5239, %v5238
      %v5271 = vpack.c.bf16 %v5241, %v5240
      %v5272 = vpack.c.bf16 %v5243, %v5242
      %v5273 = vpack.c.bf16 %v5245, %v5244
      %v5274 = vpack.c.bf16 %v5247, %v5246
      %v5275 = vpack.c.bf16 %v5249, %v5248
      %v5276 = vpack.c.bf16 %v5251, %v5250
      %v5277 = vpack.c.bf16 %v5253, %v5252
      %v5278 = vpack.c.bf16 %v5255, %v5254
      %v5279 = vpack.c.bf16 %v5257, %v5256
      %v5280 = vpack.c.bf16 %v5259, %v5258
      %v5281 = vpack.c.bf16 %v5261, %v5260
      %v5282 = vpack.c.bf16 %v5263, %v5262
      %v5283 = vpack.c.bf16 %v5265, %v5264
      %v5284 = vld [vmem:[%s224] sm:$0xff]
      %v5285 = vld [vmem:[%s224 + $0x8] sm:$0xff]
      %v5286 = vld [vmem:[%s224 + $0x10] sm:$0xff]
      %v5287 = vld [vmem:[%s224 + $0x18] sm:$0xff]
      %v5288 = vld [vmem:[%s224 + $0x20] sm:$0xff]
      %v5289 = vld [vmem:[%s224 + $0x28] sm:$0xff]
      %v5290 = vld [vmem:[%s224 + $0x30] sm:$0xff]
      %v5291 = vld [vmem:[%s224 + $0x38] sm:$0xff]
      %v5292 = vld [vmem:[%s224 + $0x40] sm:$0xff]
      %v5293 = vld [vmem:[%s224 + $0x48] sm:$0xff]
      %v5294 = vld [vmem:[%s224 + $0x50] sm:$0xff]
      %v5295 = vld [vmem:[%s224 + $0x58] sm:$0xff]
      %v5296 = vld [vmem:[%s224 + $0x60] sm:$0xff]
      %v5297 = vld [vmem:[%s224 + $0x68] sm:$0xff]
      %v5298 = vld [vmem:[%s224 + $0x70] sm:$0xff]
      %v5299 = vld [vmem:[%s224 + $0x78] sm:$0xff]
      %v5300 = vld [vmem:[%s224 + $0x80] sm:$0xff]
      %v5301 = vld [vmem:[%s224 + $0x88] sm:$0xff]
      %v5302 = vld [vmem:[%s224 + $0x90] sm:$0xff]
      %v5303 = vld [vmem:[%s224 + $0x98] sm:$0xff]
      %v5304 = vld [vmem:[%s224 + $0xa0] sm:$0xff]
      %v5305 = vld [vmem:[%s224 + $0xa8] sm:$0xff]
      %v5306 = vld [vmem:[%s224 + $0xb0] sm:$0xff]
      %v5307 = vld [vmem:[%s224 + $0xb8] sm:$0xff]
      %v5308 = vld [vmem:[%s224 + $0xc0] sm:$0xff]
      %v5309 = vld [vmem:[%s224 + $0xc8] sm:$0xff]
      %v5310 = vld [vmem:[%s224 + $0xd0] sm:$0xff]
      %v5311 = vld [vmem:[%s224 + $0xd8] sm:$0xff]
      %v5312 = vld [vmem:[%s224 + $0xe0] sm:$0xff]
      %v5313 = vld [vmem:[%s224 + $0xe8] sm:$0xff]
      %v5314 = vld [vmem:[%s224 + $0xf0] sm:$0xff]
      %v5315 = vld [vmem:[%s224 + $0xf8] sm:$0xff]
      %v5316 = vld [vmem:[%s224 + $0x100] sm:$0xff]
      %v5317 = vld [vmem:[%s224 + $0x108] sm:$0xff]
      %v5318 = vld [vmem:[%s224 + $0x110] sm:$0xff]
      %v5319 = vld [vmem:[%s224 + $0x118] sm:$0xff]
      %v5320 = vld [vmem:[%s3] sm:$0xf]
      %v5321 = vld [vmem:[%s3 + $0x4] sm:$0xf]
      %v5322 = vld [vmem:[%s3 + $0x8] sm:$0xf]
      %v5323 = vld [vmem:[%s3 + $0xc] sm:$0xf]
      %v5328 = vunpack.c.l.b16 %v5320
      %v5329 = vunpack.c.l.b16 %v5321
      %v5330 = vunpack.c.l.b16 %v5322
      %v5331 = vunpack.c.l.b16 %v5323
      %v5332 = vpack.c.b16 %v5329, %v5328
      %v5333 = vpack.c.b16 %v5331, %v5330
      %v5337 = vsel %vm357, %v5266, 0
      %v5340 = vsel %vm357, %v5267, 0
      %v5343 = vsel %vm357, %v5268, 0
      %v5346 = vsel %vm357, %v5269, 0
      %v5349 = vsel %vm357, %v5270, 0
      %v5352 = vsel %vm357, %v5271, 0
      %v5355 = vsel %vm357, %v5272, 0
      %v5358 = vsel %vm357, %v5273, 0
      %v5361 = vsel %vm357, %v5274, 0
      %v5364 = vsel %vm357, %v5275, 0
      %v5367 = vsel %vm357, %v5276, 0
      %v5370 = vsel %vm357, %v5277, 0
      %v5373 = vsel %vm357, %v5278, 0
      %v5376 = vsel %vm357, %v5279, 0
      %v5379 = vsel %vm357, %v5280, 0
      %v5382 = vsel %vm357, %v5281, 0
      %v5385 = vsel %vm357, %v5282, 0
      %v5388 = vsel %vm357, %v5283, 0
      %5390 = vmatpush.bf16.msra.mxu0 0
      %5391 = vmatpush.bf16.msra.mxu0 0
      %5392 = vmatpush.bf16.msra.mxu0 0
      %5393 = vmatpush.bf16.msra.mxu0 0
      %5394 = vmatpush.bf16.msra.mxu0 0
      %5395 = vmatpush.bf16.msra.mxu0 0
      %5396 = vmatpush.bf16.msra.mxu0 %v5333
      %5397 = vmatpush.bf16.msra.mxu0 %v5332
      %5398 = vmatmul.bf16.gmra.mxu0 %v5337
      %v5399 = vpop.f32.mrf.mxu0
      %v5400 = vadd.f32 0.0, %v5399
      %v5401 = vpop.f32.mrf.mxu0
      %v5402 = vadd.f32 0.0, %v5401
      %5403 = vmatmul.bf16.gmra.mxu0 %v5340
      %v5404 = vpop.f32.mrf.mxu0
      %v5405 = vadd.f32 0.0, %v5404
      %v5406 = vpop.f32.mrf.mxu0
      %v5407 = vadd.f32 0.0, %v5406
      %5408 = vmatmul.bf16.gmra.mxu0 %v5343
      %v5409 = vpop.f32.mrf.mxu0
      %v5410 = vadd.f32 0.0, %v5409
      %v5411 = vpop.f32.mrf.mxu0
      %v5412 = vadd.f32 0.0, %v5411
      %5413 = vmatmul.bf16.gmra.mxu0 %v5346
      %v5414 = vpop.f32.mrf.mxu0
      %v5415 = vadd.f32 0.0, %v5414
      %v5416 = vpop.f32.mrf.mxu0
      %v5417 = vadd.f32 0.0, %v5416
      %5418 = vmatmul.bf16.gmra.mxu0 %v5349
      %v5419 = vpop.f32.mrf.mxu0
      %v5420 = vadd.f32 0.0, %v5419
      %v5421 = vpop.f32.mrf.mxu0
      %v5422 = vadd.f32 0.0, %v5421
      %5423 = vmatmul.bf16.gmra.mxu0 %v5352
      %v5424 = vpop.f32.mrf.mxu0
      %v5425 = vadd.f32 0.0, %v5424
      %v5426 = vpop.f32.mrf.mxu0
      %v5427 = vadd.f32 0.0, %v5426
      %5428 = vmatmul.bf16.gmra.mxu0 %v5355
      %v5429 = vpop.f32.mrf.mxu0
      %v5430 = vadd.f32 0.0, %v5429
      %v5431 = vpop.f32.mrf.mxu0
      %v5432 = vadd.f32 0.0, %v5431
      %5433 = vmatmul.bf16.gmra.mxu0 %v5358
      %v5434 = vpop.f32.mrf.mxu0
      %v5435 = vadd.f32 0.0, %v5434
      %v5436 = vpop.f32.mrf.mxu0
      %v5437 = vadd.f32 0.0, %v5436
      %5438 = vmatmul.bf16.gmra.mxu0 %v5361
      %v5439 = vpop.f32.mrf.mxu0
      %v5440 = vadd.f32 0.0, %v5439
      %v5441 = vpop.f32.mrf.mxu0
      %v5442 = vadd.f32 0.0, %v5441
      %5443 = vmatmul.bf16.gmra.mxu0 %v5364
      %v5444 = vpop.f32.mrf.mxu0
      %v5445 = vadd.f32 0.0, %v5444
      %v5446 = vpop.f32.mrf.mxu0
      %v5447 = vadd.f32 0.0, %v5446
      %5448 = vmatmul.bf16.gmra.mxu0 %v5367
      %v5449 = vpop.f32.mrf.mxu0
      %v5450 = vadd.f32 0.0, %v5449
      %v5451 = vpop.f32.mrf.mxu0
      %v5452 = vadd.f32 0.0, %v5451
      %5453 = vmatmul.bf16.gmra.mxu0 %v5370
      %v5454 = vpop.f32.mrf.mxu0
      %v5455 = vadd.f32 0.0, %v5454
      %v5456 = vpop.f32.mrf.mxu0
      %v5457 = vadd.f32 0.0, %v5456
      %5458 = vmatmul.bf16.gmra.mxu0 %v5373
      %v5459 = vpop.f32.mrf.mxu0
      %v5460 = vadd.f32 0.0, %v5459
      %v5461 = vpop.f32.mrf.mxu0
      %v5462 = vadd.f32 0.0, %v5461
      %5463 = vmatmul.bf16.gmra.mxu0 %v5376
      %v5464 = vpop.f32.mrf.mxu0
      %v5465 = vadd.f32 0.0, %v5464
      %v5466 = vpop.f32.mrf.mxu0
      %v5467 = vadd.f32 0.0, %v5466
      %5468 = vmatmul.bf16.gmra.mxu0 %v5379
      %v5469 = vpop.f32.mrf.mxu0
      %v5470 = vadd.f32 0.0, %v5469
      %v5471 = vpop.f32.mrf.mxu0
      %v5472 = vadd.f32 0.0, %v5471
      %5473 = vmatmul.bf16.gmra.mxu0 %v5382
      %v5474 = vpop.f32.mrf.mxu0
      %v5475 = vadd.f32 0.0, %v5474
      %v5476 = vpop.f32.mrf.mxu0
      %v5477 = vadd.f32 0.0, %v5476
      %5478 = vmatmul.bf16.gmra.mxu0 %v5385
      %v5479 = vpop.f32.mrf.mxu0
      %v5480 = vadd.f32 0.0, %v5479
      %v5481 = vpop.f32.mrf.mxu0
      %v5482 = vadd.f32 0.0, %v5481
      %5483 = vmatmul.bf16.gmra.mxu0 %v5388
      %v5484 = vpop.f32.mrf.mxu0
      %v5485 = vadd.f32 0.0, %v5484
      %v5486 = vpop.f32.mrf.mxu0
      %v5487 = vadd.f32 0.0, %v5486
      %5488 = vdwg.mxu0
      %v5489 = vadd.f32 %v5284, %v5400
      %v5490 = vadd.f32 %v5285, %v5402
      %v5491 = vadd.f32 %v5286, %v5405
      %v5492 = vadd.f32 %v5287, %v5407
      %v5493 = vadd.f32 %v5288, %v5410
      %v5494 = vadd.f32 %v5289, %v5412
      %v5495 = vadd.f32 %v5290, %v5415
      %v5496 = vadd.f32 %v5291, %v5417
      %v5497 = vadd.f32 %v5292, %v5420
      %v5498 = vadd.f32 %v5293, %v5422
      %v5499 = vadd.f32 %v5294, %v5425
      %v5500 = vadd.f32 %v5295, %v5427
      %v5501 = vadd.f32 %v5296, %v5430
      %v5502 = vadd.f32 %v5297, %v5432
      %v5503 = vadd.f32 %v5298, %v5435
      %v5504 = vadd.f32 %v5299, %v5437
      %v5505 = vadd.f32 %v5300, %v5440
      %v5506 = vadd.f32 %v5301, %v5442
      %v5507 = vadd.f32 %v5302, %v5445
      %v5508 = vadd.f32 %v5303, %v5447
      %v5509 = vadd.f32 %v5304, %v5450
      %v5510 = vadd.f32 %v5305, %v5452
      %v5511 = vadd.f32 %v5306, %v5455
      %v5512 = vadd.f32 %v5307, %v5457
      %v5513 = vadd.f32 %v5308, %v5460
      %v5514 = vadd.f32 %v5309, %v5462
      %v5515 = vadd.f32 %v5310, %v5465
      %v5516 = vadd.f32 %v5311, %v5467
      %v5517 = vadd.f32 %v5312, %v5470
      %v5518 = vadd.f32 %v5313, %v5472
      %v5519 = vadd.f32 %v5314, %v5475
      %v5520 = vadd.f32 %v5315, %v5477
      %v5521 = vadd.f32 %v5316, %v5480
      %v5522 = vadd.f32 %v5317, %v5482
      %v5523 = vadd.f32 %v5318, %v5485
      %v5524 = vadd.f32 %v5319, %v5487
      %5525 = vst.msk [vmem:[%s224] sm:$0xff] %vm357, %v5489
      %5526 = vst.msk [vmem:[%s224 + $0x8] sm:$0xff] %vm357, %v5490
      %5527 = vst.msk [vmem:[%s224 + $0x10] sm:$0xff] %vm357, %v5491
      %5528 = vst.msk [vmem:[%s224 + $0x18] sm:$0xff] %vm357, %v5492
      %5529 = vst.msk [vmem:[%s224 + $0x20] sm:$0xff] %vm357, %v5493
      %5530 = vst.msk [vmem:[%s224 + $0x28] sm:$0xff] %vm357, %v5494
      %5531 = vst.msk [vmem:[%s224 + $0x30] sm:$0xff] %vm357, %v5495
      %5532 = vst.msk [vmem:[%s224 + $0x38] sm:$0xff] %vm357, %v5496
      %5533 = vst.msk [vmem:[%s224 + $0x40] sm:$0xff] %vm357, %v5497
      %5534 = vst.msk [vmem:[%s224 + $0x48] sm:$0xff] %vm357, %v5498
      %5535 = vst.msk [vmem:[%s224 + $0x50] sm:$0xff] %vm357, %v5499
      %5536 = vst.msk [vmem:[%s224 + $0x58] sm:$0xff] %vm357, %v5500
      %5537 = vst.msk [vmem:[%s224 + $0x60] sm:$0xff] %vm357, %v5501
      %5538 = vst.msk [vmem:[%s224 + $0x68] sm:$0xff] %vm357, %v5502
      %5539 = vst.msk [vmem:[%s224 + $0x70] sm:$0xff] %vm357, %v5503
      %5540 = vst.msk [vmem:[%s224 + $0x78] sm:$0xff] %vm357, %v5504
      %5541 = vst.msk [vmem:[%s224 + $0x80] sm:$0xff] %vm357, %v5505
      %5542 = vst.msk [vmem:[%s224 + $0x88] sm:$0xff] %vm357, %v5506
      %5543 = vst.msk [vmem:[%s224 + $0x90] sm:$0xff] %vm357, %v5507
      %5544 = vst.msk [vmem:[%s224 + $0x98] sm:$0xff] %vm357, %v5508
      %5545 = vst.msk [vmem:[%s224 + $0xa0] sm:$0xff] %vm357, %v5509
      %5546 = vst.msk [vmem:[%s224 + $0xa8] sm:$0xff] %vm357, %v5510
      %5547 = vst.msk [vmem:[%s224 + $0xb0] sm:$0xff] %vm357, %v5511
      %5548 = vst.msk [vmem:[%s224 + $0xb8] sm:$0xff] %vm357, %v5512
      %5549 = vst.msk [vmem:[%s224 + $0xc0] sm:$0xff] %vm357, %v5513
      %5550 = vst.msk [vmem:[%s224 + $0xc8] sm:$0xff] %vm357, %v5514
      %5551 = vst.msk [vmem:[%s224 + $0xd0] sm:$0xff] %vm357, %v5515
      %5552 = vst.msk [vmem:[%s224 + $0xd8] sm:$0xff] %vm357, %v5516
      %5553 = vst.msk [vmem:[%s224 + $0xe0] sm:$0xff] %vm357, %v5517
      %5554 = vst.msk [vmem:[%s224 + $0xe8] sm:$0xff] %vm357, %v5518
      %5555 = vst.msk [vmem:[%s224 + $0xf0] sm:$0xff] %vm357, %v5519
      %5556 = vst.msk [vmem:[%s224 + $0xf8] sm:$0xff] %vm357, %v5520
      %5557 = vst.msk [vmem:[%s224 + $0x100] sm:$0xff] %vm357, %v5521
      %5558 = vst.msk [vmem:[%s224 + $0x108] sm:$0xff] %vm357, %v5522
      %5559 = vst.msk [vmem:[%s224 + $0x110] sm:$0xff] %vm357, %v5523
      %5560 = vst.msk [vmem:[%s224 + $0x118] sm:$0xff] %vm357, %v5524
      %v5561 = vld [vmem:[#allocation4 + $0x1] sm:$0xff]
      %v5562 = vld [vmem:[#allocation4 + $0x9] sm:$0xff]
      %v5563 = vld [vmem:[#allocation4 + $0x11] sm:$0xff]
      %v5564 = vld [vmem:[#allocation4 + $0x19] sm:$0xff]
      %v5565 = vld [vmem:[#allocation4 + $0x21] sm:$0xff]
      %v5566 = vld [vmem:[#allocation4 + $0x29] sm:$0xff]
      %v5567 = vld [vmem:[#allocation4 + $0x31] sm:$0xff]
      %v5568 = vld [vmem:[#allocation4 + $0x39] sm:$0xff]
      %v5569 = vld [vmem:[#allocation4 + $0x41] sm:$0xff]
      %v5570 = vld [vmem:[#allocation4 + $0x49] sm:$0xff]
      %v5571 = vld [vmem:[#allocation4 + $0x51] sm:$0xff]
      %v5572 = vld [vmem:[#allocation4 + $0x59] sm:$0xff]
      %v5573 = vld [vmem:[#allocation4 + $0x61] sm:$0xff]
      %v5574 = vld [vmem:[#allocation4 + $0x69] sm:$0xff]
      %v5575 = vld [vmem:[#allocation4 + $0x71] sm:$0xff]
      %v5576 = vld [vmem:[#allocation4 + $0x79] sm:$0xff]
      %v5577 = vld [vmem:[#allocation4 + $0x81] sm:$0xff]
      %v5578 = vld [vmem:[#allocation4 + $0x89] sm:$0xff]
      %v5579 = vld [vmem:[#allocation4 + $0x91] sm:$0xff]
      %v5580 = vld [vmem:[#allocation4 + $0x99] sm:$0xff]
      %v5581 = vld [vmem:[#allocation4 + $0xa1] sm:$0xff]
      %v5582 = vld [vmem:[#allocation4 + $0xa9] sm:$0xff]
      %v5583 = vld [vmem:[#allocation4 + $0xb1] sm:$0xff]
      %v5584 = vld [vmem:[#allocation4 + $0xb9] sm:$0xff]
      %v5585 = vld [vmem:[#allocation4 + $0xc1] sm:$0xff]
      %v5586 = vld [vmem:[#allocation4 + $0xc9] sm:$0xff]
      %v5587 = vld [vmem:[#allocation4 + $0xd1] sm:$0xff]
      %v5588 = vld [vmem:[#allocation4 + $0xd9] sm:$0xff]
      %v5589 = vld [vmem:[#allocation4 + $0xe1] sm:$0xff]
      %v5590 = vld [vmem:[#allocation4 + $0xe9] sm:$0xff]
      %v5591 = vld [vmem:[#allocation4 + $0xf1] sm:$0xff]
      %v5592 = vld [vmem:[#allocation4 + $0xf9] sm:$0xff]
      %v5593 = vld [vmem:[#allocation4 + $0x101] sm:$0xff]
      %v5594 = vld [vmem:[#allocation4 + $0x109] sm:$0xff]
      %v5595 = vld [vmem:[#allocation4 + $0x111] sm:$0xff]
      %v5596 = vld [vmem:[#allocation4 + $0x119] sm:$0xff]
      %v5597 = vpack.c.bf16 %v5562, %v5561
      %v5598 = vpack.c.bf16 %v5564, %v5563
      %v5599 = vpack.c.bf16 %v5566, %v5565
      %v5600 = vpack.c.bf16 %v5568, %v5567
      %v5601 = vpack.c.bf16 %v5570, %v5569
      %v5602 = vpack.c.bf16 %v5572, %v5571
      %v5603 = vpack.c.bf16 %v5574, %v5573
      %v5604 = vpack.c.bf16 %v5576, %v5575
      %v5605 = vpack.c.bf16 %v5578, %v5577
      %v5606 = vpack.c.bf16 %v5580, %v5579
      %v5607 = vpack.c.bf16 %v5582, %v5581
      %v5608 = vpack.c.bf16 %v5584, %v5583
      %v5609 = vpack.c.bf16 %v5586, %v5585
      %v5610 = vpack.c.bf16 %v5588, %v5587
      %v5611 = vpack.c.bf16 %v5590, %v5589
      %v5612 = vpack.c.bf16 %v5592, %v5591
      %v5613 = vpack.c.bf16 %v5594, %v5593
      %v5614 = vpack.c.bf16 %v5596, %v5595
      %v5615 = vld [vmem:[%s224] sm:$0xff]
      %v5616 = vld [vmem:[%s224 + $0x8] sm:$0xff]
      %v5617 = vld [vmem:[%s224 + $0x10] sm:$0xff]
      %v5618 = vld [vmem:[%s224 + $0x18] sm:$0xff]
      %v5619 = vld [vmem:[%s224 + $0x20] sm:$0xff]
      %v5620 = vld [vmem:[%s224 + $0x28] sm:$0xff]
      %v5621 = vld [vmem:[%s224 + $0x30] sm:$0xff]
      %v5622 = vld [vmem:[%s224 + $0x38] sm:$0xff]
      %v5623 = vld [vmem:[%s224 + $0x40] sm:$0xff]
      %v5624 = vld [vmem:[%s224 + $0x48] sm:$0xff]
      %v5625 = vld [vmem:[%s224 + $0x50] sm:$0xff]
      %v5626 = vld [vmem:[%s224 + $0x58] sm:$0xff]
      %v5627 = vld [vmem:[%s224 + $0x60] sm:$0xff]
      %v5628 = vld [vmem:[%s224 + $0x68] sm:$0xff]
      %v5629 = vld [vmem:[%s224 + $0x70] sm:$0xff]
      %v5630 = vld [vmem:[%s224 + $0x78] sm:$0xff]
      %v5631 = vld [vmem:[%s224 + $0x80] sm:$0xff]
      %v5632 = vld [vmem:[%s224 + $0x88] sm:$0xff]
      %v5633 = vld [vmem:[%s224 + $0x90] sm:$0xff]
      %v5634 = vld [vmem:[%s224 + $0x98] sm:$0xff]
      %v5635 = vld [vmem:[%s224 + $0xa0] sm:$0xff]
      %v5636 = vld [vmem:[%s224 + $0xa8] sm:$0xff]
      %v5637 = vld [vmem:[%s224 + $0xb0] sm:$0xff]
      %v5638 = vld [vmem:[%s224 + $0xb8] sm:$0xff]
      %v5639 = vld [vmem:[%s224 + $0xc0] sm:$0xff]
      %v5640 = vld [vmem:[%s224 + $0xc8] sm:$0xff]
      %v5641 = vld [vmem:[%s224 + $0xd0] sm:$0xff]
      %v5642 = vld [vmem:[%s224 + $0xd8] sm:$0xff]
      %v5643 = vld [vmem:[%s224 + $0xe0] sm:$0xff]
      %v5644 = vld [vmem:[%s224 + $0xe8] sm:$0xff]
      %v5645 = vld [vmem:[%s224 + $0xf0] sm:$0xff]
      %v5646 = vld [vmem:[%s224 + $0xf8] sm:$0xff]
      %v5647 = vld [vmem:[%s224 + $0x100] sm:$0xff]
      %v5648 = vld [vmem:[%s224 + $0x108] sm:$0xff]
      %v5649 = vld [vmem:[%s224 + $0x110] sm:$0xff]
      %v5650 = vld [vmem:[%s224 + $0x118] sm:$0xff]
      %s5651 = scalar_lea.vmem %s3, 16
      %v5652 = vld [vmem:[%s5651] sm:$0xf]
      %v5653 = vld [vmem:[%s5651 + $0x4] sm:$0xf]
      %v5654 = vld [vmem:[%s5651 + $0x8] sm:$0xf]
      %v5655 = vld [vmem:[%s5651 + $0xc] sm:$0xf]
      %v5660 = vunpack.c.l.b16 %v5652
      %v5661 = vunpack.c.l.b16 %v5653
      %v5662 = vunpack.c.l.b16 %v5654
      %v5663 = vunpack.c.l.b16 %v5655
      %v5664 = vpack.c.b16 %v5661, %v5660
      %v5665 = vpack.c.b16 %v5663, %v5662
      %v5669 = vsel %vm357, %v5597, 0
      %v5672 = vsel %vm357, %v5598, 0
      %v5675 = vsel %vm357, %v5599, 0
      %v5678 = vsel %vm357, %v5600, 0
      %v5681 = vsel %vm357, %v5601, 0
      %v5684 = vsel %vm357, %v5602, 0
      %v5687 = vsel %vm357, %v5603, 0
      %v5690 = vsel %vm357, %v5604, 0
      %v5693 = vsel %vm357, %v5605, 0
      %v5696 = vsel %vm357, %v5606, 0
      %v5699 = vsel %vm357, %v5607, 0
      %v5702 = vsel %vm357, %v5608, 0
      %v5705 = vsel %vm357, %v5609, 0
      %v5708 = vsel %vm357, %v5610, 0
      %v5711 = vsel %vm357, %v5611, 0
      %v5714 = vsel %vm357, %v5612, 0
      %v5717 = vsel %vm357, %v5613, 0
      %v5720 = vsel %vm357, %v5614, 0
      %5722 = vmatpush.bf16.msra.mxu0 0
      %5723 = vmatpush.bf16.msra.mxu0 0
      %5724 = vmatpush.bf16.msra.mxu0 0
      %5725 = vmatpush.bf16.msra.mxu0 0
      %5726 = vmatpush.bf16.msra.mxu0 0
      %5727 = vmatpush.bf16.msra.mxu0 0
      %5728 = vmatpush.bf16.msra.mxu0 %v5665
      %5729 = vmatpush.bf16.msra.mxu0 %v5664
      %5730 = vmatmul.bf16.gmra.mxu0 %v5669
      %v5731 = vpop.f32.mrf.mxu0
      %v5732 = vadd.f32 0.0, %v5731
      %v5733 = vpop.f32.mrf.mxu0
      %v5734 = vadd.f32 0.0, %v5733
      %5735 = vmatmul.bf16.gmra.mxu0 %v5672
      %v5736 = vpop.f32.mrf.mxu0
      %v5737 = vadd.f32 0.0, %v5736
      %v5738 = vpop.f32.mrf.mxu0
      %v5739 = vadd.f32 0.0, %v5738
      %5740 = vmatmul.bf16.gmra.mxu0 %v5675
      %v5741 = vpop.f32.mrf.mxu0
      %v5742 = vadd.f32 0.0, %v5741
      %v5743 = vpop.f32.mrf.mxu0
      %v5744 = vadd.f32 0.0, %v5743
      %5745 = vmatmul.bf16.gmra.mxu0 %v5678
      %v5746 = vpop.f32.mrf.mxu0
      %v5747 = vadd.f32 0.0, %v5746
      %v5748 = vpop.f32.mrf.mxu0
      %v5749 = vadd.f32 0.0, %v5748
      %5750 = vmatmul.bf16.gmra.mxu0 %v5681
      %v5751 = vpop.f32.mrf.mxu0
      %v5752 = vadd.f32 0.0, %v5751
      %v5753 = vpop.f32.mrf.mxu0
      %v5754 = vadd.f32 0.0, %v5753
      %5755 = vmatmul.bf16.gmra.mxu0 %v5684
      %v5756 = vpop.f32.mrf.mxu0
      %v5757 = vadd.f32 0.0, %v5756
      %v5758 = vpop.f32.mrf.mxu0
      %v5759 = vadd.f32 0.0, %v5758
      %5760 = vmatmul.bf16.gmra.mxu0 %v5687
      %v5761 = vpop.f32.mrf.mxu0
      %v5762 = vadd.f32 0.0, %v5761
      %v5763 = vpop.f32.mrf.mxu0
      %v5764 = vadd.f32 0.0, %v5763
      %5765 = vmatmul.bf16.gmra.mxu0 %v5690
      %v5766 = vpop.f32.mrf.mxu0
      %v5767 = vadd.f32 0.0, %v5766
      %v5768 = vpop.f32.mrf.mxu0
      %v5769 = vadd.f32 0.0, %v5768
      %5770 = vmatmul.bf16.gmra.mxu0 %v5693
      %v5771 = vpop.f32.mrf.mxu0
      %v5772 = vadd.f32 0.0, %v5771
      %v5773 = vpop.f32.mrf.mxu0
      %v5774 = vadd.f32 0.0, %v5773
      %5775 = vmatmul.bf16.gmra.mxu0 %v5696
      %v5776 = vpop.f32.mrf.mxu0
      %v5777 = vadd.f32 0.0, %v5776
      %v5778 = vpop.f32.mrf.mxu0
      %v5779 = vadd.f32 0.0, %v5778
      %5780 = vmatmul.bf16.gmra.mxu0 %v5699
      %v5781 = vpop.f32.mrf.mxu0
      %v5782 = vadd.f32 0.0, %v5781
      %v5783 = vpop.f32.mrf.mxu0
      %v5784 = vadd.f32 0.0, %v5783
      %5785 = vmatmul.bf16.gmra.mxu0 %v5702
      %v5786 = vpop.f32.mrf.mxu0
      %v5787 = vadd.f32 0.0, %v5786
      %v5788 = vpop.f32.mrf.mxu0
      %v5789 = vadd.f32 0.0, %v5788
      %5790 = vmatmul.bf16.gmra.mxu0 %v5705
      %v5791 = vpop.f32.mrf.mxu0
      %v5792 = vadd.f32 0.0, %v5791
      %v5793 = vpop.f32.mrf.mxu0
      %v5794 = vadd.f32 0.0, %v5793
      %5795 = vmatmul.bf16.gmra.mxu0 %v5708
      %v5796 = vpop.f32.mrf.mxu0
      %v5797 = vadd.f32 0.0, %v5796
      %v5798 = vpop.f32.mrf.mxu0
      %v5799 = vadd.f32 0.0, %v5798
      %5800 = vmatmul.bf16.gmra.mxu0 %v5711
      %v5801 = vpop.f32.mrf.mxu0
      %v5802 = vadd.f32 0.0, %v5801
      %v5803 = vpop.f32.mrf.mxu0
      %v5804 = vadd.f32 0.0, %v5803
      %5805 = vmatmul.bf16.gmra.mxu0 %v5714
      %v5806 = vpop.f32.mrf.mxu0
      %v5807 = vadd.f32 0.0, %v5806
      %v5808 = vpop.f32.mrf.mxu0
      %v5809 = vadd.f32 0.0, %v5808
      %5810 = vmatmul.bf16.gmra.mxu0 %v5717
      %v5811 = vpop.f32.mrf.mxu0
      %v5812 = vadd.f32 0.0, %v5811
      %v5813 = vpop.f32.mrf.mxu0
      %v5814 = vadd.f32 0.0, %v5813
      %5815 = vmatmul.bf16.gmra.mxu0 %v5720
      %v5816 = vpop.f32.mrf.mxu0
      %v5817 = vadd.f32 0.0, %v5816
      %v5818 = vpop.f32.mrf.mxu0
      %v5819 = vadd.f32 0.0, %v5818
      %5820 = vdwg.mxu0
      %v5821 = vadd.f32 %v5615, %v5732
      %v5822 = vadd.f32 %v5616, %v5734
      %v5823 = vadd.f32 %v5617, %v5737
      %v5824 = vadd.f32 %v5618, %v5739
      %v5825 = vadd.f32 %v5619, %v5742
      %v5826 = vadd.f32 %v5620, %v5744
      %v5827 = vadd.f32 %v5621, %v5747
      %v5828 = vadd.f32 %v5622, %v5749
      %v5829 = vadd.f32 %v5623, %v5752
      %v5830 = vadd.f32 %v5624, %v5754
      %v5831 = vadd.f32 %v5625, %v5757
      %v5832 = vadd.f32 %v5626, %v5759
      %v5833 = vadd.f32 %v5627, %v5762
      %v5834 = vadd.f32 %v5628, %v5764
      %v5835 = vadd.f32 %v5629, %v5767
      %v5836 = vadd.f32 %v5630, %v5769
      %v5837 = vadd.f32 %v5631, %v5772
      %v5838 = vadd.f32 %v5632, %v5774
      %v5839 = vadd.f32 %v5633, %v5777
      %v5840 = vadd.f32 %v5634, %v5779
      %v5841 = vadd.f32 %v5635, %v5782
      %v5842 = vadd.f32 %v5636, %v5784
      %v5843 = vadd.f32 %v5637, %v5787
      %v5844 = vadd.f32 %v5638, %v5789
      %v5845 = vadd.f32 %v5639, %v5792
      %v5846 = vadd.f32 %v5640, %v5794
      %v5847 = vadd.f32 %v5641, %v5797
      %v5848 = vadd.f32 %v5642, %v5799
      %v5849 = vadd.f32 %v5643, %v5802
      %v5850 = vadd.f32 %v5644, %v5804
      %v5851 = vadd.f32 %v5645, %v5807
      %v5852 = vadd.f32 %v5646, %v5809
      %v5853 = vadd.f32 %v5647, %v5812
      %v5854 = vadd.f32 %v5648, %v5814
      %v5855 = vadd.f32 %v5649, %v5817
      %v5856 = vadd.f32 %v5650, %v5819
      %5857 = vst.msk [vmem:[%s224] sm:$0xff] %vm357, %v5821
      %5858 = vst.msk [vmem:[%s224 + $0x8] sm:$0xff] %vm357, %v5822
      %5859 = vst.msk [vmem:[%s224 + $0x10] sm:$0xff] %vm357, %v5823
      %5860 = vst.msk [vmem:[%s224 + $0x18] sm:$0xff] %vm357, %v5824
      %5861 = vst.msk [vmem:[%s224 + $0x20] sm:$0xff] %vm357, %v5825
      %5862 = vst.msk [vmem:[%s224 + $0x28] sm:$0xff] %vm357, %v5826
      %5863 = vst.msk [vmem:[%s224 + $0x30] sm:$0xff] %vm357, %v5827
      %5864 = vst.msk [vmem:[%s224 + $0x38] sm:$0xff] %vm357, %v5828
      %5865 = vst.msk [vmem:[%s224 + $0x40] sm:$0xff] %vm357, %v5829
      %5866 = vst.msk [vmem:[%s224 + $0x48] sm:$0xff] %vm357, %v5830
      %5867 = vst.msk [vmem:[%s224 + $0x50] sm:$0xff] %vm357, %v5831
      %5868 = vst.msk [vmem:[%s224 + $0x58] sm:$0xff] %vm357, %v5832
      %5869 = vst.msk [vmem:[%s224 + $0x60] sm:$0xff] %vm357, %v5833
      %5870 = vst.msk [vmem:[%s224 + $0x68] sm:$0xff] %vm357, %v5834
      %5871 = vst.msk [vmem:[%s224 + $0x70] sm:$0xff] %vm357, %v5835
      %5872 = vst.msk [vmem:[%s224 + $0x78] sm:$0xff] %vm357, %v5836
      %5873 = vst.msk [vmem:[%s224 + $0x80] sm:$0xff] %vm357, %v5837
      %5874 = vst.msk [vmem:[%s224 + $0x88] sm:$0xff] %vm357, %v5838
      %5875 = vst.msk [vmem:[%s224 + $0x90] sm:$0xff] %vm357, %v5839
      %5876 = vst.msk [vmem:[%s224 + $0x98] sm:$0xff] %vm357, %v5840
      %5877 = vst.msk [vmem:[%s224 + $0xa0] sm:$0xff] %vm357, %v5841
      %5878 = vst.msk [vmem:[%s224 + $0xa8] sm:$0xff] %vm357, %v5842
      %5879 = vst.msk [vmem:[%s224 + $0xb0] sm:$0xff] %vm357, %v5843
      %5880 = vst.msk [vmem:[%s224 + $0xb8] sm:$0xff] %vm357, %v5844
      %5881 = vst.msk [vmem:[%s224 + $0xc0] sm:$0xff] %vm357, %v5845
      %5882 = vst.msk [vmem:[%s224 + $0xc8] sm:$0xff] %vm357, %v5846
      %5883 = vst.msk [vmem:[%s224 + $0xd0] sm:$0xff] %vm357, %v5847
      %5884 = vst.msk [vmem:[%s224 + $0xd8] sm:$0xff] %vm357, %v5848
      %5885 = vst.msk [vmem:[%s224 + $0xe0] sm:$0xff] %vm357, %v5849
      %5886 = vst.msk [vmem:[%s224 + $0xe8] sm:$0xff] %vm357, %v5850
      %5887 = vst.msk [vmem:[%s224 + $0xf0] sm:$0xff] %vm357, %v5851
      %5888 = vst.msk [vmem:[%s224 + $0xf8] sm:$0xff] %vm357, %v5852
      %5889 = vst.msk [vmem:[%s224 + $0x100] sm:$0xff] %vm357, %v5853
      %5890 = vst.msk [vmem:[%s224 + $0x108] sm:$0xff] %vm357, %v5854
      %5891 = vst.msk [vmem:[%s224 + $0x110] sm:$0xff] %vm357, %v5855
      %5892 = vst.msk [vmem:[%s224 + $0x118] sm:$0xff] %vm357, %v5856
      %v5893 = vld [vmem:[#allocation4 + $0x2] sm:$0xff]
      %v5894 = vld [vmem:[#allocation4 + $0xa] sm:$0xff]
      %v5895 = vld [vmem:[#allocation4 + $0x12] sm:$0xff]
      %v5896 = vld [vmem:[#allocation4 + $0x1a] sm:$0xff]
      %v5897 = vld [vmem:[#allocation4 + $0x22] sm:$0xff]
      %v5898 = vld [vmem:[#allocation4 + $0x2a] sm:$0xff]
      %v5899 = vld [vmem:[#allocation4 + $0x32] sm:$0xff]
      %v5900 = vld [vmem:[#allocation4 + $0x3a] sm:$0xff]
      %v5901 = vld [vmem:[#allocation4 + $0x42] sm:$0xff]
      %v5902 = vld [vmem:[#allocation4 + $0x4a] sm:$0xff]
      %v5903 = vld [vmem:[#allocation4 + $0x52] sm:$0xff]
      %v5904 = vld [vmem:[#allocation4 + $0x5a] sm:$0xff]
      %v5905 = vld [vmem:[#allocation4 + $0x62] sm:$0xff]
      %v5906 = vld [vmem:[#allocation4 + $0x6a] sm:$0xff]
      %v5907 = vld [vmem:[#allocation4 + $0x72] sm:$0xff]
      %v5908 = vld [vmem:[#allocation4 + $0x7a] sm:$0xff]
      %v5909 = vld [vmem:[#allocation4 + $0x82] sm:$0xff]
      %v5910 = vld [vmem:[#allocation4 + $0x8a] sm:$0xff]
      %v5911 = vld [vmem:[#allocation4 + $0x92] sm:$0xff]
      %v5912 = vld [vmem:[#allocation4 + $0x9a] sm:$0xff]
      %v5913 = vld [vmem:[#allocation4 + $0xa2] sm:$0xff]
      %v5914 = vld [vmem:[#allocation4 + $0xaa] sm:$0xff]
      %v5915 = vld [vmem:[#allocation4 + $0xb2] sm:$0xff]
      %v5916 = vld [vmem:[#allocation4 + $0xba] sm:$0xff]
      %v5917 = vld [vmem:[#allocation4 + $0xc2] sm:$0xff]
      %v5918 = vld [vmem:[#allocation4 + $0xca] sm:$0xff]
      %v5919 = vld [vmem:[#allocation4 + $0xd2] sm:$0xff]
      %v5920 = vld [vmem:[#allocation4 + $0xda] sm:$0xff]
      %v5921 = vld [vmem:[#allocation4 + $0xe2] sm:$0xff]
      %v5922 = vld [vmem:[#allocation4 + $0xea] sm:$0xff]
      %v5923 = vld [vmem:[#allocation4 + $0xf2] sm:$0xff]
      %v5924 = vld [vmem:[#allocation4 + $0xfa] sm:$0xff]
      %v5925 = vld [vmem:[#allocation4 + $0x102] sm:$0xff]
      %v5926 = vld [vmem:[#allocation4 + $0x10a] sm:$0xff]
      %v5927 = vld [vmem:[#allocation4 + $0x112] sm:$0xff]
      %v5928 = vld [vmem:[#allocation4 + $0x11a] sm:$0xff]
      %v5929 = vpack.c.bf16 %v5894, %v5893
      %v5930 = vpack.c.bf16 %v5896, %v5895
      %v5931 = vpack.c.bf16 %v5898, %v5897
      %v5932 = vpack.c.bf16 %v5900, %v5899
      %v5933 = vpack.c.bf16 %v5902, %v5901
      %v5934 = vpack.c.bf16 %v5904, %v5903
      %v5935 = vpack.c.bf16 %v5906, %v5905
      %v5936 = vpack.c.bf16 %v5908, %v5907
      %v5937 = vpack.c.bf16 %v5910, %v5909
      %v5938 = vpack.c.bf16 %v5912, %v5911
      %v5939 = vpack.c.bf16 %v5914, %v5913
      %v5940 = vpack.c.bf16 %v5916, %v5915
      %v5941 = vpack.c.bf16 %v5918, %v5917
      %v5942 = vpack.c.bf16 %v5920, %v5919
      %v5943 = vpack.c.bf16 %v5922, %v5921
      %v5944 = vpack.c.bf16 %v5924, %v5923
      %v5945 = vpack.c.bf16 %v5926, %v5925
      %v5946 = vpack.c.bf16 %v5928, %v5927
      %v5947 = vld [vmem:[%s224] sm:$0xff]
      %v5948 = vld [vmem:[%s224 + $0x8] sm:$0xff]
      %v5949 = vld [vmem:[%s224 + $0x10] sm:$0xff]
      %v5950 = vld [vmem:[%s224 + $0x18] sm:$0xff]
      %v5951 = vld [vmem:[%s224 + $0x20] sm:$0xff]
      %v5952 = vld [vmem:[%s224 + $0x28] sm:$0xff]
      %v5953 = vld [vmem:[%s224 + $0x30] sm:$0xff]
      %v5954 = vld [vmem:[%s224 + $0x38] sm:$0xff]
      %v5955 = vld [vmem:[%s224 + $0x40] sm:$0xff]
      %v5956 = vld [vmem:[%s224 + $0x48] sm:$0xff]
      %v5957 = vld [vmem:[%s224 + $0x50] sm:$0xff]
      %v5958 = vld [vmem:[%s224 + $0x58] sm:$0xff]
      %v5959 = vld [vmem:[%s224 + $0x60] sm:$0xff]
      %v5960 = vld [vmem:[%s224 + $0x68] sm:$0xff]
      %v5961 = vld [vmem:[%s224 + $0x70] sm:$0xff]
      %v5962 = vld [vmem:[%s224 + $0x78] sm:$0xff]
      %v5963 = vld [vmem:[%s224 + $0x80] sm:$0xff]
      %v5964 = vld [vmem:[%s224 + $0x88] sm:$0xff]
      %v5965 = vld [vmem:[%s224 + $0x90] sm:$0xff]
      %v5966 = vld [vmem:[%s224 + $0x98] sm:$0xff]
      %v5967 = vld [vmem:[%s224 + $0xa0] sm:$0xff]
      %v5968 = vld [vmem:[%s224 + $0xa8] sm:$0xff]
      %v5969 = vld [vmem:[%s224 + $0xb0] sm:$0xff]
      %v5970 = vld [vmem:[%s224 + $0xb8] sm:$0xff]
      %v5971 = vld [vmem:[%s224 + $0xc0] sm:$0xff]
      %v5972 = vld [vmem:[%s224 + $0xc8] sm:$0xff]
      %v5973 = vld [vmem:[%s224 + $0xd0] sm:$0xff]
      %v5974 = vld [vmem:[%s224 + $0xd8] sm:$0xff]
      %v5975 = vld [vmem:[%s224 + $0xe0] sm:$0xff]
      %v5976 = vld [vmem:[%s224 + $0xe8] sm:$0xff]
      %v5977 = vld [vmem:[%s224 + $0xf0] sm:$0xff]
      %v5978 = vld [vmem:[%s224 + $0xf8] sm:$0xff]
      %v5979 = vld [vmem:[%s224 + $0x100] sm:$0xff]
      %v5980 = vld [vmem:[%s224 + $0x108] sm:$0xff]
      %v5981 = vld [vmem:[%s224 + $0x110] sm:$0xff]
      %v5982 = vld [vmem:[%s224 + $0x118] sm:$0xff]
      %s5983 = scalar_lea.vmem %s3, 32
      %v5984 = vld [vmem:[%s5983] sm:$0xf]
      %v5985 = vld [vmem:[%s5983 + $0x4] sm:$0xf]
      %v5986 = vld [vmem:[%s5983 + $0x8] sm:$0xf]
      %v5987 = vld [vmem:[%s5983 + $0xc] sm:$0xf]
      %v5992 = vunpack.c.l.b16 %v5984
      %v5993 = vunpack.c.l.b16 %v5985
      %v5994 = vunpack.c.l.b16 %v5986
      %v5995 = vunpack.c.l.b16 %v5987
      %v5996 = vpack.c.b16 %v5993, %v5992
      %v5997 = vpack.c.b16 %v5995, %v5994
      %v6001 = vsel %vm357, %v5929, 0
      %v6004 = vsel %vm357, %v5930, 0
      %v6007 = vsel %vm357, %v5931, 0
      %v6010 = vsel %vm357, %v5932, 0
      %v6013 = vsel %vm357, %v5933, 0
      %v6016 = vsel %vm357, %v5934, 0
      %v6019 = vsel %vm357, %v5935, 0
      %v6022 = vsel %vm357, %v5936, 0
      %v6025 = vsel %vm357, %v5937, 0
      %v6028 = vsel %vm357, %v5938, 0
      %v6031 = vsel %vm357, %v5939, 0
      %v6034 = vsel %vm357, %v5940, 0
      %v6037 = vsel %vm357, %v5941, 0
      %v6040 = vsel %vm357, %v5942, 0
      %v6043 = vsel %vm357, %v5943, 0
      %v6046 = vsel %vm357, %v5944, 0
      %v6049 = vsel %vm357, %v5945, 0
      %v6052 = vsel %vm357, %v5946, 0
      %6054 = vmatpush.bf16.msra.mxu0 0
      %6055 = vmatpush.bf16.msra.mxu0 0
      %6056 = vmatpush.bf16.msra.mxu0 0
      %6057 = vmatpush.bf16.msra.mxu0 0
      %6058 = vmatpush.bf16.msra.mxu0 0
      %6059 = vmatpush.bf16.msra.mxu0 0
      %6060 = vmatpush.bf16.msra.mxu0 %v5997
      %6061 = vmatpush.bf16.msra.mxu0 %v5996
      %6062 = vmatmul.bf16.gmra.mxu0 %v6001
      %v6063 = vpop.f32.mrf.mxu0
      %v6064 = vadd.f32 0.0, %v6063
      %v6065 = vpop.f32.mrf.mxu0
      %v6066 = vadd.f32 0.0, %v6065
      %6067 = vmatmul.bf16.gmra.mxu0 %v6004
      %v6068 = vpop.f32.mrf.mxu0
      %v6069 = vadd.f32 0.0, %v6068
      %v6070 = vpop.f32.mrf.mxu0
      %v6071 = vadd.f32 0.0, %v6070
      %6072 = vmatmul.bf16.gmra.mxu0 %v6007
      %v6073 = vpop.f32.mrf.mxu0
      %v6074 = vadd.f32 0.0, %v6073
      %v6075 = vpop.f32.mrf.mxu0
      %v6076 = vadd.f32 0.0, %v6075
      %6077 = vmatmul.bf16.gmra.mxu0 %v6010
      %v6078 = vpop.f32.mrf.mxu0
      %v6079 = vadd.f32 0.0, %v6078
      %v6080 = vpop.f32.mrf.mxu0
      %v6081 = vadd.f32 0.0, %v6080
      %6082 = vmatmul.bf16.gmra.mxu0 %v6013
      %v6083 = vpop.f32.mrf.mxu0
      %v6084 = vadd.f32 0.0, %v6083
      %v6085 = vpop.f32.mrf.mxu0
      %v6086 = vadd.f32 0.0, %v6085
      %6087 = vmatmul.bf16.gmra.mxu0 %v6016
      %v6088 = vpop.f32.mrf.mxu0
      %v6089 = vadd.f32 0.0, %v6088
      %v6090 = vpop.f32.mrf.mxu0
      %v6091 = vadd.f32 0.0, %v6090
      %6092 = vmatmul.bf16.gmra.mxu0 %v6019
      %v6093 = vpop.f32.mrf.mxu0
      %v6094 = vadd.f32 0.0, %v6093
      %v6095 = vpop.f32.mrf.mxu0
      %v6096 = vadd.f32 0.0, %v6095
      %6097 = vmatmul.bf16.gmra.mxu0 %v6022
      %v6098 = vpop.f32.mrf.mxu0
      %v6099 = vadd.f32 0.0, %v6098
      %v6100 = vpop.f32.mrf.mxu0
      %v6101 = vadd.f32 0.0, %v6100
      %6102 = vmatmul.bf16.gmra.mxu0 %v6025
      %v6103 = vpop.f32.mrf.mxu0
      %v6104 = vadd.f32 0.0, %v6103
      %v6105 = vpop.f32.mrf.mxu0
      %v6106 = vadd.f32 0.0, %v6105
      %6107 = vmatmul.bf16.gmra.mxu0 %v6028
      %v6108 = vpop.f32.mrf.mxu0
      %v6109 = vadd.f32 0.0, %v6108
      %v6110 = vpop.f32.mrf.mxu0
      %v6111 = vadd.f32 0.0, %v6110
      %6112 = vmatmul.bf16.gmra.mxu0 %v6031
      %v6113 = vpop.f32.mrf.mxu0
      %v6114 = vadd.f32 0.0, %v6113
      %v6115 = vpop.f32.mrf.mxu0
      %v6116 = vadd.f32 0.0, %v6115
      %6117 = vmatmul.bf16.gmra.mxu0 %v6034
      %v6118 = vpop.f32.mrf.mxu0
      %v6119 = vadd.f32 0.0, %v6118
      %v6120 = vpop.f32.mrf.mxu0
      %v6121 = vadd.f32 0.0, %v6120
      %6122 = vmatmul.bf16.gmra.mxu0 %v6037
      %v6123 = vpop.f32.mrf.mxu0
      %v6124 = vadd.f32 0.0, %v6123
      %v6125 = vpop.f32.mrf.mxu0
      %v6126 = vadd.f32 0.0, %v6125
      %6127 = vmatmul.bf16.gmra.mxu0 %v6040
      %v6128 = vpop.f32.mrf.mxu0
      %v6129 = vadd.f32 0.0, %v6128
      %v6130 = vpop.f32.mrf.mxu0
      %v6131 = vadd.f32 0.0, %v6130
      %6132 = vmatmul.bf16.gmra.mxu0 %v6043
      %v6133 = vpop.f32.mrf.mxu0
      %v6134 = vadd.f32 0.0, %v6133
      %v6135 = vpop.f32.mrf.mxu0
      %v6136 = vadd.f32 0.0, %v6135
      %6137 = vmatmul.bf16.gmra.mxu0 %v6046
      %v6138 = vpop.f32.mrf.mxu0
      %v6139 = vadd.f32 0.0, %v6138
      %v6140 = vpop.f32.mrf.mxu0
      %v6141 = vadd.f32 0.0, %v6140
      %6142 = vmatmul.bf16.gmra.mxu0 %v6049
      %v6143 = vpop.f32.mrf.mxu0
      %v6144 = vadd.f32 0.0, %v6143
      %v6145 = vpop.f32.mrf.mxu0
      %v6146 = vadd.f32 0.0, %v6145
      %6147 = vmatmul.bf16.gmra.mxu0 %v6052
      %v6148 = vpop.f32.mrf.mxu0
      %v6149 = vadd.f32 0.0, %v6148
      %v6150 = vpop.f32.mrf.mxu0
      %v6151 = vadd.f32 0.0, %v6150
      %6152 = vdwg.mxu0
      %v6153 = vadd.f32 %v5947, %v6064
      %v6154 = vadd.f32 %v5948, %v6066
      %v6155 = vadd.f32 %v5949, %v6069
      %v6156 = vadd.f32 %v5950, %v6071
      %v6157 = vadd.f32 %v5951, %v6074
      %v6158 = vadd.f32 %v5952, %v6076
      %v6159 = vadd.f32 %v5953, %v6079
      %v6160 = vadd.f32 %v5954, %v6081
      %v6161 = vadd.f32 %v5955, %v6084
      %v6162 = vadd.f32 %v5956, %v6086
      %v6163 = vadd.f32 %v5957, %v6089
      %v6164 = vadd.f32 %v5958, %v6091
      %v6165 = vadd.f32 %v5959, %v6094
      %v6166 = vadd.f32 %v5960, %v6096
      %v6167 = vadd.f32 %v5961, %v6099
      %v6168 = vadd.f32 %v5962, %v6101
      %v6169 = vadd.f32 %v5963, %v6104
      %v6170 = vadd.f32 %v5964, %v6106
      %v6171 = vadd.f32 %v5965, %v6109
      %v6172 = vadd.f32 %v5966, %v6111
      %v6173 = vadd.f32 %v5967, %v6114
      %v6174 = vadd.f32 %v5968, %v6116
      %v6175 = vadd.f32 %v5969, %v6119
      %v6176 = vadd.f32 %v5970, %v6121
      %v6177 = vadd.f32 %v5971, %v6124
      %v6178 = vadd.f32 %v5972, %v6126
      %v6179 = vadd.f32 %v5973, %v6129
      %v6180 = vadd.f32 %v5974, %v6131
      %v6181 = vadd.f32 %v5975, %v6134
      %v6182 = vadd.f32 %v5976, %v6136
      %v6183 = vadd.f32 %v5977, %v6139
      %v6184 = vadd.f32 %v5978, %v6141
      %v6185 = vadd.f32 %v5979, %v6144
      %v6186 = vadd.f32 %v5980, %v6146
      %v6187 = vadd.f32 %v5981, %v6149
      %v6188 = vadd.f32 %v5982, %v6151
      %6189 = vst.msk [vmem:[%s224] sm:$0xff] %vm357, %v6153
      %6190 = vst.msk [vmem:[%s224 + $0x8] sm:$0xff] %vm357, %v6154
      %6191 = vst.msk [vmem:[%s224 + $0x10] sm:$0xff] %vm357, %v6155
      %6192 = vst.msk [vmem:[%s224 + $0x18] sm:$0xff] %vm357, %v6156
      %6193 = vst.msk [vmem:[%s224 + $0x20] sm:$0xff] %vm357, %v6157
      %6194 = vst.msk [vmem:[%s224 + $0x28] sm:$0xff] %vm357, %v6158
      %6195 = vst.msk [vmem:[%s224 + $0x30] sm:$0xff] %vm357, %v6159
      %6196 = vst.msk [vmem:[%s224 + $0x38] sm:$0xff] %vm357, %v6160
      %6197 = vst.msk [vmem:[%s224 + $0x40] sm:$0xff] %vm357, %v6161
      %6198 = vst.msk [vmem:[%s224 + $0x48] sm:$0xff] %vm357, %v6162
      %6199 = vst.msk [vmem:[%s224 + $0x50] sm:$0xff] %vm357, %v6163
      %6200 = vst.msk [vmem:[%s224 + $0x58] sm:$0xff] %vm357, %v6164
      %6201 = vst.msk [vmem:[%s224 + $0x60] sm:$0xff] %vm357, %v6165
      %6202 = vst.msk [vmem:[%s224 + $0x68] sm:$0xff] %vm357, %v6166
      %6203 = vst.msk [vmem:[%s224 + $0x70] sm:$0xff] %vm357, %v6167
      %6204 = vst.msk [vmem:[%s224 + $0x78] sm:$0xff] %vm357, %v6168
      %6205 = vst.msk [vmem:[%s224 + $0x80] sm:$0xff] %vm357, %v6169
      %6206 = vst.msk [vmem:[%s224 + $0x88] sm:$0xff] %vm357, %v6170
      %6207 = vst.msk [vmem:[%s224 + $0x90] sm:$0xff] %vm357, %v6171
      %6208 = vst.msk [vmem:[%s224 + $0x98] sm:$0xff] %vm357, %v6172
      %6209 = vst.msk [vmem:[%s224 + $0xa0] sm:$0xff] %vm357, %v6173
      %6210 = vst.msk [vmem:[%s224 + $0xa8] sm:$0xff] %vm357, %v6174
      %6211 = vst.msk [vmem:[%s224 + $0xb0] sm:$0xff] %vm357, %v6175
      %6212 = vst.msk [vmem:[%s224 + $0xb8] sm:$0xff] %vm357, %v6176
      %6213 = vst.msk [vmem:[%s224 + $0xc0] sm:$0xff] %vm357, %v6177
      %6214 = vst.msk [vmem:[%s224 + $0xc8] sm:$0xff] %vm357, %v6178
      %6215 = vst.msk [vmem:[%s224 + $0xd0] sm:$0xff] %vm357, %v6179
      %6216 = vst.msk [vmem:[%s224 + $0xd8] sm:$0xff] %vm357, %v6180
      %6217 = vst.msk [vmem:[%s224 + $0xe0] sm:$0xff] %vm357, %v6181
      %6218 = vst.msk [vmem:[%s224 + $0xe8] sm:$0xff] %vm357, %v6182
      %6219 = vst.msk [vmem:[%s224 + $0xf0] sm:$0xff] %vm357, %v6183
      %6220 = vst.msk [vmem:[%s224 + $0xf8] sm:$0xff] %vm357, %v6184
      %6221 = vst.msk [vmem:[%s224 + $0x100] sm:$0xff] %vm357, %v6185
      %6222 = vst.msk [vmem:[%s224 + $0x108] sm:$0xff] %vm357, %v6186
      %6223 = vst.msk [vmem:[%s224 + $0x110] sm:$0xff] %vm357, %v6187
      %6224 = vst.msk [vmem:[%s224 + $0x118] sm:$0xff] %vm357, %v6188
      %v6225 = vld [vmem:[#allocation4 + $0x12] sm:$0xff]
      %v6226 = vld [vmem:[#allocation4 + $0x1a] sm:$0xff]
      %v6227 = vld [vmem:[#allocation4 + $0x22] sm:$0xff]
      %v6228 = vld [vmem:[#allocation4 + $0x2a] sm:$0xff]
      %v6229 = vld [vmem:[#allocation4 + $0x32] sm:$0xff]
      %v6230 = vld [vmem:[#allocation4 + $0x3a] sm:$0xff]
      %v6231 = vld [vmem:[#allocation4 + $0x42] sm:$0xff]
      %v6232 = vld [vmem:[#allocation4 + $0x4a] sm:$0xff]
      %v6233 = vld [vmem:[#allocation4 + $0x52] sm:$0xff]
      %v6234 = vld [vmem:[#allocation4 + $0x5a] sm:$0xff]
      %v6235 = vld [vmem:[#allocation4 + $0x62] sm:$0xff]
      %v6236 = vld [vmem:[#allocation4 + $0x6a] sm:$0xff]
      %v6237 = vld [vmem:[#allocation4 + $0x72] sm:$0xff]
      %v6238 = vld [vmem:[#allocation4 + $0x7a] sm:$0xff]
      %v6239 = vld [vmem:[#allocation4 + $0x82] sm:$0xff]
      %v6240 = vld [vmem:[#allocation4 + $0x8a] sm:$0xff]
      %v6241 = vld [vmem:[#allocation4 + $0x92] sm:$0xff]
      %v6242 = vld [vmem:[#allocation4 + $0x9a] sm:$0xff]
      %v6243 = vld [vmem:[#allocation4 + $0xa2] sm:$0xff]
      %v6244 = vld [vmem:[#allocation4 + $0xaa] sm:$0xff]
      %v6245 = vld [vmem:[#allocation4 + $0xb2] sm:$0xff]
      %v6246 = vld [vmem:[#allocation4 + $0xba] sm:$0xff]
      %v6247 = vld [vmem:[#allocation4 + $0xc2] sm:$0xff]
      %v6248 = vld [vmem:[#allocation4 + $0xca] sm:$0xff]
      %v6249 = vld [vmem:[#allocation4 + $0xd2] sm:$0xff]
      %v6250 = vld [vmem:[#allocation4 + $0xda] sm:$0xff]
      %v6251 = vld [vmem:[#allocation4 + $0xe2] sm:$0xff]
      %v6252 = vld [vmem:[#allocation4 + $0xea] sm:$0xff]
      %v6253 = vld [vmem:[#allocation4 + $0xf2] sm:$0xff]
      %v6254 = vld [vmem:[#allocation4 + $0xfa] sm:$0xff]
      %v6255 = vld [vmem:[#allocation4 + $0x102] sm:$0xff]
      %v6256 = vld [vmem:[#allocation4 + $0x10a] sm:$0xff]
      %v6257 = vld [vmem:[#allocation4 + $0x112] sm:$0xff]
      %v6258 = vld [vmem:[#allocation4 + $0x11a] sm:$0xff]
      %v6259 = vld [vmem:[#allocation4 + $0x122] sm:$0xff]
      %v6260 = vld [vmem:[#allocation4 + $0x12a] sm:$0xff]
      %v6261 = vpack.c.bf16 %v6226, %v6225
      %v6262 = vpack.c.bf16 %v6228, %v6227
      %v6263 = vpack.c.bf16 %v6230, %v6229
      %v6264 = vpack.c.bf16 %v6232, %v6231
      %v6265 = vpack.c.bf16 %v6234, %v6233
      %v6266 = vpack.c.bf16 %v6236, %v6235
      %v6267 = vpack.c.bf16 %v6238, %v6237
      %v6268 = vpack.c.bf16 %v6240, %v6239
      %v6269 = vpack.c.bf16 %v6242, %v6241
      %v6270 = vpack.c.bf16 %v6244, %v6243
      %v6271 = vpack.c.bf16 %v6246, %v6245
      %v6272 = vpack.c.bf16 %v6248, %v6247
      %v6273 = vpack.c.bf16 %v6250, %v6249
      %v6274 = vpack.c.bf16 %v6252, %v6251
      %v6275 = vpack.c.bf16 %v6254, %v6253
      %v6276 = vpack.c.bf16 %v6256, %v6255
      %v6277 = vpack.c.bf16 %v6258, %v6257
      %v6278 = vpack.c.bf16 %v6260, %v6259
      %v6279 = vld [vmem:[%s224] sm:$0xff]
      %v6280 = vld [vmem:[%s224 + $0x8] sm:$0xff]
      %v6281 = vld [vmem:[%s224 + $0x10] sm:$0xff]
      %v6282 = vld [vmem:[%s224 + $0x18] sm:$0xff]
      %v6283 = vld [vmem:[%s224 + $0x20] sm:$0xff]
      %v6284 = vld [vmem:[%s224 + $0x28] sm:$0xff]
      %v6285 = vld [vmem:[%s224 + $0x30] sm:$0xff]
      %v6286 = vld [vmem:[%s224 + $0x38] sm:$0xff]
      %v6287 = vld [vmem:[%s224 + $0x40] sm:$0xff]
      %v6288 = vld [vmem:[%s224 + $0x48] sm:$0xff]
      %v6289 = vld [vmem:[%s224 + $0x50] sm:$0xff]
      %v6290 = vld [vmem:[%s224 + $0x58] sm:$0xff]
      %v6291 = vld [vmem:[%s224 + $0x60] sm:$0xff]
      %v6292 = vld [vmem:[%s224 + $0x68] sm:$0xff]
      %v6293 = vld [vmem:[%s224 + $0x70] sm:$0xff]
      %v6294 = vld [vmem:[%s224 + $0x78] sm:$0xff]
      %v6295 = vld [vmem:[%s224 + $0x80] sm:$0xff]
      %v6296 = vld [vmem:[%s224 + $0x88] sm:$0xff]
      %v6297 = vld [vmem:[%s224 + $0x90] sm:$0xff]
      %v6298 = vld [vmem:[%s224 + $0x98] sm:$0xff]
      %v6299 = vld [vmem:[%s224 + $0xa0] sm:$0xff]
      %v6300 = vld [vmem:[%s224 + $0xa8] sm:$0xff]
      %v6301 = vld [vmem:[%s224 + $0xb0] sm:$0xff]
      %v6302 = vld [vmem:[%s224 + $0xb8] sm:$0xff]
      %v6303 = vld [vmem:[%s224 + $0xc0] sm:$0xff]
      %v6304 = vld [vmem:[%s224 + $0xc8] sm:$0xff]
      %v6305 = vld [vmem:[%s224 + $0xd0] sm:$0xff]
      %v6306 = vld [vmem:[%s224 + $0xd8] sm:$0xff]
      %v6307 = vld [vmem:[%s224 + $0xe0] sm:$0xff]
      %v6308 = vld [vmem:[%s224 + $0xe8] sm:$0xff]
      %v6309 = vld [vmem:[%s224 + $0xf0] sm:$0xff]
      %v6310 = vld [vmem:[%s224 + $0xf8] sm:$0xff]
      %v6311 = vld [vmem:[%s224 + $0x100] sm:$0xff]
      %v6312 = vld [vmem:[%s224 + $0x108] sm:$0xff]
      %v6313 = vld [vmem:[%s224 + $0x110] sm:$0xff]
      %v6314 = vld [vmem:[%s224 + $0x118] sm:$0xff]
      %s6315 = scalar_lea.vmem %s3, 48
      %v6316 = vld [vmem:[%s6315] sm:$0xf]
      %v6317 = vld [vmem:[%s6315 + $0x4] sm:$0xf]
      %v6318 = vld [vmem:[%s6315 + $0x8] sm:$0xf]
      %v6319 = vld [vmem:[%s6315 + $0xc] sm:$0xf]
      %v6324 = vunpack.c.l.b16 %v6316
      %v6325 = vunpack.c.l.b16 %v6317
      %v6326 = vunpack.c.l.b16 %v6318
      %v6327 = vunpack.c.l.b16 %v6319
      %v6328 = vpack.c.b16 %v6325, %v6324
      %v6329 = vpack.c.b16 %v6327, %v6326
      %v6333 = vsel %vm357, %v6261, 0
      %v6336 = vsel %vm357, %v6262, 0
      %v6339 = vsel %vm357, %v6263, 0
      %v6342 = vsel %vm357, %v6264, 0
      %v6345 = vsel %vm357, %v6265, 0
      %v6348 = vsel %vm357, %v6266, 0
      %v6351 = vsel %vm357, %v6267, 0
      %v6354 = vsel %vm357, %v6268, 0
      %v6357 = vsel %vm357, %v6269, 0
      %v6360 = vsel %vm357, %v6270, 0
      %v6363 = vsel %vm357, %v6271, 0
      %v6366 = vsel %vm357, %v6272, 0
      %v6369 = vsel %vm357, %v6273, 0
      %v6372 = vsel %vm357, %v6274, 0
      %v6375 = vsel %vm357, %v6275, 0
      %v6378 = vsel %vm357, %v6276, 0
      %v6381 = vsel %vm357, %v6277, 0
      %v6384 = vsel %vm357, %v6278, 0
      %6386 = vmatpush.bf16.msra.mxu0 0
      %6387 = vmatpush.bf16.msra.mxu0 0
      %6388 = vmatpush.bf16.msra.mxu0 0
      %6389 = vmatpush.bf16.msra.mxu0 0
      %6390 = vmatpush.bf16.msra.mxu0 0
      %6391 = vmatpush.bf16.msra.mxu0 0
      %6392 = vmatpush.bf16.msra.mxu0 %v6329
      %6393 = vmatpush.bf16.msra.mxu0 %v6328
      %6394 = vmatmul.bf16.gmra.mxu0 %v6333
      %v6395 = vpop.f32.mrf.mxu0
      %v6396 = vadd.f32 0.0, %v6395
      %v6397 = vpop.f32.mrf.mxu0
      %v6398 = vadd.f32 0.0, %v6397
      %6399 = vmatmul.bf16.gmra.mxu0 %v6336
      %v6400 = vpop.f32.mrf.mxu0
      %v6401 = vadd.f32 0.0, %v6400
      %v6402 = vpop.f32.mrf.mxu0
      %v6403 = vadd.f32 0.0, %v6402
      %6404 = vmatmul.bf16.gmra.mxu0 %v6339
      %v6405 = vpop.f32.mrf.mxu0
      %v6406 = vadd.f32 0.0, %v6405
      %v6407 = vpop.f32.mrf.mxu0
      %v6408 = vadd.f32 0.0, %v6407
      %6409 = vmatmul.bf16.gmra.mxu0 %v6342
      %v6410 = vpop.f32.mrf.mxu0
      %v6411 = vadd.f32 0.0, %v6410
      %v6412 = vpop.f32.mrf.mxu0
      %v6413 = vadd.f32 0.0, %v6412
      %6414 = vmatmul.bf16.gmra.mxu0 %v6345
      %v6415 = vpop.f32.mrf.mxu0
      %v6416 = vadd.f32 0.0, %v6415
      %v6417 = vpop.f32.mrf.mxu0
      %v6418 = vadd.f32 0.0, %v6417
      %6419 = vmatmul.bf16.gmra.mxu0 %v6348
      %v6420 = vpop.f32.mrf.mxu0
      %v6421 = vadd.f32 0.0, %v6420
      %v6422 = vpop.f32.mrf.mxu0
      %v6423 = vadd.f32 0.0, %v6422
      %6424 = vmatmul.bf16.gmra.mxu0 %v6351
      %v6425 = vpop.f32.mrf.mxu0
      %v6426 = vadd.f32 0.0, %v6425
      %v6427 = vpop.f32.mrf.mxu0
      %v6428 = vadd.f32 0.0, %v6427
      %6429 = vmatmul.bf16.gmra.mxu0 %v6354
      %v6430 = vpop.f32.mrf.mxu0
      %v6431 = vadd.f32 0.0, %v6430
      %v6432 = vpop.f32.mrf.mxu0
      %v6433 = vadd.f32 0.0, %v6432
      %6434 = vmatmul.bf16.gmra.mxu0 %v6357
      %v6435 = vpop.f32.mrf.mxu0
      %v6436 = vadd.f32 0.0, %v6435
      %v6437 = vpop.f32.mrf.mxu0
      %v6438 = vadd.f32 0.0, %v6437
      %6439 = vmatmul.bf16.gmra.mxu0 %v6360
      %v6440 = vpop.f32.mrf.mxu0
      %v6441 = vadd.f32 0.0, %v6440
      %v6442 = vpop.f32.mrf.mxu0
      %v6443 = vadd.f32 0.0, %v6442
      %6444 = vmatmul.bf16.gmra.mxu0 %v6363
      %v6445 = vpop.f32.mrf.mxu0
      %v6446 = vadd.f32 0.0, %v6445
      %v6447 = vpop.f32.mrf.mxu0
      %v6448 = vadd.f32 0.0, %v6447
      %6449 = vmatmul.bf16.gmra.mxu0 %v6366
      %v6450 = vpop.f32.mrf.mxu0
      %v6451 = vadd.f32 0.0, %v6450
      %v6452 = vpop.f32.mrf.mxu0
      %v6453 = vadd.f32 0.0, %v6452
      %6454 = vmatmul.bf16.gmra.mxu0 %v6369
      %v6455 = vpop.f32.mrf.mxu0
      %v6456 = vadd.f32 0.0, %v6455
      %v6457 = vpop.f32.mrf.mxu0
      %v6458 = vadd.f32 0.0, %v6457
      %6459 = vmatmul.bf16.gmra.mxu0 %v6372
      %v6460 = vpop.f32.mrf.mxu0
      %v6461 = vadd.f32 0.0, %v6460
      %v6462 = vpop.f32.mrf.mxu0
      %v6463 = vadd.f32 0.0, %v6462
      %6464 = vmatmul.bf16.gmra.mxu0 %v6375
      %v6465 = vpop.f32.mrf.mxu0
      %v6466 = vadd.f32 0.0, %v6465
      %v6467 = vpop.f32.mrf.mxu0
      %v6468 = vadd.f32 0.0, %v6467
      %6469 = vmatmul.bf16.gmra.mxu0 %v6378
      %v6470 = vpop.f32.mrf.mxu0
      %v6471 = vadd.f32 0.0, %v6470
      %v6472 = vpop.f32.mrf.mxu0
      %v6473 = vadd.f32 0.0, %v6472
      %6474 = vmatmul.bf16.gmra.mxu0 %v6381
      %v6475 = vpop.f32.mrf.mxu0
      %v6476 = vadd.f32 0.0, %v6475
      %v6477 = vpop.f32.mrf.mxu0
      %v6478 = vadd.f32 0.0, %v6477
      %6479 = vmatmul.bf16.gmra.mxu0 %v6384
      %v6480 = vpop.f32.mrf.mxu0
      %v6481 = vadd.f32 0.0, %v6480
      %v6482 = vpop.f32.mrf.mxu0
      %v6483 = vadd.f32 0.0, %v6482
      %6484 = vdwg.mxu0
      %v6485 = vadd.f32 %v6279, %v6396
      %v6486 = vadd.f32 %v6280, %v6398
      %v6487 = vadd.f32 %v6281, %v6401
      %v6488 = vadd.f32 %v6282, %v6403
      %v6489 = vadd.f32 %v6283, %v6406
      %v6490 = vadd.f32 %v6284, %v6408
      %v6491 = vadd.f32 %v6285, %v6411
      %v6492 = vadd.f32 %v6286, %v6413
      %v6493 = vadd.f32 %v6287, %v6416
      %v6494 = vadd.f32 %v6288, %v6418
      %v6495 = vadd.f32 %v6289, %v6421
      %v6496 = vadd.f32 %v6290, %v6423
      %v6497 = vadd.f32 %v6291, %v6426
      %v6498 = vadd.f32 %v6292, %v6428
      %v6499 = vadd.f32 %v6293, %v6431
      %v6500 = vadd.f32 %v6294, %v6433
      %v6501 = vadd.f32 %v6295, %v6436
      %v6502 = vadd.f32 %v6296, %v6438
      %v6503 = vadd.f32 %v6297, %v6441
      %v6504 = vadd.f32 %v6298, %v6443
      %v6505 = vadd.f32 %v6299, %v6446
      %v6506 = vadd.f32 %v6300, %v6448
      %v6507 = vadd.f32 %v6301, %v6451
      %v6508 = vadd.f32 %v6302, %v6453
      %v6509 = vadd.f32 %v6303, %v6456
      %v6510 = vadd.f32 %v6304, %v6458
      %v6511 = vadd.f32 %v6305, %v6461
      %v6512 = vadd.f32 %v6306, %v6463
      %v6513 = vadd.f32 %v6307, %v6466
      %v6514 = vadd.f32 %v6308, %v6468
      %v6515 = vadd.f32 %v6309, %v6471
      %v6516 = vadd.f32 %v6310, %v6473
      %v6517 = vadd.f32 %v6311, %v6476
      %v6518 = vadd.f32 %v6312, %v6478
      %v6519 = vadd.f32 %v6313, %v6481
      %v6520 = vadd.f32 %v6314, %v6483
      %6521 = vst.msk [vmem:[%s224] sm:$0xff] %vm357, %v6485
      %6522 = vst.msk [vmem:[%s224 + $0x8] sm:$0xff] %vm357, %v6486
      %6523 = vst.msk [vmem:[%s224 + $0x10] sm:$0xff] %vm357, %v6487
      %6524 = vst.msk [vmem:[%s224 + $0x18] sm:$0xff] %vm357, %v6488
      %6525 = vst.msk [vmem:[%s224 + $0x20] sm:$0xff] %vm357, %v6489
      %6526 = vst.msk [vmem:[%s224 + $0x28] sm:$0xff] %vm357, %v6490
      %6527 = vst.msk [vmem:[%s224 + $0x30] sm:$0xff] %vm357, %v6491
      %6528 = vst.msk [vmem:[%s224 + $0x38] sm:$0xff] %vm357, %v6492
      %6529 = vst.msk [vmem:[%s224 + $0x40] sm:$0xff] %vm357, %v6493
      %6530 = vst.msk [vmem:[%s224 + $0x48] sm:$0xff] %vm357, %v6494
      %6531 = vst.msk [vmem:[%s224 + $0x50] sm:$0xff] %vm357, %v6495
      %6532 = vst.msk [vmem:[%s224 + $0x58] sm:$0xff] %vm357, %v6496
      %6533 = vst.msk [vmem:[%s224 + $0x60] sm:$0xff] %vm357, %v6497
      %6534 = vst.msk [vmem:[%s224 + $0x68] sm:$0xff] %vm357, %v6498
      %6535 = vst.msk [vmem:[%s224 + $0x70] sm:$0xff] %vm357, %v6499
      %6536 = vst.msk [vmem:[%s224 + $0x78] sm:$0xff] %vm357, %v6500
      %6537 = vst.msk [vmem:[%s224 + $0x80] sm:$0xff] %vm357, %v6501
      %6538 = vst.msk [vmem:[%s224 + $0x88] sm:$0xff] %vm357, %v6502
      %6539 = vst.msk [vmem:[%s224 + $0x90] sm:$0xff] %vm357, %v6503
      %6540 = vst.msk [vmem:[%s224 + $0x98] sm:$0xff] %vm357, %v6504
      %6541 = vst.msk [vmem:[%s224 + $0xa0] sm:$0xff] %vm357, %v6505
      %6542 = vst.msk [vmem:[%s224 + $0xa8] sm:$0xff] %vm357, %v6506
      %6543 = vst.msk [vmem:[%s224 + $0xb0] sm:$0xff] %vm357, %v6507
      %6544 = vst.msk [vmem:[%s224 + $0xb8] sm:$0xff] %vm357, %v6508
      %6545 = vst.msk [vmem:[%s224 + $0xc0] sm:$0xff] %vm357, %v6509
      %6546 = vst.msk [vmem:[%s224 + $0xc8] sm:$0xff] %vm357, %v6510
      %6547 = vst.msk [vmem:[%s224 + $0xd0] sm:$0xff] %vm357, %v6511
      %6548 = vst.msk [vmem:[%s224 + $0xd8] sm:$0xff] %vm357, %v6512
      %6549 = vst.msk [vmem:[%s224 + $0xe0] sm:$0xff] %vm357, %v6513
      %6550 = vst.msk [vmem:[%s224 + $0xe8] sm:$0xff] %vm357, %v6514
      %6551 = vst.msk [vmem:[%s224 + $0xf0] sm:$0xff] %vm357, %v6515
      %6552 = vst.msk [vmem:[%s224 + $0xf8] sm:$0xff] %vm357, %v6516
      %6553 = vst.msk [vmem:[%s224 + $0x100] sm:$0xff] %vm357, %v6517
      %6554 = vst.msk [vmem:[%s224 + $0x108] sm:$0xff] %vm357, %v6518
      %6555 = vst.msk [vmem:[%s224 + $0x110] sm:$0xff] %vm357, %v6519
      %6556 = vst.msk [vmem:[%s224 + $0x118] sm:$0xff] %vm357, %v6520
      %v6557 = vld [vmem:[#allocation4 + $0x13] sm:$0xff]
      %v6558 = vld [vmem:[#allocation4 + $0x1b] sm:$0xff]
      %v6559 = vld [vmem:[#allocation4 + $0x23] sm:$0xff]
      %v6560 = vld [vmem:[#allocation4 + $0x2b] sm:$0xff]
      %v6561 = vld [vmem:[#allocation4 + $0x33] sm:$0xff]
      %v6562 = vld [vmem:[#allocation4 + $0x3b] sm:$0xff]
      %v6563 = vld [vmem:[#allocation4 + $0x43] sm:$0xff]
      %v6564 = vld [vmem:[#allocation4 + $0x4b] sm:$0xff]
      %v6565 = vld [vmem:[#allocation4 + $0x53] sm:$0xff]
      %v6566 = vld [vmem:[#allocation4 + $0x5b] sm:$0xff]
      %v6567 = vld [vmem:[#allocation4 + $0x63] sm:$0xff]
      %v6568 = vld [vmem:[#allocation4 + $0x6b] sm:$0xff]
      %v6569 = vld [vmem:[#allocation4 + $0x73] sm:$0xff]
      %v6570 = vld [vmem:[#allocation4 + $0x7b] sm:$0xff]
      %v6571 = vld [vmem:[#allocation4 + $0x83] sm:$0xff]
      %v6572 = vld [vmem:[#allocation4 + $0x8b] sm:$0xff]
      %v6573 = vld [vmem:[#allocation4 + $0x93] sm:$0xff]
      %v6574 = vld [vmem:[#allocation4 + $0x9b] sm:$0xff]
      %v6575 = vld [vmem:[#allocation4 + $0xa3] sm:$0xff]
      %v6576 = vld [vmem:[#allocation4 + $0xab] sm:$0xff]
      %v6577 = vld [vmem:[#allocation4 + $0xb3] sm:$0xff]
      %v6578 = vld [vmem:[#allocation4 + $0xbb] sm:$0xff]
      %v6579 = vld [vmem:[#allocation4 + $0xc3] sm:$0xff]
      %v6580 = vld [vmem:[#allocation4 + $0xcb] sm:$0xff]
      %v6581 = vld [vmem:[#allocation4 + $0xd3] sm:$0xff]
      %v6582 = vld [vmem:[#allocation4 + $0xdb] sm:$0xff]
      %v6583 = vld [vmem:[#allocation4 + $0xe3] sm:$0xff]
      %v6584 = vld [vmem:[#allocation4 + $0xeb] sm:$0xff]
      %v6585 = vld [vmem:[#allocation4 + $0xf3] sm:$0xff]
      %v6586 = vld [vmem:[#allocation4 + $0xfb] sm:$0xff]
      %v6587 = vld [vmem:[#allocation4 + $0x103] sm:$0xff]
      %v6588 = vld [vmem:[#allocation4 + $0x10b] sm:$0xff]
      %v6589 = vld [vmem:[#allocation4 + $0x113] sm:$0xff]
      %v6590 = vld [vmem:[#allocation4 + $0x11b] sm:$0xff]
      %v6591 = vld [vmem:[#allocation4 + $0x123] sm:$0xff]
      %v6592 = vld [vmem:[#allocation4 + $0x12b] sm:$0xff]
      %v6593 = vpack.c.bf16 %v6558, %v6557
      %v6594 = vpack.c.bf16 %v6560, %v6559
      %v6595 = vpack.c.bf16 %v6562, %v6561
      %v6596 = vpack.c.bf16 %v6564, %v6563
      %v6597 = vpack.c.bf16 %v6566, %v6565
      %v6598 = vpack.c.bf16 %v6568, %v6567
      %v6599 = vpack.c.bf16 %v6570, %v6569
      %v6600 = vpack.c.bf16 %v6572, %v6571
      %v6601 = vpack.c.bf16 %v6574, %v6573
      %v6602 = vpack.c.bf16 %v6576, %v6575
      %v6603 = vpack.c.bf16 %v6578, %v6577
      %v6604 = vpack.c.bf16 %v6580, %v6579
      %v6605 = vpack.c.bf16 %v6582, %v6581
      %v6606 = vpack.c.bf16 %v6584, %v6583
      %v6607 = vpack.c.bf16 %v6586, %v6585
      %v6608 = vpack.c.bf16 %v6588, %v6587
      %v6609 = vpack.c.bf16 %v6590, %v6589
      %v6610 = vpack.c.bf16 %v6592, %v6591
      %v6611 = vld [vmem:[%s224] sm:$0xff]
      %v6612 = vld [vmem:[%s224 + $0x8] sm:$0xff]
      %v6613 = vld [vmem:[%s224 + $0x10] sm:$0xff]
      %v6614 = vld [vmem:[%s224 + $0x18] sm:$0xff]
      %v6615 = vld [vmem:[%s224 + $0x20] sm:$0xff]
      %v6616 = vld [vmem:[%s224 + $0x28] sm:$0xff]
      %v6617 = vld [vmem:[%s224 + $0x30] sm:$0xff]
      %v6618 = vld [vmem:[%s224 + $0x38] sm:$0xff]
      %v6619 = vld [vmem:[%s224 + $0x40] sm:$0xff]
      %v6620 = vld [vmem:[%s224 + $0x48] sm:$0xff]
      %v6621 = vld [vmem:[%s224 + $0x50] sm:$0xff]
      %v6622 = vld [vmem:[%s224 + $0x58] sm:$0xff]
      %v6623 = vld [vmem:[%s224 + $0x60] sm:$0xff]
      %v6624 = vld [vmem:[%s224 + $0x68] sm:$0xff]
      %v6625 = vld [vmem:[%s224 + $0x70] sm:$0xff]
      %v6626 = vld [vmem:[%s224 + $0x78] sm:$0xff]
      %v6627 = vld [vmem:[%s224 + $0x80] sm:$0xff]
      %v6628 = vld [vmem:[%s224 + $0x88] sm:$0xff]
      %v6629 = vld [vmem:[%s224 + $0x90] sm:$0xff]
      %v6630 = vld [vmem:[%s224 + $0x98] sm:$0xff]
      %v6631 = vld [vmem:[%s224 + $0xa0] sm:$0xff]
      %v6632 = vld [vmem:[%s224 + $0xa8] sm:$0xff]
      %v6633 = vld [vmem:[%s224 + $0xb0] sm:$0xff]
      %v6634 = vld [vmem:[%s224 + $0xb8] sm:$0xff]
      %v6635 = vld [vmem:[%s224 + $0xc0] sm:$0xff]
      %v6636 = vld [vmem:[%s224 + $0xc8] sm:$0xff]
      %v6637 = vld [vmem:[%s224 + $0xd0] sm:$0xff]
      %v6638 = vld [vmem:[%s224 + $0xd8] sm:$0xff]
      %v6639 = vld [vmem:[%s224 + $0xe0] sm:$0xff]
      %v6640 = vld [vmem:[%s224 + $0xe8] sm:$0xff]
      %v6641 = vld [vmem:[%s224 + $0xf0] sm:$0xff]
      %v6642 = vld [vmem:[%s224 + $0xf8] sm:$0xff]
      %v6643 = vld [vmem:[%s224 + $0x100] sm:$0xff]
      %v6644 = vld [vmem:[%s224 + $0x108] sm:$0xff]
      %v6645 = vld [vmem:[%s224 + $0x110] sm:$0xff]
      %v6646 = vld [vmem:[%s224 + $0x118] sm:$0xff]
      %s6647 = scalar_lea.vmem %s3, 64
      %v6648 = vld [vmem:[%s6647] sm:$0xf]
      %v6649 = vld [vmem:[%s6647 + $0x4] sm:$0xf]
      %v6650 = vld [vmem:[%s6647 + $0x8] sm:$0xf]
      %v6651 = vld [vmem:[%s6647 + $0xc] sm:$0xf]
      %v6656 = vunpack.c.l.b16 %v6648
      %v6657 = vunpack.c.l.b16 %v6649
      %v6658 = vunpack.c.l.b16 %v6650
      %v6659 = vunpack.c.l.b16 %v6651
      %v6660 = vpack.c.b16 %v6657, %v6656
      %v6661 = vpack.c.b16 %v6659, %v6658
      %v6665 = vsel %vm357, %v6593, 0
      %v6668 = vsel %vm357, %v6594, 0
      %v6671 = vsel %vm357, %v6595, 0
      %v6674 = vsel %vm357, %v6596, 0
      %v6677 = vsel %vm357, %v6597, 0
      %v6680 = vsel %vm357, %v6598, 0
      %v6683 = vsel %vm357, %v6599, 0
      %v6686 = vsel %vm357, %v6600, 0
      %v6689 = vsel %vm357, %v6601, 0
      %v6692 = vsel %vm357, %v6602, 0
      %v6695 = vsel %vm357, %v6603, 0
      %v6698 = vsel %vm357, %v6604, 0
      %v6701 = vsel %vm357, %v6605, 0
      %v6704 = vsel %vm357, %v6606, 0
      %v6707 = vsel %vm357, %v6607, 0
      %v6710 = vsel %vm357, %v6608, 0
      %v6713 = vsel %vm357, %v6609, 0
      %v6716 = vsel %vm357, %v6610, 0
      %6718 = vmatpush.bf16.msra.mxu0 0
      %6719 = vmatpush.bf16.msra.mxu0 0
      %6720 = vmatpush.bf16.msra.mxu0 0
      %6721 = vmatpush.bf16.msra.mxu0 0
      %6722 = vmatpush.bf16.msra.mxu0 0
      %6723 = vmatpush.bf16.msra.mxu0 0
      %6724 = vmatpush.bf16.msra.mxu0 %v6661
      %6725 = vmatpush.bf16.msra.mxu0 %v6660
      %6726 = vmatmul.bf16.gmra.mxu0 %v6665
      %v6727 = vpop.f32.mrf.mxu0
      %v6728 = vadd.f32 0.0, %v6727
      %v6729 = vpop.f32.mrf.mxu0
      %v6730 = vadd.f32 0.0, %v6729
      %6731 = vmatmul.bf16.gmra.mxu0 %v6668
      %v6732 = vpop.f32.mrf.mxu0
      %v6733 = vadd.f32 0.0, %v6732
      %v6734 = vpop.f32.mrf.mxu0
      %v6735 = vadd.f32 0.0, %v6734
      %6736 = vmatmul.bf16.gmra.mxu0 %v6671
      %v6737 = vpop.f32.mrf.mxu0
      %v6738 = vadd.f32 0.0, %v6737
      %v6739 = vpop.f32.mrf.mxu0
      %v6740 = vadd.f32 0.0, %v6739
      %6741 = vmatmul.bf16.gmra.mxu0 %v6674
      %v6742 = vpop.f32.mrf.mxu0
      %v6743 = vadd.f32 0.0, %v6742
      %v6744 = vpop.f32.mrf.mxu0
      %v6745 = vadd.f32 0.0, %v6744
      %6746 = vmatmul.bf16.gmra.mxu0 %v6677
      %v6747 = vpop.f32.mrf.mxu0
      %v6748 = vadd.f32 0.0, %v6747
      %v6749 = vpop.f32.mrf.mxu0
      %v6750 = vadd.f32 0.0, %v6749
      %6751 = vmatmul.bf16.gmra.mxu0 %v6680
      %v6752 = vpop.f32.mrf.mxu0
      %v6753 = vadd.f32 0.0, %v6752
      %v6754 = vpop.f32.mrf.mxu0
      %v6755 = vadd.f32 0.0, %v6754
      %6756 = vmatmul.bf16.gmra.mxu0 %v6683
      %v6757 = vpop.f32.mrf.mxu0
      %v6758 = vadd.f32 0.0, %v6757
      %v6759 = vpop.f32.mrf.mxu0
      %v6760 = vadd.f32 0.0, %v6759
      %6761 = vmatmul.bf16.gmra.mxu0 %v6686
      %v6762 = vpop.f32.mrf.mxu0
      %v6763 = vadd.f32 0.0, %v6762
      %v6764 = vpop.f32.mrf.mxu0
      %v6765 = vadd.f32 0.0, %v6764
      %6766 = vmatmul.bf16.gmra.mxu0 %v6689
      %v6767 = vpop.f32.mrf.mxu0
      %v6768 = vadd.f32 0.0, %v6767
      %v6769 = vpop.f32.mrf.mxu0
      %v6770 = vadd.f32 0.0, %v6769
      %6771 = vmatmul.bf16.gmra.mxu0 %v6692
      %v6772 = vpop.f32.mrf.mxu0
      %v6773 = vadd.f32 0.0, %v6772
      %v6774 = vpop.f32.mrf.mxu0
      %v6775 = vadd.f32 0.0, %v6774
      %6776 = vmatmul.bf16.gmra.mxu0 %v6695
      %v6777 = vpop.f32.mrf.mxu0
      %v6778 = vadd.f32 0.0, %v6777
      %v6779 = vpop.f32.mrf.mxu0
      %v6780 = vadd.f32 0.0, %v6779
      %6781 = vmatmul.bf16.gmra.mxu0 %v6698
      %v6782 = vpop.f32.mrf.mxu0
      %v6783 = vadd.f32 0.0, %v6782
      %v6784 = vpop.f32.mrf.mxu0
      %v6785 = vadd.f32 0.0, %v6784
      %6786 = vmatmul.bf16.gmra.mxu0 %v6701
      %v6787 = vpop.f32.mrf.mxu0
      %v6788 = vadd.f32 0.0, %v6787
      %v6789 = vpop.f32.mrf.mxu0
      %v6790 = vadd.f32 0.0, %v6789
      %6791 = vmatmul.bf16.gmra.mxu0 %v6704
      %v6792 = vpop.f32.mrf.mxu0
      %v6793 = vadd.f32 0.0, %v6792
      %v6794 = vpop.f32.mrf.mxu0
      %v6795 = vadd.f32 0.0, %v6794
      %6796 = vmatmul.bf16.gmra.mxu0 %v6707
      %v6797 = vpop.f32.mrf.mxu0
      %v6798 = vadd.f32 0.0, %v6797
      %v6799 = vpop.f32.mrf.mxu0
      %v6800 = vadd.f32 0.0, %v6799
      %6801 = vmatmul.bf16.gmra.mxu0 %v6710
      %v6802 = vpop.f32.mrf.mxu0
      %v6803 = vadd.f32 0.0, %v6802
      %v6804 = vpop.f32.mrf.mxu0
      %v6805 = vadd.f32 0.0, %v6804
      %6806 = vmatmul.bf16.gmra.mxu0 %v6713
      %v6807 = vpop.f32.mrf.mxu0
      %v6808 = vadd.f32 0.0, %v6807
      %v6809 = vpop.f32.mrf.mxu0
      %v6810 = vadd.f32 0.0, %v6809
      %6811 = vmatmul.bf16.gmra.mxu0 %v6716
      %v6812 = vpop.f32.mrf.mxu0
      %v6813 = vadd.f32 0.0, %v6812
      %v6814 = vpop.f32.mrf.mxu0
      %v6815 = vadd.f32 0.0, %v6814
      %6816 = vdwg.mxu0
      %v6817 = vadd.f32 %v6611, %v6728
      %v6818 = vadd.f32 %v6612, %v6730
      %v6819 = vadd.f32 %v6613, %v6733
      %v6820 = vadd.f32 %v6614, %v6735
      %v6821 = vadd.f32 %v6615, %v6738
      %v6822 = vadd.f32 %v6616, %v6740
      %v6823 = vadd.f32 %v6617, %v6743
      %v6824 = vadd.f32 %v6618, %v6745
      %v6825 = vadd.f32 %v6619, %v6748
      %v6826 = vadd.f32 %v6620, %v6750
      %v6827 = vadd.f32 %v6621, %v6753
      %v6828 = vadd.f32 %v6622, %v6755
      %v6829 = vadd.f32 %v6623, %v6758
      %v6830 = vadd.f32 %v6624, %v6760
      %v6831 = vadd.f32 %v6625, %v6763
      %v6832 = vadd.f32 %v6626, %v6765
      %v6833 = vadd.f32 %v6627, %v6768
      %v6834 = vadd.f32 %v6628, %v6770
      %v6835 = vadd.f32 %v6629, %v6773
      %v6836 = vadd.f32 %v6630, %v6775
      %v6837 = vadd.f32 %v6631, %v6778
      %v6838 = vadd.f32 %v6632, %v6780
      %v6839 = vadd.f32 %v6633, %v6783
      %v6840 = vadd.f32 %v6634, %v6785
      %v6841 = vadd.f32 %v6635, %v6788
      %v6842 = vadd.f32 %v6636, %v6790
      %v6843 = vadd.f32 %v6637, %v6793
      %v6844 = vadd.f32 %v6638, %v6795
      %v6845 = vadd.f32 %v6639, %v6798
      %v6846 = vadd.f32 %v6640, %v6800
      %v6847 = vadd.f32 %v6641, %v6803
      %v6848 = vadd.f32 %v6642, %v6805
      %v6849 = vadd.f32 %v6643, %v6808
      %v6850 = vadd.f32 %v6644, %v6810
      %v6851 = vadd.f32 %v6645, %v6813
      %v6852 = vadd.f32 %v6646, %v6815
      %6853 = vst.msk [vmem:[%s224] sm:$0xff] %vm357, %v6817
      %6854 = vst.msk [vmem:[%s224 + $0x8] sm:$0xff] %vm357, %v6818
      %6855 = vst.msk [vmem:[%s224 + $0x10] sm:$0xff] %vm357, %v6819
      %6856 = vst.msk [vmem:[%s224 + $0x18] sm:$0xff] %vm357, %v6820
      %6857 = vst.msk [vmem:[%s224 + $0x20] sm:$0xff] %vm357, %v6821
      %6858 = vst.msk [vmem:[%s224 + $0x28] sm:$0xff] %vm357, %v6822
      %6859 = vst.msk [vmem:[%s224 + $0x30] sm:$0xff] %vm357, %v6823
      %6860 = vst.msk [vmem:[%s224 + $0x38] sm:$0xff] %vm357, %v6824
      %6861 = vst.msk [vmem:[%s224 + $0x40] sm:$0xff] %vm357, %v6825
      %6862 = vst.msk [vmem:[%s224 + $0x48] sm:$0xff] %vm357, %v6826
      %6863 = vst.msk [vmem:[%s224 + $0x50] sm:$0xff] %vm357, %v6827
      %6864 = vst.msk [vmem:[%s224 + $0x58] sm:$0xff] %vm357, %v6828
      %6865 = vst.msk [vmem:[%s224 + $0x60] sm:$0xff] %vm357, %v6829
      %6866 = vst.msk [vmem:[%s224 + $0x68] sm:$0xff] %vm357, %v6830
      %6867 = vst.msk [vmem:[%s224 + $0x70] sm:$0xff] %vm357, %v6831
      %6868 = vst.msk [vmem:[%s224 + $0x78] sm:$0xff] %vm357, %v6832
      %6869 = vst.msk [vmem:[%s224 + $0x80] sm:$0xff] %vm357, %v6833
      %6870 = vst.msk [vmem:[%s224 + $0x88] sm:$0xff] %vm357, %v6834
      %6871 = vst.msk [vmem:[%s224 + $0x90] sm:$0xff] %vm357, %v6835
      %6872 = vst.msk [vmem:[%s224 + $0x98] sm:$0xff] %vm357, %v6836
      %6873 = vst.msk [vmem:[%s224 + $0xa0] sm:$0xff] %vm357, %v6837
      %6874 = vst.msk [vmem:[%s224 + $0xa8] sm:$0xff] %vm357, %v6838
      %6875 = vst.msk [vmem:[%s224 + $0xb0] sm:$0xff] %vm357, %v6839
      %6876 = vst.msk [vmem:[%s224 + $0xb8] sm:$0xff] %vm357, %v6840
      %6877 = vst.msk [vmem:[%s224 + $0xc0] sm:$0xff] %vm357, %v6841
      %6878 = vst.msk [vmem:[%s224 + $0xc8] sm:$0xff] %vm357, %v6842
      %6879 = vst.msk [vmem:[%s224 + $0xd0] sm:$0xff] %vm357, %v6843
      %6880 = vst.msk [vmem:[%s224 + $0xd8] sm:$0xff] %vm357, %v6844
      %6881 = vst.msk [vmem:[%s224 + $0xe0] sm:$0xff] %vm357, %v6845
      %6882 = vst.msk [vmem:[%s224 + $0xe8] sm:$0xff] %vm357, %v6846
      %6883 = vst.msk [vmem:[%s224 + $0xf0] sm:$0xff] %vm357, %v6847
      %6884 = vst.msk [vmem:[%s224 + $0xf8] sm:$0xff] %vm357, %v6848
      %6885 = vst.msk [vmem:[%s224 + $0x100] sm:$0xff] %vm357, %v6849
      %6886 = vst.msk [vmem:[%s224 + $0x108] sm:$0xff] %vm357, %v6850
      %6887 = vst.msk [vmem:[%s224 + $0x110] sm:$0xff] %vm357, %v6851
      %6888 = vst.msk [vmem:[%s224 + $0x118] sm:$0xff] %vm357, %v6852
      %v6889 = vld [vmem:[#allocation4 + $0x14] sm:$0xff]
      %v6890 = vld [vmem:[#allocation4 + $0x1c] sm:$0xff]
      %v6891 = vld [vmem:[#allocation4 + $0x24] sm:$0xff]
      %v6892 = vld [vmem:[#allocation4 + $0x2c] sm:$0xff]
      %v6893 = vld [vmem:[#allocation4 + $0x34] sm:$0xff]
      %v6894 = vld [vmem:[#allocation4 + $0x3c] sm:$0xff]
      %v6895 = vld [vmem:[#allocation4 + $0x44] sm:$0xff]
      %v6896 = vld [vmem:[#allocation4 + $0x4c] sm:$0xff]
      %v6897 = vld [vmem:[#allocation4 + $0x54] sm:$0xff]
      %v6898 = vld [vmem:[#allocation4 + $0x5c] sm:$0xff]
      %v6899 = vld [vmem:[#allocation4 + $0x64] sm:$0xff]
      %v6900 = vld [vmem:[#allocation4 + $0x6c] sm:$0xff]
      %v6901 = vld [vmem:[#allocation4 + $0x74] sm:$0xff]
      %v6902 = vld [vmem:[#allocation4 + $0x7c] sm:$0xff]
      %v6903 = vld [vmem:[#allocation4 + $0x84] sm:$0xff]
      %v6904 = vld [vmem:[#allocation4 + $0x8c] sm:$0xff]
      %v6905 = vld [vmem:[#allocation4 + $0x94] sm:$0xff]
      %v6906 = vld [vmem:[#allocation4 + $0x9c] sm:$0xff]
      %v6907 = vld [vmem:[#allocation4 + $0xa4] sm:$0xff]
      %v6908 = vld [vmem:[#allocation4 + $0xac] sm:$0xff]
      %v6909 = vld [vmem:[#allocation4 + $0xb4] sm:$0xff]
      %v6910 = vld [vmem:[#allocation4 + $0xbc] sm:$0xff]
      %v6911 = vld [vmem:[#allocation4 + $0xc4] sm:$0xff]
      %v6912 = vld [vmem:[#allocation4 + $0xcc] sm:$0xff]
      %v6913 = vld [vmem:[#allocation4 + $0xd4] sm:$0xff]
      %v6914 = vld [vmem:[#allocation4 + $0xdc] sm:$0xff]
      %v6915 = vld [vmem:[#allocation4 + $0xe4] sm:$0xff]
      %v6916 = vld [vmem:[#allocation4 + $0xec] sm:$0xff]
      %v6917 = vld [vmem:[#allocation4 + $0xf4] sm:$0xff]
      %v6918 = vld [vmem:[#allocation4 + $0xfc] sm:$0xff]
      %v6919 = vld [vmem:[#allocation4 + $0x104] sm:$0xff]
      %v6920 = vld [vmem:[#allocation4 + $0x10c] sm:$0xff]
      %v6921 = vld [vmem:[#allocation4 + $0x114] sm:$0xff]
      %v6922 = vld [vmem:[#allocation4 + $0x11c] sm:$0xff]
      %v6923 = vld [vmem:[#allocation4 + $0x124] sm:$0xff]
      %v6924 = vld [vmem:[#allocation4 + $0x12c] sm:$0xff]
      %v6925 = vpack.c.bf16 %v6890, %v6889
      %v6926 = vpack.c.bf16 %v6892, %v6891
      %v6927 = vpack.c.bf16 %v6894, %v6893
      %v6928 = vpack.c.bf16 %v6896, %v6895
      %v6929 = vpack.c.bf16 %v6898, %v6897
      %v6930 = vpack.c.bf16 %v6900, %v6899
      %v6931 = vpack.c.bf16 %v6902, %v6901
      %v6932 = vpack.c.bf16 %v6904, %v6903
      %v6933 = vpack.c.bf16 %v6906, %v6905
      %v6934 = vpack.c.bf16 %v6908, %v6907
      %v6935 = vpack.c.bf16 %v6910, %v6909
      %v6936 = vpack.c.bf16 %v6912, %v6911
      %v6937 = vpack.c.bf16 %v6914, %v6913
      %v6938 = vpack.c.bf16 %v6916, %v6915
      %v6939 = vpack.c.bf16 %v6918, %v6917
      %v6940 = vpack.c.bf16 %v6920, %v6919
      %v6941 = vpack.c.bf16 %v6922, %v6921
      %v6942 = vpack.c.bf16 %v6924, %v6923
      %v6943 = vld [vmem:[%s224] sm:$0xff]
      %v6944 = vld [vmem:[%s224 + $0x8] sm:$0xff]
      %v6945 = vld [vmem:[%s224 + $0x10] sm:$0xff]
      %v6946 = vld [vmem:[%s224 + $0x18] sm:$0xff]
      %v6947 = vld [vmem:[%s224 + $0x20] sm:$0xff]
      %v6948 = vld [vmem:[%s224 + $0x28] sm:$0xff]
      %v6949 = vld [vmem:[%s224 + $0x30] sm:$0xff]
      %v6950 = vld [vmem:[%s224 + $0x38] sm:$0xff]
      %v6951 = vld [vmem:[%s224 + $0x40] sm:$0xff]
      %v6952 = vld [vmem:[%s224 + $0x48] sm:$0xff]
      %v6953 = vld [vmem:[%s224 + $0x50] sm:$0xff]
      %v6954 = vld [vmem:[%s224 + $0x58] sm:$0xff]
      %v6955 = vld [vmem:[%s224 + $0x60] sm:$0xff]
      %v6956 = vld [vmem:[%s224 + $0x68] sm:$0xff]
      %v6957 = vld [vmem:[%s224 + $0x70] sm:$0xff]
      %v6958 = vld [vmem:[%s224 + $0x78] sm:$0xff]
      %v6959 = vld [vmem:[%s224 + $0x80] sm:$0xff]
      %v6960 = vld [vmem:[%s224 + $0x88] sm:$0xff]
      %v6961 = vld [vmem:[%s224 + $0x90] sm:$0xff]
      %v6962 = vld [vmem:[%s224 + $0x98] sm:$0xff]
      %v6963 = vld [vmem:[%s224 + $0xa0] sm:$0xff]
      %v6964 = vld [vmem:[%s224 + $0xa8] sm:$0xff]
      %v6965 = vld [vmem:[%s224 + $0xb0] sm:$0xff]
      %v6966 = vld [vmem:[%s224 + $0xb8] sm:$0xff]
      %v6967 = vld [vmem:[%s224 + $0xc0] sm:$0xff]
      %v6968 = vld [vmem:[%s224 + $0xc8] sm:$0xff]
      %v6969 = vld [vmem:[%s224 + $0xd0] sm:$0xff]
      %v6970 = vld [vmem:[%s224 + $0xd8] sm:$0xff]
      %v6971 = vld [vmem:[%s224 + $0xe0] sm:$0xff]
      %v6972 = vld [vmem:[%s224 + $0xe8] sm:$0xff]
      %v6973 = vld [vmem:[%s224 + $0xf0] sm:$0xff]
      %v6974 = vld [vmem:[%s224 + $0xf8] sm:$0xff]
      %v6975 = vld [vmem:[%s224 + $0x100] sm:$0xff]
      %v6976 = vld [vmem:[%s224 + $0x108] sm:$0xff]
      %v6977 = vld [vmem:[%s224 + $0x110] sm:$0xff]
      %v6978 = vld [vmem:[%s224 + $0x118] sm:$0xff]
      %s6979 = scalar_lea.vmem %s3, 80
      %v6980 = vld [vmem:[%s6979] sm:$0xf]
      %v6981 = vld [vmem:[%s6979 + $0x4] sm:$0xf]
      %v6982 = vld [vmem:[%s6979 + $0x8] sm:$0xf]
      %v6983 = vld [vmem:[%s6979 + $0xc] sm:$0xf]
      %v6988 = vunpack.c.l.b16 %v6980
      %v6989 = vunpack.c.l.b16 %v6981
      %v6990 = vunpack.c.l.b16 %v6982
      %v6991 = vunpack.c.l.b16 %v6983
      %v6992 = vpack.c.b16 %v6989, %v6988
      %v6993 = vpack.c.b16 %v6991, %v6990
      %v6997 = vsel %vm357, %v6925, 0
      %v7000 = vsel %vm357, %v6926, 0
      %v7003 = vsel %vm357, %v6927, 0
      %v7006 = vsel %vm357, %v6928, 0
      %v7009 = vsel %vm357, %v6929, 0
      %v7012 = vsel %vm357, %v6930, 0
      %v7015 = vsel %vm357, %v6931, 0
      %v7018 = vsel %vm357, %v6932, 0
      %v7021 = vsel %vm357, %v6933, 0
      %v7024 = vsel %vm357, %v6934, 0
      %v7027 = vsel %vm357, %v6935, 0
      %v7030 = vsel %vm357, %v6936, 0
      %v7033 = vsel %vm357, %v6937, 0
      %v7036 = vsel %vm357, %v6938, 0
      %v7039 = vsel %vm357, %v6939, 0
      %v7042 = vsel %vm357, %v6940, 0
      %v7045 = vsel %vm357, %v6941, 0
      %v7048 = vsel %vm357, %v6942, 0
      %7050 = vmatpush.bf16.msra.mxu0 0
      %7051 = vmatpush.bf16.msra.mxu0 0
      %7052 = vmatpush.bf16.msra.mxu0 0
      %7053 = vmatpush.bf16.msra.mxu0 0
      %7054 = vmatpush.bf16.msra.mxu0 0
      %7055 = vmatpush.bf16.msra.mxu0 0
      %7056 = vmatpush.bf16.msra.mxu0 %v6993
      %7057 = vmatpush.bf16.msra.mxu0 %v6992
      %7058 = vmatmul.bf16.gmra.mxu0 %v6997
      %v7059 = vpop.f32.mrf.mxu0
      %v7060 = vadd.f32 0.0, %v7059
      %v7061 = vpop.f32.mrf.mxu0
      %v7062 = vadd.f32 0.0, %v7061
      %7063 = vmatmul.bf16.gmra.mxu0 %v7000
      %v7064 = vpop.f32.mrf.mxu0
      %v7065 = vadd.f32 0.0, %v7064
      %v7066 = vpop.f32.mrf.mxu0
      %v7067 = vadd.f32 0.0, %v7066
      %7068 = vmatmul.bf16.gmra.mxu0 %v7003
      %v7069 = vpop.f32.mrf.mxu0
      %v7070 = vadd.f32 0.0, %v7069
      %v7071 = vpop.f32.mrf.mxu0
      %v7072 = vadd.f32 0.0, %v7071
      %7073 = vmatmul.bf16.gmra.mxu0 %v7006
      %v7074 = vpop.f32.mrf.mxu0
      %v7075 = vadd.f32 0.0, %v7074
      %v7076 = vpop.f32.mrf.mxu0
      %v7077 = vadd.f32 0.0, %v7076
      %7078 = vmatmul.bf16.gmra.mxu0 %v7009
      %v7079 = vpop.f32.mrf.mxu0
      %v7080 = vadd.f32 0.0, %v7079
      %v7081 = vpop.f32.mrf.mxu0
      %v7082 = vadd.f32 0.0, %v7081
      %7083 = vmatmul.bf16.gmra.mxu0 %v7012
      %v7084 = vpop.f32.mrf.mxu0
      %v7085 = vadd.f32 0.0, %v7084
      %v7086 = vpop.f32.mrf.mxu0
      %v7087 = vadd.f32 0.0, %v7086
      %7088 = vmatmul.bf16.gmra.mxu0 %v7015
      %v7089 = vpop.f32.mrf.mxu0
      %v7090 = vadd.f32 0.0, %v7089
      %v7091 = vpop.f32.mrf.mxu0
      %v7092 = vadd.f32 0.0, %v7091
      %7093 = vmatmul.bf16.gmra.mxu0 %v7018
      %v7094 = vpop.f32.mrf.mxu0
      %v7095 = vadd.f32 0.0, %v7094
      %v7096 = vpop.f32.mrf.mxu0
      %v7097 = vadd.f32 0.0, %v7096
      %7098 = vmatmul.bf16.gmra.mxu0 %v7021
      %v7099 = vpop.f32.mrf.mxu0
      %v7100 = vadd.f32 0.0, %v7099
      %v7101 = vpop.f32.mrf.mxu0
      %v7102 = vadd.f32 0.0, %v7101
      %7103 = vmatmul.bf16.gmra.mxu0 %v7024
      %v7104 = vpop.f32.mrf.mxu0
      %v7105 = vadd.f32 0.0, %v7104
      %v7106 = vpop.f32.mrf.mxu0
      %v7107 = vadd.f32 0.0, %v7106
      %7108 = vmatmul.bf16.gmra.mxu0 %v7027
      %v7109 = vpop.f32.mrf.mxu0
      %v7110 = vadd.f32 0.0, %v7109
      %v7111 = vpop.f32.mrf.mxu0
      %v7112 = vadd.f32 0.0, %v7111
      %7113 = vmatmul.bf16.gmra.mxu0 %v7030
      %v7114 = vpop.f32.mrf.mxu0
      %v7115 = vadd.f32 0.0, %v7114
      %v7116 = vpop.f32.mrf.mxu0
      %v7117 = vadd.f32 0.0, %v7116
      %7118 = vmatmul.bf16.gmra.mxu0 %v7033
      %v7119 = vpop.f32.mrf.mxu0
      %v7120 = vadd.f32 0.0, %v7119
      %v7121 = vpop.f32.mrf.mxu0
      %v7122 = vadd.f32 0.0, %v7121
      %7123 = vmatmul.bf16.gmra.mxu0 %v7036
      %v7124 = vpop.f32.mrf.mxu0
      %v7125 = vadd.f32 0.0, %v7124
      %v7126 = vpop.f32.mrf.mxu0
      %v7127 = vadd.f32 0.0, %v7126
      %7128 = vmatmul.bf16.gmra.mxu0 %v7039
      %v7129 = vpop.f32.mrf.mxu0
      %v7130 = vadd.f32 0.0, %v7129
      %v7131 = vpop.f32.mrf.mxu0
      %v7132 = vadd.f32 0.0, %v7131
      %7133 = vmatmul.bf16.gmra.mxu0 %v7042
      %v7134 = vpop.f32.mrf.mxu0
      %v7135 = vadd.f32 0.0, %v7134
      %v7136 = vpop.f32.mrf.mxu0
      %v7137 = vadd.f32 0.0, %v7136
      %7138 = vmatmul.bf16.gmra.mxu0 %v7045
      %v7139 = vpop.f32.mrf.mxu0
      %v7140 = vadd.f32 0.0, %v7139
      %v7141 = vpop.f32.mrf.mxu0
      %v7142 = vadd.f32 0.0, %v7141
      %7143 = vmatmul.bf16.gmra.mxu0 %v7048
      %v7144 = vpop.f32.mrf.mxu0
      %v7145 = vadd.f32 0.0, %v7144
      %v7146 = vpop.f32.mrf.mxu0
      %v7147 = vadd.f32 0.0, %v7146
      %7148 = vdwg.mxu0
      %v7149 = vadd.f32 %v6943, %v7060
      %v7150 = vadd.f32 %v6944, %v7062
      %v7151 = vadd.f32 %v6945, %v7065
      %v7152 = vadd.f32 %v6946, %v7067
      %v7153 = vadd.f32 %v6947, %v7070
      %v7154 = vadd.f32 %v6948, %v7072
      %v7155 = vadd.f32 %v6949, %v7075
      %v7156 = vadd.f32 %v6950, %v7077
      %v7157 = vadd.f32 %v6951, %v7080
      %v7158 = vadd.f32 %v6952, %v7082
      %v7159 = vadd.f32 %v6953, %v7085
      %v7160 = vadd.f32 %v6954, %v7087
      %v7161 = vadd.f32 %v6955, %v7090
      %v7162 = vadd.f32 %v6956, %v7092
      %v7163 = vadd.f32 %v6957, %v7095
      %v7164 = vadd.f32 %v6958, %v7097
      %v7165 = vadd.f32 %v6959, %v7100
      %v7166 = vadd.f32 %v6960, %v7102
      %v7167 = vadd.f32 %v6961, %v7105
      %v7168 = vadd.f32 %v6962, %v7107
      %v7169 = vadd.f32 %v6963, %v7110
      %v7170 = vadd.f32 %v6964, %v7112
      %v7171 = vadd.f32 %v6965, %v7115
      %v7172 = vadd.f32 %v6966, %v7117
      %v7173 = vadd.f32 %v6967, %v7120
      %v7174 = vadd.f32 %v6968, %v7122
      %v7175 = vadd.f32 %v6969, %v7125
      %v7176 = vadd.f32 %v6970, %v7127
      %v7177 = vadd.f32 %v6971, %v7130
      %v7178 = vadd.f32 %v6972, %v7132
      %v7179 = vadd.f32 %v6973, %v7135
      %v7180 = vadd.f32 %v6974, %v7137
      %v7181 = vadd.f32 %v6975, %v7140
      %v7182 = vadd.f32 %v6976, %v7142
      %v7183 = vadd.f32 %v6977, %v7145
      %v7184 = vadd.f32 %v6978, %v7147
      %7185 = vst.msk [vmem:[%s224] sm:$0xff] %vm357, %v7149
      %7186 = vst.msk [vmem:[%s224 + $0x8] sm:$0xff] %vm357, %v7150
      %7187 = vst.msk [vmem:[%s224 + $0x10] sm:$0xff] %vm357, %v7151
      %7188 = vst.msk [vmem:[%s224 + $0x18] sm:$0xff] %vm357, %v7152
      %7189 = vst.msk [vmem:[%s224 + $0x20] sm:$0xff] %vm357, %v7153
      %7190 = vst.msk [vmem:[%s224 + $0x28] sm:$0xff] %vm357, %v7154
      %7191 = vst.msk [vmem:[%s224 + $0x30] sm:$0xff] %vm357, %v7155
      %7192 = vst.msk [vmem:[%s224 + $0x38] sm:$0xff] %vm357, %v7156
      %7193 = vst.msk [vmem:[%s224 + $0x40] sm:$0xff] %vm357, %v7157
      %7194 = vst.msk [vmem:[%s224 + $0x48] sm:$0xff] %vm357, %v7158
      %7195 = vst.msk [vmem:[%s224 + $0x50] sm:$0xff] %vm357, %v7159
      %7196 = vst.msk [vmem:[%s224 + $0x58] sm:$0xff] %vm357, %v7160
      %7197 = vst.msk [vmem:[%s224 + $0x60] sm:$0xff] %vm357, %v7161
      %7198 = vst.msk [vmem:[%s224 + $0x68] sm:$0xff] %vm357, %v7162
      %7199 = vst.msk [vmem:[%s224 + $0x70] sm:$0xff] %vm357, %v7163
      %7200 = vst.msk [vmem:[%s224 + $0x78] sm:$0xff] %vm357, %v7164
      %7201 = vst.msk [vmem:[%s224 + $0x80] sm:$0xff] %vm357, %v7165
      %7202 = vst.msk [vmem:[%s224 + $0x88] sm:$0xff] %vm357, %v7166
      %7203 = vst.msk [vmem:[%s224 + $0x90] sm:$0xff] %vm357, %v7167
      %7204 = vst.msk [vmem:[%s224 + $0x98] sm:$0xff] %vm357, %v7168
      %7205 = vst.msk [vmem:[%s224 + $0xa0] sm:$0xff] %vm357, %v7169
      %7206 = vst.msk [vmem:[%s224 + $0xa8] sm:$0xff] %vm357, %v7170
      %7207 = vst.msk [vmem:[%s224 + $0xb0] sm:$0xff] %vm357, %v7171
      %7208 = vst.msk [vmem:[%s224 + $0xb8] sm:$0xff] %vm357, %v7172
      %7209 = vst.msk [vmem:[%s224 + $0xc0] sm:$0xff] %vm357, %v7173
      %7210 = vst.msk [vmem:[%s224 + $0xc8] sm:$0xff] %vm357, %v7174
      %7211 = vst.msk [vmem:[%s224 + $0xd0] sm:$0xff] %vm357, %v7175
      %7212 = vst.msk [vmem:[%s224 + $0xd8] sm:$0xff] %vm357, %v7176
      %7213 = vst.msk [vmem:[%s224 + $0xe0] sm:$0xff] %vm357, %v7177
      %7214 = vst.msk [vmem:[%s224 + $0xe8] sm:$0xff] %vm357, %v7178
      %7215 = vst.msk [vmem:[%s224 + $0xf0] sm:$0xff] %vm357, %v7179
      %7216 = vst.msk [vmem:[%s224 + $0xf8] sm:$0xff] %vm357, %v7180
      %7217 = vst.msk [vmem:[%s224 + $0x100] sm:$0xff] %vm357, %v7181
      %7218 = vst.msk [vmem:[%s224 + $0x108] sm:$0xff] %vm357, %v7182
      %7219 = vst.msk [vmem:[%s224 + $0x110] sm:$0xff] %vm357, %v7183
      %7220 = vst.msk [vmem:[%s224 + $0x118] sm:$0xff] %vm357, %v7184
      %v7221 = vld [vmem:[#allocation4 + $0x24] sm:$0xff]
      %v7222 = vld [vmem:[#allocation4 + $0x2c] sm:$0xff]
      %v7223 = vld [vmem:[#allocation4 + $0x34] sm:$0xff]
      %v7224 = vld [vmem:[#allocation4 + $0x3c] sm:$0xff]
      %v7225 = vld [vmem:[#allocation4 + $0x44] sm:$0xff]
      %v7226 = vld [vmem:[#allocation4 + $0x4c] sm:$0xff]
      %v7227 = vld [vmem:[#allocation4 + $0x54] sm:$0xff]
      %v7228 = vld [vmem:[#allocation4 + $0x5c] sm:$0xff]
      %v7229 = vld [vmem:[#allocation4 + $0x64] sm:$0xff]
      %v7230 = vld [vmem:[#allocation4 + $0x6c] sm:$0xff]
      %v7231 = vld [vmem:[#allocation4 + $0x74] sm:$0xff]
      %v7232 = vld [vmem:[#allocation4 + $0x7c] sm:$0xff]
      %v7233 = vld [vmem:[#allocation4 + $0x84] sm:$0xff]
      %v7234 = vld [vmem:[#allocation4 + $0x8c] sm:$0xff]
      %v7235 = vld [vmem:[#allocation4 + $0x94] sm:$0xff]
      %v7236 = vld [vmem:[#allocation4 + $0x9c] sm:$0xff]
      %v7237 = vld [vmem:[#allocation4 + $0xa4] sm:$0xff]
      %v7238 = vld [vmem:[#allocation4 + $0xac] sm:$0xff]
      %v7239 = vld [vmem:[#allocation4 + $0xb4] sm:$0xff]
      %v7240 = vld [vmem:[#allocation4 + $0xbc] sm:$0xff]
      %v7241 = vld [vmem:[#allocation4 + $0xc4] sm:$0xff]
      %v7242 = vld [vmem:[#allocation4 + $0xcc] sm:$0xff]
      %v7243 = vld [vmem:[#allocation4 + $0xd4] sm:$0xff]
      %v7244 = vld [vmem:[#allocation4 + $0xdc] sm:$0xff]
      %v7245 = vld [vmem:[#allocation4 + $0xe4] sm:$0xff]
      %v7246 = vld [vmem:[#allocation4 + $0xec] sm:$0xff]
      %v7247 = vld [vmem:[#allocation4 + $0xf4] sm:$0xff]
      %v7248 = vld [vmem:[#allocation4 + $0xfc] sm:$0xff]
      %v7249 = vld [vmem:[#allocation4 + $0x104] sm:$0xff]
      %v7250 = vld [vmem:[#allocation4 + $0x10c] sm:$0xff]
      %v7251 = vld [vmem:[#allocation4 + $0x114] sm:$0xff]
      %v7252 = vld [vmem:[#allocation4 + $0x11c] sm:$0xff]
      %v7253 = vld [vmem:[#allocation4 + $0x124] sm:$0xff]
      %v7254 = vld [vmem:[#allocation4 + $0x12c] sm:$0xff]
      %v7255 = vld [vmem:[#allocation4 + $0x134] sm:$0xff]
      %v7256 = vld [vmem:[#allocation4 + $0x13c] sm:$0xff]
      %v7257 = vpack.c.bf16 %v7222, %v7221
      %v7258 = vpack.c.bf16 %v7224, %v7223
      %v7259 = vpack.c.bf16 %v7226, %v7225
      %v7260 = vpack.c.bf16 %v7228, %v7227
      %v7261 = vpack.c.bf16 %v7230, %v7229
      %v7262 = vpack.c.bf16 %v7232, %v7231
      %v7263 = vpack.c.bf16 %v7234, %v7233
      %v7264 = vpack.c.bf16 %v7236, %v7235
      %v7265 = vpack.c.bf16 %v7238, %v7237
      %v7266 = vpack.c.bf16 %v7240, %v7239
      %v7267 = vpack.c.bf16 %v7242, %v7241
      %v7268 = vpack.c.bf16 %v7244, %v7243
      %v7269 = vpack.c.bf16 %v7246, %v7245
      %v7270 = vpack.c.bf16 %v7248, %v7247
      %v7271 = vpack.c.bf16 %v7250, %v7249
      %v7272 = vpack.c.bf16 %v7252, %v7251
      %v7273 = vpack.c.bf16 %v7254, %v7253
      %v7274 = vpack.c.bf16 %v7256, %v7255
      %v7275 = vld [vmem:[%s224] sm:$0xff]
      %v7276 = vld [vmem:[%s224 + $0x8] sm:$0xff]
      %v7277 = vld [vmem:[%s224 + $0x10] sm:$0xff]
      %v7278 = vld [vmem:[%s224 + $0x18] sm:$0xff]
      %v7279 = vld [vmem:[%s224 + $0x20] sm:$0xff]
      %v7280 = vld [vmem:[%s224 + $0x28] sm:$0xff]
      %v7281 = vld [vmem:[%s224 + $0x30] sm:$0xff]
      %v7282 = vld [vmem:[%s224 + $0x38] sm:$0xff]
      %v7283 = vld [vmem:[%s224 + $0x40] sm:$0xff]
      %v7284 = vld [vmem:[%s224 + $0x48] sm:$0xff]
      %v7285 = vld [vmem:[%s224 + $0x50] sm:$0xff]
      %v7286 = vld [vmem:[%s224 + $0x58] sm:$0xff]
      %v7287 = vld [vmem:[%s224 + $0x60] sm:$0xff]
      %v7288 = vld [vmem:[%s224 + $0x68] sm:$0xff]
      %v7289 = vld [vmem:[%s224 + $0x70] sm:$0xff]
      %v7290 = vld [vmem:[%s224 + $0x78] sm:$0xff]
      %v7291 = vld [vmem:[%s224 + $0x80] sm:$0xff]
      %v7292 = vld [vmem:[%s224 + $0x88] sm:$0xff]
      %v7293 = vld [vmem:[%s224 + $0x90] sm:$0xff]
      %v7294 = vld [vmem:[%s224 + $0x98] sm:$0xff]
      %v7295 = vld [vmem:[%s224 + $0xa0] sm:$0xff]
      %v7296 = vld [vmem:[%s224 + $0xa8] sm:$0xff]
      %v7297 = vld [vmem:[%s224 + $0xb0] sm:$0xff]
      %v7298 = vld [vmem:[%s224 + $0xb8] sm:$0xff]
      %v7299 = vld [vmem:[%s224 + $0xc0] sm:$0xff]
      %v7300 = vld [vmem:[%s224 + $0xc8] sm:$0xff]
      %v7301 = vld [vmem:[%s224 + $0xd0] sm:$0xff]
      %v7302 = vld [vmem:[%s224 + $0xd8] sm:$0xff]
      %v7303 = vld [vmem:[%s224 + $0xe0] sm:$0xff]
      %v7304 = vld [vmem:[%s224 + $0xe8] sm:$0xff]
      %v7305 = vld [vmem:[%s224 + $0xf0] sm:$0xff]
      %v7306 = vld [vmem:[%s224 + $0xf8] sm:$0xff]
      %v7307 = vld [vmem:[%s224 + $0x100] sm:$0xff]
      %v7308 = vld [vmem:[%s224 + $0x108] sm:$0xff]
      %v7309 = vld [vmem:[%s224 + $0x110] sm:$0xff]
      %v7310 = vld [vmem:[%s224 + $0x118] sm:$0xff]
      %s7311 = scalar_lea.vmem %s3, 96
      %v7312 = vld [vmem:[%s7311] sm:$0xf]
      %v7313 = vld [vmem:[%s7311 + $0x4] sm:$0xf]
      %v7314 = vld [vmem:[%s7311 + $0x8] sm:$0xf]
      %v7315 = vld [vmem:[%s7311 + $0xc] sm:$0xf]
      %v7320 = vunpack.c.l.b16 %v7312
      %v7321 = vunpack.c.l.b16 %v7313
      %v7322 = vunpack.c.l.b16 %v7314
      %v7323 = vunpack.c.l.b16 %v7315
      %v7324 = vpack.c.b16 %v7321, %v7320
      %v7325 = vpack.c.b16 %v7323, %v7322
      %v7329 = vsel %vm357, %v7257, 0
      %v7332 = vsel %vm357, %v7258, 0
      %v7335 = vsel %vm357, %v7259, 0
      %v7338 = vsel %vm357, %v7260, 0
      %v7341 = vsel %vm357, %v7261, 0
      %v7344 = vsel %vm357, %v7262, 0
      %v7347 = vsel %vm357, %v7263, 0
      %v7350 = vsel %vm357, %v7264, 0
      %v7353 = vsel %vm357, %v7265, 0
      %v7356 = vsel %vm357, %v7266, 0
      %v7359 = vsel %vm357, %v7267, 0
      %v7362 = vsel %vm357, %v7268, 0
      %v7365 = vsel %vm357, %v7269, 0
      %v7368 = vsel %vm357, %v7270, 0
      %v7371 = vsel %vm357, %v7271, 0
      %v7374 = vsel %vm357, %v7272, 0
      %v7377 = vsel %vm357, %v7273, 0
      %v7380 = vsel %vm357, %v7274, 0
      %7382 = vmatpush.bf16.msra.mxu0 0
      %7383 = vmatpush.bf16.msra.mxu0 0
      %7384 = vmatpush.bf16.msra.mxu0 0
      %7385 = vmatpush.bf16.msra.mxu0 0
      %7386 = vmatpush.bf16.msra.mxu0 0
      %7387 = vmatpush.bf16.msra.mxu0 0
      %7388 = vmatpush.bf16.msra.mxu0 %v7325
      %7389 = vmatpush.bf16.msra.mxu0 %v7324
      %7390 = vmatmul.bf16.gmra.mxu0 %v7329
      %v7391 = vpop.f32.mrf.mxu0
      %v7392 = vadd.f32 0.0, %v7391
      %v7393 = vpop.f32.mrf.mxu0
      %v7394 = vadd.f32 0.0, %v7393
      %7395 = vmatmul.bf16.gmra.mxu0 %v7332
      %v7396 = vpop.f32.mrf.mxu0
      %v7397 = vadd.f32 0.0, %v7396
      %v7398 = vpop.f32.mrf.mxu0
      %v7399 = vadd.f32 0.0, %v7398
      %7400 = vmatmul.bf16.gmra.mxu0 %v7335
      %v7401 = vpop.f32.mrf.mxu0
      %v7402 = vadd.f32 0.0, %v7401
      %v7403 = vpop.f32.mrf.mxu0
      %v7404 = vadd.f32 0.0, %v7403
      %7405 = vmatmul.bf16.gmra.mxu0 %v7338
      %v7406 = vpop.f32.mrf.mxu0
      %v7407 = vadd.f32 0.0, %v7406
      %v7408 = vpop.f32.mrf.mxu0
      %v7409 = vadd.f32 0.0, %v7408
      %7410 = vmatmul.bf16.gmra.mxu0 %v7341
      %v7411 = vpop.f32.mrf.mxu0
      %v7412 = vadd.f32 0.0, %v7411
      %v7413 = vpop.f32.mrf.mxu0
      %v7414 = vadd.f32 0.0, %v7413
      %7415 = vmatmul.bf16.gmra.mxu0 %v7344
      %v7416 = vpop.f32.mrf.mxu0
      %v7417 = vadd.f32 0.0, %v7416
      %v7418 = vpop.f32.mrf.mxu0
      %v7419 = vadd.f32 0.0, %v7418
      %7420 = vmatmul.bf16.gmra.mxu0 %v7347
      %v7421 = vpop.f32.mrf.mxu0
      %v7422 = vadd.f32 0.0, %v7421
      %v7423 = vpop.f32.mrf.mxu0
      %v7424 = vadd.f32 0.0, %v7423
      %7425 = vmatmul.bf16.gmra.mxu0 %v7350
      %v7426 = vpop.f32.mrf.mxu0
      %v7427 = vadd.f32 0.0, %v7426
      %v7428 = vpop.f32.mrf.mxu0
      %v7429 = vadd.f32 0.0, %v7428
      %7430 = vmatmul.bf16.gmra.mxu0 %v7353
      %v7431 = vpop.f32.mrf.mxu0
      %v7432 = vadd.f32 0.0, %v7431
      %v7433 = vpop.f32.mrf.mxu0
      %v7434 = vadd.f32 0.0, %v7433
      %7435 = vmatmul.bf16.gmra.mxu0 %v7356
      %v7436 = vpop.f32.mrf.mxu0
      %v7437 = vadd.f32 0.0, %v7436
      %v7438 = vpop.f32.mrf.mxu0
      %v7439 = vadd.f32 0.0, %v7438
      %7440 = vmatmul.bf16.gmra.mxu0 %v7359
      %v7441 = vpop.f32.mrf.mxu0
      %v7442 = vadd.f32 0.0, %v7441
      %v7443 = vpop.f32.mrf.mxu0
      %v7444 = vadd.f32 0.0, %v7443
      %7445 = vmatmul.bf16.gmra.mxu0 %v7362
      %v7446 = vpop.f32.mrf.mxu0
      %v7447 = vadd.f32 0.0, %v7446
      %v7448 = vpop.f32.mrf.mxu0
      %v7449 = vadd.f32 0.0, %v7448
      %7450 = vmatmul.bf16.gmra.mxu0 %v7365
      %v7451 = vpop.f32.mrf.mxu0
      %v7452 = vadd.f32 0.0, %v7451
      %v7453 = vpop.f32.mrf.mxu0
      %v7454 = vadd.f32 0.0, %v7453
      %7455 = vmatmul.bf16.gmra.mxu0 %v7368
      %v7456 = vpop.f32.mrf.mxu0
      %v7457 = vadd.f32 0.0, %v7456
      %v7458 = vpop.f32.mrf.mxu0
      %v7459 = vadd.f32 0.0, %v7458
      %7460 = vmatmul.bf16.gmra.mxu0 %v7371
      %v7461 = vpop.f32.mrf.mxu0
      %v7462 = vadd.f32 0.0, %v7461
      %v7463 = vpop.f32.mrf.mxu0
      %v7464 = vadd.f32 0.0, %v7463
      %7465 = vmatmul.bf16.gmra.mxu0 %v7374
      %v7466 = vpop.f32.mrf.mxu0
      %v7467 = vadd.f32 0.0, %v7466
      %v7468 = vpop.f32.mrf.mxu0
      %v7469 = vadd.f32 0.0, %v7468
      %7470 = vmatmul.bf16.gmra.mxu0 %v7377
      %v7471 = vpop.f32.mrf.mxu0
      %v7472 = vadd.f32 0.0, %v7471
      %v7473 = vpop.f32.mrf.mxu0
      %v7474 = vadd.f32 0.0, %v7473
      %7475 = vmatmul.bf16.gmra.mxu0 %v7380
      %v7476 = vpop.f32.mrf.mxu0
      %v7477 = vadd.f32 0.0, %v7476
      %v7478 = vpop.f32.mrf.mxu0
      %v7479 = vadd.f32 0.0, %v7478
      %7480 = vdwg.mxu0
      %v7481 = vadd.f32 %v7275, %v7392
      %v7482 = vadd.f32 %v7276, %v7394
      %v7483 = vadd.f32 %v7277, %v7397
      %v7484 = vadd.f32 %v7278, %v7399
      %v7485 = vadd.f32 %v7279, %v7402
      %v7486 = vadd.f32 %v7280, %v7404
      %v7487 = vadd.f32 %v7281, %v7407
      %v7488 = vadd.f32 %v7282, %v7409
      %v7489 = vadd.f32 %v7283, %v7412
      %v7490 = vadd.f32 %v7284, %v7414
      %v7491 = vadd.f32 %v7285, %v7417
      %v7492 = vadd.f32 %v7286, %v7419
      %v7493 = vadd.f32 %v7287, %v7422
      %v7494 = vadd.f32 %v7288, %v7424
      %v7495 = vadd.f32 %v7289, %v7427
      %v7496 = vadd.f32 %v7290, %v7429
      %v7497 = vadd.f32 %v7291, %v7432
      %v7498 = vadd.f32 %v7292, %v7434
      %v7499 = vadd.f32 %v7293, %v7437
      %v7500 = vadd.f32 %v7294, %v7439
      %v7501 = vadd.f32 %v7295, %v7442
      %v7502 = vadd.f32 %v7296, %v7444
      %v7503 = vadd.f32 %v7297, %v7447
      %v7504 = vadd.f32 %v7298, %v7449
      %v7505 = vadd.f32 %v7299, %v7452
      %v7506 = vadd.f32 %v7300, %v7454
      %v7507 = vadd.f32 %v7301, %v7457
      %v7508 = vadd.f32 %v7302, %v7459
      %v7509 = vadd.f32 %v7303, %v7462
      %v7510 = vadd.f32 %v7304, %v7464
      %v7511 = vadd.f32 %v7305, %v7467
      %v7512 = vadd.f32 %v7306, %v7469
      %v7513 = vadd.f32 %v7307, %v7472
      %v7514 = vadd.f32 %v7308, %v7474
      %v7515 = vadd.f32 %v7309, %v7477
      %v7516 = vadd.f32 %v7310, %v7479
      %7517 = vst.msk [vmem:[%s224] sm:$0xff] %vm357, %v7481
      %7518 = vst.msk [vmem:[%s224 + $0x8] sm:$0xff] %vm357, %v7482
      %7519 = vst.msk [vmem:[%s224 + $0x10] sm:$0xff] %vm357, %v7483
      %7520 = vst.msk [vmem:[%s224 + $0x18] sm:$0xff] %vm357, %v7484
      %7521 = vst.msk [vmem:[%s224 + $0x20] sm:$0xff] %vm357, %v7485
      %7522 = vst.msk [vmem:[%s224 + $0x28] sm:$0xff] %vm357, %v7486
      %7523 = vst.msk [vmem:[%s224 + $0x30] sm:$0xff] %vm357, %v7487
      %7524 = vst.msk [vmem:[%s224 + $0x38] sm:$0xff] %vm357, %v7488
      %7525 = vst.msk [vmem:[%s224 + $0x40] sm:$0xff] %vm357, %v7489
      %7526 = vst.msk [vmem:[%s224 + $0x48] sm:$0xff] %vm357, %v7490
      %7527 = vst.msk [vmem:[%s224 + $0x50] sm:$0xff] %vm357, %v7491
      %7528 = vst.msk [vmem:[%s224 + $0x58] sm:$0xff] %vm357, %v7492
      %7529 = vst.msk [vmem:[%s224 + $0x60] sm:$0xff] %vm357, %v7493
      %7530 = vst.msk [vmem:[%s224 + $0x68] sm:$0xff] %vm357, %v7494
      %7531 = vst.msk [vmem:[%s224 + $0x70] sm:$0xff] %vm357, %v7495
      %7532 = vst.msk [vmem:[%s224 + $0x78] sm:$0xff] %vm357, %v7496
      %7533 = vst.msk [vmem:[%s224 + $0x80] sm:$0xff] %vm357, %v7497
      %7534 = vst.msk [vmem:[%s224 + $0x88] sm:$0xff] %vm357, %v7498
      %7535 = vst.msk [vmem:[%s224 + $0x90] sm:$0xff] %vm357, %v7499
      %7536 = vst.msk [vmem:[%s224 + $0x98] sm:$0xff] %vm357, %v7500
      %7537 = vst.msk [vmem:[%s224 + $0xa0] sm:$0xff] %vm357, %v7501
      %7538 = vst.msk [vmem:[%s224 + $0xa8] sm:$0xff] %vm357, %v7502
      %7539 = vst.msk [vmem:[%s224 + $0xb0] sm:$0xff] %vm357, %v7503
      %7540 = vst.msk [vmem:[%s224 + $0xb8] sm:$0xff] %vm357, %v7504
      %7541 = vst.msk [vmem:[%s224 + $0xc0] sm:$0xff] %vm357, %v7505
      %7542 = vst.msk [vmem:[%s224 + $0xc8] sm:$0xff] %vm357, %v7506
      %7543 = vst.msk [vmem:[%s224 + $0xd0] sm:$0xff] %vm357, %v7507
      %7544 = vst.msk [vmem:[%s224 + $0xd8] sm:$0xff] %vm357, %v7508
      %7545 = vst.msk [vmem:[%s224 + $0xe0] sm:$0xff] %vm357, %v7509
      %7546 = vst.msk [vmem:[%s224 + $0xe8] sm:$0xff] %vm357, %v7510
      %7547 = vst.msk [vmem:[%s224 + $0xf0] sm:$0xff] %vm357, %v7511
      %7548 = vst.msk [vmem:[%s224 + $0xf8] sm:$0xff] %vm357, %v7512
      %7549 = vst.msk [vmem:[%s224 + $0x100] sm:$0xff] %vm357, %v7513
      %7550 = vst.msk [vmem:[%s224 + $0x108] sm:$0xff] %vm357, %v7514
      %7551 = vst.msk [vmem:[%s224 + $0x110] sm:$0xff] %vm357, %v7515
      %7552 = vst.msk [vmem:[%s224 + $0x118] sm:$0xff] %vm357, %v7516
      %v7553 = vld [vmem:[#allocation4 + $0x25] sm:$0xff]
      %v7554 = vld [vmem:[#allocation4 + $0x2d] sm:$0xff]
      %v7555 = vld [vmem:[#allocation4 + $0x35] sm:$0xff]
      %v7556 = vld [vmem:[#allocation4 + $0x3d] sm:$0xff]
      %v7557 = vld [vmem:[#allocation4 + $0x45] sm:$0xff]
      %v7558 = vld [vmem:[#allocation4 + $0x4d] sm:$0xff]
      %v7559 = vld [vmem:[#allocation4 + $0x55] sm:$0xff]
      %v7560 = vld [vmem:[#allocation4 + $0x5d] sm:$0xff]
      %v7561 = vld [vmem:[#allocation4 + $0x65] sm:$0xff]
      %v7562 = vld [vmem:[#allocation4 + $0x6d] sm:$0xff]
      %v7563 = vld [vmem:[#allocation4 + $0x75] sm:$0xff]
      %v7564 = vld [vmem:[#allocation4 + $0x7d] sm:$0xff]
      %v7565 = vld [vmem:[#allocation4 + $0x85] sm:$0xff]
      %v7566 = vld [vmem:[#allocation4 + $0x8d] sm:$0xff]
      %v7567 = vld [vmem:[#allocation4 + $0x95] sm:$0xff]
      %v7568 = vld [vmem:[#allocation4 + $0x9d] sm:$0xff]
      %v7569 = vld [vmem:[#allocation4 + $0xa5] sm:$0xff]
      %v7570 = vld [vmem:[#allocation4 + $0xad] sm:$0xff]
      %v7571 = vld [vmem:[#allocation4 + $0xb5] sm:$0xff]
      %v7572 = vld [vmem:[#allocation4 + $0xbd] sm:$0xff]
      %v7573 = vld [vmem:[#allocation4 + $0xc5] sm:$0xff]
      %v7574 = vld [vmem:[#allocation4 + $0xcd] sm:$0xff]
      %v7575 = vld [vmem:[#allocation4 + $0xd5] sm:$0xff]
      %v7576 = vld [vmem:[#allocation4 + $0xdd] sm:$0xff]
      %v7577 = vld [vmem:[#allocation4 + $0xe5] sm:$0xff]
      %v7578 = vld [vmem:[#allocation4 + $0xed] sm:$0xff]
      %v7579 = vld [vmem:[#allocation4 + $0xf5] sm:$0xff]
      %v7580 = vld [vmem:[#allocation4 + $0xfd] sm:$0xff]
      %v7581 = vld [vmem:[#allocation4 + $0x105] sm:$0xff]
      %v7582 = vld [vmem:[#allocation4 + $0x10d] sm:$0xff]
      %v7583 = vld [vmem:[#allocation4 + $0x115] sm:$0xff]
      %v7584 = vld [vmem:[#allocation4 + $0x11d] sm:$0xff]
      %v7585 = vld [vmem:[#allocation4 + $0x125] sm:$0xff]
      %v7586 = vld [vmem:[#allocation4 + $0x12d] sm:$0xff]
      %v7587 = vld [vmem:[#allocation4 + $0x135] sm:$0xff]
      %v7588 = vld [vmem:[#allocation4 + $0x13d] sm:$0xff]
      %v7589 = vpack.c.bf16 %v7554, %v7553
      %v7590 = vpack.c.bf16 %v7556, %v7555
      %v7591 = vpack.c.bf16 %v7558, %v7557
      %v7592 = vpack.c.bf16 %v7560, %v7559
      %v7593 = vpack.c.bf16 %v7562, %v7561
      %v7594 = vpack.c.bf16 %v7564, %v7563
      %v7595 = vpack.c.bf16 %v7566, %v7565
      %v7596 = vpack.c.bf16 %v7568, %v7567
      %v7597 = vpack.c.bf16 %v7570, %v7569
      %v7598 = vpack.c.bf16 %v7572, %v7571
      %v7599 = vpack.c.bf16 %v7574, %v7573
      %v7600 = vpack.c.bf16 %v7576, %v7575
      %v7601 = vpack.c.bf16 %v7578, %v7577
      %v7602 = vpack.c.bf16 %v7580, %v7579
      %v7603 = vpack.c.bf16 %v7582, %v7581
      %v7604 = vpack.c.bf16 %v7584, %v7583
      %v7605 = vpack.c.bf16 %v7586, %v7585
      %v7606 = vpack.c.bf16 %v7588, %v7587
      %v7607 = vld [vmem:[%s224] sm:$0xff]
      %v7608 = vld [vmem:[%s224 + $0x8] sm:$0xff]
      %v7609 = vld [vmem:[%s224 + $0x10] sm:$0xff]
      %v7610 = vld [vmem:[%s224 + $0x18] sm:$0xff]
      %v7611 = vld [vmem:[%s224 + $0x20] sm:$0xff]
      %v7612 = vld [vmem:[%s224 + $0x28] sm:$0xff]
      %v7613 = vld [vmem:[%s224 + $0x30] sm:$0xff]
      %v7614 = vld [vmem:[%s224 + $0x38] sm:$0xff]
      %v7615 = vld [vmem:[%s224 + $0x40] sm:$0xff]
      %v7616 = vld [vmem:[%s224 + $0x48] sm:$0xff]
      %v7617 = vld [vmem:[%s224 + $0x50] sm:$0xff]
      %v7618 = vld [vmem:[%s224 + $0x58] sm:$0xff]
      %v7619 = vld [vmem:[%s224 + $0x60] sm:$0xff]
      %v7620 = vld [vmem:[%s224 + $0x68] sm:$0xff]
      %v7621 = vld [vmem:[%s224 + $0x70] sm:$0xff]
      %v7622 = vld [vmem:[%s224 + $0x78] sm:$0xff]
      %v7623 = vld [vmem:[%s224 + $0x80] sm:$0xff]
      %v7624 = vld [vmem:[%s224 + $0x88] sm:$0xff]
      %v7625 = vld [vmem:[%s224 + $0x90] sm:$0xff]
      %v7626 = vld [vmem:[%s224 + $0x98] sm:$0xff]
      %v7627 = vld [vmem:[%s224 + $0xa0] sm:$0xff]
      %v7628 = vld [vmem:[%s224 + $0xa8] sm:$0xff]
      %v7629 = vld [vmem:[%s224 + $0xb0] sm:$0xff]
      %v7630 = vld [vmem:[%s224 + $0xb8] sm:$0xff]
      %v7631 = vld [vmem:[%s224 + $0xc0] sm:$0xff]
      %v7632 = vld [vmem:[%s224 + $0xc8] sm:$0xff]
      %v7633 = vld [vmem:[%s224 + $0xd0] sm:$0xff]
      %v7634 = vld [vmem:[%s224 + $0xd8] sm:$0xff]
      %v7635 = vld [vmem:[%s224 + $0xe0] sm:$0xff]
      %v7636 = vld [vmem:[%s224 + $0xe8] sm:$0xff]
      %v7637 = vld [vmem:[%s224 + $0xf0] sm:$0xff]
      %v7638 = vld [vmem:[%s224 + $0xf8] sm:$0xff]
      %v7639 = vld [vmem:[%s224 + $0x100] sm:$0xff]
      %v7640 = vld [vmem:[%s224 + $0x108] sm:$0xff]
      %v7641 = vld [vmem:[%s224 + $0x110] sm:$0xff]
      %v7642 = vld [vmem:[%s224 + $0x118] sm:$0xff]
      %s7643 = scalar_lea.vmem %s3, 112
      %v7644 = vld [vmem:[%s7643] sm:$0xf]
      %v7645 = vld [vmem:[%s7643 + $0x4] sm:$0xf]
      %v7646 = vld [vmem:[%s7643 + $0x8] sm:$0xf]
      %v7647 = vld [vmem:[%s7643 + $0xc] sm:$0xf]
      %v7652 = vunpack.c.l.b16 %v7644
      %v7653 = vunpack.c.l.b16 %v7645
      %v7654 = vunpack.c.l.b16 %v7646
      %v7655 = vunpack.c.l.b16 %v7647
      %v7656 = vpack.c.b16 %v7653, %v7652
      %v7657 = vpack.c.b16 %v7655, %v7654
      %v7661 = vsel %vm357, %v7589, 0
      %v7664 = vsel %vm357, %v7590, 0
      %v7667 = vsel %vm357, %v7591, 0
      %v7670 = vsel %vm357, %v7592, 0
      %v7673 = vsel %vm357, %v7593, 0
      %v7676 = vsel %vm357, %v7594, 0
      %v7679 = vsel %vm357, %v7595, 0
      %v7682 = vsel %vm357, %v7596, 0
      %v7685 = vsel %vm357, %v7597, 0
      %v7688 = vsel %vm357, %v7598, 0
      %v7691 = vsel %vm357, %v7599, 0
      %v7694 = vsel %vm357, %v7600, 0
      %v7697 = vsel %vm357, %v7601, 0
      %v7700 = vsel %vm357, %v7602, 0
      %v7703 = vsel %vm357, %v7603, 0
      %v7706 = vsel %vm357, %v7604, 0
      %v7709 = vsel %vm357, %v7605, 0
      %v7712 = vsel %vm357, %v7606, 0
      %7714 = vmatpush.bf16.msra.mxu0 0
      %7715 = vmatpush.bf16.msra.mxu0 0
      %7716 = vmatpush.bf16.msra.mxu0 0
      %7717 = vmatpush.bf16.msra.mxu0 0
      %7718 = vmatpush.bf16.msra.mxu0 0
      %7719 = vmatpush.bf16.msra.mxu0 0
      %7720 = vmatpush.bf16.msra.mxu0 %v7657
      %7721 = vmatpush.bf16.msra.mxu0 %v7656
      %7722 = vmatmul.bf16.gmra.mxu0 %v7661
      %v7723 = vpop.f32.mrf.mxu0
      %v7724 = vadd.f32 0.0, %v7723
      %v7725 = vpop.f32.mrf.mxu0
      %v7726 = vadd.f32 0.0, %v7725
      %7727 = vmatmul.bf16.gmra.mxu0 %v7664
      %v7728 = vpop.f32.mrf.mxu0
      %v7729 = vadd.f32 0.0, %v7728
      %v7730 = vpop.f32.mrf.mxu0
      %v7731 = vadd.f32 0.0, %v7730
      %7732 = vmatmul.bf16.gmra.mxu0 %v7667
      %v7733 = vpop.f32.mrf.mxu0
      %v7734 = vadd.f32 0.0, %v7733
      %v7735 = vpop.f32.mrf.mxu0
      %v7736 = vadd.f32 0.0, %v7735
      %7737 = vmatmul.bf16.gmra.mxu0 %v7670
      %v7738 = vpop.f32.mrf.mxu0
      %v7739 = vadd.f32 0.0, %v7738
      %v7740 = vpop.f32.mrf.mxu0
      %v7741 = vadd.f32 0.0, %v7740
      %7742 = vmatmul.bf16.gmra.mxu0 %v7673
      %v7743 = vpop.f32.mrf.mxu0
      %v7744 = vadd.f32 0.0, %v7743
      %v7745 = vpop.f32.mrf.mxu0
      %v7746 = vadd.f32 0.0, %v7745
      %7747 = vmatmul.bf16.gmra.mxu0 %v7676
      %v7748 = vpop.f32.mrf.mxu0
      %v7749 = vadd.f32 0.0, %v7748
      %v7750 = vpop.f32.mrf.mxu0
      %v7751 = vadd.f32 0.0, %v7750
      %7752 = vmatmul.bf16.gmra.mxu0 %v7679
      %v7753 = vpop.f32.mrf.mxu0
      %v7754 = vadd.f32 0.0, %v7753
      %v7755 = vpop.f32.mrf.mxu0
      %v7756 = vadd.f32 0.0, %v7755
      %7757 = vmatmul.bf16.gmra.mxu0 %v7682
      %v7758 = vpop.f32.mrf.mxu0
      %v7759 = vadd.f32 0.0, %v7758
      %v7760 = vpop.f32.mrf.mxu0
      %v7761 = vadd.f32 0.0, %v7760
      %7762 = vmatmul.bf16.gmra.mxu0 %v7685
      %v7763 = vpop.f32.mrf.mxu0
      %v7764 = vadd.f32 0.0, %v7763
      %v7765 = vpop.f32.mrf.mxu0
      %v7766 = vadd.f32 0.0, %v7765
      %7767 = vmatmul.bf16.gmra.mxu0 %v7688
      %v7768 = vpop.f32.mrf.mxu0
      %v7769 = vadd.f32 0.0, %v7768
      %v7770 = vpop.f32.mrf.mxu0
      %v7771 = vadd.f32 0.0, %v7770
      %7772 = vmatmul.bf16.gmra.mxu0 %v7691
      %v7773 = vpop.f32.mrf.mxu0
      %v7774 = vadd.f32 0.0, %v7773
      %v7775 = vpop.f32.mrf.mxu0
      %v7776 = vadd.f32 0.0, %v7775
      %7777 = vmatmul.bf16.gmra.mxu0 %v7694
      %v7778 = vpop.f32.mrf.mxu0
      %v7779 = vadd.f32 0.0, %v7778
      %v7780 = vpop.f32.mrf.mxu0
      %v7781 = vadd.f32 0.0, %v7780
      %7782 = vmatmul.bf16.gmra.mxu0 %v7697
      %v7783 = vpop.f32.mrf.mxu0
      %v7784 = vadd.f32 0.0, %v7783
      %v7785 = vpop.f32.mrf.mxu0
      %v7786 = vadd.f32 0.0, %v7785
      %7787 = vmatmul.bf16.gmra.mxu0 %v7700
      %v7788 = vpop.f32.mrf.mxu0
      %v7789 = vadd.f32 0.0, %v7788
      %v7790 = vpop.f32.mrf.mxu0
      %v7791 = vadd.f32 0.0, %v7790
      %7792 = vmatmul.bf16.gmra.mxu0 %v7703
      %v7793 = vpop.f32.mrf.mxu0
      %v7794 = vadd.f32 0.0, %v7793
      %v7795 = vpop.f32.mrf.mxu0
      %v7796 = vadd.f32 0.0, %v7795
      %7797 = vmatmul.bf16.gmra.mxu0 %v7706
      %v7798 = vpop.f32.mrf.mxu0
      %v7799 = vadd.f32 0.0, %v7798
      %v7800 = vpop.f32.mrf.mxu0
      %v7801 = vadd.f32 0.0, %v7800
      %7802 = vmatmul.bf16.gmra.mxu0 %v7709
      %v7803 = vpop.f32.mrf.mxu0
      %v7804 = vadd.f32 0.0, %v7803
      %v7805 = vpop.f32.mrf.mxu0
      %v7806 = vadd.f32 0.0, %v7805
      %7807 = vmatmul.bf16.gmra.mxu0 %v7712
      %v7808 = vpop.f32.mrf.mxu0
      %v7809 = vadd.f32 0.0, %v7808
      %v7810 = vpop.f32.mrf.mxu0
      %v7811 = vadd.f32 0.0, %v7810
      %7812 = vdwg.mxu0
      %v7813 = vadd.f32 %v7607, %v7724
      %v7814 = vadd.f32 %v7608, %v7726
      %v7815 = vadd.f32 %v7609, %v7729
      %v7816 = vadd.f32 %v7610, %v7731
      %v7817 = vadd.f32 %v7611, %v7734
      %v7818 = vadd.f32 %v7612, %v7736
      %v7819 = vadd.f32 %v7613, %v7739
      %v7820 = vadd.f32 %v7614, %v7741
      %v7821 = vadd.f32 %v7615, %v7744
      %v7822 = vadd.f32 %v7616, %v7746
      %v7823 = vadd.f32 %v7617, %v7749
      %v7824 = vadd.f32 %v7618, %v7751
      %v7825 = vadd.f32 %v7619, %v7754
      %v7826 = vadd.f32 %v7620, %v7756
      %v7827 = vadd.f32 %v7621, %v7759
      %v7828 = vadd.f32 %v7622, %v7761
      %v7829 = vadd.f32 %v7623, %v7764
      %v7830 = vadd.f32 %v7624, %v7766
      %v7831 = vadd.f32 %v7625, %v7769
      %v7832 = vadd.f32 %v7626, %v7771
      %v7833 = vadd.f32 %v7627, %v7774
      %v7834 = vadd.f32 %v7628, %v7776
      %v7835 = vadd.f32 %v7629, %v7779
      %v7836 = vadd.f32 %v7630, %v7781
      %v7837 = vadd.f32 %v7631, %v7784
      %v7838 = vadd.f32 %v7632, %v7786
      %v7839 = vadd.f32 %v7633, %v7789
      %v7840 = vadd.f32 %v7634, %v7791
      %v7841 = vadd.f32 %v7635, %v7794
      %v7842 = vadd.f32 %v7636, %v7796
      %v7843 = vadd.f32 %v7637, %v7799
      %v7844 = vadd.f32 %v7638, %v7801
      %v7845 = vadd.f32 %v7639, %v7804
      %v7846 = vadd.f32 %v7640, %v7806
      %v7847 = vadd.f32 %v7641, %v7809
      %v7848 = vadd.f32 %v7642, %v7811
      %7849 = vst.msk [vmem:[%s224] sm:$0xff] %vm357, %v7813
      %7850 = vst.msk [vmem:[%s224 + $0x8] sm:$0xff] %vm357, %v7814
      %7851 = vst.msk [vmem:[%s224 + $0x10] sm:$0xff] %vm357, %v7815
      %7852 = vst.msk [vmem:[%s224 + $0x18] sm:$0xff] %vm357, %v7816
      %7853 = vst.msk [vmem:[%s224 + $0x20] sm:$0xff] %vm357, %v7817
      %7854 = vst.msk [vmem:[%s224 + $0x28] sm:$0xff] %vm357, %v7818
      %7855 = vst.msk [vmem:[%s224 + $0x30] sm:$0xff] %vm357, %v7819
      %7856 = vst.msk [vmem:[%s224 + $0x38] sm:$0xff] %vm357, %v7820
      %7857 = vst.msk [vmem:[%s224 + $0x40] sm:$0xff] %vm357, %v7821
      %7858 = vst.msk [vmem:[%s224 + $0x48] sm:$0xff] %vm357, %v7822
      %7859 = vst.msk [vmem:[%s224 + $0x50] sm:$0xff] %vm357, %v7823
      %7860 = vst.msk [vmem:[%s224 + $0x58] sm:$0xff] %vm357, %v7824
      %7861 = vst.msk [vmem:[%s224 + $0x60] sm:$0xff] %vm357, %v7825
      %7862 = vst.msk [vmem:[%s224 + $0x68] sm:$0xff] %vm357, %v7826
      %7863 = vst.msk [vmem:[%s224 + $0x70] sm:$0xff] %vm357, %v7827
      %7864 = vst.msk [vmem:[%s224 + $0x78] sm:$0xff] %vm357, %v7828
      %7865 = vst.msk [vmem:[%s224 + $0x80] sm:$0xff] %vm357, %v7829
      %7866 = vst.msk [vmem:[%s224 + $0x88] sm:$0xff] %vm357, %v7830
      %7867 = vst.msk [vmem:[%s224 + $0x90] sm:$0xff] %vm357, %v7831
      %7868 = vst.msk [vmem:[%s224 + $0x98] sm:$0xff] %vm357, %v7832
      %7869 = vst.msk [vmem:[%s224 + $0xa0] sm:$0xff] %vm357, %v7833
      %7870 = vst.msk [vmem:[%s224 + $0xa8] sm:$0xff] %vm357, %v7834
      %7871 = vst.msk [vmem:[%s224 + $0xb0] sm:$0xff] %vm357, %v7835
      %7872 = vst.msk [vmem:[%s224 + $0xb8] sm:$0xff] %vm357, %v7836
      %7873 = vst.msk [vmem:[%s224 + $0xc0] sm:$0xff] %vm357, %v7837
      %7874 = vst.msk [vmem:[%s224 + $0xc8] sm:$0xff] %vm357, %v7838
      %7875 = vst.msk [vmem:[%s224 + $0xd0] sm:$0xff] %vm357, %v7839
      %7876 = vst.msk [vmem:[%s224 + $0xd8] sm:$0xff] %vm357, %v7840
      %7877 = vst.msk [vmem:[%s224 + $0xe0] sm:$0xff] %vm357, %v7841
      %7878 = vst.msk [vmem:[%s224 + $0xe8] sm:$0xff] %vm357, %v7842
      %7879 = vst.msk [vmem:[%s224 + $0xf0] sm:$0xff] %vm357, %v7843
      %7880 = vst.msk [vmem:[%s224 + $0xf8] sm:$0xff] %vm357, %v7844
      %7881 = vst.msk [vmem:[%s224 + $0x100] sm:$0xff] %vm357, %v7845
      %7882 = vst.msk [vmem:[%s224 + $0x108] sm:$0xff] %vm357, %v7846
      %7883 = vst.msk [vmem:[%s224 + $0x110] sm:$0xff] %vm357, %v7847
      %7884 = vst.msk [vmem:[%s224 + $0x118] sm:$0xff] %vm357, %v7848
      %v7885 = vld [vmem:[#allocation4 + $0x26] sm:$0xff]
      %v7886 = vld [vmem:[#allocation4 + $0x2e] sm:$0xff]
      %v7887 = vld [vmem:[#allocation4 + $0x36] sm:$0xff]
      %v7888 = vld [vmem:[#allocation4 + $0x3e] sm:$0xff]
      %v7889 = vld [vmem:[#allocation4 + $0x46] sm:$0xff]
      %v7890 = vld [vmem:[#allocation4 + $0x4e] sm:$0xff]
      %v7891 = vld [vmem:[#allocation4 + $0x56] sm:$0xff]
      %v7892 = vld [vmem:[#allocation4 + $0x5e] sm:$0xff]
      %v7893 = vld [vmem:[#allocation4 + $0x66] sm:$0xff]
      %v7894 = vld [vmem:[#allocation4 + $0x6e] sm:$0xff]
      %v7895 = vld [vmem:[#allocation4 + $0x76] sm:$0xff]
      %v7896 = vld [vmem:[#allocation4 + $0x7e] sm:$0xff]
      %v7897 = vld [vmem:[#allocation4 + $0x86] sm:$0xff]
      %v7898 = vld [vmem:[#allocation4 + $0x8e] sm:$0xff]
      %v7899 = vld [vmem:[#allocation4 + $0x96] sm:$0xff]
      %v7900 = vld [vmem:[#allocation4 + $0x9e] sm:$0xff]
      %v7901 = vld [vmem:[#allocation4 + $0xa6] sm:$0xff]
      %v7902 = vld [vmem:[#allocation4 + $0xae] sm:$0xff]
      %v7903 = vld [vmem:[#allocation4 + $0xb6] sm:$0xff]
      %v7904 = vld [vmem:[#allocation4 + $0xbe] sm:$0xff]
      %v7905 = vld [vmem:[#allocation4 + $0xc6] sm:$0xff]
      %v7906 = vld [vmem:[#allocation4 + $0xce] sm:$0xff]
      %v7907 = vld [vmem:[#allocation4 + $0xd6] sm:$0xff]
      %v7908 = vld [vmem:[#allocation4 + $0xde] sm:$0xff]
      %v7909 = vld [vmem:[#allocation4 + $0xe6] sm:$0xff]
      %v7910 = vld [vmem:[#allocation4 + $0xee] sm:$0xff]
      %v7911 = vld [vmem:[#allocation4 + $0xf6] sm:$0xff]
      %v7912 = vld [vmem:[#allocation4 + $0xfe] sm:$0xff]
      %v7913 = vld [vmem:[#allocation4 + $0x106] sm:$0xff]
      %v7914 = vld [vmem:[#allocation4 + $0x10e] sm:$0xff]
      %v7915 = vld [vmem:[#allocation4 + $0x116] sm:$0xff]
      %v7916 = vld [vmem:[#allocation4 + $0x11e] sm:$0xff]
      %v7917 = vld [vmem:[#allocation4 + $0x126] sm:$0xff]
      %v7918 = vld [vmem:[#allocation4 + $0x12e] sm:$0xff]
      %v7919 = vld [vmem:[#allocation4 + $0x136] sm:$0xff]
      %v7920 = vld [vmem:[#allocation4 + $0x13e] sm:$0xff]
      %v7921 = vpack.c.bf16 %v7886, %v7885
      %v7922 = vpack.c.bf16 %v7888, %v7887
      %v7923 = vpack.c.bf16 %v7890, %v7889
      %v7924 = vpack.c.bf16 %v7892, %v7891
      %v7925 = vpack.c.bf16 %v7894, %v7893
      %v7926 = vpack.c.bf16 %v7896, %v7895
      %v7927 = vpack.c.bf16 %v7898, %v7897
      %v7928 = vpack.c.bf16 %v7900, %v7899
      %v7929 = vpack.c.bf16 %v7902, %v7901
      %v7930 = vpack.c.bf16 %v7904, %v7903
      %v7931 = vpack.c.bf16 %v7906, %v7905
      %v7932 = vpack.c.bf16 %v7908, %v7907
      %v7933 = vpack.c.bf16 %v7910, %v7909
      %v7934 = vpack.c.bf16 %v7912, %v7911
      %v7935 = vpack.c.bf16 %v7914, %v7913
      %v7936 = vpack.c.bf16 %v7916, %v7915
      %v7937 = vpack.c.bf16 %v7918, %v7917
      %v7938 = vpack.c.bf16 %v7920, %v7919
      %v7939 = vld [vmem:[%s224] sm:$0xff]
      %v7940 = vld [vmem:[%s224 + $0x8] sm:$0xff]
      %v7941 = vld [vmem:[%s224 + $0x10] sm:$0xff]
      %v7942 = vld [vmem:[%s224 + $0x18] sm:$0xff]
      %v7943 = vld [vmem:[%s224 + $0x20] sm:$0xff]
      %v7944 = vld [vmem:[%s224 + $0x28] sm:$0xff]
      %v7945 = vld [vmem:[%s224 + $0x30] sm:$0xff]
      %v7946 = vld [vmem:[%s224 + $0x38] sm:$0xff]
      %v7947 = vld [vmem:[%s224 + $0x40] sm:$0xff]
      %v7948 = vld [vmem:[%s224 + $0x48] sm:$0xff]
      %v7949 = vld [vmem:[%s224 + $0x50] sm:$0xff]
      %v7950 = vld [vmem:[%s224 + $0x58] sm:$0xff]
      %v7951 = vld [vmem:[%s224 + $0x60] sm:$0xff]
      %v7952 = vld [vmem:[%s224 + $0x68] sm:$0xff]
      %v7953 = vld [vmem:[%s224 + $0x70] sm:$0xff]
      %v7954 = vld [vmem:[%s224 + $0x78] sm:$0xff]
      %v7955 = vld [vmem:[%s224 + $0x80] sm:$0xff]
      %v7956 = vld [vmem:[%s224 + $0x88] sm:$0xff]
      %v7957 = vld [vmem:[%s224 + $0x90] sm:$0xff]
      %v7958 = vld [vmem:[%s224 + $0x98] sm:$0xff]
      %v7959 = vld [vmem:[%s224 + $0xa0] sm:$0xff]
      %v7960 = vld [vmem:[%s224 + $0xa8] sm:$0xff]
      %v7961 = vld [vmem:[%s224 + $0xb0] sm:$0xff]
      %v7962 = vld [vmem:[%s224 + $0xb8] sm:$0xff]
      %v7963 = vld [vmem:[%s224 + $0xc0] sm:$0xff]
      %v7964 = vld [vmem:[%s224 + $0xc8] sm:$0xff]
      %v7965 = vld [vmem:[%s224 + $0xd0] sm:$0xff]
      %v7966 = vld [vmem:[%s224 + $0xd8] sm:$0xff]
      %v7967 = vld [vmem:[%s224 + $0xe0] sm:$0xff]
      %v7968 = vld [vmem:[%s224 + $0xe8] sm:$0xff]
      %v7969 = vld [vmem:[%s224 + $0xf0] sm:$0xff]
      %v7970 = vld [vmem:[%s224 + $0xf8] sm:$0xff]
      %v7971 = vld [vmem:[%s224 + $0x100] sm:$0xff]
      %v7972 = vld [vmem:[%s224 + $0x108] sm:$0xff]
      %v7973 = vld [vmem:[%s224 + $0x110] sm:$0xff]
      %v7974 = vld [vmem:[%s224 + $0x118] sm:$0xff]
      %s7975 = scalar_lea.vmem %s3, 128
      %v7976 = vld [vmem:[%s7975] sm:$0xf]
      %v7977 = vld [vmem:[%s7975 + $0x4] sm:$0xf]
      %v7978 = vld [vmem:[%s7975 + $0x8] sm:$0xf]
      %v7979 = vld [vmem:[%s7975 + $0xc] sm:$0xf]
      %v7984 = vunpack.c.l.b16 %v7976
      %v7985 = vunpack.c.l.b16 %v7977
      %v7986 = vunpack.c.l.b16 %v7978
      %v7987 = vunpack.c.l.b16 %v7979
      %v7988 = vpack.c.b16 %v7985, %v7984
      %v7989 = vpack.c.b16 %v7987, %v7986
      %v7993 = vsel %vm357, %v7921, 0
      %v7996 = vsel %vm357, %v7922, 0
      %v7999 = vsel %vm357, %v7923, 0
      %v8002 = vsel %vm357, %v7924, 0
      %v8005 = vsel %vm357, %v7925, 0
      %v8008 = vsel %vm357, %v7926, 0
      %v8011 = vsel %vm357, %v7927, 0
      %v8014 = vsel %vm357, %v7928, 0
      %v8017 = vsel %vm357, %v7929, 0
      %v8020 = vsel %vm357, %v7930, 0
      %v8023 = vsel %vm357, %v7931, 0
      %v8026 = vsel %vm357, %v7932, 0
      %v8029 = vsel %vm357, %v7933, 0
      %v8032 = vsel %vm357, %v7934, 0
      %v8035 = vsel %vm357, %v7935, 0
      %v8038 = vsel %vm357, %v7936, 0
      %v8041 = vsel %vm357, %v7937, 0
      %v8044 = vsel %vm357, %v7938, 0
      %8046 = vmatpush.bf16.msra.mxu0 0
      %8047 = vmatpush.bf16.msra.mxu0 0
      %8048 = vmatpush.bf16.msra.mxu0 0
      %8049 = vmatpush.bf16.msra.mxu0 0
      %8050 = vmatpush.bf16.msra.mxu0 0
      %8051 = vmatpush.bf16.msra.mxu0 0
      %8052 = vmatpush.bf16.msra.mxu0 %v7989
      %8053 = vmatpush.bf16.msra.mxu0 %v7988
      %8054 = vmatmul.bf16.gmra.mxu0 %v7993
      %v8055 = vpop.f32.mrf.mxu0
      %v8056 = vadd.f32 0.0, %v8055
      %v8057 = vpop.f32.mrf.mxu0
      %v8058 = vadd.f32 0.0, %v8057
      %8059 = vmatmul.bf16.gmra.mxu0 %v7996
      %v8060 = vpop.f32.mrf.mxu0
      %v8061 = vadd.f32 0.0, %v8060
      %v8062 = vpop.f32.mrf.mxu0
      %v8063 = vadd.f32 0.0, %v8062
      %8064 = vmatmul.bf16.gmra.mxu0 %v7999
      %v8065 = vpop.f32.mrf.mxu0
      %v8066 = vadd.f32 0.0, %v8065
      %v8067 = vpop.f32.mrf.mxu0
      %v8068 = vadd.f32 0.0, %v8067
      %8069 = vmatmul.bf16.gmra.mxu0 %v8002
      %v8070 = vpop.f32.mrf.mxu0
      %v8071 = vadd.f32 0.0, %v8070
      %v8072 = vpop.f32.mrf.mxu0
      %v8073 = vadd.f32 0.0, %v8072
      %8074 = vmatmul.bf16.gmra.mxu0 %v8005
      %v8075 = vpop.f32.mrf.mxu0
      %v8076 = vadd.f32 0.0, %v8075
      %v8077 = vpop.f32.mrf.mxu0
      %v8078 = vadd.f32 0.0, %v8077
      %8079 = vmatmul.bf16.gmra.mxu0 %v8008
      %v8080 = vpop.f32.mrf.mxu0
      %v8081 = vadd.f32 0.0, %v8080
      %v8082 = vpop.f32.mrf.mxu0
      %v8083 = vadd.f32 0.0, %v8082
      %8084 = vmatmul.bf16.gmra.mxu0 %v8011
      %v8085 = vpop.f32.mrf.mxu0
      %v8086 = vadd.f32 0.0, %v8085
      %v8087 = vpop.f32.mrf.mxu0
      %v8088 = vadd.f32 0.0, %v8087
      %8089 = vmatmul.bf16.gmra.mxu0 %v8014
      %v8090 = vpop.f32.mrf.mxu0
      %v8091 = vadd.f32 0.0, %v8090
      %v8092 = vpop.f32.mrf.mxu0
      %v8093 = vadd.f32 0.0, %v8092
      %8094 = vmatmul.bf16.gmra.mxu0 %v8017
      %v8095 = vpop.f32.mrf.mxu0
      %v8096 = vadd.f32 0.0, %v8095
      %v8097 = vpop.f32.mrf.mxu0
      %v8098 = vadd.f32 0.0, %v8097
      %8099 = vmatmul.bf16.gmra.mxu0 %v8020
      %v8100 = vpop.f32.mrf.mxu0
      %v8101 = vadd.f32 0.0, %v8100
      %v8102 = vpop.f32.mrf.mxu0
      %v8103 = vadd.f32 0.0, %v8102
      %8104 = vmatmul.bf16.gmra.mxu0 %v8023
      %v8105 = vpop.f32.mrf.mxu0
      %v8106 = vadd.f32 0.0, %v8105
      %v8107 = vpop.f32.mrf.mxu0
      %v8108 = vadd.f32 0.0, %v8107
      %8109 = vmatmul.bf16.gmra.mxu0 %v8026
      %v8110 = vpop.f32.mrf.mxu0
      %v8111 = vadd.f32 0.0, %v8110
      %v8112 = vpop.f32.mrf.mxu0
      %v8113 = vadd.f32 0.0, %v8112
      %8114 = vmatmul.bf16.gmra.mxu0 %v8029
      %v8115 = vpop.f32.mrf.mxu0
      %v8116 = vadd.f32 0.0, %v8115
      %v8117 = vpop.f32.mrf.mxu0
      %v8118 = vadd.f32 0.0, %v8117
      %8119 = vmatmul.bf16.gmra.mxu0 %v8032
      %v8120 = vpop.f32.mrf.mxu0
      %v8121 = vadd.f32 0.0, %v8120
      %v8122 = vpop.f32.mrf.mxu0
      %v8123 = vadd.f32 0.0, %v8122
      %8124 = vmatmul.bf16.gmra.mxu0 %v8035
      %v8125 = vpop.f32.mrf.mxu0
      %v8126 = vadd.f32 0.0, %v8125
      %v8127 = vpop.f32.mrf.mxu0
      %v8128 = vadd.f32 0.0, %v8127
      %8129 = vmatmul.bf16.gmra.mxu0 %v8038
      %v8130 = vpop.f32.mrf.mxu0
      %v8131 = vadd.f32 0.0, %v8130
      %v8132 = vpop.f32.mrf.mxu0
      %v8133 = vadd.f32 0.0, %v8132
      %8134 = vmatmul.bf16.gmra.mxu0 %v8041
      %v8135 = vpop.f32.mrf.mxu0
      %v8136 = vadd.f32 0.0, %v8135
      %v8137 = vpop.f32.mrf.mxu0
      %v8138 = vadd.f32 0.0, %v8137
      %8139 = vmatmul.bf16.gmra.mxu0 %v8044
      %v8140 = vpop.f32.mrf.mxu0
      %v8141 = vadd.f32 0.0, %v8140
      %v8142 = vpop.f32.mrf.mxu0
      %v8143 = vadd.f32 0.0, %v8142
      %8144 = vdwg.mxu0
      %v8145 = vadd.f32 %v7939, %v8056
      %v8146 = vadd.f32 %v7940, %v8058
      %v8147 = vadd.f32 %v7941, %v8061
      %v8148 = vadd.f32 %v7942, %v8063
      %v8149 = vadd.f32 %v7943, %v8066
      %v8150 = vadd.f32 %v7944, %v8068
      %v8151 = vadd.f32 %v7945, %v8071
      %v8152 = vadd.f32 %v7946, %v8073
      %v8153 = vadd.f32 %v7947, %v8076
      %v8154 = vadd.f32 %v7948, %v8078
      %v8155 = vadd.f32 %v7949, %v8081
      %v8156 = vadd.f32 %v7950, %v8083
      %v8157 = vadd.f32 %v7951, %v8086
      %v8158 = vadd.f32 %v7952, %v8088
      %v8159 = vadd.f32 %v7953, %v8091
      %v8160 = vadd.f32 %v7954, %v8093
      %v8161 = vadd.f32 %v7955, %v8096
      %v8162 = vadd.f32 %v7956, %v8098
      %v8163 = vadd.f32 %v7957, %v8101
      %v8164 = vadd.f32 %v7958, %v8103
      %v8165 = vadd.f32 %v7959, %v8106
      %v8166 = vadd.f32 %v7960, %v8108
      %v8167 = vadd.f32 %v7961, %v8111
      %v8168 = vadd.f32 %v7962, %v8113
      %v8169 = vadd.f32 %v7963, %v8116
      %v8170 = vadd.f32 %v7964, %v8118
      %v8171 = vadd.f32 %v7965, %v8121
      %v8172 = vadd.f32 %v7966, %v8123
      %v8173 = vadd.f32 %v7967, %v8126
      %v8174 = vadd.f32 %v7968, %v8128
      %v8175 = vadd.f32 %v7969, %v8131
      %v8176 = vadd.f32 %v7970, %v8133
      %v8177 = vadd.f32 %v7971, %v8136
      %v8178 = vadd.f32 %v7972, %v8138
      %v8179 = vadd.f32 %v7973, %v8141
      %v8180 = vadd.f32 %v7974, %v8143
      %8181 = vst.msk [vmem:[%s224] sm:$0xff] %vm357, %v8145
      %8182 = vst.msk [vmem:[%s224 + $0x8] sm:$0xff] %vm357, %v8146
      %8183 = vst.msk [vmem:[%s224 + $0x10] sm:$0xff] %vm357, %v8147
      %8184 = vst.msk [vmem:[%s224 + $0x18] sm:$0xff] %vm357, %v8148
      %8185 = vst.msk [vmem:[%s224 + $0x20] sm:$0xff] %vm357, %v8149
      %8186 = vst.msk [vmem:[%s224 + $0x28] sm:$0xff] %vm357, %v8150
      %8187 = vst.msk [vmem:[%s224 + $0x30] sm:$0xff] %vm357, %v8151
      %8188 = vst.msk [vmem:[%s224 + $0x38] sm:$0xff] %vm357, %v8152
      %8189 = vst.msk [vmem:[%s224 + $0x40] sm:$0xff] %vm357, %v8153
      %8190 = vst.msk [vmem:[%s224 + $0x48] sm:$0xff] %vm357, %v8154
      %8191 = vst.msk [vmem:[%s224 + $0x50] sm:$0xff] %vm357, %v8155
      %8192 = vst.msk [vmem:[%s224 + $0x58] sm:$0xff] %vm357, %v8156
      %8193 = vst.msk [vmem:[%s224 + $0x60] sm:$0xff] %vm357, %v8157
      %8194 = vst.msk [vmem:[%s224 + $0x68] sm:$0xff] %vm357, %v8158
      %8195 = vst.msk [vmem:[%s224 + $0x70] sm:$0xff] %vm357, %v8159
      %8196 = vst.msk [vmem:[%s224 + $0x78] sm:$0xff] %vm357, %v8160
      %8197 = vst.msk [vmem:[%s224 + $0x80] sm:$0xff] %vm357, %v8161
      %8198 = vst.msk [vmem:[%s224 + $0x88] sm:$0xff] %vm357, %v8162
      %8199 = vst.msk [vmem:[%s224 + $0x90] sm:$0xff] %vm357, %v8163
      %8200 = vst.msk [vmem:[%s224 + $0x98] sm:$0xff] %vm357, %v8164
      %8201 = vst.msk [vmem:[%s224 + $0xa0] sm:$0xff] %vm357, %v8165
      %8202 = vst.msk [vmem:[%s224 + $0xa8] sm:$0xff] %vm357, %v8166
      %8203 = vst.msk [vmem:[%s224 + $0xb0] sm:$0xff] %vm357, %v8167
      %8204 = vst.msk [vmem:[%s224 + $0xb8] sm:$0xff] %vm357, %v8168
      %8205 = vst.msk [vmem:[%s224 + $0xc0] sm:$0xff] %vm357, %v8169
      %8206 = vst.msk [vmem:[%s224 + $0xc8] sm:$0xff] %vm357, %v8170
      %8207 = vst.msk [vmem:[%s224 + $0xd0] sm:$0xff] %vm357, %v8171
      %8208 = vst.msk [vmem:[%s224 + $0xd8] sm:$0xff] %vm357, %v8172
      %8209 = vst.msk [vmem:[%s224 + $0xe0] sm:$0xff] %vm357, %v8173
      %8210 = vst.msk [vmem:[%s224 + $0xe8] sm:$0xff] %vm357, %v8174
      %8211 = vst.msk [vmem:[%s224 + $0xf0] sm:$0xff] %vm357, %v8175
      %8212 = vst.msk [vmem:[%s224 + $0xf8] sm:$0xff] %vm357, %v8176
      %8213 = vst.msk [vmem:[%s224 + $0x100] sm:$0xff] %vm357, %v8177
      %8214 = vst.msk [vmem:[%s224 + $0x108] sm:$0xff] %vm357, %v8178
      %8215 = vst.msk [vmem:[%s224 + $0x110] sm:$0xff] %vm357, %v8179
      %8216 = vst.msk [vmem:[%s224 + $0x118] sm:$0xff] %vm357, %v8180
      %v8217 = vld [vmem:[%s224] sm:$0xff]
      %v8218 = vld [vmem:[%s224 + $0x8] sm:$0xff]
      %v8219 = vld [vmem:[%s224 + $0x10] sm:$0xff]
      %v8220 = vld [vmem:[%s224 + $0x18] sm:$0xff]
      %v8221 = vld [vmem:[%s224 + $0x20] sm:$0xff]
      %v8222 = vld [vmem:[%s224 + $0x28] sm:$0xff]
      %v8223 = vld [vmem:[%s224 + $0x30] sm:$0xff]
      %v8224 = vld [vmem:[%s224 + $0x38] sm:$0xff]
      %v8225 = vld [vmem:[%s224 + $0x40] sm:$0xff]
      %v8226 = vld [vmem:[%s224 + $0x48] sm:$0xff]
      %v8227 = vld [vmem:[%s224 + $0x50] sm:$0xff]
      %v8228 = vld [vmem:[%s224 + $0x58] sm:$0xff]
      %v8229 = vld [vmem:[%s224 + $0x60] sm:$0xff]
      %v8230 = vld [vmem:[%s224 + $0x68] sm:$0xff]
      %v8231 = vld [vmem:[%s224 + $0x70] sm:$0xff]
      %v8232 = vld [vmem:[%s224 + $0x78] sm:$0xff]
      %v8233 = vld [vmem:[%s224 + $0x80] sm:$0xff]
      %v8234 = vld [vmem:[%s224 + $0x88] sm:$0xff]
      %v8235 = vld [vmem:[%s224 + $0x90] sm:$0xff]
      %v8236 = vld [vmem:[%s224 + $0x98] sm:$0xff]
      %v8237 = vld [vmem:[%s224 + $0xa0] sm:$0xff]
      %v8238 = vld [vmem:[%s224 + $0xa8] sm:$0xff]
      %v8239 = vld [vmem:[%s224 + $0xb0] sm:$0xff]
      %v8240 = vld [vmem:[%s224 + $0xb8] sm:$0xff]
      %v8241 = vld [vmem:[%s224 + $0xc0] sm:$0xff]
      %v8242 = vld [vmem:[%s224 + $0xc8] sm:$0xff]
      %v8243 = vld [vmem:[%s224 + $0xd0] sm:$0xff]
      %v8244 = vld [vmem:[%s224 + $0xd8] sm:$0xff]
      %v8245 = vld [vmem:[%s224 + $0xe0] sm:$0xff]
      %v8246 = vld [vmem:[%s224 + $0xe8] sm:$0xff]
      %v8247 = vld [vmem:[%s224 + $0xf0] sm:$0xff]
      %v8248 = vld [vmem:[%s224 + $0xf8] sm:$0xff]
      %v8249 = vld [vmem:[%s224 + $0x100] sm:$0xff]
      %v8250 = vld [vmem:[%s224 + $0x108] sm:$0xff]
      %v8251 = vld [vmem:[%s224 + $0x110] sm:$0xff]
      %v8252 = vld [vmem:[%s224 + $0x118] sm:$0xff]
      %v8253 = vld [vmem:[%s4] sm:$0x1]
      %v8255 = vperm.slane %v8253, 0
      %v8257 = vadd.f32 %v8217, %v8255
      %v8258 = vadd.f32 %v8218, %v8255
      %v8259 = vadd.f32 %v8219, %v8255
      %v8260 = vadd.f32 %v8220, %v8255
      %v8261 = vadd.f32 %v8221, %v8255
      %v8262 = vadd.f32 %v8222, %v8255
      %v8263 = vadd.f32 %v8223, %v8255
      %v8264 = vadd.f32 %v8224, %v8255
      %v8265 = vadd.f32 %v8225, %v8255
      %v8266 = vadd.f32 %v8226, %v8255
      %v8267 = vadd.f32 %v8227, %v8255
      %v8268 = vadd.f32 %v8228, %v8255
      %v8269 = vadd.f32 %v8229, %v8255
      %v8270 = vadd.f32 %v8230, %v8255
      %v8271 = vadd.f32 %v8231, %v8255
      %v8272 = vadd.f32 %v8232, %v8255
      %v8273 = vadd.f32 %v8233, %v8255
      %v8274 = vadd.f32 %v8234, %v8255
      %v8275 = vadd.f32 %v8235, %v8255
      %v8276 = vadd.f32 %v8236, %v8255
      %v8277 = vadd.f32 %v8237, %v8255
      %v8278 = vadd.f32 %v8238, %v8255
      %v8279 = vadd.f32 %v8239, %v8255
      %v8280 = vadd.f32 %v8240, %v8255
      %v8281 = vadd.f32 %v8241, %v8255
      %v8282 = vadd.f32 %v8242, %v8255
      %v8283 = vadd.f32 %v8243, %v8255
      %v8284 = vadd.f32 %v8244, %v8255
      %v8285 = vadd.f32 %v8245, %v8255
      %v8286 = vadd.f32 %v8246, %v8255
      %v8287 = vadd.f32 %v8247, %v8255
      %v8288 = vadd.f32 %v8248, %v8255
      %v8289 = vadd.f32 %v8249, %v8255
      %v8290 = vadd.f32 %v8250, %v8255
      %v8291 = vadd.f32 %v8251, %v8255
      %v8292 = vadd.f32 %v8252, %v8255
      %v8293 = vmax.f32 %v8257, 0.0
      %v8294 = vmax.f32 %v8258, 0.0
      %v8295 = vmax.f32 %v8259, 0.0
      %v8296 = vmax.f32 %v8260, 0.0
      %v8297 = vmax.f32 %v8261, 0.0
      %v8298 = vmax.f32 %v8262, 0.0
      %v8299 = vmax.f32 %v8263, 0.0
      %v8300 = vmax.f32 %v8264, 0.0
      %v8301 = vmax.f32 %v8265, 0.0
      %v8302 = vmax.f32 %v8266, 0.0
      %v8303 = vmax.f32 %v8267, 0.0
      %v8304 = vmax.f32 %v8268, 0.0
      %v8305 = vmax.f32 %v8269, 0.0
      %v8306 = vmax.f32 %v8270, 0.0
      %v8307 = vmax.f32 %v8271, 0.0
      %v8308 = vmax.f32 %v8272, 0.0
      %v8309 = vmax.f32 %v8273, 0.0
      %v8310 = vmax.f32 %v8274, 0.0
      %v8311 = vmax.f32 %v8275, 0.0
      %v8312 = vmax.f32 %v8276, 0.0
      %v8313 = vmax.f32 %v8277, 0.0
      %v8314 = vmax.f32 %v8278, 0.0
      %v8315 = vmax.f32 %v8279, 0.0
      %v8316 = vmax.f32 %v8280, 0.0
      %v8317 = vmax.f32 %v8281, 0.0
      %v8318 = vmax.f32 %v8282, 0.0
      %v8319 = vmax.f32 %v8283, 0.0
      %v8320 = vmax.f32 %v8284, 0.0
      %v8321 = vmax.f32 %v8285, 0.0
      %v8322 = vmax.f32 %v8286, 0.0
      %v8323 = vmax.f32 %v8287, 0.0
      %v8324 = vmax.f32 %v8288, 0.0
      %v8325 = vmax.f32 %v8289, 0.0
      %v8326 = vmax.f32 %v8290, 0.0
      %v8327 = vmax.f32 %v8291, 0.0
      %v8328 = vmax.f32 %v8292, 0.0
      %8329 = vst.msk [vmem:[%s224] sm:$0xff] %vm357, %v8293
      %8330 = vst.msk [vmem:[%s224 + $0x8] sm:$0xff] %vm357, %v8294
      %8331 = vst.msk [vmem:[%s224 + $0x10] sm:$0xff] %vm357, %v8295
      %8332 = vst.msk [vmem:[%s224 + $0x18] sm:$0xff] %vm357, %v8296
      %8333 = vst.msk [vmem:[%s224 + $0x20] sm:$0xff] %vm357, %v8297
      %8334 = vst.msk [vmem:[%s224 + $0x28] sm:$0xff] %vm357, %v8298
      %8335 = vst.msk [vmem:[%s224 + $0x30] sm:$0xff] %vm357, %v8299
      %8336 = vst.msk [vmem:[%s224 + $0x38] sm:$0xff] %vm357, %v8300
      %8337 = vst.msk [vmem:[%s224 + $0x40] sm:$0xff] %vm357, %v8301
      %8338 = vst.msk [vmem:[%s224 + $0x48] sm:$0xff] %vm357, %v8302
      %8339 = vst.msk [vmem:[%s224 + $0x50] sm:$0xff] %vm357, %v8303
      %8340 = vst.msk [vmem:[%s224 + $0x58] sm:$0xff] %vm357, %v8304
      %8341 = vst.msk [vmem:[%s224 + $0x60] sm:$0xff] %vm357, %v8305
      %8342 = vst.msk [vmem:[%s224 + $0x68] sm:$0xff] %vm357, %v8306
      %8343 = vst.msk [vmem:[%s224 + $0x70] sm:$0xff] %vm357, %v8307
      %8344 = vst.msk [vmem:[%s224 + $0x78] sm:$0xff] %vm357, %v8308
      %8345 = vst.msk [vmem:[%s224 + $0x80] sm:$0xff] %vm357, %v8309
      %8346 = vst.msk [vmem:[%s224 + $0x88] sm:$0xff] %vm357, %v8310
      %8347 = vst.msk [vmem:[%s224 + $0x90] sm:$0xff] %vm357, %v8311
      %8348 = vst.msk [vmem:[%s224 + $0x98] sm:$0xff] %vm357, %v8312
      %8349 = vst.msk [vmem:[%s224 + $0xa0] sm:$0xff] %vm357, %v8313
      %8350 = vst.msk [vmem:[%s224 + $0xa8] sm:$0xff] %vm357, %v8314
      %8351 = vst.msk [vmem:[%s224 + $0xb0] sm:$0xff] %vm357, %v8315
      %8352 = vst.msk [vmem:[%s224 + $0xb8] sm:$0xff] %vm357, %v8316
      %8353 = vst.msk [vmem:[%s224 + $0xc0] sm:$0xff] %vm357, %v8317
      %8354 = vst.msk [vmem:[%s224 + $0xc8] sm:$0xff] %vm357, %v8318
      %8355 = vst.msk [vmem:[%s224 + $0xd0] sm:$0xff] %vm357, %v8319
      %8356 = vst.msk [vmem:[%s224 + $0xd8] sm:$0xff] %vm357, %v8320
      %8357 = vst.msk [vmem:[%s224 + $0xe0] sm:$0xff] %vm357, %v8321
      %8358 = vst.msk [vmem:[%s224 + $0xe8] sm:$0xff] %vm357, %v8322
      %8359 = vst.msk [vmem:[%s224 + $0xf0] sm:$0xff] %vm357, %v8323
      %8360 = vst.msk [vmem:[%s224 + $0xf8] sm:$0xff] %vm357, %v8324
      %8361 = vst.msk [vmem:[%s224 + $0x100] sm:$0xff] %vm357, %v8325
      %8362 = vst.msk [vmem:[%s224 + $0x108] sm:$0xff] %vm357, %v8326
      %8363 = vst.msk [vmem:[%s224 + $0x110] sm:$0xff] %vm357, %v8327
      %8364 = vst.msk [vmem:[%s224 + $0x118] sm:$0xff] %vm357, %v8328
      %p8365 = scmp.lt.s32.totalorder %s16, 1
      %s8366 = scalar_select %p8365, %s16, 1
      %s8367 = smul.addr %s8366, 36
      %s8368 = smul.addr %s8367, 8
      %s8369 = scalar_lea.vmem %s5, %s8368
      // Predicated region
      $region41: #{decoder_block_forward.3} parent=39 // pred_check
        %p8370 = pneg %p144
      $region42: #{decoder_block_forward.3} parent=39 // pred_check_branch
        %8372 = sbr.rel (%p8370) target = $region44
      $region43: #{decoder_block_forward.3} parent=39 // pred_region
        _
      $region44: #{decoder_block_forward.3} parent=39 // pred_fallthru
        _
    $region40: #{decoder_block_forward.3} parent=5 // pred_fallthru
      _
    %p8373 = scmp.le.s32.totalorder 2, %s11
    // Predicated region
    $region45: #{decoder_block_forward.3} parent=5 // pred_check
      %p8374 = pneg %p8373
    $region46: #{decoder_block_forward.3} parent=5 // pred_check_branch
      %8376 = sbr.rel (%p8374) target = $region48
    $region47: #{decoder_block_forward.3} parent=5 // pred_region
      %s8377 = ssub.s32 %s11, 2
      // Predicated region
      $region49: #{decoder_block_forward.3} parent=47 // pred_check
        %p8378 = pneg %p150
      $region50: #{decoder_block_forward.3} parent=47 // pred_check_branch
        %8380 = sbr.rel (%p8378) target = $region52
      $region51: #{decoder_block_forward.3} parent=47 // pred_region
        %p8381 = scmp.lt.s32.totalorder %s17, 1
        %s8382 = scalar_select %p8381, %s17, 1
        %s8383 = smul.addr %s8382, 36
        %s8384 = smul.addr %s8383, 8
        %s8385 = scalar_lea.vmem %s5, %s8384
      $region52: #{decoder_block_forward.3} parent=47 // pred_fallthru
        _
    $region48: #{decoder_block_forward.3} parent=5 // pred_fallthru
      _
  $region6: #{decoder_block_forward.3} parent=0 // loop_footer
    %s15 = sadd.s32 1, %s11
  $region7: #{decoder_block_forward.3} parent=0 // loop_footer_branch
    %10 = sbr.rel target = $region3
  $region8: #{decoder_block_forward.3} parent=0 // loop_exit
    _

</llo_original>
